<compile_context>
chip_gen: v7x
topology: tpu7x:2x2x1
jax: 0.10.0
libtpu: 0.0.40
codegen_flags: <defaults>
</compile_context>

<pallas_src>
import functools

import jax
import jax.numpy as jnp
from jax.experimental import pallas as pl
from jax.experimental.pallas import tpu as pltpu

NUM_CLASSES = 2
NUM_COORDINATES = 2

_LANE = 128
_TM_MAX = 512          # M tile (per tap); 4*512 stacked rows worst case.
_TM_ALIGN = 16         # bf16 sublane packing -> keep the in-kernel reshape a no-op.


def _round_up(x, m):
    return (x + m - 1) // m * m


# ---------------------------------------------------------------- Pallas kernel

def _gemm_tapmax_bias_kernel(a_ref, w_ref, b_ref, o_ref, *, num_taps, apply_relu):
    """out = act( max_t( A_t @ W ) + b ) for tap-stacked LHS.

    a_ref : (T, tm, Kp) bf16   T pool-tap im2col blocks (T=1 => plain GEMM)
    w_ref : (Kp, tn)    bf16
    b_ref : (1,  tn)    f32
    o_ref : (tm, tn)    out dtype

    One MXU matmul over the tap-stacked (T*tm, Kp) LHS (f32 accumulation); the
    pool-max / bias / ReLU epilogue is f32 VPU work on contiguous row slices and
    the result is cast exactly once on store.
    """
    tm = o_ref.shape[0]
    kp = a_ref.shape[-1]
    a = a_ref[...].reshape(num_taps * tm, kp)        # layout-preserving (tm % 16 == 0)
    acc = jnp.dot(a, w_ref[...], preferred_element_type=jnp.float32)  # (T*tm, tn)

    red = acc[0:tm, :]
    for t in range(1, num_taps):                     # elementwise max over taps (VPU)
        red = jnp.maximum(red, acc[t * tm:(t + 1) * tm, :])

    red = red + b_ref[...]
    if apply_relu:
        red = jnp.maximum(red, 0.0)
    o_ref[...] = red.astype(o_ref.dtype)


def fused_gemm(taps, w, b, *, apply_relu, out_dtype=jnp.bfloat16, tm_max=_TM_MAX):
    """act(max_t(taps[t] @ w) + b) as one pallas_call over a 2-D parallel grid.

    taps : (T, M, K) bf16  — tap-stacked im2col matrices (T = 4 for 2x2 pool, else 1)
    w    : (Kp, Cout) bf16 — Kp >= K, extra rows zero (prepared once)
    b    : (1, Cout)  f32
    """
    T, M, K = taps.shape
    Kp, Cout = w.shape
    assert Kp >= K

    # M tiling (per-tap rows).
    if M <= tm_max:
        tm = _round_up(M, _TM_ALIGN)
        Mp = tm
    else:
        tm = tm_max
        Mp = _round_up(M, tm)

    # Cout tiling: 128-wide lane-dense column blocks (engages megacore for Cout>=256),
    # otherwise the full (sub-128) Cout.
    tn = _LANE if (Cout % _LANE == 0 and Cout >= _LANE) else Cout
    grid = (Mp // tm, Cout // tn)

    # Single pad folds both the M round-up and the K alignment (zeros are exact).
    if (Mp, Kp) != (M, K):
        taps = jnp.pad(taps, ((0, 0), (0, Mp - M), (0, Kp - K)))

    out_itemsize = jnp.dtype(out_dtype).itemsize
    cost = pl.CostEstimate(
        flops=2 * T * Mp * Kp * Cout,
        transcendentals=0,
        bytes_accessed=int(T * Mp * Kp * 2 + (Mp // tm) * Kp * Cout * 2
                           + Cout * 4 + Mp * Cout * out_itemsize),
    )

    out = pl.pallas_call(
        functools.partial(_gemm_tapmax_bias_kernel,
                          num_taps=T, apply_relu=apply_relu),
        grid=grid,
        in_specs=[
            # Tap block is invariant along the (fast) Cout axis -> fetched once per M tile.
            pl.BlockSpec((T, tm, Kp), lambda i, j: (0, i, 0)),
            pl.BlockSpec((Kp, tn), lambda i, j: (0, j)),
            pl.BlockSpec((1, tn), lambda i, j: (0, j)),
        ],
        out_specs=pl.BlockSpec((tm, tn), lambda i, j: (i, j)),
        out_shape=jax.ShapeDtypeStruct((Mp, Cout), out_dtype),
        compiler_params=pltpu.CompilerParams(
            dimension_semantics=("parallel", "parallel")),
        cost_estimate=cost,
    )(taps, w, b)

    return out[:M] if Mp != M else out


# ---------------------------------------------------------------- im2col glue (XLA)

def _im2col_taps(x, *, k, pad, pool):
    """NHWC activations -> tap-stacked im2col matrices (T, M, Cin*k*k).

    Feature order is (Cin, dy, dx), i.e. PyTorch's weight.reshape(Cout, -1) order.
    With pool=True the four 2x2-pool taps are stacked tap-major along a new
    leading axis, so the kernel's max over taps reproduces MaxPool2d(2,2)
    (bias is per-channel and ReLU is monotonic, so max-before-bias/ReLU is exact).
    """
    N, H, W, Cin = x.shape
    Ho = H + 2 * pad - k + 1
    Wo = W + 2 * pad - k + 1
    xp = jnp.pad(x, ((0, 0), (pad, pad), (pad, pad), (0, 0)))
    cols = [xp[:, dy:dy + Ho, dx:dx + Wo, :] for dy in range(k) for dx in range(k)]
    p = jnp.stack(cols, axis=-1)                       # (N, Ho, Wo, Cin, k*k)
    kk = Cin * k * k
    if pool:
        assert Ho % 2 == 0 and Wo % 2 == 0, "pool path assumes even conv output"
        Hp, Wp = Ho // 2, Wo // 2
        taps = jnp.stack([p[:, ty::2, tx::2] for ty in range(2) for tx in range(2)],
                         axis=0)                        # (4, N, Hp, Wp, Cin, k*k)
        return taps.reshape(4, N * Hp * Wp, kk), (Hp, Wp)
    return p.reshape(1, N * Ho * Wo, kk), (Ho, Wo)


# ---------------------------------------------------------------- params

def init_params(key, max_dislocations):
    """Raw parameters in PyTorch layout (conv OIHW, head (flattened_CHW, out))."""
    ks = jax.random.split(key, 12)

    def conv(kw_, kb_, cout, cin, k):
        fan_in = cin * k * k
        w = jax.random.normal(kw_, (cout, cin, k, k), jnp.float32) / jnp.sqrt(fan_in)
        b = jax.random.normal(kb_, (cout,), jnp.float32) * 0.01
        return w, b

    flattened = 512 * 3 * 3
    params = {}
    params["w1"], params["b1"] = conv(ks[0], ks[1], 64, 3, 7)
    params["w2"], params["b2"] = conv(ks[2], ks[3], 128, 64, 5)
    params["w3"], params["b3"] = conv(ks[4], ks[5], 256, 128, 3)
    params["w4"], params["b4"] = conv(ks[6], ks[7], 512, 256, 2)
    params["w_cls"] = jax.random.normal(
        ks[8], (flattened, max_dislocations * NUM_CLASSES), jnp.float32) / jnp.sqrt(flattened)
    params["b_cls"] = jnp.zeros((max_dislocations * NUM_CLASSES,), jnp.float32)
    params["w_reg"] = jax.random.normal(
        ks[9], (flattened, max_dislocations * NUM_COORDINATES), jnp.float32) / jnp.sqrt(flattened)
    params["b_reg"] = jnp.zeros((max_dislocations * NUM_COORDINATES,), jnp.float32)
    return params


def prepare_params(raw, max_dislocations):
    """One-time conversion of PyTorch-layout weights into kernel-friendly form.

    * conv OIHW -> (Kp, Cout) GEMM matrices, K zero-padded to a multiple of 128, bf16.
    * head weight rows permuted from (C,H,W) to NHWC flatten order, both heads
      concatenated into a single GEMM, output columns zero-padded to 128
      (lane-dense stores), bf16; biases kept in f32.
    """
    prep = {}
    for li in (1, 2, 3, 4):
        w = raw[f"w{li}"]                               # (Cout, Cin, k, k)
        Cout, Cin, kh, kw = w.shape
        K = Cin * kh * kw
        Kp = _round_up(K, _LANE)
        w_mat = jnp.pad(w.reshape(Cout, K).T, ((0, Kp - K), (0, 0)))
        prep[f"w{li}"] = w_mat.astype(jnp.bfloat16)
        prep[f"b{li}"] = raw[f"b{li}"].reshape(1, Cout).astype(jnp.float32)

    # NOTE: hardcodes the 3x3x512 final feature map implied by a 16x16 input.
    feat = 512 * 3 * 3
    j = jnp.arange(feat)
    perm = (j % 512) * 9 + (j // 512)                   # NHWC row j <- CHW row perm[j]
    w_h = jnp.concatenate([raw["w_cls"][perm], raw["w_reg"][perm]], axis=1)
    b_h = jnp.concatenate([raw["b_cls"], raw["b_reg"]], axis=0)
    n_out = max_dislocations * (NUM_CLASSES + NUM_COORDINATES)
    n_pad = _round_up(n_out, _LANE)
    prep["w_heads"] = jnp.pad(w_h, ((0, 0), (0, n_pad - n_out))).astype(jnp.bfloat16)
    prep["b_heads"] = jnp.pad(b_h, (0, n_pad - n_out)).reshape(1, n_pad).astype(jnp.float32)
    return prep


# ---------------------------------------------------------------- model

_LAYER_CFG = (
    ("w1", "b1", 7, 3, True),   # 16 -> 16 -> pool 8
    ("w2", "b2", 5, 2, True),   # 8  -> 8  -> pool 4
    ("w3", "b3", 3, 1, True),   # 4  -> 4  -> pool 2
    ("w4", "b4", 2, 1, False),  # 2  -> 3  (no pool)
)


def cnn_forward(params, x_nchw, padded_positions):
    # NCHW (PyTorch) -> NHWC (kernel layout); bf16 activations feed the MXU.
    x = jnp.transpose(x_nchw, (0, 2, 3, 1)).astype(jnp.bfloat16)
    N = x.shape[0]

    for wname, bname, k, pad, pool in _LAYER_CFG:
        taps, (ho, wo) = _im2col_taps(x, k=k, pad=pad, pool=pool)
        y = fused_gemm(taps, params[wname], params[bname], apply_relu=True)
        x = y.reshape(N, ho, wo, -1)

    # NHWC flatten; head weight rows were pre-permuted to NHWC order, so this
    # matches PyTorch's (C,H,W) flatten without a runtime transpose.
    x_flat = x.reshape(1, N, -1)                                       # (1, N, 4608)

    max_d = padded_positions.shape[1]
    n_out = max_d * (NUM_CLASSES + NUM_COORDINATES)
    heads = fused_gemm(x_flat, params["w_heads"], params["b_heads"],
                       apply_relu=False, out_dtype=jnp.float32)        # (N, 128)
    heads = heads[:, :n_out]
    classification_logits = heads[:, :max_d * NUM_CLASSES].reshape(-1, max_d, NUM_CLASSES)
    regression_output = heads[:, max_d * NUM_CLASSES:].reshape(-1, max_d, NUM_COORDINATES)
    return classification_logits, regression_output


# ---------------------------------------------------------------- driver

if __name__ == "__main__":
    key = jax.random.PRNGKey(0)
    k_x, k_pos, k_params = jax.random.split(key, 3)

    batch = 2
    max_dislocations = 8
    # 16x16 input is what the module's flattened_size (512*3*3) implies.
    x = jax.random.normal(k_x, (batch, 3, 16, 16), jnp.float32)
    padded_positions = jax.random.normal(
        k_pos, (batch, max_dislocations, NUM_COORDINATES), jnp.float32)

    raw_params = init_params(k_params, max_dislocations)
    params = prepare_params(raw_params, max_dislocations)

    fwd = jax.jit(cnn_forward)
    cls_logits, reg_out = fwd(params, x, padded_positions)
    jax.block_until_ready((cls_logits, reg_out))

    assert cls_logits.shape == (batch, max_dislocations, NUM_CLASSES)
    assert reg_out.shape == (batch, max_dislocations, NUM_COORDINATES)
    assert bool(jnp.all(jnp.isfinite(cls_logits))) and bool(jnp.all(jnp.isfinite(reg_out)))
    print("KERNEL_OK")
</pallas_src>

<mosaic_0001>
module attributes {stable_mosaic.version = 11 : i64} {
  func.func @_gemm_tapmax_bias_kernel(%arg0: i32, %arg1: i32, %arg2: memref<4x128x256xbf16, #tpu.memory_space<vmem>>, %arg3: memref<256x64xbf16, #tpu.memory_space<vmem>>, %arg4: memref<1x64xf32, #tpu.memory_space<vmem>>, %arg5: memref<128x64xbf16, #tpu.memory_space<vmem>>) attributes {dimension_semantics = [#tpu.dimension_semantics<parallel>, #tpu.dimension_semantics<parallel>], iteration_bounds = array<i64: 1, 1>, scalar_prefetch = 0 : i64, scratch_operands = 0 : i64, tpu.core_type = #tpu.core_type<tc>, window_params = [{transform_indices = @transform_0, window_bounds = array<i64: 4, 128, 256>}, {transform_indices = @transform_1, window_bounds = array<i64: 256, 64>}, {transform_indices = @transform_2, window_bounds = array<i64: 1, 64>}, {transform_indices = @transform_3, window_bounds = array<i64: 128, 64>}]} {
    %c0 = arith.constant 0 : index
    %c0_0 = arith.constant 0 : index
    %c0_1 = arith.constant 0 : index
    %0 = vector.load %arg2[%c0, %c0_0, %c0_1] : memref<4x128x256xbf16, #tpu.memory_space<vmem>>, vector<4x128x256xbf16>
    %1 = vector.shape_cast %0 : vector<4x128x256xbf16> to vector<512x256xbf16>
    %c0_2 = arith.constant 0 : index
    %c0_3 = arith.constant 0 : index
    %2 = vector.load %arg3[%c0_2, %c0_3] : memref<256x64xbf16, #tpu.memory_space<vmem>>, vector<256x64xbf16>
    %cst = arith.constant dense<0.000000e+00> : vector<512x64xf32>
    %3 = tpu.matmul %1, %2, %cst {dimension_numbers = #tpu.dot_dimension_numbers<[1], [0], [0], [1], [0, 0, 1, 1], [], []>} : vector<512x256xbf16>, vector<256x64xbf16>, vector<512x64xf32> -> vector<512x64xf32>
    %4 = vector.extract_strided_slice %3 {offsets = [0, 0], sizes = [128, 64], strides = [1, 1]} : vector<512x64xf32> to vector<128x64xf32>
    %5 = vector.extract_strided_slice %3 {offsets = [128, 0], sizes = [128, 64], strides = [1, 1]} : vector<512x64xf32> to vector<128x64xf32>
    %6 = arith.maximumf %4, %5 : vector<128x64xf32>
    %7 = vector.extract_strided_slice %3 {offsets = [256, 0], sizes = [128, 64], strides = [1, 1]} : vector<512x64xf32> to vector<128x64xf32>
    %8 = arith.maximumf %6, %7 : vector<128x64xf32>
    %9 = vector.extract_strided_slice %3 {offsets = [384, 0], sizes = [128, 64], strides = [1, 1]} : vector<512x64xf32> to vector<128x64xf32>
    %10 = arith.maximumf %8, %9 : vector<128x64xf32>
    %c0_4 = arith.constant 0 : index
    %c0_5 = arith.constant 0 : index
    %11 = vector.load %arg4[%c0_4, %c0_5] : memref<1x64xf32, #tpu.memory_space<vmem>>, vector<1x64xf32>
    %12 = vector.broadcast %11 : vector<1x64xf32> to vector<128x64xf32>
    %13 = arith.addf %10, %12 : vector<128x64xf32>
    %cst_6 = arith.constant 0.000000e+00 : f32
    %14 = vector.broadcast %cst_6 : f32 to vector<128x64xf32>
    %15 = arith.maximumf %13, %14 : vector<128x64xf32>
    %16 = arith.truncf %15 : vector<128x64xf32> to vector<128x64xbf16>
    %c0_7 = arith.constant 0 : index
    %c0_8 = arith.constant 0 : index
    %17 = vector.load %arg5[%c0_7, %c0_8] : memref<128x64xbf16, #tpu.memory_space<vmem>>, vector<128x64xbf16>
    tpu.vector_store %arg5[%c0_7, %c0_8], %16 {strides = array<i32>} : memref<128x64xbf16, #tpu.memory_space<vmem>>, vector<128x64xbf16>,
    return
  }
  func.func @transform_0(%arg0: i32, %arg1: i32) -> (i32, i32, i32) {
    %c0_i32 = arith.constant 0 : i32
    %c0_i32_0 = arith.constant 0 : i32
    %c0_i32_1 = arith.constant 0 : i32
    return %c0_i32, %arg0, %c0_i32_0 : i32, i32, i32
  }
  func.func @transform_1(%arg0: i32, %arg1: i32) -> (i32, i32) {
    %c0_i32 = arith.constant 0 : i32
    %c0_i32_0 = arith.constant 0 : i32
    return %c0_i32, %arg1 : i32, i32
  }
  func.func @transform_2(%arg0: i32, %arg1: i32) -> (i32, i32) {
    %c0_i32 = arith.constant 0 : i32
    %c0_i32_0 = arith.constant 0 : i32
    return %c0_i32, %arg1 : i32, i32
  }
  func.func @transform_3(%arg0: i32, %arg1: i32) -> (i32, i32) {
    %c0_i32 = arith.constant 0 : i32
    return %arg0, %arg1 : i32, i32
  }
}

module attributes {stable_mosaic.version = 11 : i64} {
  func.func @_gemm_tapmax_bias_kernel(%arg0: i32, %arg1: i32, %arg2: memref<4x32x1664xbf16, #tpu.memory_space<vmem>>, %arg3: memref<1664x128xbf16, #tpu.memory_space<vmem>>, %arg4: memref<1x128xf32, #tpu.memory_space<vmem>>, %arg5: memref<32x128xbf16, #tpu.memory_space<vmem>>) attributes {dimension_semantics = [#tpu.dimension_semantics<parallel>, #tpu.dimension_semantics<parallel>], iteration_bounds = array<i64: 1, 1>, scalar_prefetch = 0 : i64, scratch_operands = 0 : i64, tpu.core_type = #tpu.core_type<tc>, window_params = [{transform_indices = @transform_0, window_bounds = array<i64: 4, 32, 1664>}, {transform_indices = @transform_1, window_bounds = array<i64: 1664, 128>}, {transform_indices = @transform_2, window_bounds = array<i64: 1, 128>}, {transform_indices = @transform_3, window_bounds = array<i64: 32, 128>}]} {
    %c0 = arith.constant 0 : index
    %c0_0 = arith.constant 0 : index
    %c0_1 = arith.constant 0 : index
    %0 = vector.load %arg2[%c0, %c0_0, %c0_1] : memref<4x32x1664xbf16, #tpu.memory_space<vmem>>, vector<4x32x1664xbf16>
    %1 = vector.shape_cast %0 : vector<4x32x1664xbf16> to vector<128x1664xbf16>
    %c0_2 = arith.constant 0 : index
    %c0_3 = arith.constant 0 : index
    %2 = vector.load %arg3[%c0_2, %c0_3] : memref<1664x128xbf16, #tpu.memory_space<vmem>>, vector<1664x128xbf16>
    %cst = arith.constant dense<0.000000e+00> : vector<128x128xf32>
    %3 = tpu.matmul %1, %2, %cst {dimension_numbers = #tpu.dot_dimension_numbers<[1], [0], [0], [1], [0, 0, 1, 1], [], []>} : vector<128x1664xbf16>, vector<1664x128xbf16>, vector<128x128xf32> -> vector<128x128xf32>
    %4 = vector.extract_strided_slice %3 {offsets = [0, 0], sizes = [32, 128], strides = [1, 1]} : vector<128x128xf32> to vector<32x128xf32>
    %5 = vector.extract_strided_slice %3 {offsets = [32, 0], sizes = [32, 128], strides = [1, 1]} : vector<128x128xf32> to vector<32x128xf32>
    %6 = arith.maximumf %4, %5 : vector<32x128xf32>
    %7 = vector.extract_strided_slice %3 {offsets = [64, 0], sizes = [32, 128], strides = [1, 1]} : vector<128x128xf32> to vector<32x128xf32>
    %8 = arith.maximumf %6, %7 : vector<32x128xf32>
    %9 = vector.extract_strided_slice %3 {offsets = [96, 0], sizes = [32, 128], strides = [1, 1]} : vector<128x128xf32> to vector<32x128xf32>
    %10 = arith.maximumf %8, %9 : vector<32x128xf32>
    %c0_4 = arith.constant 0 : index
    %c0_5 = arith.constant 0 : index
    %11 = vector.load %arg4[%c0_4, %c0_5] : memref<1x128xf32, #tpu.memory_space<vmem>>, vector<1x128xf32>
    %12 = vector.broadcast %11 : vector<1x128xf32> to vector<32x128xf32>
    %13 = arith.addf %10, %12 : vector<32x128xf32>
    %cst_6 = arith.constant 0.000000e+00 : f32
    %14 = vector.broadcast %cst_6 : f32 to vector<32x128xf32>
    %15 = arith.maximumf %13, %14 : vector<32x128xf32>
    %16 = arith.truncf %15 : vector<32x128xf32> to vector<32x128xbf16>
    %c0_7 = arith.constant 0 : index
    %c0_8 = arith.constant 0 : index
    %17 = vector.load %arg5[%c0_7, %c0_8] : memref<32x128xbf16, #tpu.memory_space<vmem>>, vector<32x128xbf16>
    tpu.vector_store %arg5[%c0_7, %c0_8], %16 {strides = array<i32>} : memref<32x128xbf16, #tpu.memory_space<vmem>>, vector<32x128xbf16>,
    return
  }
  func.func @transform_0(%arg0: i32, %arg1: i32) -> (i32, i32, i32) {
    %c0_i32 = arith.constant 0 : i32
    %c0_i32_0 = arith.constant 0 : i32
    %c0_i32_1 = arith.constant 0 : i32
    return %c0_i32, %arg0, %c0_i32_0 : i32, i32, i32
  }
  func.func @transform_1(%arg0: i32, %arg1: i32) -> (i32, i32) {
    %c0_i32 = arith.constant 0 : i32
    %c0_i32_0 = arith.constant 0 : i32
    return %c0_i32, %arg1 : i32, i32
  }
  func.func @transform_2(%arg0: i32, %arg1: i32) -> (i32, i32) {
    %c0_i32 = arith.constant 0 : i32
    %c0_i32_0 = arith.constant 0 : i32
    return %c0_i32, %arg1 : i32, i32
  }
  func.func @transform_3(%arg0: i32, %arg1: i32) -> (i32, i32) {
    %c0_i32 = arith.constant 0 : i32
    return %arg0, %arg1 : i32, i32
  }
}

module attributes {stable_mosaic.version = 11 : i64} {
  func.func @_gemm_tapmax_bias_kernel(%arg0: i32, %arg1: i32, %arg2: memref<4x16x1152xbf16, #tpu.memory_space<vmem>>, %arg3: memref<1152x128xbf16, #tpu.memory_space<vmem>>, %arg4: memref<1x128xf32, #tpu.memory_space<vmem>>, %arg5: memref<16x128xbf16, #tpu.memory_space<vmem>>) attributes {dimension_semantics = [#tpu.dimension_semantics<parallel>, #tpu.dimension_semantics<parallel>], iteration_bounds = array<i64: 1, 2>, scalar_prefetch = 0 : i64, scratch_operands = 0 : i64, tpu.core_type = #tpu.core_type<tc>, window_params = [{transform_indices = @transform_0, window_bounds = array<i64: 4, 16, 1152>}, {transform_indices = @transform_1, window_bounds = array<i64: 1152, 128>}, {transform_indices = @transform_2, window_bounds = array<i64: 1, 128>}, {transform_indices = @transform_3, window_bounds = array<i64: 16, 128>}]} {
    %c0 = arith.constant 0 : index
    %c0_0 = arith.constant 0 : index
    %c0_1 = arith.constant 0 : index
    %0 = vector.load %arg2[%c0, %c0_0, %c0_1] : memref<4x16x1152xbf16, #tpu.memory_space<vmem>>, vector<4x16x1152xbf16>
    %1 = vector.shape_cast %0 : vector<4x16x1152xbf16> to vector<64x1152xbf16>
    %c0_2 = arith.constant 0 : index
    %c0_3 = arith.constant 0 : index
    %2 = vector.load %arg3[%c0_2, %c0_3] : memref<1152x128xbf16, #tpu.memory_space<vmem>>, vector<1152x128xbf16>
    %cst = arith.constant dense<0.000000e+00> : vector<64x128xf32>
    %3 = tpu.matmul %1, %2, %cst {dimension_numbers = #tpu.dot_dimension_numbers<[1], [0], [0], [1], [0, 0, 1, 1], [], []>} : vector<64x1152xbf16>, vector<1152x128xbf16>, vector<64x128xf32> -> vector<64x128xf32>
    %4 = vector.extract_strided_slice %3 {offsets = [0, 0], sizes = [16, 128], strides = [1, 1]} : vector<64x128xf32> to vector<16x128xf32>
    %5 = vector.extract_strided_slice %3 {offsets = [16, 0], sizes = [16, 128], strides = [1, 1]} : vector<64x128xf32> to vector<16x128xf32>
    %6 = arith.maximumf %4, %5 : vector<16x128xf32>
    %7 = vector.extract_strided_slice %3 {offsets = [32, 0], sizes = [16, 128], strides = [1, 1]} : vector<64x128xf32> to vector<16x128xf32>
    %8 = arith.maximumf %6, %7 : vector<16x128xf32>
    %9 = vector.extract_strided_slice %3 {offsets = [48, 0], sizes = [16, 128], strides = [1, 1]} : vector<64x128xf32> to vector<16x128xf32>
    %10 = arith.maximumf %8, %9 : vector<16x128xf32>
    %c0_4 = arith.constant 0 : index
    %c0_5 = arith.constant 0 : index
    %11 = vector.load %arg4[%c0_4, %c0_5] : memref<1x128xf32, #tpu.memory_space<vmem>>, vector<1x128xf32>
    %12 = vector.broadcast %11 : vector<1x128xf32> to vector<16x128xf32>
    %13 = arith.addf %10, %12 : vector<16x128xf32>
    %cst_6 = arith.constant 0.000000e+00 : f32
    %14 = vector.broadcast %cst_6 : f32 to vector<16x128xf32>
    %15 = arith.maximumf %13, %14 : vector<16x128xf32>
    %16 = arith.truncf %15 : vector<16x128xf32> to vector<16x128xbf16>
    %c0_7 = arith.constant 0 : index
    %c0_8 = arith.constant 0 : index
    %17 = vector.load %arg5[%c0_7, %c0_8] : memref<16x128xbf16, #tpu.memory_space<vmem>>, vector<16x128xbf16>
    tpu.vector_store %arg5[%c0_7, %c0_8], %16 {strides = array<i32>} : memref<16x128xbf16, #tpu.memory_space<vmem>>, vector<16x128xbf16>,
    return
  }
  func.func @transform_0(%arg0: i32, %arg1: i32) -> (i32, i32, i32) {
    %c0_i32 = arith.constant 0 : i32
    %c0_i32_0 = arith.constant 0 : i32
    %c0_i32_1 = arith.constant 0 : i32
    return %c0_i32, %arg0, %c0_i32_0 : i32, i32, i32
  }
  func.func @transform_1(%arg0: i32, %arg1: i32) -> (i32, i32) {
    %c0_i32 = arith.constant 0 : i32
    %c0_i32_0 = arith.constant 0 : i32
    return %c0_i32, %arg1 : i32, i32
  }
  func.func @transform_2(%arg0: i32, %arg1: i32) -> (i32, i32) {
    %c0_i32 = arith.constant 0 : i32
    %c0_i32_0 = arith.constant 0 : i32
    return %c0_i32, %arg1 : i32, i32
  }
  func.func @transform_3(%arg0: i32, %arg1: i32) -> (i32, i32) {
    %c0_i32 = arith.constant 0 : i32
    return %arg0, %arg1 : i32, i32
  }
}

module attributes {stable_mosaic.version = 11 : i64} {
  func.func @_gemm_tapmax_bias_kernel(%arg0: i32, %arg1: i32, %arg2: memref<1x32x1024xbf16, #tpu.memory_space<vmem>>, %arg3: memref<1024x128xbf16, #tpu.memory_space<vmem>>, %arg4: memref<1x128xf32, #tpu.memory_space<vmem>>, %arg5: memref<32x128xbf16, #tpu.memory_space<vmem>>) attributes {dimension_semantics = [#tpu.dimension_semantics<parallel>, #tpu.dimension_semantics<parallel>], iteration_bounds = array<i64: 1, 4>, scalar_prefetch = 0 : i64, scratch_operands = 0 : i64, tpu.core_type = #tpu.core_type<tc>, window_params = [{transform_indices = @transform_0, window_bounds = array<i64: 1, 32, 1024>}, {transform_indices = @transform_1, window_bounds = array<i64: 1024, 128>}, {transform_indices = @transform_2, window_bounds = array<i64: 1, 128>}, {transform_indices = @transform_3, window_bounds = array<i64: 32, 128>}]} {
    %c0 = arith.constant 0 : index
    %c0_0 = arith.constant 0 : index
    %c0_1 = arith.constant 0 : index
    %0 = vector.load %arg2[%c0, %c0_0, %c0_1] : memref<1x32x1024xbf16, #tpu.memory_space<vmem>>, vector<1x32x1024xbf16>
    %1 = vector.shape_cast %0 : vector<1x32x1024xbf16> to vector<32x1024xbf16>
    %c0_2 = arith.constant 0 : index
    %c0_3 = arith.constant 0 : index
    %2 = vector.load %arg3[%c0_2, %c0_3] : memref<1024x128xbf16, #tpu.memory_space<vmem>>, vector<1024x128xbf16>
    %cst = arith.constant dense<0.000000e+00> : vector<32x128xf32>
    %3 = tpu.matmul %1, %2, %cst {dimension_numbers = #tpu.dot_dimension_numbers<[1], [0], [0], [1], [0, 0, 1, 1], [], []>} : vector<32x1024xbf16>, vector<1024x128xbf16>, vector<32x128xf32> -> vector<32x128xf32>
    %c0_4 = arith.constant 0 : index
    %c0_5 = arith.constant 0 : index
    %4 = vector.load %arg4[%c0_4, %c0_5] : memref<1x128xf32, #tpu.memory_space<vmem>>, vector<1x128xf32>
    %5 = vector.broadcast %4 : vector<1x128xf32> to vector<32x128xf32>
    %6 = arith.addf %3, %5 : vector<32x128xf32>
    %cst_6 = arith.constant 0.000000e+00 : f32
    %7 = vector.broadcast %cst_6 : f32 to vector<32x128xf32>
    %8 = arith.maximumf %6, %7 : vector<32x128xf32>
    %9 = arith.truncf %8 : vector<32x128xf32> to vector<32x128xbf16>
    %c0_7 = arith.constant 0 : index
    %c0_8 = arith.constant 0 : index
    %10 = vector.load %arg5[%c0_7, %c0_8] : memref<32x128xbf16, #tpu.memory_space<vmem>>, vector<32x128xbf16>
    tpu.vector_store %arg5[%c0_7, %c0_8], %9 {strides = array<i32>} : memref<32x128xbf16, #tpu.memory_space<vmem>>, vector<32x128xbf16>,
    return
  }
  func.func @transform_0(%arg0: i32, %arg1: i32) -> (i32, i32, i32) {
    %c0_i32 = arith.constant 0 : i32
    %c0_i32_0 = arith.constant 0 : i32
    %c0_i32_1 = arith.constant 0 : i32
    return %c0_i32, %arg0, %c0_i32_0 : i32, i32, i32
  }
  func.func @transform_1(%arg0: i32, %arg1: i32) -> (i32, i32) {
    %c0_i32 = arith.constant 0 : i32
    %c0_i32_0 = arith.constant 0 : i32
    return %c0_i32, %arg1 : i32, i32
  }
  func.func @transform_2(%arg0: i32, %arg1: i32) -> (i32, i32) {
    %c0_i32 = arith.constant 0 : i32
    %c0_i32_0 = arith.constant 0 : i32
    return %c0_i32, %arg1 : i32, i32
  }
  func.func @transform_3(%arg0: i32, %arg1: i32) -> (i32, i32) {
    %c0_i32 = arith.constant 0 : i32
    return %arg0, %arg1 : i32, i32
  }
}

module attributes {stable_mosaic.version = 11 : i64} {
  func.func @_gemm_tapmax_bias_kernel(%arg0: i32, %arg1: i32, %arg2: memref<1x16x4608xbf16, #tpu.memory_space<vmem>>, %arg3: memref<4608x128xbf16, #tpu.memory_space<vmem>>, %arg4: memref<1x128xf32, #tpu.memory_space<vmem>>, %arg5: memref<16x128xf32, #tpu.memory_space<vmem>>) attributes {dimension_semantics = [#tpu.dimension_semantics<parallel>, #tpu.dimension_semantics<parallel>], iteration_bounds = array<i64: 1, 1>, scalar_prefetch = 0 : i64, scratch_operands = 0 : i64, tpu.core_type = #tpu.core_type<tc>, window_params = [{transform_indices = @transform_0, window_bounds = array<i64: 1, 16, 4608>}, {transform_indices = @transform_1, window_bounds = array<i64: 4608, 128>}, {transform_indices = @transform_2, window_bounds = array<i64: 1, 128>}, {transform_indices = @transform_3, window_bounds = array<i64: 16, 128>}]} {
    %c0 = arith.constant 0 : index
    %c0_0 = arith.constant 0 : index
    %c0_1 = arith.constant 0 : index
    %0 = vector.load %arg2[%c0, %c0_0, %c0_1] : memref<1x16x4608xbf16, #tpu.memory_space<vmem>>, vector<1x16x4608xbf16>
    %1 = vector.shape_cast %0 : vector<1x16x4608xbf16> to vector<16x4608xbf16>
    %c0_2 = arith.constant 0 : index
    %c0_3 = arith.constant 0 : index
    %2 = vector.load %arg3[%c0_2, %c0_3] : memref<4608x128xbf16, #tpu.memory_space<vmem>>, vector<4608x128xbf16>
    %cst = arith.constant dense<0.000000e+00> : vector<16x128xf32>
    %3 = tpu.matmul %1, %2, %cst {dimension_numbers = #tpu.dot_dimension_numbers<[1], [0], [0], [1], [0, 0, 1, 1], [], []>} : vector<16x4608xbf16>, vector<4608x128xbf16>, vector<16x128xf32> -> vector<16x128xf32>
    %c0_4 = arith.constant 0 : index
    %c0_5 = arith.constant 0 : index
    %4 = vector.load %arg4[%c0_4, %c0_5] : memref<1x128xf32, #tpu.memory_space<vmem>>, vector<1x128xf32>
    %5 = vector.broadcast %4 : vector<1x128xf32> to vector<16x128xf32>
    %6 = arith.addf %3, %5 : vector<16x128xf32>
    %c0_6 = arith.constant 0 : index
    %c0_7 = arith.constant 0 : index
    %7 = vector.load %arg5[%c0_6, %c0_7] : memref<16x128xf32, #tpu.memory_space<vmem>>, vector<16x128xf32>
    tpu.vector_store %arg5[%c0_6, %c0_7], %6 {strides = array<i32>} : memref<16x128xf32, #tpu.memory_space<vmem>>, vector<16x128xf32>,
    return
  }
  func.func @transform_0(%arg0: i32, %arg1: i32) -> (i32, i32, i32) {
    %c0_i32 = arith.constant 0 : i32
    %c0_i32_0 = arith.constant 0 : i32
    %c0_i32_1 = arith.constant 0 : i32
    return %c0_i32, %arg0, %c0_i32_0 : i32, i32, i32
  }
  func.func @transform_1(%arg0: i32, %arg1: i32) -> (i32, i32) {
    %c0_i32 = arith.constant 0 : i32
    %c0_i32_0 = arith.constant 0 : i32
    return %c0_i32, %arg1 : i32, i32
  }
  func.func @transform_2(%arg0: i32, %arg1: i32) -> (i32, i32) {
    %c0_i32 = arith.constant 0 : i32
    %c0_i32_0 = arith.constant 0 : i32
    return %c0_i32, %arg1 : i32, i32
  }
  func.func @transform_3(%arg0: i32, %arg1: i32) -> (i32, i32) {
    %c0_i32 = arith.constant 0 : i32
    return %arg0, %arg1 : i32, i32
  }
}

</mosaic_0001>

<llo_original>
// kernel: cnn_forward.5
$region0: #{cnn_forward.5}
  #allocation0 [shape = 'u32[]', space=smem, size = 0x4, offset = 0x4, fixed_abs, tag = 'smem constant byte address 0x4 - core index']
  #allocation1 [shape = 'u32[144,128]{1,0:T(1,128)}', space=vmem, size = 0x12000, scoped, tag = 'internal scratch']
  %s0 = inlined_call_operand.vmem [shape: bf16[4,128,256], index: 0, kind: input, shape index: {}]
  %s1 = inlined_call_operand.vmem [shape: bf16[256,64], index: 1, kind: input, shape index: {}]
  %s2 = inlined_call_operand.vmem [shape: f32[1,64], index: 2, kind: input, shape index: {}]
  %s3 = inlined_call_operand.vmem [shape: bf16[128,64], index: 3, kind: output, shape index: {}]
  %s4 = sld [smem:[#allocation0]]
  $region22: #{cnn_forward.5} parent=0
    _
  %s6 = ssub.s32 1, %s4
  %s7 = scalar_select 0, %s6, %s4
  // Predicated region
  $region2: #{cnn_forward.5} parent=0 // pred_check
    _
  $region3: #{cnn_forward.5} parent=0 // pred_check_branch
    %9 = sbr.rel (0) target = $region5
  $region4: #{cnn_forward.5} parent=0 // pred_region
    _
  $region5: #{cnn_forward.5} parent=0 // pred_fallthru
    _
  // Predicated region
  $region6: #{cnn_forward.5} parent=0 // pred_check
    _
  $region7: #{cnn_forward.5} parent=0 // pred_check_branch
    %11 = sbr.rel (0) target = $region9
  $region8: #{cnn_forward.5} parent=0 // pred_region
    _
  $region9: #{cnn_forward.5} parent=0 // pred_fallthru
    _
  // Predicated region
  $region10: #{cnn_forward.5} parent=0 // pred_check
    _
  $region11: #{cnn_forward.5} parent=0 // pred_check_branch
    %13 = sbr.rel (0) target = $region13
  $region12: #{cnn_forward.5} parent=0 // pred_region
    _
  $region13: #{cnn_forward.5} parent=0 // pred_fallthru
    _
  %v15 = vld [vmem:[%s0] sm:$0xff]
  %v16 = vld [vmem:[%s0 + $0x8] sm:$0xff]
  %v17 = vld [vmem:[%s0 + $0x10] sm:$0xff]
  %v18 = vld [vmem:[%s0 + $0x18] sm:$0xff]
  %v19 = vld [vmem:[%s0 + $0x20] sm:$0xff]
  %v20 = vld [vmem:[%s0 + $0x28] sm:$0xff]
  %v21 = vld [vmem:[%s0 + $0x30] sm:$0xff]
  %v22 = vld [vmem:[%s0 + $0x38] sm:$0xff]
  %v23 = vld [vmem:[%s0 + $0x40] sm:$0xff]
  %v24 = vld [vmem:[%s0 + $0x48] sm:$0xff]
  %v25 = vld [vmem:[%s0 + $0x50] sm:$0xff]
  %v26 = vld [vmem:[%s0 + $0x58] sm:$0xff]
  %v27 = vld [vmem:[%s0 + $0x60] sm:$0xff]
  %v28 = vld [vmem:[%s0 + $0x68] sm:$0xff]
  %v29 = vld [vmem:[%s0 + $0x70] sm:$0xff]
  %v30 = vld [vmem:[%s0 + $0x78] sm:$0xff]
  %v31 = vld [vmem:[%s0 + $0x80] sm:$0xff]
  %v32 = vld [vmem:[%s0 + $0x88] sm:$0xff]
  %v33 = vld [vmem:[%s0 + $0x90] sm:$0xff]
  %v34 = vld [vmem:[%s0 + $0x98] sm:$0xff]
  %v35 = vld [vmem:[%s0 + $0xa0] sm:$0xff]
  %v36 = vld [vmem:[%s0 + $0xa8] sm:$0xff]
  %v37 = vld [vmem:[%s0 + $0xb0] sm:$0xff]
  %v38 = vld [vmem:[%s0 + $0xb8] sm:$0xff]
  %v39 = vld [vmem:[%s0 + $0xc0] sm:$0xff]
  %v40 = vld [vmem:[%s0 + $0xc8] sm:$0xff]
  %v41 = vld [vmem:[%s0 + $0xd0] sm:$0xff]
  %v42 = vld [vmem:[%s0 + $0xd8] sm:$0xff]
  %v43 = vld [vmem:[%s0 + $0xe0] sm:$0xff]
  %v44 = vld [vmem:[%s0 + $0xe8] sm:$0xff]
  %v45 = vld [vmem:[%s0 + $0xf0] sm:$0xff]
  %v46 = vld [vmem:[%s0 + $0xf8] sm:$0xff]
  %v47 = vld [vmem:[%s0 + $0x100] sm:$0xff]
  %v48 = vld [vmem:[%s0 + $0x108] sm:$0xff]
  %v49 = vld [vmem:[%s0 + $0x110] sm:$0xff]
  %v50 = vld [vmem:[%s0 + $0x118] sm:$0xff]
  %v51 = vld [vmem:[%s0 + $0x120] sm:$0xff]
  %v52 = vld [vmem:[%s0 + $0x128] sm:$0xff]
  %v53 = vld [vmem:[%s0 + $0x130] sm:$0xff]
  %v54 = vld [vmem:[%s0 + $0x138] sm:$0xff]
  %v55 = vld [vmem:[%s0 + $0x140] sm:$0xff]
  %v56 = vld [vmem:[%s0 + $0x148] sm:$0xff]
  %v57 = vld [vmem:[%s0 + $0x150] sm:$0xff]
  %v58 = vld [vmem:[%s0 + $0x158] sm:$0xff]
  %v59 = vld [vmem:[%s0 + $0x160] sm:$0xff]
  %v60 = vld [vmem:[%s0 + $0x168] sm:$0xff]
  %v61 = vld [vmem:[%s0 + $0x170] sm:$0xff]
  %v62 = vld [vmem:[%s0 + $0x178] sm:$0xff]
  %v63 = vld [vmem:[%s0 + $0x180] sm:$0xff]
  %v64 = vld [vmem:[%s0 + $0x188] sm:$0xff]
  %v65 = vld [vmem:[%s0 + $0x190] sm:$0xff]
  %v66 = vld [vmem:[%s0 + $0x198] sm:$0xff]
  %v67 = vld [vmem:[%s0 + $0x1a0] sm:$0xff]
  %v68 = vld [vmem:[%s0 + $0x1a8] sm:$0xff]
  %v69 = vld [vmem:[%s0 + $0x1b0] sm:$0xff]
  %v70 = vld [vmem:[%s0 + $0x1b8] sm:$0xff]
  %v71 = vld [vmem:[%s0 + $0x1c0] sm:$0xff]
  %v72 = vld [vmem:[%s0 + $0x1c8] sm:$0xff]
  %v73 = vld [vmem:[%s0 + $0x1d0] sm:$0xff]
  %v74 = vld [vmem:[%s0 + $0x1d8] sm:$0xff]
  %v75 = vld [vmem:[%s0 + $0x1e0] sm:$0xff]
  %v76 = vld [vmem:[%s0 + $0x1e8] sm:$0xff]
  %v77 = vld [vmem:[%s0 + $0x1f0] sm:$0xff]
  %v78 = vld [vmem:[%s0 + $0x1f8] sm:$0xff]
  %v79 = vld [vmem:[%s1] sm:$0xf]
  %v80 = vld [vmem:[%s1 + $0x4] sm:$0xf]
  %v81 = vld [vmem:[%s1 + $0x8] sm:$0xf]
  %v82 = vld [vmem:[%s1 + $0xc] sm:$0xf]
  %v83 = vld [vmem:[%s1 + $0x10] sm:$0xf]
  %v84 = vld [vmem:[%s1 + $0x14] sm:$0xf]
  %v85 = vld [vmem:[%s1 + $0x18] sm:$0xf]
  %v86 = vld [vmem:[%s1 + $0x1c] sm:$0xf]
  %v87 = vld [vmem:[%s1 + $0x20] sm:$0xf]
  %v88 = vld [vmem:[%s1 + $0x24] sm:$0xf]
  %v89 = vld [vmem:[%s1 + $0x28] sm:$0xf]
  %v90 = vld [vmem:[%s1 + $0x2c] sm:$0xf]
  %v91 = vld [vmem:[%s1 + $0x30] sm:$0xf]
  %v92 = vld [vmem:[%s1 + $0x34] sm:$0xf]
  %v93 = vld [vmem:[%s1 + $0x38] sm:$0xf]
  %v94 = vld [vmem:[%s1 + $0x3c] sm:$0xf]
  %v95 = vld [vmem:[%s1 + $0x40] sm:$0xf]
  %v96 = vld [vmem:[%s1 + $0x44] sm:$0xf]
  %v97 = vld [vmem:[%s1 + $0x48] sm:$0xf]
  %v98 = vld [vmem:[%s1 + $0x4c] sm:$0xf]
  %v99 = vld [vmem:[%s1 + $0x50] sm:$0xf]
  %v100 = vld [vmem:[%s1 + $0x54] sm:$0xf]
  %v101 = vld [vmem:[%s1 + $0x58] sm:$0xf]
  %v102 = vld [vmem:[%s1 + $0x5c] sm:$0xf]
  %v103 = vld [vmem:[%s1 + $0x60] sm:$0xf]
  %v104 = vld [vmem:[%s1 + $0x64] sm:$0xf]
  %v105 = vld [vmem:[%s1 + $0x68] sm:$0xf]
  %v106 = vld [vmem:[%s1 + $0x6c] sm:$0xf]
  %v107 = vld [vmem:[%s1 + $0x70] sm:$0xf]
  %v108 = vld [vmem:[%s1 + $0x74] sm:$0xf]
  %v109 = vld [vmem:[%s1 + $0x78] sm:$0xf]
  %v110 = vld [vmem:[%s1 + $0x7c] sm:$0xf]
  %v175 = vunpack.c.l.b16 %v15
  %v176 = vunpack.c.h.b16 %v15
  %v177 = vunpack.c.l.b16 %v16
  %v178 = vunpack.c.h.b16 %v16
  %v179 = vunpack.c.l.b16 %v17
  %v180 = vunpack.c.h.b16 %v17
  %v181 = vunpack.c.l.b16 %v18
  %v182 = vunpack.c.h.b16 %v18
  %v183 = vunpack.c.l.b16 %v19
  %v184 = vunpack.c.h.b16 %v19
  %v185 = vunpack.c.l.b16 %v20
  %v186 = vunpack.c.h.b16 %v20
  %v187 = vunpack.c.l.b16 %v21
  %v188 = vunpack.c.h.b16 %v21
  %v189 = vunpack.c.l.b16 %v22
  %v190 = vunpack.c.h.b16 %v22
  %v191 = vunpack.c.l.b16 %v23
  %v192 = vunpack.c.h.b16 %v23
  %v193 = vunpack.c.l.b16 %v24
  %v194 = vunpack.c.h.b16 %v24
  %v195 = vunpack.c.l.b16 %v25
  %v196 = vunpack.c.h.b16 %v25
  %v197 = vunpack.c.l.b16 %v26
  %v198 = vunpack.c.h.b16 %v26
  %v199 = vunpack.c.l.b16 %v27
  %v200 = vunpack.c.h.b16 %v27
  %v201 = vunpack.c.l.b16 %v28
  %v202 = vunpack.c.h.b16 %v28
  %v203 = vunpack.c.l.b16 %v29
  %v204 = vunpack.c.h.b16 %v29
  %v205 = vunpack.c.l.b16 %v30
  %v206 = vunpack.c.h.b16 %v30
  %v207 = vunpack.c.l.b16 %v31
  %v208 = vunpack.c.h.b16 %v31
  %v209 = vunpack.c.l.b16 %v32
  %v210 = vunpack.c.h.b16 %v32
  %v211 = vunpack.c.l.b16 %v33
  %v212 = vunpack.c.h.b16 %v33
  %v213 = vunpack.c.l.b16 %v34
  %v214 = vunpack.c.h.b16 %v34
  %v215 = vunpack.c.l.b16 %v35
  %v216 = vunpack.c.h.b16 %v35
  %v217 = vunpack.c.l.b16 %v36
  %v218 = vunpack.c.h.b16 %v36
  %v219 = vunpack.c.l.b16 %v37
  %v220 = vunpack.c.h.b16 %v37
  %v221 = vunpack.c.l.b16 %v38
  %v222 = vunpack.c.h.b16 %v38
  %v223 = vunpack.c.l.b16 %v39
  %v224 = vunpack.c.h.b16 %v39
  %v225 = vunpack.c.l.b16 %v40
  %v226 = vunpack.c.h.b16 %v40
  %v227 = vunpack.c.l.b16 %v41
  %v228 = vunpack.c.h.b16 %v41
  %v229 = vunpack.c.l.b16 %v42
  %v230 = vunpack.c.h.b16 %v42
  %v231 = vunpack.c.l.b16 %v43
  %v232 = vunpack.c.h.b16 %v43
  %v233 = vunpack.c.l.b16 %v44
  %v234 = vunpack.c.h.b16 %v44
  %v235 = vunpack.c.l.b16 %v45
  %v236 = vunpack.c.h.b16 %v45
  %v237 = vunpack.c.l.b16 %v46
  %v238 = vunpack.c.h.b16 %v46
  %v239 = vunpack.c.l.b16 %v47
  %v240 = vunpack.c.h.b16 %v47
  %v241 = vunpack.c.l.b16 %v48
  %v242 = vunpack.c.h.b16 %v48
  %v243 = vunpack.c.l.b16 %v49
  %v244 = vunpack.c.h.b16 %v49
  %v245 = vunpack.c.l.b16 %v50
  %v246 = vunpack.c.h.b16 %v50
  %v247 = vunpack.c.l.b16 %v51
  %v248 = vunpack.c.h.b16 %v51
  %v249 = vunpack.c.l.b16 %v52
  %v250 = vunpack.c.h.b16 %v52
  %v251 = vunpack.c.l.b16 %v53
  %v252 = vunpack.c.h.b16 %v53
  %v253 = vunpack.c.l.b16 %v54
  %v254 = vunpack.c.h.b16 %v54
  %v255 = vunpack.c.l.b16 %v55
  %v256 = vunpack.c.h.b16 %v55
  %v257 = vunpack.c.l.b16 %v56
  %v258 = vunpack.c.h.b16 %v56
  %v259 = vunpack.c.l.b16 %v57
  %v260 = vunpack.c.h.b16 %v57
  %v261 = vunpack.c.l.b16 %v58
  %v262 = vunpack.c.h.b16 %v58
  %v263 = vunpack.c.l.b16 %v59
  %v264 = vunpack.c.h.b16 %v59
  %v265 = vunpack.c.l.b16 %v60
  %v266 = vunpack.c.h.b16 %v60
  %v267 = vunpack.c.l.b16 %v61
  %v268 = vunpack.c.h.b16 %v61
  %v269 = vunpack.c.l.b16 %v62
  %v270 = vunpack.c.h.b16 %v62
  %v271 = vunpack.c.l.b16 %v63
  %v272 = vunpack.c.h.b16 %v63
  %v273 = vunpack.c.l.b16 %v64
  %v274 = vunpack.c.h.b16 %v64
  %v275 = vunpack.c.l.b16 %v65
  %v276 = vunpack.c.h.b16 %v65
  %v277 = vunpack.c.l.b16 %v66
  %v278 = vunpack.c.h.b16 %v66
  %v279 = vunpack.c.l.b16 %v67
  %v280 = vunpack.c.h.b16 %v67
  %v281 = vunpack.c.l.b16 %v68
  %v282 = vunpack.c.h.b16 %v68
  %v283 = vunpack.c.l.b16 %v69
  %v284 = vunpack.c.h.b16 %v69
  %v285 = vunpack.c.l.b16 %v70
  %v286 = vunpack.c.h.b16 %v70
  %v287 = vunpack.c.l.b16 %v71
  %v288 = vunpack.c.h.b16 %v71
  %v289 = vunpack.c.l.b16 %v72
  %v290 = vunpack.c.h.b16 %v72
  %v291 = vunpack.c.l.b16 %v73
  %v292 = vunpack.c.h.b16 %v73
  %v293 = vunpack.c.l.b16 %v74
  %v294 = vunpack.c.h.b16 %v74
  %v295 = vunpack.c.l.b16 %v75
  %v296 = vunpack.c.h.b16 %v75
  %v297 = vunpack.c.l.b16 %v76
  %v298 = vunpack.c.h.b16 %v76
  %v299 = vunpack.c.l.b16 %v77
  %v300 = vunpack.c.h.b16 %v77
  %v301 = vunpack.c.l.b16 %v78
  %v302 = vunpack.c.h.b16 %v78
  %v303 = vpack.c.b16 %v177, %v175
  %v304 = vpack.c.b16 %v178, %v176
  %v305 = vpack.c.b16 %v181, %v179
  %v306 = vpack.c.b16 %v182, %v180
  %v307 = vpack.c.b16 %v185, %v183
  %v308 = vpack.c.b16 %v186, %v184
  %v309 = vpack.c.b16 %v189, %v187
  %v310 = vpack.c.b16 %v190, %v188
  %v311 = vpack.c.b16 %v193, %v191
  %v312 = vpack.c.b16 %v194, %v192
  %v313 = vpack.c.b16 %v197, %v195
  %v314 = vpack.c.b16 %v198, %v196
  %v315 = vpack.c.b16 %v201, %v199
  %v316 = vpack.c.b16 %v202, %v200
  %v317 = vpack.c.b16 %v205, %v203
  %v318 = vpack.c.b16 %v206, %v204
  %v319 = vpack.c.b16 %v209, %v207
  %v320 = vpack.c.b16 %v210, %v208
  %v321 = vpack.c.b16 %v213, %v211
  %v322 = vpack.c.b16 %v214, %v212
  %v323 = vpack.c.b16 %v217, %v215
  %v324 = vpack.c.b16 %v218, %v216
  %v325 = vpack.c.b16 %v221, %v219
  %v326 = vpack.c.b16 %v222, %v220
  %v327 = vpack.c.b16 %v225, %v223
  %v328 = vpack.c.b16 %v226, %v224
  %v329 = vpack.c.b16 %v229, %v227
  %v330 = vpack.c.b16 %v230, %v228
  %v331 = vpack.c.b16 %v233, %v231
  %v332 = vpack.c.b16 %v234, %v232
  %v333 = vpack.c.b16 %v237, %v235
  %v334 = vpack.c.b16 %v238, %v236
  %v335 = vpack.c.b16 %v241, %v239
  %v336 = vpack.c.b16 %v242, %v240
  %v337 = vpack.c.b16 %v245, %v243
  %v338 = vpack.c.b16 %v246, %v244
  %v339 = vpack.c.b16 %v249, %v247
  %v340 = vpack.c.b16 %v250, %v248
  %v341 = vpack.c.b16 %v253, %v251
  %v342 = vpack.c.b16 %v254, %v252
  %v343 = vpack.c.b16 %v257, %v255
  %v344 = vpack.c.b16 %v258, %v256
  %v345 = vpack.c.b16 %v261, %v259
  %v346 = vpack.c.b16 %v262, %v260
  %v347 = vpack.c.b16 %v265, %v263
  %v348 = vpack.c.b16 %v266, %v264
  %v349 = vpack.c.b16 %v269, %v267
  %v350 = vpack.c.b16 %v270, %v268
  %v351 = vpack.c.b16 %v273, %v271
  %v352 = vpack.c.b16 %v274, %v272
  %v353 = vpack.c.b16 %v277, %v275
  %v354 = vpack.c.b16 %v278, %v276
  %v355 = vpack.c.b16 %v281, %v279
  %v356 = vpack.c.b16 %v282, %v280
  %v357 = vpack.c.b16 %v285, %v283
  %v358 = vpack.c.b16 %v286, %v284
  %v359 = vpack.c.b16 %v289, %v287
  %v360 = vpack.c.b16 %v290, %v288
  %v361 = vpack.c.b16 %v293, %v291
  %v362 = vpack.c.b16 %v294, %v292
  %v363 = vpack.c.b16 %v297, %v295
  %v364 = vpack.c.b16 %v298, %v296
  %v365 = vpack.c.b16 %v301, %v299
  %v366 = vpack.c.b16 %v302, %v300
  %v463 = vunpack.c.l.b16 %v79
  %v464 = vunpack.c.l.b16 %v80
  %v465 = vunpack.c.l.b16 %v81
  %v466 = vunpack.c.l.b16 %v82
  %v467 = vunpack.c.l.b16 %v83
  %v468 = vunpack.c.l.b16 %v84
  %v469 = vunpack.c.l.b16 %v85
  %v470 = vunpack.c.l.b16 %v86
  %v471 = vunpack.c.l.b16 %v87
  %v472 = vunpack.c.l.b16 %v88
  %v473 = vunpack.c.l.b16 %v89
  %v474 = vunpack.c.l.b16 %v90
  %v475 = vunpack.c.l.b16 %v91
  %v476 = vunpack.c.l.b16 %v92
  %v477 = vunpack.c.l.b16 %v93
  %v478 = vunpack.c.l.b16 %v94
  %v479 = vunpack.c.l.b16 %v95
  %v480 = vunpack.c.l.b16 %v96
  %v481 = vunpack.c.l.b16 %v97
  %v482 = vunpack.c.l.b16 %v98
  %v483 = vunpack.c.l.b16 %v99
  %v484 = vunpack.c.l.b16 %v100
  %v485 = vunpack.c.l.b16 %v101
  %v486 = vunpack.c.l.b16 %v102
  %v487 = vunpack.c.l.b16 %v103
  %v488 = vunpack.c.l.b16 %v104
  %v489 = vunpack.c.l.b16 %v105
  %v490 = vunpack.c.l.b16 %v106
  %v491 = vunpack.c.l.b16 %v107
  %v492 = vunpack.c.l.b16 %v108
  %v493 = vunpack.c.l.b16 %v109
  %v494 = vunpack.c.l.b16 %v110
  %v495 = vpack.c.b16 %v464, %v463
  %v496 = vpack.c.b16 %v466, %v465
  %v497 = vpack.c.b16 %v468, %v467
  %v498 = vpack.c.b16 %v470, %v469
  %v499 = vpack.c.b16 %v472, %v471
  %v500 = vpack.c.b16 %v474, %v473
  %v501 = vpack.c.b16 %v476, %v475
  %v502 = vpack.c.b16 %v478, %v477
  %v503 = vpack.c.b16 %v480, %v479
  %v504 = vpack.c.b16 %v482, %v481
  %v505 = vpack.c.b16 %v484, %v483
  %v506 = vpack.c.b16 %v486, %v485
  %v507 = vpack.c.b16 %v488, %v487
  %v508 = vpack.c.b16 %v490, %v489
  %v509 = vpack.c.b16 %v492, %v491
  %v510 = vpack.c.b16 %v494, %v493
  %527 = vmatprep.subr.bf16.mxu0 0
  %528 = vmatpush1.bf16.msra.mxu0 %v495
  %529 = vmatprep.subr.bf16.mxu0 0
  %530 = vmatpush1.bf16.msra.mxu0 %v496
  %531 = vmatprep.subr.bf16.mxu0 0
  %532 = vmatpush1.bf16.msra.mxu0 %v497
  %533 = vmatprep.subr.bf16.mxu0 0
  %534 = vmatpush1.bf16.msra.mxu0 %v498
  %535 = vmatprep.subr.bf16.mxu0 0
  %536 = vmatpush1.bf16.msra.mxu0 %v499
  %537 = vmatprep.subr.bf16.mxu0 0
  %538 = vmatpush1.bf16.msra.mxu0 %v500
  %539 = vmatprep.subr.bf16.mxu0 0
  %540 = vmatpush1.bf16.msra.mxu0 %v501
  %541 = vmatprep.subr.bf16.mxu0 0
  %542 = vmatpush1.bf16.msra.mxu0 %v502
  %543 = vmatprep.subr.bf16.mxu0 0
  %544 = vmatpush1.bf16.msra.mxu0 %v503
  %545 = vmatprep.subr.bf16.mxu0 0
  %546 = vmatpush1.bf16.msra.mxu0 %v504
  %547 = vmatprep.subr.bf16.mxu0 0
  %548 = vmatpush1.bf16.msra.mxu0 %v505
  %549 = vmatprep.subr.bf16.mxu0 0
  %550 = vmatpush1.bf16.msra.mxu0 %v506
  %551 = vmatprep.subr.bf16.mxu0 0
  %552 = vmatpush1.bf16.msra.mxu0 %v507
  %553 = vmatprep.subr.bf16.mxu0 0
  %554 = vmatpush1.bf16.msra.mxu0 %v508
  %555 = vmatprep.subr.bf16.mxu0 0
  %556 = vmatpush1.bf16.msra.mxu0 %v509
  %557 = vmatprep.subr.bf16.mxu0 0
  %558 = vmatpush1.bf16.msra.mxu0 %v510
  %559 = vmatprep.mubr.bf16.mxu0 %v304
  %560 = vmatmul.mubr.bf16.gmra.mrb[0].mxu0 %v303
  %v561 = vpop.f32.mrb[0].mxu0
  %v562 = vadd.f32 0.0, %v561
  %v563 = vpop.f32.mrb[0].mxu0
  %v564 = vpop.f32.mrb[0].mxu0
  %v565 = vadd.f32 0.0, %v564
  %v566 = vpop.f32.mrb[0].mxu0
  %567 = vmatprep.mubr.bf16.mxu0 %v306
  %568 = vmatmul.mubr.bf16.gmra.mrb[0].mxu0 %v305
  %v569 = vpop.f32.mrb[0].mxu0
  %v570 = vadd.f32 0.0, %v569
  %v571 = vpop.f32.mrb[0].mxu0
  %v572 = vpop.f32.mrb[0].mxu0
  %v573 = vadd.f32 0.0, %v572
  %v574 = vpop.f32.mrb[0].mxu0
  %575 = vmatprep.mubr.bf16.mxu0 %v308
  %576 = vmatmul.mubr.bf16.gmra.mrb[0].mxu0 %v307
  %v577 = vpop.f32.mrb[0].mxu0
  %v578 = vadd.f32 0.0, %v577
  %v579 = vpop.f32.mrb[0].mxu0
  %v580 = vpop.f32.mrb[0].mxu0
  %v581 = vadd.f32 0.0, %v580
  %v582 = vpop.f32.mrb[0].mxu0
  %583 = vmatprep.mubr.bf16.mxu0 %v310
  %584 = vmatmul.mubr.bf16.gmra.mrb[0].mxu0 %v309
  %v585 = vpop.f32.mrb[0].mxu0
  %v586 = vadd.f32 0.0, %v585
  %v587 = vpop.f32.mrb[0].mxu0
  %v588 = vpop.f32.mrb[0].mxu0
  %v589 = vadd.f32 0.0, %v588
  %v590 = vpop.f32.mrb[0].mxu0
  %591 = vmatprep.mubr.bf16.mxu0 %v312
  %592 = vmatmul.mubr.bf16.gmra.mrb[0].mxu0 %v311
  %v593 = vpop.f32.mrb[0].mxu0
  %v594 = vadd.f32 0.0, %v593
  %v595 = vpop.f32.mrb[0].mxu0
  %v596 = vpop.f32.mrb[0].mxu0
  %v597 = vadd.f32 0.0, %v596
  %v598 = vpop.f32.mrb[0].mxu0
  %599 = vmatprep.mubr.bf16.mxu0 %v314
  %600 = vmatmul.mubr.bf16.gmra.mrb[0].mxu0 %v313
  %v601 = vpop.f32.mrb[0].mxu0
  %v602 = vadd.f32 0.0, %v601
  %v603 = vpop.f32.mrb[0].mxu0
  %v604 = vpop.f32.mrb[0].mxu0
  %v605 = vadd.f32 0.0, %v604
  %v606 = vpop.f32.mrb[0].mxu0
  %607 = vmatprep.mubr.bf16.mxu0 %v316
  %608 = vmatmul.mubr.bf16.gmra.mrb[0].mxu0 %v315
  %v609 = vpop.f32.mrb[0].mxu0
  %v610 = vadd.f32 0.0, %v609
  %v611 = vpop.f32.mrb[0].mxu0
  %v612 = vpop.f32.mrb[0].mxu0
  %v613 = vadd.f32 0.0, %v612
  %v614 = vpop.f32.mrb[0].mxu0
  %615 = vmatprep.mubr.bf16.mxu0 %v318
  %616 = vmatmul.mubr.bf16.gmra.mrb[0].mxu0 %v317
  %v617 = vpop.f32.mrb[0].mxu0
  %v618 = vadd.f32 0.0, %v617
  %v619 = vpop.f32.mrb[0].mxu0
  %v620 = vpop.f32.mrb[0].mxu0
  %v621 = vadd.f32 0.0, %v620
  %v622 = vpop.f32.mrb[0].mxu0
  %623 = vmatprep.mubr.bf16.mxu0 %v320
  %624 = vmatmul.mubr.bf16.gmra.mrb[0].mxu0 %v319
  %v625 = vpop.f32.mrb[0].mxu0
  %v626 = vadd.f32 0.0, %v625
  %v627 = vpop.f32.mrb[0].mxu0
  %v628 = vpop.f32.mrb[0].mxu0
  %v629 = vadd.f32 0.0, %v628
  %v630 = vpop.f32.mrb[0].mxu0
  %631 = vmatprep.mubr.bf16.mxu0 %v322
  %632 = vmatmul.mubr.bf16.gmra.mrb[0].mxu0 %v321
  %v633 = vpop.f32.mrb[0].mxu0
  %v634 = vadd.f32 0.0, %v633
  %v635 = vpop.f32.mrb[0].mxu0
  %v636 = vpop.f32.mrb[0].mxu0
  %v637 = vadd.f32 0.0, %v636
  %v638 = vpop.f32.mrb[0].mxu0
  %639 = vmatprep.mubr.bf16.mxu0 %v324
  %640 = vmatmul.mubr.bf16.gmra.mrb[0].mxu0 %v323
  %v641 = vpop.f32.mrb[0].mxu0
  %v642 = vadd.f32 0.0, %v641
  %v643 = vpop.f32.mrb[0].mxu0
  %v644 = vpop.f32.mrb[0].mxu0
  %v645 = vadd.f32 0.0, %v644
  %v646 = vpop.f32.mrb[0].mxu0
  %647 = vmatprep.mubr.bf16.mxu0 %v326
  %648 = vmatmul.mubr.bf16.gmra.mrb[0].mxu0 %v325
  %v649 = vpop.f32.mrb[0].mxu0
  %v650 = vadd.f32 0.0, %v649
  %v651 = vpop.f32.mrb[0].mxu0
  %v652 = vpop.f32.mrb[0].mxu0
  %v653 = vadd.f32 0.0, %v652
  %v654 = vpop.f32.mrb[0].mxu0
  %655 = vmatprep.mubr.bf16.mxu0 %v328
  %656 = vmatmul.mubr.bf16.gmra.mrb[0].mxu0 %v327
  %v657 = vpop.f32.mrb[0].mxu0
  %v658 = vadd.f32 0.0, %v657
  %v659 = vpop.f32.mrb[0].mxu0
  %v660 = vpop.f32.mrb[0].mxu0
  %v661 = vadd.f32 0.0, %v660
  %v662 = vpop.f32.mrb[0].mxu0
  %663 = vmatprep.mubr.bf16.mxu0 %v330
  %664 = vmatmul.mubr.bf16.gmra.mrb[0].mxu0 %v329
  %v665 = vpop.f32.mrb[0].mxu0
  %v666 = vadd.f32 0.0, %v665
  %v667 = vpop.f32.mrb[0].mxu0
  %v668 = vpop.f32.mrb[0].mxu0
  %v669 = vadd.f32 0.0, %v668
  %v670 = vpop.f32.mrb[0].mxu0
  %671 = vmatprep.mubr.bf16.mxu0 %v332
  %672 = vmatmul.mubr.bf16.gmra.mrb[0].mxu0 %v331
  %v673 = vpop.f32.mrb[0].mxu0
  %v674 = vadd.f32 0.0, %v673
  %v675 = vpop.f32.mrb[0].mxu0
  %v676 = vpop.f32.mrb[0].mxu0
  %v677 = vadd.f32 0.0, %v676
  %v678 = vpop.f32.mrb[0].mxu0
  %679 = vmatprep.mubr.bf16.mxu0 %v334
  %680 = vmatmul.mubr.bf16.gmra.mrb[0].mxu0 %v333
  %v681 = vpop.f32.mrb[0].mxu0
  %v682 = vadd.f32 0.0, %v681
  %v683 = vpop.f32.mrb[0].mxu0
  %v684 = vpop.f32.mrb[0].mxu0
  %v685 = vadd.f32 0.0, %v684
  %v686 = vpop.f32.mrb[0].mxu0
  %687 = vmatprep.mubr.bf16.mxu0 %v336
  %688 = vmatmul.mubr.bf16.gmra.mrb[0].mxu0 %v335
  %v689 = vpop.f32.mrb[0].mxu0
  %v690 = vadd.f32 0.0, %v689
  %v691 = vpop.f32.mrb[0].mxu0
  %v692 = vpop.f32.mrb[0].mxu0
  %v693 = vadd.f32 0.0, %v692
  %v694 = vpop.f32.mrb[0].mxu0
  %695 = vmatprep.mubr.bf16.mxu0 %v338
  %696 = vmatmul.mubr.bf16.gmra.mrb[0].mxu0 %v337
  %v697 = vpop.f32.mrb[0].mxu0
  %v698 = vadd.f32 0.0, %v697
  %v699 = vpop.f32.mrb[0].mxu0
  %v700 = vpop.f32.mrb[0].mxu0
  %v701 = vadd.f32 0.0, %v700
  %v702 = vpop.f32.mrb[0].mxu0
  %703 = vmatprep.mubr.bf16.mxu0 %v340
  %704 = vmatmul.mubr.bf16.gmra.mrb[0].mxu0 %v339
  %v705 = vpop.f32.mrb[0].mxu0
  %v706 = vadd.f32 0.0, %v705
  %v707 = vpop.f32.mrb[0].mxu0
  %v708 = vpop.f32.mrb[0].mxu0
  %v709 = vadd.f32 0.0, %v708
  %v710 = vpop.f32.mrb[0].mxu0
  %711 = vmatprep.mubr.bf16.mxu0 %v342
  %712 = vmatmul.mubr.bf16.gmra.mrb[0].mxu0 %v341
  %v713 = vpop.f32.mrb[0].mxu0
  %v714 = vadd.f32 0.0, %v713
  %v715 = vpop.f32.mrb[0].mxu0
  %v716 = vpop.f32.mrb[0].mxu0
  %v717 = vadd.f32 0.0, %v716
  %v718 = vpop.f32.mrb[0].mxu0
  %719 = vmatprep.mubr.bf16.mxu0 %v344
  %720 = vmatmul.mubr.bf16.gmra.mrb[0].mxu0 %v343
  %v721 = vpop.f32.mrb[0].mxu0
  %v722 = vadd.f32 0.0, %v721
  %v723 = vpop.f32.mrb[0].mxu0
  %v724 = vpop.f32.mrb[0].mxu0
  %v725 = vadd.f32 0.0, %v724
  %v726 = vpop.f32.mrb[0].mxu0
  %727 = vmatprep.mubr.bf16.mxu0 %v346
  %728 = vmatmul.mubr.bf16.gmra.mrb[0].mxu0 %v345
  %v729 = vpop.f32.mrb[0].mxu0
  %v730 = vadd.f32 0.0, %v729
  %v731 = vpop.f32.mrb[0].mxu0
  %v732 = vpop.f32.mrb[0].mxu0
  %v733 = vadd.f32 0.0, %v732
  %v734 = vpop.f32.mrb[0].mxu0
  %735 = vmatprep.mubr.bf16.mxu0 %v348
  %736 = vmatmul.mubr.bf16.gmra.mrb[0].mxu0 %v347
  %v737 = vpop.f32.mrb[0].mxu0
  %v738 = vadd.f32 0.0, %v737
  %v739 = vpop.f32.mrb[0].mxu0
  %v740 = vpop.f32.mrb[0].mxu0
  %v741 = vadd.f32 0.0, %v740
  %v742 = vpop.f32.mrb[0].mxu0
  %743 = vmatprep.mubr.bf16.mxu0 %v350
  %744 = vmatmul.mubr.bf16.gmra.mrb[0].mxu0 %v349
  %v745 = vpop.f32.mrb[0].mxu0
  %v746 = vadd.f32 0.0, %v745
  %v747 = vpop.f32.mrb[0].mxu0
  %v748 = vpop.f32.mrb[0].mxu0
  %v749 = vadd.f32 0.0, %v748
  %v750 = vpop.f32.mrb[0].mxu0
  %751 = vmatprep.mubr.bf16.mxu0 %v352
  %752 = vmatmul.mubr.bf16.gmra.mrb[0].mxu0 %v351
  %v753 = vpop.f32.mrb[0].mxu0
  %v754 = vadd.f32 0.0, %v753
  %v755 = vpop.f32.mrb[0].mxu0
  %v756 = vpop.f32.mrb[0].mxu0
  %v757 = vadd.f32 0.0, %v756
  %v758 = vpop.f32.mrb[0].mxu0
  %759 = vmatprep.mubr.bf16.mxu0 %v354
  %760 = vmatmul.mubr.bf16.gmra.mrb[0].mxu0 %v353
  %v761 = vpop.f32.mrb[0].mxu0
  %v762 = vadd.f32 0.0, %v761
  %v763 = vpop.f32.mrb[0].mxu0
  %v764 = vpop.f32.mrb[0].mxu0
  %v765 = vadd.f32 0.0, %v764
  %v766 = vpop.f32.mrb[0].mxu0
  %767 = vmatprep.mubr.bf16.mxu0 %v356
  %768 = vmatmul.mubr.bf16.gmra.mrb[0].mxu0 %v355
  %v769 = vpop.f32.mrb[0].mxu0
  %v770 = vadd.f32 0.0, %v769
  %v771 = vpop.f32.mrb[0].mxu0
  %v772 = vpop.f32.mrb[0].mxu0
  %v773 = vadd.f32 0.0, %v772
  %v774 = vpop.f32.mrb[0].mxu0
  %775 = vmatprep.mubr.bf16.mxu0 %v358
  %776 = vmatmul.mubr.bf16.gmra.mrb[0].mxu0 %v357
  %v777 = vpop.f32.mrb[0].mxu0
  %v778 = vadd.f32 0.0, %v777
  %v779 = vpop.f32.mrb[0].mxu0
  %v780 = vpop.f32.mrb[0].mxu0
  %v781 = vadd.f32 0.0, %v780
  %v782 = vpop.f32.mrb[0].mxu0
  %783 = vmatprep.mubr.bf16.mxu0 %v360
  %784 = vmatmul.mubr.bf16.gmra.mrb[0].mxu0 %v359
  %v785 = vpop.f32.mrb[0].mxu0
  %v786 = vadd.f32 0.0, %v785
  %v787 = vpop.f32.mrb[0].mxu0
  %v788 = vpop.f32.mrb[0].mxu0
  %v789 = vadd.f32 0.0, %v788
  %v790 = vpop.f32.mrb[0].mxu0
  %791 = vmatprep.mubr.bf16.mxu0 %v362
  %792 = vmatmul.mubr.bf16.gmra.mrb[0].mxu0 %v361
  %v793 = vpop.f32.mrb[0].mxu0
  %v794 = vadd.f32 0.0, %v793
  %v795 = vpop.f32.mrb[0].mxu0
  %v796 = vpop.f32.mrb[0].mxu0
  %v797 = vadd.f32 0.0, %v796
  %v798 = vpop.f32.mrb[0].mxu0
  %799 = vmatprep.mubr.bf16.mxu0 %v364
  %800 = vmatmul.mubr.bf16.gmra.mrb[0].mxu0 %v363
  %v801 = vpop.f32.mrb[0].mxu0
  %v802 = vadd.f32 0.0, %v801
  %v803 = vpop.f32.mrb[0].mxu0
  %v804 = vpop.f32.mrb[0].mxu0
  %v805 = vadd.f32 0.0, %v804
  %v806 = vpop.f32.mrb[0].mxu0
  %807 = vmatprep.mubr.bf16.mxu0 %v366
  %808 = vmatmul.mubr.bf16.gmra.mrb[0].mxu0 %v365
  %v809 = vpop.f32.mrb[0].mxu0
  %v810 = vadd.f32 0.0, %v809
  %v811 = vpop.f32.mrb[0].mxu0
  %v812 = vpop.f32.mrb[0].mxu0
  %v813 = vadd.f32 0.0, %v812
  %v814 = vpop.f32.mrb[0].mxu0
  %815 = vdwg.mxu0
  %v816 = vmax.f32 %v562, %v626
  %v817 = vmax.f32 %v565, %v629
  %v818 = vmax.f32 %v570, %v634
  %v819 = vmax.f32 %v573, %v637
  %v820 = vmax.f32 %v578, %v642
  %v821 = vmax.f32 %v581, %v645
  %v822 = vmax.f32 %v586, %v650
  %v823 = vmax.f32 %v589, %v653
  %v824 = vmax.f32 %v594, %v658
  %v825 = vmax.f32 %v597, %v661
  %v826 = vmax.f32 %v602, %v666
  %v827 = vmax.f32 %v605, %v669
  %v828 = vmax.f32 %v610, %v674
  %v829 = vmax.f32 %v613, %v677
  %v830 = vmax.f32 %v618, %v682
  %v831 = vmax.f32 %v621, %v685
  %v832 = vmax.f32 %v816, %v690
  %v833 = vmax.f32 %v817, %v693
  %v834 = vmax.f32 %v818, %v698
  %v835 = vmax.f32 %v819, %v701
  %v836 = vmax.f32 %v820, %v706
  %v837 = vmax.f32 %v821, %v709
  %v838 = vmax.f32 %v822, %v714
  %v839 = vmax.f32 %v823, %v717
  %v840 = vmax.f32 %v824, %v722
  %v841 = vmax.f32 %v825, %v725
  %v842 = vmax.f32 %v826, %v730
  %v843 = vmax.f32 %v827, %v733
  %v844 = vmax.f32 %v828, %v738
  %v845 = vmax.f32 %v829, %v741
  %v846 = vmax.f32 %v830, %v746
  %v847 = vmax.f32 %v831, %v749
  %v848 = vmax.f32 %v832, %v754
  %v849 = vmax.f32 %v833, %v757
  %v850 = vmax.f32 %v834, %v762
  %v851 = vmax.f32 %v835, %v765
  %v852 = vmax.f32 %v836, %v770
  %v853 = vmax.f32 %v837, %v773
  %v854 = vmax.f32 %v838, %v778
  %v855 = vmax.f32 %v839, %v781
  %v856 = vmax.f32 %v840, %v786
  %v857 = vmax.f32 %v841, %v789
  %v858 = vmax.f32 %v842, %v794
  %v859 = vmax.f32 %v843, %v797
  %v860 = vmax.f32 %v844, %v802
  %v861 = vmax.f32 %v845, %v805
  %v862 = vmax.f32 %v846, %v810
  %v863 = vmax.f32 %v847, %v813
  %v864 = vld [vmem:[%s2] sm:$0x1]
  %v866 = vlaneseq
  %v867 = vshrl.u32 %v866, 7
  %v868 = vsub.s32 0, %v867
  %v869 = vrot.slane %v864, %v868
  %v871 = vadd.f32 %v848, %v869
  %v872 = vadd.f32 %v849, %v869
  %v873 = vadd.f32 %v850, %v869
  %v874 = vadd.f32 %v851, %v869
  %v875 = vadd.f32 %v852, %v869
  %v876 = vadd.f32 %v853, %v869
  %v877 = vadd.f32 %v854, %v869
  %v878 = vadd.f32 %v855, %v869
  %v879 = vadd.f32 %v856, %v869
  %v880 = vadd.f32 %v857, %v869
  %v881 = vadd.f32 %v858, %v869
  %v882 = vadd.f32 %v859, %v869
  %v883 = vadd.f32 %v860, %v869
  %v884 = vadd.f32 %v861, %v869
  %v885 = vadd.f32 %v862, %v869
  %v886 = vadd.f32 %v863, %v869
  %v887 = vmax.f32 %v871, 0.0
  %v888 = vmax.f32 %v872, 0.0
  %v889 = vmax.f32 %v873, 0.0
  %v890 = vmax.f32 %v874, 0.0
  %v891 = vmax.f32 %v875, 0.0
  %v892 = vmax.f32 %v876, 0.0
  %v893 = vmax.f32 %v877, 0.0
  %v894 = vmax.f32 %v878, 0.0
  %v895 = vmax.f32 %v879, 0.0
  %v896 = vmax.f32 %v880, 0.0
  %v897 = vmax.f32 %v881, 0.0
  %v898 = vmax.f32 %v882, 0.0
  %v899 = vmax.f32 %v883, 0.0
  %v900 = vmax.f32 %v884, 0.0
  %v901 = vmax.f32 %v885, 0.0
  %v902 = vmax.f32 %v886, 0.0
  %v903 = vpack.c.bf16 %v888, %v887
  %v904 = vpack.c.bf16 %v890, %v889
  %v905 = vpack.c.bf16 %v892, %v891
  %v906 = vpack.c.bf16 %v894, %v893
  %v907 = vpack.c.bf16 %v896, %v895
  %v908 = vpack.c.bf16 %v898, %v897
  %v909 = vpack.c.bf16 %v900, %v899
  %v910 = vpack.c.bf16 %v902, %v901
  %v919 = vunpack.c.l.b16 %v903
  %v920 = vunpack.c.h.b16 %v903
  %v921 = vunpack.c.l.b16 %v904
  %v922 = vunpack.c.h.b16 %v904
  %v923 = vunpack.c.l.b16 %v905
  %v924 = vunpack.c.h.b16 %v905
  %v925 = vunpack.c.l.b16 %v906
  %v926 = vunpack.c.h.b16 %v906
  %v927 = vunpack.c.l.b16 %v907
  %v928 = vunpack.c.h.b16 %v907
  %v929 = vunpack.c.l.b16 %v908
  %v930 = vunpack.c.h.b16 %v908
  %v931 = vunpack.c.l.b16 %v909
  %v932 = vunpack.c.h.b16 %v909
  %v933 = vunpack.c.l.b16 %v910
  %v934 = vunpack.c.h.b16 %v910
  %v935 = vpack.c.b16 %v919, %v919
  %v936 = vpack.c.b16 %v920, %v920
  %v937 = vpack.c.b16 %v921, %v921
  %v938 = vpack.c.b16 %v922, %v922
  %v939 = vpack.c.b16 %v923, %v923
  %v940 = vpack.c.b16 %v924, %v924
  %v941 = vpack.c.b16 %v925, %v925
  %v942 = vpack.c.b16 %v926, %v926
  %v943 = vpack.c.b16 %v927, %v927
  %v944 = vpack.c.b16 %v928, %v928
  %v945 = vpack.c.b16 %v929, %v929
  %v946 = vpack.c.b16 %v930, %v930
  %v947 = vpack.c.b16 %v931, %v931
  %v948 = vpack.c.b16 %v932, %v932
  %v949 = vpack.c.b16 %v933, %v933
  %v950 = vpack.c.b16 %v934, %v934
  %vm967 = vcmask 519168
  %968 = vst.msk [vmem:[%s3] sm:$0xf] %vm967, %v935
  %969 = vst.msk [vmem:[%s3 + $0x4] sm:$0xf] %vm967, %v936
  %970 = vst.msk [vmem:[%s3 + $0x8] sm:$0xf] %vm967, %v937
  %971 = vst.msk [vmem:[%s3 + $0xc] sm:$0xf] %vm967, %v938
  %972 = vst.msk [vmem:[%s3 + $0x10] sm:$0xf] %vm967, %v939
  %973 = vst.msk [vmem:[%s3 + $0x14] sm:$0xf] %vm967, %v940
  %974 = vst.msk [vmem:[%s3 + $0x18] sm:$0xf] %vm967, %v941
  %975 = vst.msk [vmem:[%s3 + $0x1c] sm:$0xf] %vm967, %v942
  %976 = vst.msk [vmem:[%s3 + $0x20] sm:$0xf] %vm967, %v943
  %977 = vst.msk [vmem:[%s3 + $0x24] sm:$0xf] %vm967, %v944
  %978 = vst.msk [vmem:[%s3 + $0x28] sm:$0xf] %vm967, %v945
  %979 = vst.msk [vmem:[%s3 + $0x2c] sm:$0xf] %vm967, %v946
  %980 = vst.msk [vmem:[%s3 + $0x30] sm:$0xf] %vm967, %v947
  %981 = vst.msk [vmem:[%s3 + $0x34] sm:$0xf] %vm967, %v948
  %982 = vst.msk [vmem:[%s3 + $0x38] sm:$0xf] %vm967, %v949
  %983 = vst.msk [vmem:[%s3 + $0x3c] sm:$0xf] %vm967, %v950
  // Predicated region
  $region14: #{cnn_forward.5} parent=0 // pred_check
    _
  $region15: #{cnn_forward.5} parent=0 // pred_check_branch
    %985 = sbr.rel (0) target = $region17
  $region16: #{cnn_forward.5} parent=0 // pred_region
    _
  $region17: #{cnn_forward.5} parent=0 // pred_fallthru
    _
  // Predicated region
  $region18: #{cnn_forward.5} parent=0 // pred_check
    _
  $region19: #{cnn_forward.5} parent=0 // pred_check_branch
    %987 = sbr.rel (0) target = $region21
  $region20: #{cnn_forward.5} parent=0 // pred_region
    _
  $region21: #{cnn_forward.5} parent=0 // pred_fallthru
    _

// kernel: cnn_forward.6
$region0: #{cnn_forward.6}
  #allocation0 [shape = 'u32[]', space=smem, size = 0x4, offset = 0x4, fixed_abs, tag = 'smem constant byte address 0x4 - core index']
  #allocation1 [shape = 'u32[144,128]{1,0:T(1,128)}', space=vmem, size = 0x12000, scoped, tag = 'internal scratch']
  %s0 = inlined_call_operand.vmem [shape: bf16[4,32,1664], index: 0, kind: input, shape index: {}]
  %s1 = inlined_call_operand.vmem [shape: bf16[1664,128], index: 1, kind: input, shape index: {}]
  %s2 = inlined_call_operand.vmem [shape: f32[1,128], index: 2, kind: input, shape index: {}]
  %s3 = inlined_call_operand.vmem [shape: bf16[32,128], index: 3, kind: output, shape index: {}]
  %s4 = sld [smem:[#allocation0]]
  $region22: #{cnn_forward.6} parent=0
    _
  %s6 = ssub.s32 1, %s4
  %s7 = scalar_select 0, %s6, %s4
  // Predicated region
  $region2: #{cnn_forward.6} parent=0 // pred_check
    _
  $region3: #{cnn_forward.6} parent=0 // pred_check_branch
    %9 = sbr.rel (0) target = $region5
  $region4: #{cnn_forward.6} parent=0 // pred_region
    _
  $region5: #{cnn_forward.6} parent=0 // pred_fallthru
    _
  // Predicated region
  $region6: #{cnn_forward.6} parent=0 // pred_check
    _
  $region7: #{cnn_forward.6} parent=0 // pred_check_branch
    %11 = sbr.rel (0) target = $region9
  $region8: #{cnn_forward.6} parent=0 // pred_region
    _
  $region9: #{cnn_forward.6} parent=0 // pred_fallthru
    _
  // Predicated region
  $region10: #{cnn_forward.6} parent=0 // pred_check
    _
  $region11: #{cnn_forward.6} parent=0 // pred_check_branch
    %13 = sbr.rel (0) target = $region13
  $region12: #{cnn_forward.6} parent=0 // pred_region
    _
  $region13: #{cnn_forward.6} parent=0 // pred_fallthru
    _
  %v15 = vld [vmem:[%s0] sm:$0xff]
  %v16 = vld [vmem:[%s0 + $0x8] sm:$0xff]
  %v17 = vld [vmem:[%s0 + $0x10] sm:$0xff]
  %v18 = vld [vmem:[%s0 + $0x18] sm:$0xff]
  %v19 = vld [vmem:[%s0 + $0x20] sm:$0xff]
  %v20 = vld [vmem:[%s0 + $0x28] sm:$0xff]
  %v21 = vld [vmem:[%s0 + $0x30] sm:$0xf]
  %v22 = vld [vmem:[%s0 + $0x34] sm:$0xff]
  %v23 = vld [vmem:[%s0 + $0x3c] sm:$0xff]
  %v24 = vld [vmem:[%s0 + $0x44] sm:$0xff]
  %v25 = vld [vmem:[%s0 + $0x4c] sm:$0xff]
  %v26 = vld [vmem:[%s0 + $0x54] sm:$0xff]
  %v27 = vld [vmem:[%s0 + $0x5c] sm:$0xff]
  %v28 = vld [vmem:[%s0 + $0x64] sm:$0xf]
  %v29 = vld [vmem:[%s0 + $0x68] sm:$0xff]
  %v30 = vld [vmem:[%s0 + $0x70] sm:$0xff]
  %v31 = vld [vmem:[%s0 + $0x78] sm:$0xff]
  %v32 = vld [vmem:[%s0 + $0x80] sm:$0xff]
  %v33 = vld [vmem:[%s0 + $0x88] sm:$0xff]
  %v34 = vld [vmem:[%s0 + $0x90] sm:$0xff]
  %v35 = vld [vmem:[%s0 + $0x98] sm:$0xf]
  %v36 = vld [vmem:[%s0 + $0x9c] sm:$0xff]
  %v37 = vld [vmem:[%s0 + $0xa4] sm:$0xff]
  %v38 = vld [vmem:[%s0 + $0xac] sm:$0xff]
  %v39 = vld [vmem:[%s0 + $0xb4] sm:$0xff]
  %v40 = vld [vmem:[%s0 + $0xbc] sm:$0xff]
  %v41 = vld [vmem:[%s0 + $0xc4] sm:$0xff]
  %v42 = vld [vmem:[%s0 + $0xcc] sm:$0xf]
  %v43 = vld [vmem:[%s0 + $0xd0] sm:$0xff]
  %v44 = vld [vmem:[%s0 + $0xd8] sm:$0xff]
  %v45 = vld [vmem:[%s0 + $0xe0] sm:$0xff]
  %v46 = vld [vmem:[%s0 + $0xe8] sm:$0xff]
  %v47 = vld [vmem:[%s0 + $0xf0] sm:$0xff]
  %v48 = vld [vmem:[%s0 + $0xf8] sm:$0xff]
  %v49 = vld [vmem:[%s0 + $0x100] sm:$0xf]
  %v50 = vld [vmem:[%s0 + $0x104] sm:$0xff]
  %v51 = vld [vmem:[%s0 + $0x10c] sm:$0xff]
  %v52 = vld [vmem:[%s0 + $0x114] sm:$0xff]
  %v53 = vld [vmem:[%s0 + $0x11c] sm:$0xff]
  %v54 = vld [vmem:[%s0 + $0x124] sm:$0xff]
  %v55 = vld [vmem:[%s0 + $0x12c] sm:$0xff]
  %v56 = vld [vmem:[%s0 + $0x134] sm:$0xf]
  %v57 = vld [vmem:[%s0 + $0x138] sm:$0xff]
  %v58 = vld [vmem:[%s0 + $0x140] sm:$0xff]
  %v59 = vld [vmem:[%s0 + $0x148] sm:$0xff]
  %v60 = vld [vmem:[%s0 + $0x150] sm:$0xff]
  %v61 = vld [vmem:[%s0 + $0x158] sm:$0xff]
  %v62 = vld [vmem:[%s0 + $0x160] sm:$0xff]
  %v63 = vld [vmem:[%s0 + $0x168] sm:$0xf]
  %v64 = vld [vmem:[%s0 + $0x16c] sm:$0xff]
  %v65 = vld [vmem:[%s0 + $0x174] sm:$0xff]
  %v66 = vld [vmem:[%s0 + $0x17c] sm:$0xff]
  %v67 = vld [vmem:[%s0 + $0x184] sm:$0xff]
  %v68 = vld [vmem:[%s0 + $0x18c] sm:$0xff]
  %v69 = vld [vmem:[%s0 + $0x194] sm:$0xff]
  %v70 = vld [vmem:[%s0 + $0x19c] sm:$0xf]
  %v71 = vld [vmem:[%s0 + $0x1a0] sm:$0xff]
  %v72 = vld [vmem:[%s0 + $0x1a8] sm:$0xff]
  %v73 = vld [vmem:[%s0 + $0x1b0] sm:$0xff]
  %v74 = vld [vmem:[%s0 + $0x1b8] sm:$0xff]
  %v75 = vld [vmem:[%s0 + $0x1c0] sm:$0xff]
  %v76 = vld [vmem:[%s0 + $0x1c8] sm:$0xff]
  %v77 = vld [vmem:[%s0 + $0x1d0] sm:$0xf]
  %v78 = vld [vmem:[%s0 + $0x1d4] sm:$0xff]
  %v79 = vld [vmem:[%s0 + $0x1dc] sm:$0xff]
  %v80 = vld [vmem:[%s0 + $0x1e4] sm:$0xff]
  %v81 = vld [vmem:[%s0 + $0x1ec] sm:$0xff]
  %v82 = vld [vmem:[%s0 + $0x1f4] sm:$0xff]
  %v83 = vld [vmem:[%s0 + $0x1fc] sm:$0xff]
  %v84 = vld [vmem:[%s0 + $0x204] sm:$0xf]
  %v85 = vld [vmem:[%s0 + $0x208] sm:$0xff]
  %v86 = vld [vmem:[%s0 + $0x210] sm:$0xff]
  %v87 = vld [vmem:[%s0 + $0x218] sm:$0xff]
  %v88 = vld [vmem:[%s0 + $0x220] sm:$0xff]
  %v89 = vld [vmem:[%s0 + $0x228] sm:$0xff]
  %v90 = vld [vmem:[%s0 + $0x230] sm:$0xff]
  %v91 = vld [vmem:[%s0 + $0x238] sm:$0xf]
  %v92 = vld [vmem:[%s0 + $0x23c] sm:$0xff]
  %v93 = vld [vmem:[%s0 + $0x244] sm:$0xff]
  %v94 = vld [vmem:[%s0 + $0x24c] sm:$0xff]
  %v95 = vld [vmem:[%s0 + $0x254] sm:$0xff]
  %v96 = vld [vmem:[%s0 + $0x25c] sm:$0xff]
  %v97 = vld [vmem:[%s0 + $0x264] sm:$0xff]
  %v98 = vld [vmem:[%s0 + $0x26c] sm:$0xf]
  %v99 = vld [vmem:[%s0 + $0x270] sm:$0xff]
  %v100 = vld [vmem:[%s0 + $0x278] sm:$0xff]
  %v101 = vld [vmem:[%s0 + $0x280] sm:$0xff]
  %v102 = vld [vmem:[%s0 + $0x288] sm:$0xff]
  %v103 = vld [vmem:[%s0 + $0x290] sm:$0xff]
  %v104 = vld [vmem:[%s0 + $0x298] sm:$0xff]
  %v105 = vld [vmem:[%s0 + $0x2a0] sm:$0xf]
  %v106 = vld [vmem:[%s0 + $0x2a4] sm:$0xff]
  %v107 = vld [vmem:[%s0 + $0x2ac] sm:$0xff]
  %v108 = vld [vmem:[%s0 + $0x2b4] sm:$0xff]
  %v109 = vld [vmem:[%s0 + $0x2bc] sm:$0xff]
  %v110 = vld [vmem:[%s0 + $0x2c4] sm:$0xff]
  %v111 = vld [vmem:[%s0 + $0x2cc] sm:$0xff]
  %v112 = vld [vmem:[%s0 + $0x2d4] sm:$0xf]
  %v113 = vld [vmem:[%s0 + $0x2d8] sm:$0xff]
  %v114 = vld [vmem:[%s0 + $0x2e0] sm:$0xff]
  %v115 = vld [vmem:[%s0 + $0x2e8] sm:$0xff]
  %v116 = vld [vmem:[%s0 + $0x2f0] sm:$0xff]
  %v117 = vld [vmem:[%s0 + $0x2f8] sm:$0xff]
  %v118 = vld [vmem:[%s0 + $0x300] sm:$0xff]
  %v119 = vld [vmem:[%s0 + $0x308] sm:$0xf]
  %v120 = vld [vmem:[%s0 + $0x30c] sm:$0xff]
  %v121 = vld [vmem:[%s0 + $0x314] sm:$0xff]
  %v122 = vld [vmem:[%s0 + $0x31c] sm:$0xff]
  %v123 = vld [vmem:[%s0 + $0x324] sm:$0xff]
  %v124 = vld [vmem:[%s0 + $0x32c] sm:$0xff]
  %v125 = vld [vmem:[%s0 + $0x334] sm:$0xff]
  %v126 = vld [vmem:[%s0 + $0x33c] sm:$0xf]
  %v127 = vld [vmem:[%s1] sm:$0xf]
  %v128 = vld [vmem:[%s1 + $0x4] sm:$0xf]
  %v129 = vld [vmem:[%s1 + $0x8] sm:$0xf]
  %v130 = vld [vmem:[%s1 + $0xc] sm:$0xf]
  %v131 = vld [vmem:[%s1 + $0x10] sm:$0xf]
  %v132 = vld [vmem:[%s1 + $0x14] sm:$0xf]
  %v133 = vld [vmem:[%s1 + $0x18] sm:$0xf]
  %v134 = vld [vmem:[%s1 + $0x1c] sm:$0xf]
  %v135 = vld [vmem:[%s1 + $0x20] sm:$0xf]
  %v136 = vld [vmem:[%s1 + $0x24] sm:$0xf]
  %v137 = vld [vmem:[%s1 + $0x28] sm:$0xf]
  %v138 = vld [vmem:[%s1 + $0x2c] sm:$0xf]
  %v139 = vld [vmem:[%s1 + $0x30] sm:$0xf]
  %v140 = vld [vmem:[%s1 + $0x34] sm:$0xf]
  %v141 = vld [vmem:[%s1 + $0x38] sm:$0xf]
  %v142 = vld [vmem:[%s1 + $0x3c] sm:$0xf]
  %v143 = vld [vmem:[%s1 + $0x40] sm:$0xf]
  %v144 = vld [vmem:[%s1 + $0x44] sm:$0xf]
  %v145 = vld [vmem:[%s1 + $0x48] sm:$0xf]
  %v146 = vld [vmem:[%s1 + $0x4c] sm:$0xf]
  %v147 = vld [vmem:[%s1 + $0x50] sm:$0xf]
  %v148 = vld [vmem:[%s1 + $0x54] sm:$0xf]
  %v149 = vld [vmem:[%s1 + $0x58] sm:$0xf]
  %v150 = vld [vmem:[%s1 + $0x5c] sm:$0xf]
  %v151 = vld [vmem:[%s1 + $0x60] sm:$0xf]
  %v152 = vld [vmem:[%s1 + $0x64] sm:$0xf]
  %v153 = vld [vmem:[%s1 + $0x68] sm:$0xf]
  %v154 = vld [vmem:[%s1 + $0x6c] sm:$0xf]
  %v155 = vld [vmem:[%s1 + $0x70] sm:$0xf]
  %v156 = vld [vmem:[%s1 + $0x74] sm:$0xf]
  %v157 = vld [vmem:[%s1 + $0x78] sm:$0xf]
  %v158 = vld [vmem:[%s1 + $0x7c] sm:$0xf]
  %v159 = vld [vmem:[%s1 + $0x80] sm:$0xf]
  %v160 = vld [vmem:[%s1 + $0x84] sm:$0xf]
  %v161 = vld [vmem:[%s1 + $0x88] sm:$0xf]
  %v162 = vld [vmem:[%s1 + $0x8c] sm:$0xf]
  %v163 = vld [vmem:[%s1 + $0x90] sm:$0xf]
  %v164 = vld [vmem:[%s1 + $0x94] sm:$0xf]
  %v165 = vld [vmem:[%s1 + $0x98] sm:$0xf]
  %v166 = vld [vmem:[%s1 + $0x9c] sm:$0xf]
  %v167 = vld [vmem:[%s1 + $0xa0] sm:$0xf]
  %v168 = vld [vmem:[%s1 + $0xa4] sm:$0xf]
  %v169 = vld [vmem:[%s1 + $0xa8] sm:$0xf]
  %v170 = vld [vmem:[%s1 + $0xac] sm:$0xf]
  %v171 = vld [vmem:[%s1 + $0xb0] sm:$0xf]
  %v172 = vld [vmem:[%s1 + $0xb4] sm:$0xf]
  %v173 = vld [vmem:[%s1 + $0xb8] sm:$0xf]
  %v174 = vld [vmem:[%s1 + $0xbc] sm:$0xf]
  %v175 = vld [vmem:[%s1 + $0xc0] sm:$0xf]
  %v176 = vld [vmem:[%s1 + $0xc4] sm:$0xf]
  %v177 = vld [vmem:[%s1 + $0xc8] sm:$0xf]
  %v178 = vld [vmem:[%s1 + $0xcc] sm:$0xf]
  %v179 = vld [vmem:[%s1 + $0xd0] sm:$0xf]
  %v180 = vld [vmem:[%s1 + $0xd4] sm:$0xf]
  %v181 = vld [vmem:[%s1 + $0xd8] sm:$0xf]
  %v182 = vld [vmem:[%s1 + $0xdc] sm:$0xf]
  %v183 = vld [vmem:[%s1 + $0xe0] sm:$0xf]
  %v184 = vld [vmem:[%s1 + $0xe4] sm:$0xf]
  %v185 = vld [vmem:[%s1 + $0xe8] sm:$0xf]
  %v186 = vld [vmem:[%s1 + $0xec] sm:$0xf]
  %v187 = vld [vmem:[%s1 + $0xf0] sm:$0xf]
  %v188 = vld [vmem:[%s1 + $0xf4] sm:$0xf]
  %v189 = vld [vmem:[%s1 + $0xf8] sm:$0xf]
  %v190 = vld [vmem:[%s1 + $0xfc] sm:$0xf]
  %v191 = vld [vmem:[%s1 + $0x100] sm:$0xf]
  %v192 = vld [vmem:[%s1 + $0x104] sm:$0xf]
  %v193 = vld [vmem:[%s1 + $0x108] sm:$0xf]
  %v194 = vld [vmem:[%s1 + $0x10c] sm:$0xf]
  %v195 = vld [vmem:[%s1 + $0x110] sm:$0xf]
  %v196 = vld [vmem:[%s1 + $0x114] sm:$0xf]
  %v197 = vld [vmem:[%s1 + $0x118] sm:$0xf]
  %v198 = vld [vmem:[%s1 + $0x11c] sm:$0xf]
  %v199 = vld [vmem:[%s1 + $0x120] sm:$0xf]
  %v200 = vld [vmem:[%s1 + $0x124] sm:$0xf]
  %v201 = vld [vmem:[%s1 + $0x128] sm:$0xf]
  %v202 = vld [vmem:[%s1 + $0x12c] sm:$0xf]
  %v203 = vld [vmem:[%s1 + $0x130] sm:$0xf]
  %v204 = vld [vmem:[%s1 + $0x134] sm:$0xf]
  %v205 = vld [vmem:[%s1 + $0x138] sm:$0xf]
  %v206 = vld [vmem:[%s1 + $0x13c] sm:$0xf]
  %v207 = vld [vmem:[%s1 + $0x140] sm:$0xf]
  %v208 = vld [vmem:[%s1 + $0x144] sm:$0xf]
  %v209 = vld [vmem:[%s1 + $0x148] sm:$0xf]
  %v210 = vld [vmem:[%s1 + $0x14c] sm:$0xf]
  %v211 = vld [vmem:[%s1 + $0x150] sm:$0xf]
  %v212 = vld [vmem:[%s1 + $0x154] sm:$0xf]
  %v213 = vld [vmem:[%s1 + $0x158] sm:$0xf]
  %v214 = vld [vmem:[%s1 + $0x15c] sm:$0xf]
  %v215 = vld [vmem:[%s1 + $0x160] sm:$0xf]
  %v216 = vld [vmem:[%s1 + $0x164] sm:$0xf]
  %v217 = vld [vmem:[%s1 + $0x168] sm:$0xf]
  %v218 = vld [vmem:[%s1 + $0x16c] sm:$0xf]
  %v219 = vld [vmem:[%s1 + $0x170] sm:$0xf]
  %v220 = vld [vmem:[%s1 + $0x174] sm:$0xf]
  %v221 = vld [vmem:[%s1 + $0x178] sm:$0xf]
  %v222 = vld [vmem:[%s1 + $0x17c] sm:$0xf]
  %v223 = vld [vmem:[%s1 + $0x180] sm:$0xf]
  %v224 = vld [vmem:[%s1 + $0x184] sm:$0xf]
  %v225 = vld [vmem:[%s1 + $0x188] sm:$0xf]
  %v226 = vld [vmem:[%s1 + $0x18c] sm:$0xf]
  %v227 = vld [vmem:[%s1 + $0x190] sm:$0xf]
  %v228 = vld [vmem:[%s1 + $0x194] sm:$0xf]
  %v229 = vld [vmem:[%s1 + $0x198] sm:$0xf]
  %v230 = vld [vmem:[%s1 + $0x19c] sm:$0xf]
  %v231 = vld [vmem:[%s1 + $0x1a0] sm:$0xf]
  %v232 = vld [vmem:[%s1 + $0x1a4] sm:$0xf]
  %v233 = vld [vmem:[%s1 + $0x1a8] sm:$0xf]
  %v234 = vld [vmem:[%s1 + $0x1ac] sm:$0xf]
  %v235 = vld [vmem:[%s1 + $0x1b0] sm:$0xf]
  %v236 = vld [vmem:[%s1 + $0x1b4] sm:$0xf]
  %v237 = vld [vmem:[%s1 + $0x1b8] sm:$0xf]
  %v238 = vld [vmem:[%s1 + $0x1bc] sm:$0xf]
  %v239 = vld [vmem:[%s1 + $0x1c0] sm:$0xf]
  %v240 = vld [vmem:[%s1 + $0x1c4] sm:$0xf]
  %v241 = vld [vmem:[%s1 + $0x1c8] sm:$0xf]
  %v242 = vld [vmem:[%s1 + $0x1cc] sm:$0xf]
  %v243 = vld [vmem:[%s1 + $0x1d0] sm:$0xf]
  %v244 = vld [vmem:[%s1 + $0x1d4] sm:$0xf]
  %v245 = vld [vmem:[%s1 + $0x1d8] sm:$0xf]
  %v246 = vld [vmem:[%s1 + $0x1dc] sm:$0xf]
  %v247 = vld [vmem:[%s1 + $0x1e0] sm:$0xf]
  %v248 = vld [vmem:[%s1 + $0x1e4] sm:$0xf]
  %v249 = vld [vmem:[%s1 + $0x1e8] sm:$0xf]
  %v250 = vld [vmem:[%s1 + $0x1ec] sm:$0xf]
  %v251 = vld [vmem:[%s1 + $0x1f0] sm:$0xf]
  %v252 = vld [vmem:[%s1 + $0x1f4] sm:$0xf]
  %v253 = vld [vmem:[%s1 + $0x1f8] sm:$0xf]
  %v254 = vld [vmem:[%s1 + $0x1fc] sm:$0xf]
  %v255 = vld [vmem:[%s1 + $0x200] sm:$0xf]
  %v256 = vld [vmem:[%s1 + $0x204] sm:$0xf]
  %v257 = vld [vmem:[%s1 + $0x208] sm:$0xf]
  %v258 = vld [vmem:[%s1 + $0x20c] sm:$0xf]
  %v259 = vld [vmem:[%s1 + $0x210] sm:$0xf]
  %v260 = vld [vmem:[%s1 + $0x214] sm:$0xf]
  %v261 = vld [vmem:[%s1 + $0x218] sm:$0xf]
  %v262 = vld [vmem:[%s1 + $0x21c] sm:$0xf]
  %v263 = vld [vmem:[%s1 + $0x220] sm:$0xf]
  %v264 = vld [vmem:[%s1 + $0x224] sm:$0xf]
  %v265 = vld [vmem:[%s1 + $0x228] sm:$0xf]
  %v266 = vld [vmem:[%s1 + $0x22c] sm:$0xf]
  %v267 = vld [vmem:[%s1 + $0x230] sm:$0xf]
  %v268 = vld [vmem:[%s1 + $0x234] sm:$0xf]
  %v269 = vld [vmem:[%s1 + $0x238] sm:$0xf]
  %v270 = vld [vmem:[%s1 + $0x23c] sm:$0xf]
  %v271 = vld [vmem:[%s1 + $0x240] sm:$0xf]
  %v272 = vld [vmem:[%s1 + $0x244] sm:$0xf]
  %v273 = vld [vmem:[%s1 + $0x248] sm:$0xf]
  %v274 = vld [vmem:[%s1 + $0x24c] sm:$0xf]
  %v275 = vld [vmem:[%s1 + $0x250] sm:$0xf]
  %v276 = vld [vmem:[%s1 + $0x254] sm:$0xf]
  %v277 = vld [vmem:[%s1 + $0x258] sm:$0xf]
  %v278 = vld [vmem:[%s1 + $0x25c] sm:$0xf]
  %v279 = vld [vmem:[%s1 + $0x260] sm:$0xf]
  %v280 = vld [vmem:[%s1 + $0x264] sm:$0xf]
  %v281 = vld [vmem:[%s1 + $0x268] sm:$0xf]
  %v282 = vld [vmem:[%s1 + $0x26c] sm:$0xf]
  %v283 = vld [vmem:[%s1 + $0x270] sm:$0xf]
  %v284 = vld [vmem:[%s1 + $0x274] sm:$0xf]
  %v285 = vld [vmem:[%s1 + $0x278] sm:$0xf]
  %v286 = vld [vmem:[%s1 + $0x27c] sm:$0xf]
  %v287 = vld [vmem:[%s1 + $0x280] sm:$0xf]
  %v288 = vld [vmem:[%s1 + $0x284] sm:$0xf]
  %v289 = vld [vmem:[%s1 + $0x288] sm:$0xf]
  %v290 = vld [vmem:[%s1 + $0x28c] sm:$0xf]
  %v291 = vld [vmem:[%s1 + $0x290] sm:$0xf]
  %v292 = vld [vmem:[%s1 + $0x294] sm:$0xf]
  %v293 = vld [vmem:[%s1 + $0x298] sm:$0xf]
  %v294 = vld [vmem:[%s1 + $0x29c] sm:$0xf]
  %v295 = vld [vmem:[%s1 + $0x2a0] sm:$0xf]
  %v296 = vld [vmem:[%s1 + $0x2a4] sm:$0xf]
  %v297 = vld [vmem:[%s1 + $0x2a8] sm:$0xf]
  %v298 = vld [vmem:[%s1 + $0x2ac] sm:$0xf]
  %v299 = vld [vmem:[%s1 + $0x2b0] sm:$0xf]
  %v300 = vld [vmem:[%s1 + $0x2b4] sm:$0xf]
  %v301 = vld [vmem:[%s1 + $0x2b8] sm:$0xf]
  %v302 = vld [vmem:[%s1 + $0x2bc] sm:$0xf]
  %v303 = vld [vmem:[%s1 + $0x2c0] sm:$0xf]
  %v304 = vld [vmem:[%s1 + $0x2c4] sm:$0xf]
  %v305 = vld [vmem:[%s1 + $0x2c8] sm:$0xf]
  %v306 = vld [vmem:[%s1 + $0x2cc] sm:$0xf]
  %v307 = vld [vmem:[%s1 + $0x2d0] sm:$0xf]
  %v308 = vld [vmem:[%s1 + $0x2d4] sm:$0xf]
  %v309 = vld [vmem:[%s1 + $0x2d8] sm:$0xf]
  %v310 = vld [vmem:[%s1 + $0x2dc] sm:$0xf]
  %v311 = vld [vmem:[%s1 + $0x2e0] sm:$0xf]
  %v312 = vld [vmem:[%s1 + $0x2e4] sm:$0xf]
  %v313 = vld [vmem:[%s1 + $0x2e8] sm:$0xf]
  %v314 = vld [vmem:[%s1 + $0x2ec] sm:$0xf]
  %v315 = vld [vmem:[%s1 + $0x2f0] sm:$0xf]
  %v316 = vld [vmem:[%s1 + $0x2f4] sm:$0xf]
  %v317 = vld [vmem:[%s1 + $0x2f8] sm:$0xf]
  %v318 = vld [vmem:[%s1 + $0x2fc] sm:$0xf]
  %v319 = vld [vmem:[%s1 + $0x300] sm:$0xf]
  %v320 = vld [vmem:[%s1 + $0x304] sm:$0xf]
  %v321 = vld [vmem:[%s1 + $0x308] sm:$0xf]
  %v322 = vld [vmem:[%s1 + $0x30c] sm:$0xf]
  %v323 = vld [vmem:[%s1 + $0x310] sm:$0xf]
  %v324 = vld [vmem:[%s1 + $0x314] sm:$0xf]
  %v325 = vld [vmem:[%s1 + $0x318] sm:$0xf]
  %v326 = vld [vmem:[%s1 + $0x31c] sm:$0xf]
  %v327 = vld [vmem:[%s1 + $0x320] sm:$0xf]
  %v328 = vld [vmem:[%s1 + $0x324] sm:$0xf]
  %v329 = vld [vmem:[%s1 + $0x328] sm:$0xf]
  %v330 = vld [vmem:[%s1 + $0x32c] sm:$0xf]
  %v331 = vld [vmem:[%s1 + $0x330] sm:$0xf]
  %v332 = vld [vmem:[%s1 + $0x334] sm:$0xf]
  %v333 = vld [vmem:[%s1 + $0x338] sm:$0xf]
  %v334 = vld [vmem:[%s1 + $0x33c] sm:$0xf]
  %v447 = vunpack.c.l.b16 %v15
  %v448 = vunpack.c.h.b16 %v15
  %v449 = vunpack.c.l.b16 %v16
  %v450 = vunpack.c.h.b16 %v16
  %v451 = vunpack.c.l.b16 %v17
  %v452 = vunpack.c.h.b16 %v17
  %v453 = vunpack.c.l.b16 %v18
  %v454 = vunpack.c.h.b16 %v18
  %v455 = vunpack.c.l.b16 %v19
  %v456 = vunpack.c.h.b16 %v19
  %v457 = vunpack.c.l.b16 %v20
  %v458 = vunpack.c.h.b16 %v20
  %v459 = vunpack.c.l.b16 %v21
  %v460 = vunpack.c.l.b16 %v22
  %v461 = vunpack.c.h.b16 %v22
  %v462 = vunpack.c.l.b16 %v23
  %v463 = vunpack.c.h.b16 %v23
  %v464 = vunpack.c.l.b16 %v24
  %v465 = vunpack.c.h.b16 %v24
  %v466 = vunpack.c.l.b16 %v25
  %v467 = vunpack.c.h.b16 %v25
  %v468 = vunpack.c.l.b16 %v26
  %v469 = vunpack.c.h.b16 %v26
  %v470 = vunpack.c.l.b16 %v27
  %v471 = vunpack.c.h.b16 %v27
  %v472 = vunpack.c.l.b16 %v28
  %v473 = vunpack.c.l.b16 %v29
  %v474 = vunpack.c.h.b16 %v29
  %v475 = vunpack.c.l.b16 %v30
  %v476 = vunpack.c.h.b16 %v30
  %v477 = vunpack.c.l.b16 %v31
  %v478 = vunpack.c.h.b16 %v31
  %v479 = vunpack.c.l.b16 %v32
  %v480 = vunpack.c.h.b16 %v32
  %v481 = vunpack.c.l.b16 %v33
  %v482 = vunpack.c.h.b16 %v33
  %v483 = vunpack.c.l.b16 %v34
  %v484 = vunpack.c.h.b16 %v34
  %v485 = vunpack.c.l.b16 %v35
  %v486 = vunpack.c.l.b16 %v36
  %v487 = vunpack.c.h.b16 %v36
  %v488 = vunpack.c.l.b16 %v37
  %v489 = vunpack.c.h.b16 %v37
  %v490 = vunpack.c.l.b16 %v38
  %v491 = vunpack.c.h.b16 %v38
  %v492 = vunpack.c.l.b16 %v39
  %v493 = vunpack.c.h.b16 %v39
  %v494 = vunpack.c.l.b16 %v40
  %v495 = vunpack.c.h.b16 %v40
  %v496 = vunpack.c.l.b16 %v41
  %v497 = vunpack.c.h.b16 %v41
  %v498 = vunpack.c.l.b16 %v42
  %v499 = vunpack.c.l.b16 %v43
  %v500 = vunpack.c.h.b16 %v43
  %v501 = vunpack.c.l.b16 %v44
  %v502 = vunpack.c.h.b16 %v44
  %v503 = vunpack.c.l.b16 %v45
  %v504 = vunpack.c.h.b16 %v45
  %v505 = vunpack.c.l.b16 %v46
  %v506 = vunpack.c.h.b16 %v46
  %v507 = vunpack.c.l.b16 %v47
  %v508 = vunpack.c.h.b16 %v47
  %v509 = vunpack.c.l.b16 %v48
  %v510 = vunpack.c.h.b16 %v48
  %v511 = vunpack.c.l.b16 %v49
  %v512 = vunpack.c.l.b16 %v50
  %v513 = vunpack.c.h.b16 %v50
  %v514 = vunpack.c.l.b16 %v51
  %v515 = vunpack.c.h.b16 %v51
  %v516 = vunpack.c.l.b16 %v52
  %v517 = vunpack.c.h.b16 %v52
  %v518 = vunpack.c.l.b16 %v53
  %v519 = vunpack.c.h.b16 %v53
  %v520 = vunpack.c.l.b16 %v54
  %v521 = vunpack.c.h.b16 %v54
  %v522 = vunpack.c.l.b16 %v55
  %v523 = vunpack.c.h.b16 %v55
  %v524 = vunpack.c.l.b16 %v56
  %v525 = vunpack.c.l.b16 %v57
  %v526 = vunpack.c.h.b16 %v57
  %v527 = vunpack.c.l.b16 %v58
  %v528 = vunpack.c.h.b16 %v58
  %v529 = vunpack.c.l.b16 %v59
  %v530 = vunpack.c.h.b16 %v59
  %v531 = vunpack.c.l.b16 %v60
  %v532 = vunpack.c.h.b16 %v60
  %v533 = vunpack.c.l.b16 %v61
  %v534 = vunpack.c.h.b16 %v61
  %v535 = vunpack.c.l.b16 %v62
  %v536 = vunpack.c.h.b16 %v62
  %v537 = vunpack.c.l.b16 %v63
  %v538 = vunpack.c.l.b16 %v64
  %v539 = vunpack.c.h.b16 %v64
  %v540 = vunpack.c.l.b16 %v65
  %v541 = vunpack.c.h.b16 %v65
  %v542 = vunpack.c.l.b16 %v66
  %v543 = vunpack.c.h.b16 %v66
  %v544 = vunpack.c.l.b16 %v67
  %v545 = vunpack.c.h.b16 %v67
  %v546 = vunpack.c.l.b16 %v68
  %v547 = vunpack.c.h.b16 %v68
  %v548 = vunpack.c.l.b16 %v69
  %v549 = vunpack.c.h.b16 %v69
  %v550 = vunpack.c.l.b16 %v70
  %v551 = vunpack.c.l.b16 %v71
  %v552 = vunpack.c.h.b16 %v71
  %v553 = vunpack.c.l.b16 %v72
  %v554 = vunpack.c.h.b16 %v72
  %v555 = vunpack.c.l.b16 %v73
  %v556 = vunpack.c.h.b16 %v73
  %v557 = vunpack.c.l.b16 %v74
  %v558 = vunpack.c.h.b16 %v74
  %v559 = vunpack.c.l.b16 %v75
  %v560 = vunpack.c.h.b16 %v75
  %v561 = vunpack.c.l.b16 %v76
  %v562 = vunpack.c.h.b16 %v76
  %v563 = vunpack.c.l.b16 %v77
  %v564 = vunpack.c.l.b16 %v78
  %v565 = vunpack.c.h.b16 %v78
  %v566 = vunpack.c.l.b16 %v79
  %v567 = vunpack.c.h.b16 %v79
  %v568 = vunpack.c.l.b16 %v80
  %v569 = vunpack.c.h.b16 %v80
  %v570 = vunpack.c.l.b16 %v81
  %v571 = vunpack.c.h.b16 %v81
  %v572 = vunpack.c.l.b16 %v82
  %v573 = vunpack.c.h.b16 %v82
  %v574 = vunpack.c.l.b16 %v83
  %v575 = vunpack.c.h.b16 %v83
  %v576 = vunpack.c.l.b16 %v84
  %v577 = vunpack.c.l.b16 %v85
  %v578 = vunpack.c.h.b16 %v85
  %v579 = vunpack.c.l.b16 %v86
  %v580 = vunpack.c.h.b16 %v86
  %v581 = vunpack.c.l.b16 %v87
  %v582 = vunpack.c.h.b16 %v87
  %v583 = vunpack.c.l.b16 %v88
  %v584 = vunpack.c.h.b16 %v88
  %v585 = vunpack.c.l.b16 %v89
  %v586 = vunpack.c.h.b16 %v89
  %v587 = vunpack.c.l.b16 %v90
  %v588 = vunpack.c.h.b16 %v90
  %v589 = vunpack.c.l.b16 %v91
  %v590 = vunpack.c.l.b16 %v92
  %v591 = vunpack.c.h.b16 %v92
  %v592 = vunpack.c.l.b16 %v93
  %v593 = vunpack.c.h.b16 %v93
  %v594 = vunpack.c.l.b16 %v94
  %v595 = vunpack.c.h.b16 %v94
  %v596 = vunpack.c.l.b16 %v95
  %v597 = vunpack.c.h.b16 %v95
  %v598 = vunpack.c.l.b16 %v96
  %v599 = vunpack.c.h.b16 %v96
  %v600 = vunpack.c.l.b16 %v97
  %v601 = vunpack.c.h.b16 %v97
  %v602 = vunpack.c.l.b16 %v98
  %v603 = vunpack.c.l.b16 %v99
  %v604 = vunpack.c.h.b16 %v99
  %v605 = vunpack.c.l.b16 %v100
  %v606 = vunpack.c.h.b16 %v100
  %v607 = vunpack.c.l.b16 %v101
  %v608 = vunpack.c.h.b16 %v101
  %v609 = vunpack.c.l.b16 %v102
  %v610 = vunpack.c.h.b16 %v102
  %v611 = vunpack.c.l.b16 %v103
  %v612 = vunpack.c.h.b16 %v103
  %v613 = vunpack.c.l.b16 %v104
  %v614 = vunpack.c.h.b16 %v104
  %v615 = vunpack.c.l.b16 %v105
  %v616 = vunpack.c.l.b16 %v106
  %v617 = vunpack.c.h.b16 %v106
  %v618 = vunpack.c.l.b16 %v107
  %v619 = vunpack.c.h.b16 %v107
  %v620 = vunpack.c.l.b16 %v108
  %v621 = vunpack.c.h.b16 %v108
  %v622 = vunpack.c.l.b16 %v109
  %v623 = vunpack.c.h.b16 %v109
  %v624 = vunpack.c.l.b16 %v110
  %v625 = vunpack.c.h.b16 %v110
  %v626 = vunpack.c.l.b16 %v111
  %v627 = vunpack.c.h.b16 %v111
  %v628 = vunpack.c.l.b16 %v112
  %v629 = vunpack.c.l.b16 %v113
  %v630 = vunpack.c.h.b16 %v113
  %v631 = vunpack.c.l.b16 %v114
  %v632 = vunpack.c.h.b16 %v114
  %v633 = vunpack.c.l.b16 %v115
  %v634 = vunpack.c.h.b16 %v115
  %v635 = vunpack.c.l.b16 %v116
  %v636 = vunpack.c.h.b16 %v116
  %v637 = vunpack.c.l.b16 %v117
  %v638 = vunpack.c.h.b16 %v117
  %v639 = vunpack.c.l.b16 %v118
  %v640 = vunpack.c.h.b16 %v118
  %v641 = vunpack.c.l.b16 %v119
  %v642 = vunpack.c.l.b16 %v120
  %v643 = vunpack.c.h.b16 %v120
  %v644 = vunpack.c.l.b16 %v121
  %v645 = vunpack.c.h.b16 %v121
  %v646 = vunpack.c.l.b16 %v122
  %v647 = vunpack.c.h.b16 %v122
  %v648 = vunpack.c.l.b16 %v123
  %v649 = vunpack.c.h.b16 %v123
  %v650 = vunpack.c.l.b16 %v124
  %v651 = vunpack.c.h.b16 %v124
  %v652 = vunpack.c.l.b16 %v125
  %v653 = vunpack.c.h.b16 %v125
  %v654 = vunpack.c.l.b16 %v126
  %v655 = vpack.c.b16 %v460, %v447
  %v656 = vpack.c.b16 %v461, %v448
  %v657 = vpack.c.b16 %v462, %v449
  %v658 = vpack.c.b16 %v463, %v450
  %v659 = vpack.c.b16 %v464, %v451
  %v660 = vpack.c.b16 %v465, %v452
  %v661 = vpack.c.b16 %v466, %v453
  %v662 = vpack.c.b16 %v467, %v454
  %v663 = vpack.c.b16 %v468, %v455
  %v664 = vpack.c.b16 %v469, %v456
  %v665 = vpack.c.b16 %v470, %v457
  %v666 = vpack.c.b16 %v471, %v458
  %v667 = vpack.c.b16 %v472, %v459
  %v668 = vpack.c.b16 %v486, %v473
  %v669 = vpack.c.b16 %v487, %v474
  %v670 = vpack.c.b16 %v488, %v475
  %v671 = vpack.c.b16 %v489, %v476
  %v672 = vpack.c.b16 %v490, %v477
  %v673 = vpack.c.b16 %v491, %v478
  %v674 = vpack.c.b16 %v492, %v479
  %v675 = vpack.c.b16 %v493, %v480
  %v676 = vpack.c.b16 %v494, %v481
  %v677 = vpack.c.b16 %v495, %v482
  %v678 = vpack.c.b16 %v496, %v483
  %v679 = vpack.c.b16 %v497, %v484
  %v680 = vpack.c.b16 %v498, %v485
  %v681 = vpack.c.b16 %v512, %v499
  %v682 = vpack.c.b16 %v513, %v500
  %v683 = vpack.c.b16 %v514, %v501
  %v684 = vpack.c.b16 %v515, %v502
  %v685 = vpack.c.b16 %v516, %v503
  %v686 = vpack.c.b16 %v517, %v504
  %v687 = vpack.c.b16 %v518, %v505
  %v688 = vpack.c.b16 %v519, %v506
  %v689 = vpack.c.b16 %v520, %v507
  %v690 = vpack.c.b16 %v521, %v508
  %v691 = vpack.c.b16 %v522, %v509
  %v692 = vpack.c.b16 %v523, %v510
  %v693 = vpack.c.b16 %v524, %v511
  %v694 = vpack.c.b16 %v538, %v525
  %v695 = vpack.c.b16 %v539, %v526
  %v696 = vpack.c.b16 %v540, %v527
  %v697 = vpack.c.b16 %v541, %v528
  %v698 = vpack.c.b16 %v542, %v529
  %v699 = vpack.c.b16 %v543, %v530
  %v700 = vpack.c.b16 %v544, %v531
  %v701 = vpack.c.b16 %v545, %v532
  %v702 = vpack.c.b16 %v546, %v533
  %v703 = vpack.c.b16 %v547, %v534
  %v704 = vpack.c.b16 %v548, %v535
  %v705 = vpack.c.b16 %v549, %v536
  %v706 = vpack.c.b16 %v550, %v537
  %v707 = vpack.c.b16 %v564, %v551
  %v708 = vpack.c.b16 %v565, %v552
  %v709 = vpack.c.b16 %v566, %v553
  %v710 = vpack.c.b16 %v567, %v554
  %v711 = vpack.c.b16 %v568, %v555
  %v712 = vpack.c.b16 %v569, %v556
  %v713 = vpack.c.b16 %v570, %v557
  %v714 = vpack.c.b16 %v571, %v558
  %v715 = vpack.c.b16 %v572, %v559
  %v716 = vpack.c.b16 %v573, %v560
  %v717 = vpack.c.b16 %v574, %v561
  %v718 = vpack.c.b16 %v575, %v562
  %v719 = vpack.c.b16 %v576, %v563
  %v720 = vpack.c.b16 %v590, %v577
  %v721 = vpack.c.b16 %v591, %v578
  %v722 = vpack.c.b16 %v592, %v579
  %v723 = vpack.c.b16 %v593, %v580
  %v724 = vpack.c.b16 %v594, %v581
  %v725 = vpack.c.b16 %v595, %v582
  %v726 = vpack.c.b16 %v596, %v583
  %v727 = vpack.c.b16 %v597, %v584
  %v728 = vpack.c.b16 %v598, %v585
  %v729 = vpack.c.b16 %v599, %v586
  %v730 = vpack.c.b16 %v600, %v587
  %v731 = vpack.c.b16 %v601, %v588
  %v732 = vpack.c.b16 %v602, %v589
  %v733 = vpack.c.b16 %v616, %v603
  %v734 = vpack.c.b16 %v617, %v604
  %v735 = vpack.c.b16 %v618, %v605
  %v736 = vpack.c.b16 %v619, %v606
  %v737 = vpack.c.b16 %v620, %v607
  %v738 = vpack.c.b16 %v621, %v608
  %v739 = vpack.c.b16 %v622, %v609
  %v740 = vpack.c.b16 %v623, %v610
  %v741 = vpack.c.b16 %v624, %v611
  %v742 = vpack.c.b16 %v625, %v612
  %v743 = vpack.c.b16 %v626, %v613
  %v744 = vpack.c.b16 %v627, %v614
  %v745 = vpack.c.b16 %v628, %v615
  %v746 = vpack.c.b16 %v642, %v629
  %v747 = vpack.c.b16 %v643, %v630
  %v748 = vpack.c.b16 %v644, %v631
  %v749 = vpack.c.b16 %v645, %v632
  %v750 = vpack.c.b16 %v646, %v633
  %v751 = vpack.c.b16 %v647, %v634
  %v752 = vpack.c.b16 %v648, %v635
  %v753 = vpack.c.b16 %v649, %v636
  %v754 = vpack.c.b16 %v650, %v637
  %v755 = vpack.c.b16 %v651, %v638
  %v756 = vpack.c.b16 %v652, %v639
  %v757 = vpack.c.b16 %v653, %v640
  %v758 = vpack.c.b16 %v654, %v641
  %v1071 = vunpack.c.l.b16 %v127
  %v1072 = vunpack.c.l.b16 %v128
  %v1073 = vunpack.c.l.b16 %v129
  %v1074 = vunpack.c.l.b16 %v130
  %v1075 = vunpack.c.l.b16 %v131
  %v1076 = vunpack.c.l.b16 %v132
  %v1077 = vunpack.c.l.b16 %v133
  %v1078 = vunpack.c.l.b16 %v134
  %v1079 = vunpack.c.l.b16 %v135
  %v1080 = vunpack.c.l.b16 %v136
  %v1081 = vunpack.c.l.b16 %v137
  %v1082 = vunpack.c.l.b16 %v138
  %v1083 = vunpack.c.l.b16 %v139
  %v1084 = vunpack.c.l.b16 %v140
  %v1085 = vunpack.c.l.b16 %v141
  %v1086 = vunpack.c.l.b16 %v142
  %v1087 = vunpack.c.l.b16 %v143
  %v1088 = vunpack.c.l.b16 %v144
  %v1089 = vunpack.c.l.b16 %v145
  %v1090 = vunpack.c.l.b16 %v146
  %v1091 = vunpack.c.l.b16 %v147
  %v1092 = vunpack.c.l.b16 %v148
  %v1093 = vunpack.c.l.b16 %v149
  %v1094 = vunpack.c.l.b16 %v150
  %v1095 = vunpack.c.l.b16 %v151
  %v1096 = vunpack.c.l.b16 %v152
  %v1097 = vunpack.c.l.b16 %v153
  %v1098 = vunpack.c.l.b16 %v154
  %v1099 = vunpack.c.l.b16 %v155
  %v1100 = vunpack.c.l.b16 %v156
  %v1101 = vunpack.c.l.b16 %v157
  %v1102 = vunpack.c.l.b16 %v158
  %v1103 = vunpack.c.l.b16 %v159
  %v1104 = vunpack.c.l.b16 %v160
  %v1105 = vunpack.c.l.b16 %v161
  %v1106 = vunpack.c.l.b16 %v162
  %v1107 = vunpack.c.l.b16 %v163
  %v1108 = vunpack.c.l.b16 %v164
  %v1109 = vunpack.c.l.b16 %v165
  %v1110 = vunpack.c.l.b16 %v166
  %v1111 = vunpack.c.l.b16 %v167
  %v1112 = vunpack.c.l.b16 %v168
  %v1113 = vunpack.c.l.b16 %v169
  %v1114 = vunpack.c.l.b16 %v170
  %v1115 = vunpack.c.l.b16 %v171
  %v1116 = vunpack.c.l.b16 %v172
  %v1117 = vunpack.c.l.b16 %v173
  %v1118 = vunpack.c.l.b16 %v174
  %v1119 = vunpack.c.l.b16 %v175
  %v1120 = vunpack.c.l.b16 %v176
  %v1121 = vunpack.c.l.b16 %v177
  %v1122 = vunpack.c.l.b16 %v178
  %v1123 = vunpack.c.l.b16 %v179
  %v1124 = vunpack.c.l.b16 %v180
  %v1125 = vunpack.c.l.b16 %v181
  %v1126 = vunpack.c.l.b16 %v182
  %v1127 = vunpack.c.l.b16 %v183
  %v1128 = vunpack.c.l.b16 %v184
  %v1129 = vunpack.c.l.b16 %v185
  %v1130 = vunpack.c.l.b16 %v186
  %v1131 = vunpack.c.l.b16 %v187
  %v1132 = vunpack.c.l.b16 %v188
  %v1133 = vunpack.c.l.b16 %v189
  %v1134 = vunpack.c.l.b16 %v190
  %v1135 = vunpack.c.l.b16 %v191
  %v1136 = vunpack.c.l.b16 %v192
  %v1137 = vunpack.c.l.b16 %v193
  %v1138 = vunpack.c.l.b16 %v194
  %v1139 = vunpack.c.l.b16 %v195
  %v1140 = vunpack.c.l.b16 %v196
  %v1141 = vunpack.c.l.b16 %v197
  %v1142 = vunpack.c.l.b16 %v198
  %v1143 = vunpack.c.l.b16 %v199
  %v1144 = vunpack.c.l.b16 %v200
  %v1145 = vunpack.c.l.b16 %v201
  %v1146 = vunpack.c.l.b16 %v202
  %v1147 = vunpack.c.l.b16 %v203
  %v1148 = vunpack.c.l.b16 %v204
  %v1149 = vunpack.c.l.b16 %v205
  %v1150 = vunpack.c.l.b16 %v206
  %v1151 = vunpack.c.l.b16 %v207
  %v1152 = vunpack.c.l.b16 %v208
  %v1153 = vunpack.c.l.b16 %v209
  %v1154 = vunpack.c.l.b16 %v210
  %v1155 = vunpack.c.l.b16 %v211
  %v1156 = vunpack.c.l.b16 %v212
  %v1157 = vunpack.c.l.b16 %v213
  %v1158 = vunpack.c.l.b16 %v214
  %v1159 = vunpack.c.l.b16 %v215
  %v1160 = vunpack.c.l.b16 %v216
  %v1161 = vunpack.c.l.b16 %v217
  %v1162 = vunpack.c.l.b16 %v218
  %v1163 = vunpack.c.l.b16 %v219
  %v1164 = vunpack.c.l.b16 %v220
  %v1165 = vunpack.c.l.b16 %v221
  %v1166 = vunpack.c.l.b16 %v222
  %v1167 = vunpack.c.l.b16 %v223
  %v1168 = vunpack.c.l.b16 %v224
  %v1169 = vunpack.c.l.b16 %v225
  %v1170 = vunpack.c.l.b16 %v226
  %v1171 = vunpack.c.l.b16 %v227
  %v1172 = vunpack.c.l.b16 %v228
  %v1173 = vunpack.c.l.b16 %v229
  %v1174 = vunpack.c.l.b16 %v230
  %v1175 = vunpack.c.l.b16 %v231
  %v1176 = vunpack.c.l.b16 %v232
  %v1177 = vunpack.c.l.b16 %v233
  %v1178 = vunpack.c.l.b16 %v234
  %v1179 = vunpack.c.l.b16 %v235
  %v1180 = vunpack.c.l.b16 %v236
  %v1181 = vunpack.c.l.b16 %v237
  %v1182 = vunpack.c.l.b16 %v238
  %v1183 = vunpack.c.l.b16 %v239
  %v1184 = vunpack.c.l.b16 %v240
  %v1185 = vunpack.c.l.b16 %v241
  %v1186 = vunpack.c.l.b16 %v242
  %v1187 = vunpack.c.l.b16 %v243
  %v1188 = vunpack.c.l.b16 %v244
  %v1189 = vunpack.c.l.b16 %v245
  %v1190 = vunpack.c.l.b16 %v246
  %v1191 = vunpack.c.l.b16 %v247
  %v1192 = vunpack.c.l.b16 %v248
  %v1193 = vunpack.c.l.b16 %v249
  %v1194 = vunpack.c.l.b16 %v250
  %v1195 = vunpack.c.l.b16 %v251
  %v1196 = vunpack.c.l.b16 %v252
  %v1197 = vunpack.c.l.b16 %v253
  %v1198 = vunpack.c.l.b16 %v254
  %v1199 = vunpack.c.l.b16 %v255
  %v1200 = vunpack.c.l.b16 %v256
  %v1201 = vunpack.c.l.b16 %v257
  %v1202 = vunpack.c.l.b16 %v258
  %v1203 = vunpack.c.l.b16 %v259
  %v1204 = vunpack.c.l.b16 %v260
  %v1205 = vunpack.c.l.b16 %v261
  %v1206 = vunpack.c.l.b16 %v262
  %v1207 = vunpack.c.l.b16 %v263
  %v1208 = vunpack.c.l.b16 %v264
  %v1209 = vunpack.c.l.b16 %v265
  %v1210 = vunpack.c.l.b16 %v266
  %v1211 = vunpack.c.l.b16 %v267
  %v1212 = vunpack.c.l.b16 %v268
  %v1213 = vunpack.c.l.b16 %v269
  %v1214 = vunpack.c.l.b16 %v270
  %v1215 = vunpack.c.l.b16 %v271
  %v1216 = vunpack.c.l.b16 %v272
  %v1217 = vunpack.c.l.b16 %v273
  %v1218 = vunpack.c.l.b16 %v274
  %v1219 = vunpack.c.l.b16 %v275
  %v1220 = vunpack.c.l.b16 %v276
  %v1221 = vunpack.c.l.b16 %v277
  %v1222 = vunpack.c.l.b16 %v278
  %v1223 = vunpack.c.l.b16 %v279
  %v1224 = vunpack.c.l.b16 %v280
  %v1225 = vunpack.c.l.b16 %v281
  %v1226 = vunpack.c.l.b16 %v282
  %v1227 = vunpack.c.l.b16 %v283
  %v1228 = vunpack.c.l.b16 %v284
  %v1229 = vunpack.c.l.b16 %v285
  %v1230 = vunpack.c.l.b16 %v286
  %v1231 = vunpack.c.l.b16 %v287
  %v1232 = vunpack.c.l.b16 %v288
  %v1233 = vunpack.c.l.b16 %v289
  %v1234 = vunpack.c.l.b16 %v290
  %v1235 = vunpack.c.l.b16 %v291
  %v1236 = vunpack.c.l.b16 %v292
  %v1237 = vunpack.c.l.b16 %v293
  %v1238 = vunpack.c.l.b16 %v294
  %v1239 = vunpack.c.l.b16 %v295
  %v1240 = vunpack.c.l.b16 %v296
  %v1241 = vunpack.c.l.b16 %v297
  %v1242 = vunpack.c.l.b16 %v298
  %v1243 = vunpack.c.l.b16 %v299
  %v1244 = vunpack.c.l.b16 %v300
  %v1245 = vunpack.c.l.b16 %v301
  %v1246 = vunpack.c.l.b16 %v302
  %v1247 = vunpack.c.l.b16 %v303
  %v1248 = vunpack.c.l.b16 %v304
  %v1249 = vunpack.c.l.b16 %v305
  %v1250 = vunpack.c.l.b16 %v306
  %v1251 = vunpack.c.l.b16 %v307
  %v1252 = vunpack.c.l.b16 %v308
  %v1253 = vunpack.c.l.b16 %v309
  %v1254 = vunpack.c.l.b16 %v310
  %v1255 = vunpack.c.l.b16 %v311
  %v1256 = vunpack.c.l.b16 %v312
  %v1257 = vunpack.c.l.b16 %v313
  %v1258 = vunpack.c.l.b16 %v314
  %v1259 = vunpack.c.l.b16 %v315
  %v1260 = vunpack.c.l.b16 %v316
  %v1261 = vunpack.c.l.b16 %v317
  %v1262 = vunpack.c.l.b16 %v318
  %v1263 = vunpack.c.l.b16 %v319
  %v1264 = vunpack.c.l.b16 %v320
  %v1265 = vunpack.c.l.b16 %v321
  %v1266 = vunpack.c.l.b16 %v322
  %v1267 = vunpack.c.l.b16 %v323
  %v1268 = vunpack.c.l.b16 %v324
  %v1269 = vunpack.c.l.b16 %v325
  %v1270 = vunpack.c.l.b16 %v326
  %v1271 = vunpack.c.l.b16 %v327
  %v1272 = vunpack.c.l.b16 %v328
  %v1273 = vunpack.c.l.b16 %v329
  %v1274 = vunpack.c.l.b16 %v330
  %v1275 = vunpack.c.l.b16 %v331
  %v1276 = vunpack.c.l.b16 %v332
  %v1277 = vunpack.c.l.b16 %v333
  %v1278 = vunpack.c.l.b16 %v334
  %v1279 = vpack.c.b16 %v1072, %v1071
  %v1280 = vpack.c.b16 %v1074, %v1073
  %v1281 = vpack.c.b16 %v1076, %v1075
  %v1282 = vpack.c.b16 %v1078, %v1077
  %v1283 = vpack.c.b16 %v1080, %v1079
  %v1284 = vpack.c.b16 %v1082, %v1081
  %v1285 = vpack.c.b16 %v1084, %v1083
  %v1286 = vpack.c.b16 %v1086, %v1085
  %v1287 = vpack.c.b16 %v1088, %v1087
  %v1288 = vpack.c.b16 %v1090, %v1089
  %v1289 = vpack.c.b16 %v1092, %v1091
  %v1290 = vpack.c.b16 %v1094, %v1093
  %v1291 = vpack.c.b16 %v1096, %v1095
  %v1292 = vpack.c.b16 %v1098, %v1097
  %v1293 = vpack.c.b16 %v1100, %v1099
  %v1294 = vpack.c.b16 %v1102, %v1101
  %v1295 = vpack.c.b16 %v1104, %v1103
  %v1296 = vpack.c.b16 %v1106, %v1105
  %v1297 = vpack.c.b16 %v1108, %v1107
  %v1298 = vpack.c.b16 %v1110, %v1109
  %v1299 = vpack.c.b16 %v1112, %v1111
  %v1300 = vpack.c.b16 %v1114, %v1113
  %v1301 = vpack.c.b16 %v1116, %v1115
  %v1302 = vpack.c.b16 %v1118, %v1117
  %v1303 = vpack.c.b16 %v1120, %v1119
  %v1304 = vpack.c.b16 %v1122, %v1121
  %v1305 = vpack.c.b16 %v1124, %v1123
  %v1306 = vpack.c.b16 %v1126, %v1125
  %v1307 = vpack.c.b16 %v1128, %v1127
  %v1308 = vpack.c.b16 %v1130, %v1129
  %v1309 = vpack.c.b16 %v1132, %v1131
  %v1310 = vpack.c.b16 %v1134, %v1133
  %v1311 = vpack.c.b16 %v1136, %v1135
  %v1312 = vpack.c.b16 %v1138, %v1137
  %v1313 = vpack.c.b16 %v1140, %v1139
  %v1314 = vpack.c.b16 %v1142, %v1141
  %v1315 = vpack.c.b16 %v1144, %v1143
  %v1316 = vpack.c.b16 %v1146, %v1145
  %v1317 = vpack.c.b16 %v1148, %v1147
  %v1318 = vpack.c.b16 %v1150, %v1149
  %v1319 = vpack.c.b16 %v1152, %v1151
  %v1320 = vpack.c.b16 %v1154, %v1153
  %v1321 = vpack.c.b16 %v1156, %v1155
  %v1322 = vpack.c.b16 %v1158, %v1157
  %v1323 = vpack.c.b16 %v1160, %v1159
  %v1324 = vpack.c.b16 %v1162, %v1161
  %v1325 = vpack.c.b16 %v1164, %v1163
  %v1326 = vpack.c.b16 %v1166, %v1165
  %v1327 = vpack.c.b16 %v1168, %v1167
  %v1328 = vpack.c.b16 %v1170, %v1169
  %v1329 = vpack.c.b16 %v1172, %v1171
  %v1330 = vpack.c.b16 %v1174, %v1173
  %v1331 = vpack.c.b16 %v1176, %v1175
  %v1332 = vpack.c.b16 %v1178, %v1177
  %v1333 = vpack.c.b16 %v1180, %v1179
  %v1334 = vpack.c.b16 %v1182, %v1181
  %v1335 = vpack.c.b16 %v1184, %v1183
  %v1336 = vpack.c.b16 %v1186, %v1185
  %v1337 = vpack.c.b16 %v1188, %v1187
  %v1338 = vpack.c.b16 %v1190, %v1189
  %v1339 = vpack.c.b16 %v1192, %v1191
  %v1340 = vpack.c.b16 %v1194, %v1193
  %v1341 = vpack.c.b16 %v1196, %v1195
  %v1342 = vpack.c.b16 %v1198, %v1197
  %v1343 = vpack.c.b16 %v1200, %v1199
  %v1344 = vpack.c.b16 %v1202, %v1201
  %v1345 = vpack.c.b16 %v1204, %v1203
  %v1346 = vpack.c.b16 %v1206, %v1205
  %v1347 = vpack.c.b16 %v1208, %v1207
  %v1348 = vpack.c.b16 %v1210, %v1209
  %v1349 = vpack.c.b16 %v1212, %v1211
  %v1350 = vpack.c.b16 %v1214, %v1213
  %v1351 = vpack.c.b16 %v1216, %v1215
  %v1352 = vpack.c.b16 %v1218, %v1217
  %v1353 = vpack.c.b16 %v1220, %v1219
  %v1354 = vpack.c.b16 %v1222, %v1221
  %v1355 = vpack.c.b16 %v1224, %v1223
  %v1356 = vpack.c.b16 %v1226, %v1225
  %v1357 = vpack.c.b16 %v1228, %v1227
  %v1358 = vpack.c.b16 %v1230, %v1229
  %v1359 = vpack.c.b16 %v1232, %v1231
  %v1360 = vpack.c.b16 %v1234, %v1233
  %v1361 = vpack.c.b16 %v1236, %v1235
  %v1362 = vpack.c.b16 %v1238, %v1237
  %v1363 = vpack.c.b16 %v1240, %v1239
  %v1364 = vpack.c.b16 %v1242, %v1241
  %v1365 = vpack.c.b16 %v1244, %v1243
  %v1366 = vpack.c.b16 %v1246, %v1245
  %v1367 = vpack.c.b16 %v1248, %v1247
  %v1368 = vpack.c.b16 %v1250, %v1249
  %v1369 = vpack.c.b16 %v1252, %v1251
  %v1370 = vpack.c.b16 %v1254, %v1253
  %v1371 = vpack.c.b16 %v1256, %v1255
  %v1372 = vpack.c.b16 %v1258, %v1257
  %v1373 = vpack.c.b16 %v1260, %v1259
  %v1374 = vpack.c.b16 %v1262, %v1261
  %v1375 = vpack.c.b16 %v1264, %v1263
  %v1376 = vpack.c.b16 %v1266, %v1265
  %v1377 = vpack.c.b16 %v1268, %v1267
  %v1378 = vpack.c.b16 %v1270, %v1269
  %v1379 = vpack.c.b16 %v1272, %v1271
  %v1380 = vpack.c.b16 %v1274, %v1273
  %v1381 = vpack.c.b16 %v1276, %v1275
  %v1382 = vpack.c.b16 %v1278, %v1277
  %1487 = vmatprep.subr.bf16.mxu0 0
  %1488 = vmatpush1.bf16.msra.mxu0 %v1279
  %1489 = vmatprep.subr.bf16.mxu0 0
  %1490 = vmatpush1.bf16.msra.mxu0 %v1280
  %1491 = vmatprep.subr.bf16.mxu0 0
  %1492 = vmatpush1.bf16.msra.mxu0 %v1281
  %1493 = vmatprep.subr.bf16.mxu0 0
  %1494 = vmatpush1.bf16.msra.mxu0 %v1282
  %1495 = vmatprep.subr.bf16.mxu0 0
  %1496 = vmatpush1.bf16.msra.mxu0 %v1283
  %1497 = vmatprep.subr.bf16.mxu0 0
  %1498 = vmatpush1.bf16.msra.mxu0 %v1284
  %1499 = vmatprep.subr.bf16.mxu0 0
  %1500 = vmatpush1.bf16.msra.mxu0 %v1285
  %1501 = vmatprep.subr.bf16.mxu0 0
  %1502 = vmatpush1.bf16.msra.mxu0 %v1286
  %1503 = vmatprep.subr.bf16.mxu0 0
  %1504 = vmatpush1.bf16.msra.mxu0 %v1287
  %1505 = vmatprep.subr.bf16.mxu0 0
  %1506 = vmatpush1.bf16.msra.mxu0 %v1288
  %1507 = vmatprep.subr.bf16.mxu0 0
  %1508 = vmatpush1.bf16.msra.mxu0 %v1289
  %1509 = vmatprep.subr.bf16.mxu0 0
  %1510 = vmatpush1.bf16.msra.mxu0 %v1290
  %1511 = vmatprep.subr.bf16.mxu0 0
  %1512 = vmatpush1.bf16.msra.mxu0 %v1291
  %1513 = vmatprep.subr.bf16.mxu0 0
  %1514 = vmatpush1.bf16.msra.mxu0 %v1292
  %1515 = vmatprep.subr.bf16.mxu0 0
  %1516 = vmatpush1.bf16.msra.mxu0 %v1293
  %1517 = vmatprep.subr.bf16.mxu0 0
  %1518 = vmatpush1.bf16.msra.mxu0 %v1294
  %1519 = vmatprep.mubr.bf16.mxu0 %v656
  %1520 = vmatmul.mubr.bf16.gmra.mrb[0].mxu0 %v655
  %v1521 = vpop.f32.mrb[0].mxu0
  %v1522 = vadd.f32 0.0, %v1521
  %v1523 = vpop.f32.mrb[0].mxu0
  %v1524 = vpop.f32.mrb[0].mxu0
  %v1525 = vadd.f32 0.0, %v1524
  %v1526 = vpop.f32.mrb[0].mxu0
  %1527 = vmatprep.mubr.bf16.mxu0 %v669
  %1528 = vmatmul.mubr.bf16.gmra.mrb[0].mxu0 %v668
  %v1529 = vpop.f32.mrb[0].mxu0
  %v1530 = vadd.f32 0.0, %v1529
  %v1531 = vpop.f32.mrb[0].mxu0
  %v1532 = vpop.f32.mrb[0].mxu0
  %v1533 = vadd.f32 0.0, %v1532
  %v1534 = vpop.f32.mrb[0].mxu0
  %1535 = vmatprep.mubr.bf16.mxu0 %v682
  %1536 = vmatmul.mubr.bf16.gmra.mrb[0].mxu0 %v681
  %v1537 = vpop.f32.mrb[0].mxu0
  %v1538 = vadd.f32 0.0, %v1537
  %v1539 = vpop.f32.mrb[0].mxu0
  %v1540 = vpop.f32.mrb[0].mxu0
  %v1541 = vadd.f32 0.0, %v1540
  %v1542 = vpop.f32.mrb[0].mxu0
  %1543 = vmatprep.mubr.bf16.mxu0 %v695
  %1544 = vmatmul.mubr.bf16.gmra.mrb[0].mxu0 %v694
  %v1545 = vpop.f32.mrb[0].mxu0
  %v1546 = vadd.f32 0.0, %v1545
  %v1547 = vpop.f32.mrb[0].mxu0
  %v1548 = vpop.f32.mrb[0].mxu0
  %v1549 = vadd.f32 0.0, %v1548
  %v1550 = vpop.f32.mrb[0].mxu0
  %1551 = vmatprep.mubr.bf16.mxu0 %v708
  %1552 = vmatmul.mubr.bf16.gmra.mrb[0].mxu0 %v707
  %v1553 = vpop.f32.mrb[0].mxu0
  %v1554 = vadd.f32 0.0, %v1553
  %v1555 = vpop.f32.mrb[0].mxu0
  %v1556 = vpop.f32.mrb[0].mxu0
  %v1557 = vadd.f32 0.0, %v1556
  %v1558 = vpop.f32.mrb[0].mxu0
  %1559 = vmatprep.mubr.bf16.mxu0 %v721
  %1560 = vmatmul.mubr.bf16.gmra.mrb[0].mxu0 %v720
  %v1561 = vpop.f32.mrb[0].mxu0
  %v1562 = vadd.f32 0.0, %v1561
  %v1563 = vpop.f32.mrb[0].mxu0
  %v1564 = vpop.f32.mrb[0].mxu0
  %v1565 = vadd.f32 0.0, %v1564
  %v1566 = vpop.f32.mrb[0].mxu0
  %1567 = vmatprep.mubr.bf16.mxu0 %v734
  %1568 = vmatmul.mubr.bf16.gmra.mrb[0].mxu0 %v733
  %v1569 = vpop.f32.mrb[0].mxu0
  %v1570 = vadd.f32 0.0, %v1569
  %v1571 = vpop.f32.mrb[0].mxu0
  %v1572 = vpop.f32.mrb[0].mxu0
  %v1573 = vadd.f32 0.0, %v1572
  %v1574 = vpop.f32.mrb[0].mxu0
  %1575 = vmatprep.mubr.bf16.mxu0 %v747
  %1576 = vmatmul.mubr.bf16.gmra.mrb[0].mxu0 %v746
  %v1577 = vpop.f32.mrb[0].mxu0
  %v1578 = vadd.f32 0.0, %v1577
  %v1579 = vpop.f32.mrb[0].mxu0
  %v1580 = vpop.f32.mrb[0].mxu0
  %v1581 = vadd.f32 0.0, %v1580
  %v1582 = vpop.f32.mrb[0].mxu0
  %1583 = vdwg.mxu0
  %1584 = vmatprep.subr.bf16.mxu0 0
  %1585 = vmatpush1.bf16.msra.mxu0 %v1295
  %1586 = vmatprep.subr.bf16.mxu0 0
  %1587 = vmatpush1.bf16.msra.mxu0 %v1296
  %1588 = vmatprep.subr.bf16.mxu0 0
  %1589 = vmatpush1.bf16.msra.mxu0 %v1297
  %1590 = vmatprep.subr.bf16.mxu0 0
  %1591 = vmatpush1.bf16.msra.mxu0 %v1298
  %1592 = vmatprep.subr.bf16.mxu0 0
  %1593 = vmatpush1.bf16.msra.mxu0 %v1299
  %1594 = vmatprep.subr.bf16.mxu0 0
  %1595 = vmatpush1.bf16.msra.mxu0 %v1300
  %1596 = vmatprep.subr.bf16.mxu0 0
  %1597 = vmatpush1.bf16.msra.mxu0 %v1301
  %1598 = vmatprep.subr.bf16.mxu0 0
  %1599 = vmatpush1.bf16.msra.mxu0 %v1302
  %1600 = vmatprep.subr.bf16.mxu0 0
  %1601 = vmatpush1.bf16.msra.mxu0 %v1303
  %1602 = vmatprep.subr.bf16.mxu0 0
  %1603 = vmatpush1.bf16.msra.mxu0 %v1304
  %1604 = vmatprep.subr.bf16.mxu0 0
  %1605 = vmatpush1.bf16.msra.mxu0 %v1305
  %1606 = vmatprep.subr.bf16.mxu0 0
  %1607 = vmatpush1.bf16.msra.mxu0 %v1306
  %1608 = vmatprep.subr.bf16.mxu0 0
  %1609 = vmatpush1.bf16.msra.mxu0 %v1307
  %1610 = vmatprep.subr.bf16.mxu0 0
  %1611 = vmatpush1.bf16.msra.mxu0 %v1308
  %1612 = vmatprep.subr.bf16.mxu0 0
  %1613 = vmatpush1.bf16.msra.mxu0 %v1309
  %1614 = vmatprep.subr.bf16.mxu0 0
  %1615 = vmatpush1.bf16.msra.mxu0 %v1310
  %1616 = vmatprep.mubr.bf16.mxu0 %v658
  %1617 = vmatmul.mubr.bf16.gmra.mrb[0].mxu0 %v657
  %v1618 = vpop.f32.mrb[0].mxu0
  %v1619 = vadd.f32 %v1522, %v1618
  %v1620 = vpop.f32.mrb[0].mxu0
  %v1621 = vpop.f32.mrb[0].mxu0
  %v1622 = vadd.f32 %v1525, %v1621
  %v1623 = vpop.f32.mrb[0].mxu0
  %1624 = vmatprep.mubr.bf16.mxu0 %v671
  %1625 = vmatmul.mubr.bf16.gmra.mrb[0].mxu0 %v670
  %v1626 = vpop.f32.mrb[0].mxu0
  %v1627 = vadd.f32 %v1530, %v1626
  %v1628 = vpop.f32.mrb[0].mxu0
  %v1629 = vpop.f32.mrb[0].mxu0
  %v1630 = vadd.f32 %v1533, %v1629
  %v1631 = vpop.f32.mrb[0].mxu0
  %1632 = vmatprep.mubr.bf16.mxu0 %v684
  %1633 = vmatmul.mubr.bf16.gmra.mrb[0].mxu0 %v683
  %v1634 = vpop.f32.mrb[0].mxu0
  %v1635 = vadd.f32 %v1538, %v1634
  %v1636 = vpop.f32.mrb[0].mxu0
  %v1637 = vpop.f32.mrb[0].mxu0
  %v1638 = vadd.f32 %v1541, %v1637
  %v1639 = vpop.f32.mrb[0].mxu0
  %1640 = vmatprep.mubr.bf16.mxu0 %v697
  %1641 = vmatmul.mubr.bf16.gmra.mrb[0].mxu0 %v696
  %v1642 = vpop.f32.mrb[0].mxu0
  %v1643 = vadd.f32 %v1546, %v1642
  %v1644 = vpop.f32.mrb[0].mxu0
  %v1645 = vpop.f32.mrb[0].mxu0
  %v1646 = vadd.f32 %v1549, %v1645
  %v1647 = vpop.f32.mrb[0].mxu0
  %1648 = vmatprep.mubr.bf16.mxu0 %v710
  %1649 = vmatmul.mubr.bf16.gmra.mrb[0].mxu0 %v709
  %v1650 = vpop.f32.mrb[0].mxu0
  %v1651 = vadd.f32 %v1554, %v1650
  %v1652 = vpop.f32.mrb[0].mxu0
  %v1653 = vpop.f32.mrb[0].mxu0
  %v1654 = vadd.f32 %v1557, %v1653
  %v1655 = vpop.f32.mrb[0].mxu0
  %1656 = vmatprep.mubr.bf16.mxu0 %v723
  %1657 = vmatmul.mubr.bf16.gmra.mrb[0].mxu0 %v722
  %v1658 = vpop.f32.mrb[0].mxu0
  %v1659 = vadd.f32 %v1562, %v1658
  %v1660 = vpop.f32.mrb[0].mxu0
  %v1661 = vpop.f32.mrb[0].mxu0
  %v1662 = vadd.f32 %v1565, %v1661
  %v1663 = vpop.f32.mrb[0].mxu0
  %1664 = vmatprep.mubr.bf16.mxu0 %v736
  %1665 = vmatmul.mubr.bf16.gmra.mrb[0].mxu0 %v735
  %v1666 = vpop.f32.mrb[0].mxu0
  %v1667 = vadd.f32 %v1570, %v1666
  %v1668 = vpop.f32.mrb[0].mxu0
  %v1669 = vpop.f32.mrb[0].mxu0
  %v1670 = vadd.f32 %v1573, %v1669
  %v1671 = vpop.f32.mrb[0].mxu0
  %1672 = vmatprep.mubr.bf16.mxu0 %v749
  %1673 = vmatmul.mubr.bf16.gmra.mrb[0].mxu0 %v748
  %v1674 = vpop.f32.mrb[0].mxu0
  %v1675 = vadd.f32 %v1578, %v1674
  %v1676 = vpop.f32.mrb[0].mxu0
  %v1677 = vpop.f32.mrb[0].mxu0
  %v1678 = vadd.f32 %v1581, %v1677
  %v1679 = vpop.f32.mrb[0].mxu0
  %1680 = vdwg.mxu0
  %1681 = vmatprep.subr.bf16.mxu0 0
  %1682 = vmatpush1.bf16.msra.mxu0 %v1311
  %1683 = vmatprep.subr.bf16.mxu0 0
  %1684 = vmatpush1.bf16.msra.mxu0 %v1312
  %1685 = vmatprep.subr.bf16.mxu0 0
  %1686 = vmatpush1.bf16.msra.mxu0 %v1313
  %1687 = vmatprep.subr.bf16.mxu0 0
  %1688 = vmatpush1.bf16.msra.mxu0 %v1314
  %1689 = vmatprep.subr.bf16.mxu0 0
  %1690 = vmatpush1.bf16.msra.mxu0 %v1315
  %1691 = vmatprep.subr.bf16.mxu0 0
  %1692 = vmatpush1.bf16.msra.mxu0 %v1316
  %1693 = vmatprep.subr.bf16.mxu0 0
  %1694 = vmatpush1.bf16.msra.mxu0 %v1317
  %1695 = vmatprep.subr.bf16.mxu0 0
  %1696 = vmatpush1.bf16.msra.mxu0 %v1318
  %1697 = vmatprep.subr.bf16.mxu0 0
  %1698 = vmatpush1.bf16.msra.mxu0 %v1319
  %1699 = vmatprep.subr.bf16.mxu0 0
  %1700 = vmatpush1.bf16.msra.mxu0 %v1320
  %1701 = vmatprep.subr.bf16.mxu0 0
  %1702 = vmatpush1.bf16.msra.mxu0 %v1321
  %1703 = vmatprep.subr.bf16.mxu0 0
  %1704 = vmatpush1.bf16.msra.mxu0 %v1322
  %1705 = vmatprep.subr.bf16.mxu0 0
  %1706 = vmatpush1.bf16.msra.mxu0 %v1323
  %1707 = vmatprep.subr.bf16.mxu0 0
  %1708 = vmatpush1.bf16.msra.mxu0 %v1324
  %1709 = vmatprep.subr.bf16.mxu0 0
  %1710 = vmatpush1.bf16.msra.mxu0 %v1325
  %1711 = vmatprep.subr.bf16.mxu0 0
  %1712 = vmatpush1.bf16.msra.mxu0 %v1326
  %1713 = vmatprep.mubr.bf16.mxu0 %v660
  %1714 = vmatmul.mubr.bf16.gmra.mrb[0].mxu0 %v659
  %v1715 = vpop.f32.mrb[0].mxu0
  %v1716 = vadd.f32 %v1619, %v1715
  %v1717 = vpop.f32.mrb[0].mxu0
  %v1718 = vpop.f32.mrb[0].mxu0
  %v1719 = vadd.f32 %v1622, %v1718
  %v1720 = vpop.f32.mrb[0].mxu0
  %1721 = vmatprep.mubr.bf16.mxu0 %v673
  %1722 = vmatmul.mubr.bf16.gmra.mrb[0].mxu0 %v672
  %v1723 = vpop.f32.mrb[0].mxu0
  %v1724 = vadd.f32 %v1627, %v1723
  %v1725 = vpop.f32.mrb[0].mxu0
  %v1726 = vpop.f32.mrb[0].mxu0
  %v1727 = vadd.f32 %v1630, %v1726
  %v1728 = vpop.f32.mrb[0].mxu0
  %1729 = vmatprep.mubr.bf16.mxu0 %v686
  %1730 = vmatmul.mubr.bf16.gmra.mrb[0].mxu0 %v685
  %v1731 = vpop.f32.mrb[0].mxu0
  %v1732 = vadd.f32 %v1635, %v1731
  %v1733 = vpop.f32.mrb[0].mxu0
  %v1734 = vpop.f32.mrb[0].mxu0
  %v1735 = vadd.f32 %v1638, %v1734
  %v1736 = vpop.f32.mrb[0].mxu0
  %1737 = vmatprep.mubr.bf16.mxu0 %v699
  %1738 = vmatmul.mubr.bf16.gmra.mrb[0].mxu0 %v698
  %v1739 = vpop.f32.mrb[0].mxu0
  %v1740 = vadd.f32 %v1643, %v1739
  %v1741 = vpop.f32.mrb[0].mxu0
  %v1742 = vpop.f32.mrb[0].mxu0
  %v1743 = vadd.f32 %v1646, %v1742
  %v1744 = vpop.f32.mrb[0].mxu0
  %1745 = vmatprep.mubr.bf16.mxu0 %v712
  %1746 = vmatmul.mubr.bf16.gmra.mrb[0].mxu0 %v711
  %v1747 = vpop.f32.mrb[0].mxu0
  %v1748 = vadd.f32 %v1651, %v1747
  %v1749 = vpop.f32.mrb[0].mxu0
  %v1750 = vpop.f32.mrb[0].mxu0
  %v1751 = vadd.f32 %v1654, %v1750
  %v1752 = vpop.f32.mrb[0].mxu0
  %1753 = vmatprep.mubr.bf16.mxu0 %v725
  %1754 = vmatmul.mubr.bf16.gmra.mrb[0].mxu0 %v724
  %v1755 = vpop.f32.mrb[0].mxu0
  %v1756 = vadd.f32 %v1659, %v1755
  %v1757 = vpop.f32.mrb[0].mxu0
  %v1758 = vpop.f32.mrb[0].mxu0
  %v1759 = vadd.f32 %v1662, %v1758
  %v1760 = vpop.f32.mrb[0].mxu0
  %1761 = vmatprep.mubr.bf16.mxu0 %v738
  %1762 = vmatmul.mubr.bf16.gmra.mrb[0].mxu0 %v737
  %v1763 = vpop.f32.mrb[0].mxu0
  %v1764 = vadd.f32 %v1667, %v1763
  %v1765 = vpop.f32.mrb[0].mxu0
  %v1766 = vpop.f32.mrb[0].mxu0
  %v1767 = vadd.f32 %v1670, %v1766
  %v1768 = vpop.f32.mrb[0].mxu0
  %1769 = vmatprep.mubr.bf16.mxu0 %v751
  %1770 = vmatmul.mubr.bf16.gmra.mrb[0].mxu0 %v750
  %v1771 = vpop.f32.mrb[0].mxu0
  %v1772 = vadd.f32 %v1675, %v1771
  %v1773 = vpop.f32.mrb[0].mxu0
  %v1774 = vpop.f32.mrb[0].mxu0
  %v1775 = vadd.f32 %v1678, %v1774
  %v1776 = vpop.f32.mrb[0].mxu0
  %1777 = vdwg.mxu0
  %1778 = vmatprep.subr.bf16.mxu0 0
  %1779 = vmatpush1.bf16.msra.mxu0 %v1327
  %1780 = vmatprep.subr.bf16.mxu0 0
  %1781 = vmatpush1.bf16.msra.mxu0 %v1328
  %1782 = vmatprep.subr.bf16.mxu0 0
  %1783 = vmatpush1.bf16.msra.mxu0 %v1329
  %1784 = vmatprep.subr.bf16.mxu0 0
  %1785 = vmatpush1.bf16.msra.mxu0 %v1330
  %1786 = vmatprep.subr.bf16.mxu0 0
  %1787 = vmatpush1.bf16.msra.mxu0 %v1331
  %1788 = vmatprep.subr.bf16.mxu0 0
  %1789 = vmatpush1.bf16.msra.mxu0 %v1332
  %1790 = vmatprep.subr.bf16.mxu0 0
  %1791 = vmatpush1.bf16.msra.mxu0 %v1333
  %1792 = vmatprep.subr.bf16.mxu0 0
  %1793 = vmatpush1.bf16.msra.mxu0 %v1334
  %1794 = vmatprep.subr.bf16.mxu0 0
  %1795 = vmatpush1.bf16.msra.mxu0 %v1335
  %1796 = vmatprep.subr.bf16.mxu0 0
  %1797 = vmatpush1.bf16.msra.mxu0 %v1336
  %1798 = vmatprep.subr.bf16.mxu0 0
  %1799 = vmatpush1.bf16.msra.mxu0 %v1337
  %1800 = vmatprep.subr.bf16.mxu0 0
  %1801 = vmatpush1.bf16.msra.mxu0 %v1338
  %1802 = vmatprep.subr.bf16.mxu0 0
  %1803 = vmatpush1.bf16.msra.mxu0 %v1339
  %1804 = vmatprep.subr.bf16.mxu0 0
  %1805 = vmatpush1.bf16.msra.mxu0 %v1340
  %1806 = vmatprep.subr.bf16.mxu0 0
  %1807 = vmatpush1.bf16.msra.mxu0 %v1341
  %1808 = vmatprep.subr.bf16.mxu0 0
  %1809 = vmatpush1.bf16.msra.mxu0 %v1342
  %1810 = vmatprep.mubr.bf16.mxu0 %v662
  %1811 = vmatmul.mubr.bf16.gmra.mrb[0].mxu0 %v661
  %v1812 = vpop.f32.mrb[0].mxu0
  %v1813 = vadd.f32 %v1716, %v1812
  %v1814 = vpop.f32.mrb[0].mxu0
  %v1815 = vpop.f32.mrb[0].mxu0
  %v1816 = vadd.f32 %v1719, %v1815
  %v1817 = vpop.f32.mrb[0].mxu0
  %1818 = vmatprep.mubr.bf16.mxu0 %v675
  %1819 = vmatmul.mubr.bf16.gmra.mrb[0].mxu0 %v674
  %v1820 = vpop.f32.mrb[0].mxu0
  %v1821 = vadd.f32 %v1724, %v1820
  %v1822 = vpop.f32.mrb[0].mxu0
  %v1823 = vpop.f32.mrb[0].mxu0
  %v1824 = vadd.f32 %v1727, %v1823
  %v1825 = vpop.f32.mrb[0].mxu0
  %1826 = vmatprep.mubr.bf16.mxu0 %v688
  %1827 = vmatmul.mubr.bf16.gmra.mrb[0].mxu0 %v687
  %v1828 = vpop.f32.mrb[0].mxu0
  %v1829 = vadd.f32 %v1732, %v1828
  %v1830 = vpop.f32.mrb[0].mxu0
  %v1831 = vpop.f32.mrb[0].mxu0
  %v1832 = vadd.f32 %v1735, %v1831
  %v1833 = vpop.f32.mrb[0].mxu0
  %1834 = vmatprep.mubr.bf16.mxu0 %v701
  %1835 = vmatmul.mubr.bf16.gmra.mrb[0].mxu0 %v700
  %v1836 = vpop.f32.mrb[0].mxu0
  %v1837 = vadd.f32 %v1740, %v1836
  %v1838 = vpop.f32.mrb[0].mxu0
  %v1839 = vpop.f32.mrb[0].mxu0
  %v1840 = vadd.f32 %v1743, %v1839
  %v1841 = vpop.f32.mrb[0].mxu0
  %1842 = vmatprep.mubr.bf16.mxu0 %v714
  %1843 = vmatmul.mubr.bf16.gmra.mrb[0].mxu0 %v713
  %v1844 = vpop.f32.mrb[0].mxu0
  %v1845 = vadd.f32 %v1748, %v1844
  %v1846 = vpop.f32.mrb[0].mxu0
  %v1847 = vpop.f32.mrb[0].mxu0
  %v1848 = vadd.f32 %v1751, %v1847
  %v1849 = vpop.f32.mrb[0].mxu0
  %1850 = vmatprep.mubr.bf16.mxu0 %v727
  %1851 = vmatmul.mubr.bf16.gmra.mrb[0].mxu0 %v726
  %v1852 = vpop.f32.mrb[0].mxu0
  %v1853 = vadd.f32 %v1756, %v1852
  %v1854 = vpop.f32.mrb[0].mxu0
  %v1855 = vpop.f32.mrb[0].mxu0
  %v1856 = vadd.f32 %v1759, %v1855
  %v1857 = vpop.f32.mrb[0].mxu0
  %1858 = vmatprep.mubr.bf16.mxu0 %v740
  %1859 = vmatmul.mubr.bf16.gmra.mrb[0].mxu0 %v739
  %v1860 = vpop.f32.mrb[0].mxu0
  %v1861 = vadd.f32 %v1764, %v1860
  %v1862 = vpop.f32.mrb[0].mxu0
  %v1863 = vpop.f32.mrb[0].mxu0
  %v1864 = vadd.f32 %v1767, %v1863
  %v1865 = vpop.f32.mrb[0].mxu0
  %1866 = vmatprep.mubr.bf16.mxu0 %v753
  %1867 = vmatmul.mubr.bf16.gmra.mrb[0].mxu0 %v752
  %v1868 = vpop.f32.mrb[0].mxu0
  %v1869 = vadd.f32 %v1772, %v1868
  %v1870 = vpop.f32.mrb[0].mxu0
  %v1871 = vpop.f32.mrb[0].mxu0
  %v1872 = vadd.f32 %v1775, %v1871
  %v1873 = vpop.f32.mrb[0].mxu0
  %1874 = vdwg.mxu0
  %1875 = vmatprep.subr.bf16.mxu0 0
  %1876 = vmatpush1.bf16.msra.mxu0 %v1343
  %1877 = vmatprep.subr.bf16.mxu0 0
  %1878 = vmatpush1.bf16.msra.mxu0 %v1344
  %1879 = vmatprep.subr.bf16.mxu0 0
  %1880 = vmatpush1.bf16.msra.mxu0 %v1345
  %1881 = vmatprep.subr.bf16.mxu0 0
  %1882 = vmatpush1.bf16.msra.mxu0 %v1346
  %1883 = vmatprep.subr.bf16.mxu0 0
  %1884 = vmatpush1.bf16.msra.mxu0 %v1347
  %1885 = vmatprep.subr.bf16.mxu0 0
  %1886 = vmatpush1.bf16.msra.mxu0 %v1348
  %1887 = vmatprep.subr.bf16.mxu0 0
  %1888 = vmatpush1.bf16.msra.mxu0 %v1349
  %1889 = vmatprep.subr.bf16.mxu0 0
  %1890 = vmatpush1.bf16.msra.mxu0 %v1350
  %1891 = vmatprep.subr.bf16.mxu0 0
  %1892 = vmatpush1.bf16.msra.mxu0 %v1351
  %1893 = vmatprep.subr.bf16.mxu0 0
  %1894 = vmatpush1.bf16.msra.mxu0 %v1352
  %1895 = vmatprep.subr.bf16.mxu0 0
  %1896 = vmatpush1.bf16.msra.mxu0 %v1353
  %1897 = vmatprep.subr.bf16.mxu0 0
  %1898 = vmatpush1.bf16.msra.mxu0 %v1354
  %1899 = vmatprep.subr.bf16.mxu0 0
  %1900 = vmatpush1.bf16.msra.mxu0 %v1355
  %1901 = vmatprep.subr.bf16.mxu0 0
  %1902 = vmatpush1.bf16.msra.mxu0 %v1356
  %1903 = vmatprep.subr.bf16.mxu0 0
  %1904 = vmatpush1.bf16.msra.mxu0 %v1357
  %1905 = vmatprep.subr.bf16.mxu0 0
  %1906 = vmatpush1.bf16.msra.mxu0 %v1358
  %1907 = vmatprep.mubr.bf16.mxu0 %v664
  %1908 = vmatmul.mubr.bf16.gmra.mrb[0].mxu0 %v663
  %v1909 = vpop.f32.mrb[0].mxu0
  %v1910 = vadd.f32 %v1813, %v1909
  %v1911 = vpop.f32.mrb[0].mxu0
  %v1912 = vpop.f32.mrb[0].mxu0
  %v1913 = vadd.f32 %v1816, %v1912
  %v1914 = vpop.f32.mrb[0].mxu0
  %1915 = vmatprep.mubr.bf16.mxu0 %v677
  %1916 = vmatmul.mubr.bf16.gmra.mrb[0].mxu0 %v676
  %v1917 = vpop.f32.mrb[0].mxu0
  %v1918 = vadd.f32 %v1821, %v1917
  %v1919 = vpop.f32.mrb[0].mxu0
  %v1920 = vpop.f32.mrb[0].mxu0
  %v1921 = vadd.f32 %v1824, %v1920
  %v1922 = vpop.f32.mrb[0].mxu0
  %1923 = vmatprep.mubr.bf16.mxu0 %v690
  %1924 = vmatmul.mubr.bf16.gmra.mrb[0].mxu0 %v689
  %v1925 = vpop.f32.mrb[0].mxu0
  %v1926 = vadd.f32 %v1829, %v1925
  %v1927 = vpop.f32.mrb[0].mxu0
  %v1928 = vpop.f32.mrb[0].mxu0
  %v1929 = vadd.f32 %v1832, %v1928
  %v1930 = vpop.f32.mrb[0].mxu0
  %1931 = vmatprep.mubr.bf16.mxu0 %v703
  %1932 = vmatmul.mubr.bf16.gmra.mrb[0].mxu0 %v702
  %v1933 = vpop.f32.mrb[0].mxu0
  %v1934 = vadd.f32 %v1837, %v1933
  %v1935 = vpop.f32.mrb[0].mxu0
  %v1936 = vpop.f32.mrb[0].mxu0
  %v1937 = vadd.f32 %v1840, %v1936
  %v1938 = vpop.f32.mrb[0].mxu0
  %1939 = vmatprep.mubr.bf16.mxu0 %v716
  %1940 = vmatmul.mubr.bf16.gmra.mrb[0].mxu0 %v715
  %v1941 = vpop.f32.mrb[0].mxu0
  %v1942 = vadd.f32 %v1845, %v1941
  %v1943 = vpop.f32.mrb[0].mxu0
  %v1944 = vpop.f32.mrb[0].mxu0
  %v1945 = vadd.f32 %v1848, %v1944
  %v1946 = vpop.f32.mrb[0].mxu0
  %1947 = vmatprep.mubr.bf16.mxu0 %v729
  %1948 = vmatmul.mubr.bf16.gmra.mrb[0].mxu0 %v728
  %v1949 = vpop.f32.mrb[0].mxu0
  %v1950 = vadd.f32 %v1853, %v1949
  %v1951 = vpop.f32.mrb[0].mxu0
  %v1952 = vpop.f32.mrb[0].mxu0
  %v1953 = vadd.f32 %v1856, %v1952
  %v1954 = vpop.f32.mrb[0].mxu0
  %1955 = vmatprep.mubr.bf16.mxu0 %v742
  %1956 = vmatmul.mubr.bf16.gmra.mrb[0].mxu0 %v741
  %v1957 = vpop.f32.mrb[0].mxu0
  %v1958 = vadd.f32 %v1861, %v1957
  %v1959 = vpop.f32.mrb[0].mxu0
  %v1960 = vpop.f32.mrb[0].mxu0
  %v1961 = vadd.f32 %v1864, %v1960
  %v1962 = vpop.f32.mrb[0].mxu0
  %1963 = vmatprep.mubr.bf16.mxu0 %v755
  %1964 = vmatmul.mubr.bf16.gmra.mrb[0].mxu0 %v754
  %v1965 = vpop.f32.mrb[0].mxu0
  %v1966 = vadd.f32 %v1869, %v1965
  %v1967 = vpop.f32.mrb[0].mxu0
  %v1968 = vpop.f32.mrb[0].mxu0
  %v1969 = vadd.f32 %v1872, %v1968
  %v1970 = vpop.f32.mrb[0].mxu0
  %1971 = vdwg.mxu0
  %1972 = vmatprep.subr.bf16.mxu0 0
  %1973 = vmatpush1.bf16.msra.mxu0 %v1359
  %1974 = vmatprep.subr.bf16.mxu0 0
  %1975 = vmatpush1.bf16.msra.mxu0 %v1360
  %1976 = vmatprep.subr.bf16.mxu0 0
  %1977 = vmatpush1.bf16.msra.mxu0 %v1361
  %1978 = vmatprep.subr.bf16.mxu0 0
  %1979 = vmatpush1.bf16.msra.mxu0 %v1362
  %1980 = vmatprep.subr.bf16.mxu0 0
  %1981 = vmatpush1.bf16.msra.mxu0 %v1363
  %1982 = vmatprep.subr.bf16.mxu0 0
  %1983 = vmatpush1.bf16.msra.mxu0 %v1364
  %1984 = vmatprep.subr.bf16.mxu0 0
  %1985 = vmatpush1.bf16.msra.mxu0 %v1365
  %1986 = vmatprep.subr.bf16.mxu0 0
  %1987 = vmatpush1.bf16.msra.mxu0 %v1366
  %1988 = vmatprep.subr.bf16.mxu0 0
  %1989 = vmatpush1.bf16.msra.mxu0 %v1367
  %1990 = vmatprep.subr.bf16.mxu0 0
  %1991 = vmatpush1.bf16.msra.mxu0 %v1368
  %1992 = vmatprep.subr.bf16.mxu0 0
  %1993 = vmatpush1.bf16.msra.mxu0 %v1369
  %1994 = vmatprep.subr.bf16.mxu0 0
  %1995 = vmatpush1.bf16.msra.mxu0 %v1370
  %1996 = vmatprep.subr.bf16.mxu0 0
  %1997 = vmatpush1.bf16.msra.mxu0 %v1371
  %1998 = vmatprep.subr.bf16.mxu0 0
  %1999 = vmatpush1.bf16.msra.mxu0 %v1372
  %2000 = vmatprep.subr.bf16.mxu0 0
  %2001 = vmatpush1.bf16.msra.mxu0 %v1373
  %2002 = vmatprep.subr.bf16.mxu0 0
  %2003 = vmatpush1.bf16.msra.mxu0 %v1374
  %2004 = vmatprep.mubr.bf16.mxu0 %v666
  %2005 = vmatmul.mubr.bf16.gmra.mrb[0].mxu0 %v665
  %v2006 = vpop.f32.mrb[0].mxu0
  %v2007 = vadd.f32 %v1910, %v2006
  %v2008 = vpop.f32.mrb[0].mxu0
  %v2009 = vpop.f32.mrb[0].mxu0
  %v2010 = vadd.f32 %v1913, %v2009
  %v2011 = vpop.f32.mrb[0].mxu0
  %2012 = vmatprep.mubr.bf16.mxu0 %v679
  %2013 = vmatmul.mubr.bf16.gmra.mrb[0].mxu0 %v678
  %v2014 = vpop.f32.mrb[0].mxu0
  %v2015 = vadd.f32 %v1918, %v2014
  %v2016 = vpop.f32.mrb[0].mxu0
  %v2017 = vpop.f32.mrb[0].mxu0
  %v2018 = vadd.f32 %v1921, %v2017
  %v2019 = vpop.f32.mrb[0].mxu0
  %2020 = vmatprep.mubr.bf16.mxu0 %v692
  %2021 = vmatmul.mubr.bf16.gmra.mrb[0].mxu0 %v691
  %v2022 = vpop.f32.mrb[0].mxu0
  %v2023 = vadd.f32 %v1926, %v2022
  %v2024 = vpop.f32.mrb[0].mxu0
  %v2025 = vpop.f32.mrb[0].mxu0
  %v2026 = vadd.f32 %v1929, %v2025
  %v2027 = vpop.f32.mrb[0].mxu0
  %2028 = vmatprep.mubr.bf16.mxu0 %v705
  %2029 = vmatmul.mubr.bf16.gmra.mrb[0].mxu0 %v704
  %v2030 = vpop.f32.mrb[0].mxu0
  %v2031 = vadd.f32 %v1934, %v2030
  %v2032 = vpop.f32.mrb[0].mxu0
  %v2033 = vpop.f32.mrb[0].mxu0
  %v2034 = vadd.f32 %v1937, %v2033
  %v2035 = vpop.f32.mrb[0].mxu0
  %2036 = vmatprep.mubr.bf16.mxu0 %v718
  %2037 = vmatmul.mubr.bf16.gmra.mrb[0].mxu0 %v717
  %v2038 = vpop.f32.mrb[0].mxu0
  %v2039 = vadd.f32 %v1942, %v2038
  %v2040 = vpop.f32.mrb[0].mxu0
  %v2041 = vpop.f32.mrb[0].mxu0
  %v2042 = vadd.f32 %v1945, %v2041
  %v2043 = vpop.f32.mrb[0].mxu0
  %2044 = vmatprep.mubr.bf16.mxu0 %v731
  %2045 = vmatmul.mubr.bf16.gmra.mrb[0].mxu0 %v730
  %v2046 = vpop.f32.mrb[0].mxu0
  %v2047 = vadd.f32 %v1950, %v2046
  %v2048 = vpop.f32.mrb[0].mxu0
  %v2049 = vpop.f32.mrb[0].mxu0
  %v2050 = vadd.f32 %v1953, %v2049
  %v2051 = vpop.f32.mrb[0].mxu0
  %2052 = vmatprep.mubr.bf16.mxu0 %v744
  %2053 = vmatmul.mubr.bf16.gmra.mrb[0].mxu0 %v743
  %v2054 = vpop.f32.mrb[0].mxu0
  %v2055 = vadd.f32 %v1958, %v2054
  %v2056 = vpop.f32.mrb[0].mxu0
  %v2057 = vpop.f32.mrb[0].mxu0
  %v2058 = vadd.f32 %v1961, %v2057
  %v2059 = vpop.f32.mrb[0].mxu0
  %2060 = vmatprep.mubr.bf16.mxu0 %v757
  %2061 = vmatmul.mubr.bf16.gmra.mrb[0].mxu0 %v756
  %v2062 = vpop.f32.mrb[0].mxu0
  %v2063 = vadd.f32 %v1966, %v2062
  %v2064 = vpop.f32.mrb[0].mxu0
  %v2065 = vpop.f32.mrb[0].mxu0
  %v2066 = vadd.f32 %v1969, %v2065
  %v2067 = vpop.f32.mrb[0].mxu0
  %2068 = vdwg.mxu0
  %2069 = vmatprep.subr.bf16.mxu0 0
  %2070 = vmatpush1.bf16.msra.mxu0 %v1375
  %2071 = vmatprep.subr.bf16.mxu0 0
  %2072 = vmatpush1.bf16.msra.mxu0 %v1376
  %2073 = vmatprep.subr.bf16.mxu0 0
  %2074 = vmatpush1.bf16.msra.mxu0 %v1377
  %2075 = vmatprep.subr.bf16.mxu0 0
  %2076 = vmatpush1.bf16.msra.mxu0 %v1378
  %2077 = vmatprep.subr.bf16.mxu0 0
  %2078 = vmatpush1.bf16.msra.mxu0 %v1379
  %2079 = vmatprep.subr.bf16.mxu0 0
  %2080 = vmatpush1.bf16.msra.mxu0 %v1380
  %2081 = vmatprep.subr.bf16.mxu0 0
  %2082 = vmatpush1.bf16.msra.mxu0 %v1381
  %2083 = vmatprep.subr.bf16.mxu0 0
  %2084 = vmatpush1.bf16.msra.mxu0 %v1382
  %2085 = vmatprep.subr.bf16.mxu0 0
  %2086 = vmatpush1.bf16.msra.mxu0 0
  %2087 = vmatprep.subr.bf16.mxu0 0
  %2088 = vmatpush1.bf16.msra.mxu0 0
  %2089 = vmatprep.subr.bf16.mxu0 0
  %2090 = vmatpush1.bf16.msra.mxu0 0
  %2091 = vmatprep.subr.bf16.mxu0 0
  %2092 = vmatpush1.bf16.msra.mxu0 0
  %2093 = vmatprep.subr.bf16.mxu0 0
  %2094 = vmatpush1.bf16.msra.mxu0 0
  %2095 = vmatprep.subr.bf16.mxu0 0
  %2096 = vmatpush1.bf16.msra.mxu0 0
  %2097 = vmatprep.subr.bf16.mxu0 0
  %2098 = vmatpush1.bf16.msra.mxu0 0
  %2099 = vmatprep.subr.bf16.mxu0 0
  %2100 = vmatpush1.bf16.msra.mxu0 0
  %2101 = vmatprep.mubr.bf16.mxu0 0
  %2102 = vmatmul.mubr.bf16.gmra.mrb[0].mxu0 %v667
  %v2103 = vpop.f32.mrb[0].mxu0
  %v2104 = vadd.f32 %v2007, %v2103
  %v2105 = vpop.f32.mrb[0].mxu0
  %v2106 = vpop.f32.mrb[0].mxu0
  %v2107 = vadd.f32 %v2010, %v2106
  %v2108 = vpop.f32.mrb[0].mxu0
  %2109 = vmatprep.mubr.bf16.mxu0 0
  %2110 = vmatmul.mubr.bf16.gmra.mrb[0].mxu0 %v680
  %v2111 = vpop.f32.mrb[0].mxu0
  %v2112 = vadd.f32 %v2015, %v2111
  %v2113 = vpop.f32.mrb[0].mxu0
  %v2114 = vpop.f32.mrb[0].mxu0
  %v2115 = vadd.f32 %v2018, %v2114
  %v2116 = vpop.f32.mrb[0].mxu0
  %2117 = vmatprep.mubr.bf16.mxu0 0
  %2118 = vmatmul.mubr.bf16.gmra.mrb[0].mxu0 %v693
  %v2119 = vpop.f32.mrb[0].mxu0
  %v2120 = vadd.f32 %v2023, %v2119
  %v2121 = vpop.f32.mrb[0].mxu0
  %v2122 = vpop.f32.mrb[0].mxu0
  %v2123 = vadd.f32 %v2026, %v2122
  %v2124 = vpop.f32.mrb[0].mxu0
  %2125 = vmatprep.mubr.bf16.mxu0 0
  %2126 = vmatmul.mubr.bf16.gmra.mrb[0].mxu0 %v706
  %v2127 = vpop.f32.mrb[0].mxu0
  %v2128 = vadd.f32 %v2031, %v2127
  %v2129 = vpop.f32.mrb[0].mxu0
  %v2130 = vpop.f32.mrb[0].mxu0
  %v2131 = vadd.f32 %v2034, %v2130
  %v2132 = vpop.f32.mrb[0].mxu0
  %2133 = vmatprep.mubr.bf16.mxu0 0
  %2134 = vmatmul.mubr.bf16.gmra.mrb[0].mxu0 %v719
  %v2135 = vpop.f32.mrb[0].mxu0
  %v2136 = vadd.f32 %v2039, %v2135
  %v2137 = vpop.f32.mrb[0].mxu0
  %v2138 = vpop.f32.mrb[0].mxu0
  %v2139 = vadd.f32 %v2042, %v2138
  %v2140 = vpop.f32.mrb[0].mxu0
  %2141 = vmatprep.mubr.bf16.mxu0 0
  %2142 = vmatmul.mubr.bf16.gmra.mrb[0].mxu0 %v732
  %v2143 = vpop.f32.mrb[0].mxu0
  %v2144 = vadd.f32 %v2047, %v2143
  %v2145 = vpop.f32.mrb[0].mxu0
  %v2146 = vpop.f32.mrb[0].mxu0
  %v2147 = vadd.f32 %v2050, %v2146
  %v2148 = vpop.f32.mrb[0].mxu0
  %2149 = vmatprep.mubr.bf16.mxu0 0
  %2150 = vmatmul.mubr.bf16.gmra.mrb[0].mxu0 %v745
  %v2151 = vpop.f32.mrb[0].mxu0
  %v2152 = vadd.f32 %v2055, %v2151
  %v2153 = vpop.f32.mrb[0].mxu0
  %v2154 = vpop.f32.mrb[0].mxu0
  %v2155 = vadd.f32 %v2058, %v2154
  %v2156 = vpop.f32.mrb[0].mxu0
  %2157 = vmatprep.mubr.bf16.mxu0 0
  %2158 = vmatmul.mubr.bf16.gmra.mrb[0].mxu0 %v758
  %v2159 = vpop.f32.mrb[0].mxu0
  %v2160 = vadd.f32 %v2063, %v2159
  %v2161 = vpop.f32.mrb[0].mxu0
  %v2162 = vpop.f32.mrb[0].mxu0
  %v2163 = vadd.f32 %v2066, %v2162
  %v2164 = vpop.f32.mrb[0].mxu0
  %2165 = vdwg.mxu0
  %v2166 = vmax.f32 %v2104, %v2120
  %v2167 = vmax.f32 %v2107, %v2123
  %v2168 = vmax.f32 %v2112, %v2128
  %v2169 = vmax.f32 %v2115, %v2131
  %v2170 = vmax.f32 %v2166, %v2136
  %v2171 = vmax.f32 %v2167, %v2139
  %v2172 = vmax.f32 %v2168, %v2144
  %v2173 = vmax.f32 %v2169, %v2147
  %v2174 = vmax.f32 %v2170, %v2152
  %v2175 = vmax.f32 %v2171, %v2155
  %v2176 = vmax.f32 %v2172, %v2160
  %v2177 = vmax.f32 %v2173, %v2163
  %v2178 = vld [vmem:[%s2] sm:$0x1]
  %v2180 = vlaneseq
  %v2181 = vshrl.u32 %v2180, 7
  %v2182 = vsub.s32 0, %v2181
  %v2183 = vrot.slane %v2178, %v2182
  %v2185 = vadd.f32 %v2174, %v2183
  %v2186 = vadd.f32 %v2175, %v2183
  %v2187 = vadd.f32 %v2176, %v2183
  %v2188 = vadd.f32 %v2177, %v2183
  %v2189 = vmax.f32 %v2185, 0.0
  %v2190 = vmax.f32 %v2186, 0.0
  %v2191 = vmax.f32 %v2187, 0.0
  %v2192 = vmax.f32 %v2188, 0.0
  %v2193 = vpack.c.bf16 %v2190, %v2189
  %v2194 = vpack.c.bf16 %v2192, %v2191
  %v2197 = vunpack.c.l.b16 %v2193
  %v2198 = vunpack.c.h.b16 %v2193
  %v2199 = vunpack.c.l.b16 %v2194
  %v2200 = vunpack.c.h.b16 %v2194
  %v2201 = vpack.c.b16 %v2197, %v2197
  %v2202 = vpack.c.b16 %v2198, %v2198
  %v2203 = vpack.c.b16 %v2199, %v2199
  %v2204 = vpack.c.b16 %v2200, %v2200
  %2209 = vst [vmem:[%s3] sm:$0xf] %v2201
  %2210 = vst [vmem:[%s3 + $0x4] sm:$0xf] %v2202
  %2211 = vst [vmem:[%s3 + $0x8] sm:$0xf] %v2203
  %2212 = vst [vmem:[%s3 + $0xc] sm:$0xf] %v2204
  // Predicated region
  $region14: #{cnn_forward.6} parent=0 // pred_check
    _
  $region15: #{cnn_forward.6} parent=0 // pred_check_branch
    %2214 = sbr.rel (0) target = $region17
  $region16: #{cnn_forward.6} parent=0 // pred_region
    _
  $region17: #{cnn_forward.6} parent=0 // pred_fallthru
    _
  // Predicated region
  $region18: #{cnn_forward.6} parent=0 // pred_check
    _
  $region19: #{cnn_forward.6} parent=0 // pred_check_branch
    %2216 = sbr.rel (0) target = $region21
  $region20: #{cnn_forward.6} parent=0 // pred_region
    _
  $region21: #{cnn_forward.6} parent=0 // pred_fallthru
    _

// kernel: cnn_forward.7
$region0: #{cnn_forward.7}
  #allocation0 [shape = 'u32[]', space=smem, size = 0x4, offset = 0x4, fixed_abs, tag = 'smem constant byte address 0x4 - core index']
  #allocation1 [shape = 'u32[144,128]{1,0:T(1,128)}', space=vmem, size = 0x12000, scoped, tag = 'internal scratch']
  %s0 = inlined_call_operand.vmem [shape: bf16[4,16,1152], index: 0, kind: input, shape index: {}]
  %s1 = inlined_call_operand.vmem [shape: bf16[1152,256], index: 1, kind: input, shape index: {}]
  %s2 = inlined_call_operand.vmem [shape: f32[1,256], index: 2, kind: input, shape index: {}]
  %s3 = inlined_call_operand.vmem [shape: bf16[16,256], index: 3, kind: output, shape index: {}]
  %s4 = sld [smem:[#allocation0]]
  $region123: #{cnn_forward.7} parent=0
    _
  %s6 = ssub.s32 1, %s4
  %s7 = scalar_select 0, %s6, %s4
  $region1: #{cnn_forward.7} parent=0
    #allocation2 [shape = 'u8[589824]{0}', space=vmem, size = 0x90000, scoped, tag = 'input window, operand 1']
    #allocation3 [shape = 'u8[8192]{0}', space=vmem, size = 0x2000, scoped, tag = 'output window, operand 0']
    loop: start=0, step=1, limit=4
    $region2: #{cnn_forward.7} parent=1 // loop_pre_header
      _
    $region3: #{cnn_forward.7} parent=1 // loop_header
      %s9 = sphi 0, %s13
      %p10 = scmp.ge.s32.totalorder %s9, 4
      %s16 = sphi 0, %s28
      %s17 = sphi 0, %s24
      %s18 = sphi 0, %s16
      %s19 = sphi 0, %s17
      %s20 = sphi 0, %s18
      %s21 = sphi 0, %s19
      %s31 = sphi 0, %s33
      %s34 = sphi 0, %s31
      %s35 = sphi 0, %s34
      %s51 = sphi 0, %s35
      %s57 = sphi 0, %s59
      %s60 = sphi 0, %s57
      %s61 = sphi 0, %s60
      %s77 = sphi 0, %s61
      %s83 = sphi 0, %s85
      %s86 = sphi 0, %s83
      %s87 = sphi 0, %s86
      %s103 = sphi 0, %s87
      %s111 = sphi 0, %s113
      %s114 = sphi 0, %s111
      %s115 = sphi 0, %s114
      %s131 = sphi 0, %s115
    $region4: #{cnn_forward.7} parent=1 // loop_header_branch
      %12 = sbr.rel (%p10) target = $region8
    $region5: #{cnn_forward.7} parent=1 // loop_body
      %s14 = ssub.s32 %s9, 1
      %s15 = ssub.s32 %s9, 2
      %s22 = sadd.s32 1, %s17
      %p23 = scmp.ge.s32.totalorder %s22, 2
      %s24 = scalar_select %p23, 0, %s22
      %s25 = sadd.s32 1, %s16
      %s26 = scalar_select %p23, %s25, %s16
      %p27 = scmp.ge.s32.totalorder %s26, 1
      %s28 = scalar_select %p27, 0, %s26
      %s29 = ssub.s32 %s16, %s28
      %p30 = scmp.eq.s32.totalorder %s29, 0
      %s32 = sadd.s32 %s31, 1
      %s33 = scalar_select %p30, %s31, %s32
      %p36 = pneg %p30
      %p37 = scmp.eq.s32.totalorder %s9, 1
      %p38 = por %p36, %p37
      %p39 = scmp.ne.s32.totalorder %s31, %s34
      %p40 = scmp.eq.s32.totalorder %s9, 0
      %p41 = por %p39, %p40
      %p42 = scmp.ne.s32.totalorder %s31, %s34
      %p43 = scmp.eq.s32.totalorder %s14, 1
      %p44 = por %p42, %p43
      %p45 = scmp.ne.s32.totalorder %s34, %s35
      %p46 = scmp.eq.s32.totalorder %s14, 0
      %p47 = por %p45, %p46
      %p48 = scmp.ne.s32.totalorder %s34, %s35
      %p49 = scmp.eq.s32.totalorder %s15, 1
      %p50 = por %p48, %p49
      %p52 = scmp.ne.s32.totalorder %s35, %s51
      %p53 = scmp.eq.s32.totalorder %s15, 0
      %p54 = por %p52, %p53
      %s55 = ssub.s32 %s17, %s24
      %p56 = scmp.eq.s32.totalorder %s55, 0
      %s58 = sadd.s32 %s57, 1
      %s59 = scalar_select %p56, %s57, %s58
      %p62 = pneg %p56
      %p63 = scmp.eq.s32.totalorder %s9, 1
      %p64 = por %p62, %p63
      %p65 = scmp.ne.s32.totalorder %s57, %s60
      %p66 = scmp.eq.s32.totalorder %s9, 0
      %p67 = por %p65, %p66
      %p68 = scmp.ne.s32.totalorder %s57, %s60
      %p69 = scmp.eq.s32.totalorder %s14, 1
      %p70 = por %p68, %p69
      %p71 = scmp.ne.s32.totalorder %s60, %s61
      %p72 = scmp.eq.s32.totalorder %s14, 0
      %p73 = por %p71, %p72
      %p74 = scmp.ne.s32.totalorder %s60, %s61
      %p75 = scmp.eq.s32.totalorder %s15, 1
      %p76 = por %p74, %p75
      %p78 = scmp.ne.s32.totalorder %s61, %s77
      %p79 = scmp.eq.s32.totalorder %s15, 0
      %p80 = por %p78, %p79
      %s81 = ssub.s32 %s17, %s24
      %p82 = scmp.eq.s32.totalorder %s81, 0
      %s84 = sadd.s32 %s83, 1
      %s85 = scalar_select %p82, %s83, %s84
      %p88 = pneg %p82
      %p89 = scmp.eq.s32.totalorder %s9, 1
      %p90 = por %p88, %p89
      %p91 = scmp.ne.s32.totalorder %s83, %s86
      %p92 = scmp.eq.s32.totalorder %s9, 0
      %p93 = por %p91, %p92
      %p94 = scmp.ne.s32.totalorder %s83, %s86
      %p95 = scmp.eq.s32.totalorder %s14, 1
      %p96 = por %p94, %p95
      %p97 = scmp.ne.s32.totalorder %s86, %s87
      %p98 = scmp.eq.s32.totalorder %s14, 0
      %p99 = por %p97, %p98
      %p100 = scmp.ne.s32.totalorder %s86, %s87
      %p101 = scmp.eq.s32.totalorder %s15, 1
      %p102 = por %p100, %p101
      %p104 = scmp.ne.s32.totalorder %s87, %s103
      %p105 = scmp.eq.s32.totalorder %s15, 0
      %p106 = por %p104, %p105
      %s107 = ssub.s32 %s16, %s28
      %s108 = ssub.s32 %s17, %s24
      %s109 = sor.u32 %s107, %s108
      %p110 = scmp.eq.s32.totalorder %s109, 0
      %s112 = sadd.s32 %s111, 1
      %s113 = scalar_select %p110, %s111, %s112
      %p116 = pneg %p110
      %p117 = scmp.eq.s32.totalorder %s9, 1
      %p118 = por %p116, %p117
      %p119 = scmp.ne.s32.totalorder %s111, %s114
      %p120 = scmp.eq.s32.totalorder %s9, 0
      %p121 = por %p119, %p120
      %p122 = scmp.ne.s32.totalorder %s111, %s114
      %p123 = scmp.eq.s32.totalorder %s14, 1
      %p124 = por %p122, %p123
      %p125 = scmp.ne.s32.totalorder %s114, %s115
      %p126 = scmp.eq.s32.totalorder %s14, 0
      %p127 = por %p125, %p126
      %p128 = scmp.ne.s32.totalorder %s114, %s115
      %p129 = scmp.eq.s32.totalorder %s15, 1
      %p130 = por %p128, %p129
      %p132 = scmp.ne.s32.totalorder %s115, %s131
      %p133 = scmp.eq.s32.totalorder %s15, 0
      %p134 = por %p132, %p133
      %p135 = scmp.le.s32.totalorder 1, %s9
      %p136 = scmp.lt.s32.totalorder %s9, 3
      %p137 = pnand %p135, %p136
      %p138 = pneg %p137
      // Predicated region
      $region9: #{cnn_forward.7} parent=5 // pred_check
        _
      $region10: #{cnn_forward.7} parent=5 // pred_check_branch
        %140 = sbr.rel (%p137) target = $region12
      $region11: #{cnn_forward.7} parent=5 // pred_region
        %s141 = ssub.s32 %s9, 1
        // Predicated region
        $region13: #{cnn_forward.7} parent=11 // pred_check
          %p142 = pneg %p47
        $region14: #{cnn_forward.7} parent=11 // pred_check_branch
          %144 = sbr.rel (%p142) target = $region16
        $region15: #{cnn_forward.7} parent=11 // pred_region
          %s145 = smul.u32 2, %s18
          %p146 = scmp.lt.s32.totalorder %s145, 1
          %s147 = scalar_select %p146, %s145, 1
          %s148 = smul.addr %s147, 9
          %s149 = smul.addr %s148, 4
          %s150 = scalar_lea.vmem %s0, %s149
          %s151 = smul.u32 2, %s18
        $region16: #{cnn_forward.7} parent=11 // pred_fallthru
          _
      $region12: #{cnn_forward.7} parent=5 // pred_fallthru
        _
      %p152 = scmp.lt.s32.totalorder %s9, 2
      // Predicated region
      $region17: #{cnn_forward.7} parent=5 // pred_check
        %p153 = pneg %p152
      $region18: #{cnn_forward.7} parent=5 // pred_check_branch
        %155 = sbr.rel (%p153) target = $region20
      $region19: #{cnn_forward.7} parent=5 // pred_region
        // Predicated region
        $region21: #{cnn_forward.7} parent=19 // pred_check
          %p156 = pneg %p67
        $region22: #{cnn_forward.7} parent=19 // pred_check_branch
          %158 = sbr.rel (%p156) target = $region24
        $region23: #{cnn_forward.7} parent=19 // pred_region
          %s159 = sand.u32 %s57, 1
          %s160 = sand.u32 %s57, 1
          %s161 = smul.addr %s160, 576
          %s162 = scalar_lea.vmem [#allocation2], %s161
          %s163 = smul.addr %s17, 4
          %s164 = scalar_lea.vmem %s1, %s163
          // Predicated region
          $region25: #{cnn_forward.7} parent=23 // pred_check
            _
          $region26: #{cnn_forward.7} parent=23 // pred_check_branch
            %166 = sbr.rel (0) target = $region28
          $region27: #{cnn_forward.7} parent=23 // pred_region
            // Predicated region
            $region29: #{cnn_forward.7} parent=27 // pred_check
              _
            $region30: #{cnn_forward.7} parent=27 // pred_check_branch
              %168 = sbr.rel target = $region32
            $region31: #{cnn_forward.7} parent=27 // pred_region
              // Predicated region
              $region44: #{cnn_forward.7} parent=31 // pred_check
                _
              $region45: #{cnn_forward.7} parent=31 // pred_check_branch
                %469 = sbr.rel (0) target = $region47
              $region46: #{cnn_forward.7} parent=31 // pred_region
                loop: start=0, step=1, limit=1
                $region48: #{cnn_forward.7} parent=46 // loop_pre_header
                  _
                $region49: #{cnn_forward.7} parent=46 // loop_header
                  %s471 = sphi 0, %s475
                  %p472 = scmp.ge.s32.totalorder %s471, 1
                  %s476 = sphi %s164, %s164
                  %s477 = sphi %s162, %s162
                $region50: #{cnn_forward.7} parent=46 // loop_header_branch
                  %474 = sbr.rel (%p472) target = $region54
                $region51: #{cnn_forward.7} parent=46 // loop_body
                  _
                $region52: #{cnn_forward.7} parent=46 // loop_footer
                  %s475 = sadd.s32 1, %s471
                $region53: #{cnn_forward.7} parent=46 // loop_footer_branch
                  %470 = sbr.rel target = $region49
                $region54: #{cnn_forward.7} parent=46 // loop_exit
                  _
                loop: start=0, step=1, limit=1
                $region55: #{cnn_forward.7} parent=46 // loop_pre_header
                  _
                $region56: #{cnn_forward.7} parent=46 // loop_header
                  %s480 = sphi 0, %s484
                  %p481 = scmp.ge.s32.totalorder %s480, 1
                  %s485 = sphi %s164, %s164
                  %s486 = sphi %s162, %s162
                $region57: #{cnn_forward.7} parent=46 // loop_header_branch
                  %483 = sbr.rel (%p481) target = $region61
                $region58: #{cnn_forward.7} parent=46 // loop_body
                  %v487 = vld [vmem:[%s485] sm:$0xf]
                  %488 = vst [vmem:[%s486] sm:$0xf] %v487
                  %v489 = vld [vmem:[%s485 + $0x8] sm:$0xf]
                  %490 = vst [vmem:[%s486 + $0x4] sm:$0xf] %v489
                  %v491 = vld [vmem:[%s485 + $0x10] sm:$0xf]
                  %492 = vst [vmem:[%s486 + $0x8] sm:$0xf] %v491
                  %v493 = vld [vmem:[%s485 + $0x18] sm:$0xf]
                  %494 = vst [vmem:[%s486 + $0xc] sm:$0xf] %v493
                  %v495 = vld [vmem:[%s485 + $0x20] sm:$0xf]
                  %496 = vst [vmem:[%s486 + $0x10] sm:$0xf] %v495
                  %v497 = vld [vmem:[%s485 + $0x28] sm:$0xf]
                  %498 = vst [vmem:[%s486 + $0x14] sm:$0xf] %v497
                  %v499 = vld [vmem:[%s485 + $0x30] sm:$0xf]
                  %500 = vst [vmem:[%s486 + $0x18] sm:$0xf] %v499
                  %v501 = vld [vmem:[%s485 + $0x38] sm:$0xf]
                  %502 = vst [vmem:[%s486 + $0x1c] sm:$0xf] %v501
                  %v503 = vld [vmem:[%s485 + $0x40] sm:$0xf]
                  %504 = vst [vmem:[%s486 + $0x20] sm:$0xf] %v503
                  %v505 = vld [vmem:[%s485 + $0x48] sm:$0xf]
                  %506 = vst [vmem:[%s486 + $0x24] sm:$0xf] %v505
                  %v507 = vld [vmem:[%s485 + $0x50] sm:$0xf]
                  %508 = vst [vmem:[%s486 + $0x28] sm:$0xf] %v507
                  %v509 = vld [vmem:[%s485 + $0x58] sm:$0xf]
                  %510 = vst [vmem:[%s486 + $0x2c] sm:$0xf] %v509
                  %v511 = vld [vmem:[%s485 + $0x60] sm:$0xf]
                  %512 = vst [vmem:[%s486 + $0x30] sm:$0xf] %v511
                  %v513 = vld [vmem:[%s485 + $0x68] sm:$0xf]
                  %514 = vst [vmem:[%s486 + $0x34] sm:$0xf] %v513
                  %v515 = vld [vmem:[%s485 + $0x70] sm:$0xf]
                  %516 = vst [vmem:[%s486 + $0x38] sm:$0xf] %v515
                  %v517 = vld [vmem:[%s485 + $0x78] sm:$0xf]
                  %518 = vst [vmem:[%s486 + $0x3c] sm:$0xf] %v517
                  %v519 = vld [vmem:[%s485 + $0x80] sm:$0xf]
                  %520 = vst [vmem:[%s486 + $0x40] sm:$0xf] %v519
                  %v521 = vld [vmem:[%s485 + $0x88] sm:$0xf]
                  %522 = vst [vmem:[%s486 + $0x44] sm:$0xf] %v521
                  %v523 = vld [vmem:[%s485 + $0x90] sm:$0xf]
                  %524 = vst [vmem:[%s486 + $0x48] sm:$0xf] %v523
                  %v525 = vld [vmem:[%s485 + $0x98] sm:$0xf]
                  %526 = vst [vmem:[%s486 + $0x4c] sm:$0xf] %v525
                  %v527 = vld [vmem:[%s485 + $0xa0] sm:$0xf]
                  %528 = vst [vmem:[%s486 + $0x50] sm:$0xf] %v527
                  %v529 = vld [vmem:[%s485 + $0xa8] sm:$0xf]
                  %530 = vst [vmem:[%s486 + $0x54] sm:$0xf] %v529
                  %v531 = vld [vmem:[%s485 + $0xb0] sm:$0xf]
                  %532 = vst [vmem:[%s486 + $0x58] sm:$0xf] %v531
                  %v533 = vld [vmem:[%s485 + $0xb8] sm:$0xf]
                  %534 = vst [vmem:[%s486 + $0x5c] sm:$0xf] %v533
                  %v535 = vld [vmem:[%s485 + $0xc0] sm:$0xf]
                  %536 = vst [vmem:[%s486 + $0x60] sm:$0xf] %v535
                  %v537 = vld [vmem:[%s485 + $0xc8] sm:$0xf]
                  %538 = vst [vmem:[%s486 + $0x64] sm:$0xf] %v537
                  %v539 = vld [vmem:[%s485 + $0xd0] sm:$0xf]
                  %540 = vst [vmem:[%s486 + $0x68] sm:$0xf] %v539
                  %v541 = vld [vmem:[%s485 + $0xd8] sm:$0xf]
                  %542 = vst [vmem:[%s486 + $0x6c] sm:$0xf] %v541
                  %v543 = vld [vmem:[%s485 + $0xe0] sm:$0xf]
                  %544 = vst [vmem:[%s486 + $0x70] sm:$0xf] %v543
                  %v545 = vld [vmem:[%s485 + $0xe8] sm:$0xf]
                  %546 = vst [vmem:[%s486 + $0x74] sm:$0xf] %v545
                  %v547 = vld [vmem:[%s485 + $0xf0] sm:$0xf]
                  %548 = vst [vmem:[%s486 + $0x78] sm:$0xf] %v547
                  %v549 = vld [vmem:[%s485 + $0xf8] sm:$0xf]
                  %550 = vst [vmem:[%s486 + $0x7c] sm:$0xf] %v549
                  %v551 = vld [vmem:[%s485 + $0x100] sm:$0xf]
                  %552 = vst [vmem:[%s486 + $0x80] sm:$0xf] %v551
                  %v553 = vld [vmem:[%s485 + $0x108] sm:$0xf]
                  %554 = vst [vmem:[%s486 + $0x84] sm:$0xf] %v553
                  %v555 = vld [vmem:[%s485 + $0x110] sm:$0xf]
                  %556 = vst [vmem:[%s486 + $0x88] sm:$0xf] %v555
                  %v557 = vld [vmem:[%s485 + $0x118] sm:$0xf]
                  %558 = vst [vmem:[%s486 + $0x8c] sm:$0xf] %v557
                  %v559 = vld [vmem:[%s485 + $0x120] sm:$0xf]
                  %560 = vst [vmem:[%s486 + $0x90] sm:$0xf] %v559
                  %v561 = vld [vmem:[%s485 + $0x128] sm:$0xf]
                  %562 = vst [vmem:[%s486 + $0x94] sm:$0xf] %v561
                  %v563 = vld [vmem:[%s485 + $0x130] sm:$0xf]
                  %564 = vst [vmem:[%s486 + $0x98] sm:$0xf] %v563
                  %v565 = vld [vmem:[%s485 + $0x138] sm:$0xf]
                  %566 = vst [vmem:[%s486 + $0x9c] sm:$0xf] %v565
                  %v567 = vld [vmem:[%s485 + $0x140] sm:$0xf]
                  %568 = vst [vmem:[%s486 + $0xa0] sm:$0xf] %v567
                  %v569 = vld [vmem:[%s485 + $0x148] sm:$0xf]
                  %570 = vst [vmem:[%s486 + $0xa4] sm:$0xf] %v569
                  %v571 = vld [vmem:[%s485 + $0x150] sm:$0xf]
                  %572 = vst [vmem:[%s486 + $0xa8] sm:$0xf] %v571
                  %v573 = vld [vmem:[%s485 + $0x158] sm:$0xf]
                  %574 = vst [vmem:[%s486 + $0xac] sm:$0xf] %v573
                  %v575 = vld [vmem:[%s485 + $0x160] sm:$0xf]
                  %576 = vst [vmem:[%s486 + $0xb0] sm:$0xf] %v575
                  %v577 = vld [vmem:[%s485 + $0x168] sm:$0xf]
                  %578 = vst [vmem:[%s486 + $0xb4] sm:$0xf] %v577
                  %v579 = vld [vmem:[%s485 + $0x170] sm:$0xf]
                  %580 = vst [vmem:[%s486 + $0xb8] sm:$0xf] %v579
                  %v581 = vld [vmem:[%s485 + $0x178] sm:$0xf]
                  %582 = vst [vmem:[%s486 + $0xbc] sm:$0xf] %v581
                  %v583 = vld [vmem:[%s485 + $0x180] sm:$0xf]
                  %584 = vst [vmem:[%s486 + $0xc0] sm:$0xf] %v583
                  %v585 = vld [vmem:[%s485 + $0x188] sm:$0xf]
                  %586 = vst [vmem:[%s486 + $0xc4] sm:$0xf] %v585
                  %v587 = vld [vmem:[%s485 + $0x190] sm:$0xf]
                  %588 = vst [vmem:[%s486 + $0xc8] sm:$0xf] %v587
                  %v589 = vld [vmem:[%s485 + $0x198] sm:$0xf]
                  %590 = vst [vmem:[%s486 + $0xcc] sm:$0xf] %v589
                  %v591 = vld [vmem:[%s485 + $0x1a0] sm:$0xf]
                  %592 = vst [vmem:[%s486 + $0xd0] sm:$0xf] %v591
                  %v593 = vld [vmem:[%s485 + $0x1a8] sm:$0xf]
                  %594 = vst [vmem:[%s486 + $0xd4] sm:$0xf] %v593
                  %v595 = vld [vmem:[%s485 + $0x1b0] sm:$0xf]
                  %596 = vst [vmem:[%s486 + $0xd8] sm:$0xf] %v595
                  %v597 = vld [vmem:[%s485 + $0x1b8] sm:$0xf]
                  %598 = vst [vmem:[%s486 + $0xdc] sm:$0xf] %v597
                  %v599 = vld [vmem:[%s485 + $0x1c0] sm:$0xf]
                  %600 = vst [vmem:[%s486 + $0xe0] sm:$0xf] %v599
                  %v601 = vld [vmem:[%s485 + $0x1c8] sm:$0xf]
                  %602 = vst [vmem:[%s486 + $0xe4] sm:$0xf] %v601
                  %v603 = vld [vmem:[%s485 + $0x1d0] sm:$0xf]
                  %604 = vst [vmem:[%s486 + $0xe8] sm:$0xf] %v603
                  %v605 = vld [vmem:[%s485 + $0x1d8] sm:$0xf]
                  %606 = vst [vmem:[%s486 + $0xec] sm:$0xf] %v605
                  %v607 = vld [vmem:[%s485 + $0x1e0] sm:$0xf]
                  %608 = vst [vmem:[%s486 + $0xf0] sm:$0xf] %v607
                  %v609 = vld [vmem:[%s485 + $0x1e8] sm:$0xf]
                  %610 = vst [vmem:[%s486 + $0xf4] sm:$0xf] %v609
                  %v611 = vld [vmem:[%s485 + $0x1f0] sm:$0xf]
                  %612 = vst [vmem:[%s486 + $0xf8] sm:$0xf] %v611
                  %v613 = vld [vmem:[%s485 + $0x1f8] sm:$0xf]
                  %614 = vst [vmem:[%s486 + $0xfc] sm:$0xf] %v613
                  %v615 = vld [vmem:[%s485 + $0x200] sm:$0xf]
                  %616 = vst [vmem:[%s486 + $0x100] sm:$0xf] %v615
                  %v617 = vld [vmem:[%s485 + $0x208] sm:$0xf]
                  %618 = vst [vmem:[%s486 + $0x104] sm:$0xf] %v617
                  %v619 = vld [vmem:[%s485 + $0x210] sm:$0xf]
                  %620 = vst [vmem:[%s486 + $0x108] sm:$0xf] %v619
                  %v621 = vld [vmem:[%s485 + $0x218] sm:$0xf]
                  %622 = vst [vmem:[%s486 + $0x10c] sm:$0xf] %v621
                  %v623 = vld [vmem:[%s485 + $0x220] sm:$0xf]
                  %624 = vst [vmem:[%s486 + $0x110] sm:$0xf] %v623
                  %v625 = vld [vmem:[%s485 + $0x228] sm:$0xf]
                  %626 = vst [vmem:[%s486 + $0x114] sm:$0xf] %v625
                  %v627 = vld [vmem:[%s485 + $0x230] sm:$0xf]
                  %628 = vst [vmem:[%s486 + $0x118] sm:$0xf] %v627
                  %v629 = vld [vmem:[%s485 + $0x238] sm:$0xf]
                  %630 = vst [vmem:[%s486 + $0x11c] sm:$0xf] %v629
                  %v631 = vld [vmem:[%s485 + $0x240] sm:$0xf]
                  %632 = vst [vmem:[%s486 + $0x120] sm:$0xf] %v631
                  %v633 = vld [vmem:[%s485 + $0x248] sm:$0xf]
                  %634 = vst [vmem:[%s486 + $0x124] sm:$0xf] %v633
                  %v635 = vld [vmem:[%s485 + $0x250] sm:$0xf]
                  %636 = vst [vmem:[%s486 + $0x128] sm:$0xf] %v635
                  %v637 = vld [vmem:[%s485 + $0x258] sm:$0xf]
                  %638 = vst [vmem:[%s486 + $0x12c] sm:$0xf] %v637
                  %v639 = vld [vmem:[%s485 + $0x260] sm:$0xf]
                  %640 = vst [vmem:[%s486 + $0x130] sm:$0xf] %v639
                  %v641 = vld [vmem:[%s485 + $0x268] sm:$0xf]
                  %642 = vst [vmem:[%s486 + $0x134] sm:$0xf] %v641
                  %v643 = vld [vmem:[%s485 + $0x270] sm:$0xf]
                  %644 = vst [vmem:[%s486 + $0x138] sm:$0xf] %v643
                  %v645 = vld [vmem:[%s485 + $0x278] sm:$0xf]
                  %646 = vst [vmem:[%s486 + $0x13c] sm:$0xf] %v645
                  %v647 = vld [vmem:[%s485 + $0x280] sm:$0xf]
                  %648 = vst [vmem:[%s486 + $0x140] sm:$0xf] %v647
                  %v649 = vld [vmem:[%s485 + $0x288] sm:$0xf]
                  %650 = vst [vmem:[%s486 + $0x144] sm:$0xf] %v649
                  %v651 = vld [vmem:[%s485 + $0x290] sm:$0xf]
                  %652 = vst [vmem:[%s486 + $0x148] sm:$0xf] %v651
                  %v653 = vld [vmem:[%s485 + $0x298] sm:$0xf]
                  %654 = vst [vmem:[%s486 + $0x14c] sm:$0xf] %v653
                  %v655 = vld [vmem:[%s485 + $0x2a0] sm:$0xf]
                  %656 = vst [vmem:[%s486 + $0x150] sm:$0xf] %v655
                  %v657 = vld [vmem:[%s485 + $0x2a8] sm:$0xf]
                  %658 = vst [vmem:[%s486 + $0x154] sm:$0xf] %v657
                  %v659 = vld [vmem:[%s485 + $0x2b0] sm:$0xf]
                  %660 = vst [vmem:[%s486 + $0x158] sm:$0xf] %v659
                  %v661 = vld [vmem:[%s485 + $0x2b8] sm:$0xf]
                  %662 = vst [vmem:[%s486 + $0x15c] sm:$0xf] %v661
                  %v663 = vld [vmem:[%s485 + $0x2c0] sm:$0xf]
                  %664 = vst [vmem:[%s486 + $0x160] sm:$0xf] %v663
                  %v665 = vld [vmem:[%s485 + $0x2c8] sm:$0xf]
                  %666 = vst [vmem:[%s486 + $0x164] sm:$0xf] %v665
                  %v667 = vld [vmem:[%s485 + $0x2d0] sm:$0xf]
                  %668 = vst [vmem:[%s486 + $0x168] sm:$0xf] %v667
                  %v669 = vld [vmem:[%s485 + $0x2d8] sm:$0xf]
                  %670 = vst [vmem:[%s486 + $0x16c] sm:$0xf] %v669
                  %v671 = vld [vmem:[%s485 + $0x2e0] sm:$0xf]
                  %672 = vst [vmem:[%s486 + $0x170] sm:$0xf] %v671
                  %v673 = vld [vmem:[%s485 + $0x2e8] sm:$0xf]
                  %674 = vst [vmem:[%s486 + $0x174] sm:$0xf] %v673
                  %v675 = vld [vmem:[%s485 + $0x2f0] sm:$0xf]
                  %676 = vst [vmem:[%s486 + $0x178] sm:$0xf] %v675
                  %v677 = vld [vmem:[%s485 + $0x2f8] sm:$0xf]
                  %678 = vst [vmem:[%s486 + $0x17c] sm:$0xf] %v677
                  %v679 = vld [vmem:[%s485 + $0x300] sm:$0xf]
                  %680 = vst [vmem:[%s486 + $0x180] sm:$0xf] %v679
                  %v681 = vld [vmem:[%s485 + $0x308] sm:$0xf]
                  %682 = vst [vmem:[%s486 + $0x184] sm:$0xf] %v681
                  %v683 = vld [vmem:[%s485 + $0x310] sm:$0xf]
                  %684 = vst [vmem:[%s486 + $0x188] sm:$0xf] %v683
                  %v685 = vld [vmem:[%s485 + $0x318] sm:$0xf]
                  %686 = vst [vmem:[%s486 + $0x18c] sm:$0xf] %v685
                  %v687 = vld [vmem:[%s485 + $0x320] sm:$0xf]
                  %688 = vst [vmem:[%s486 + $0x190] sm:$0xf] %v687
                  %v689 = vld [vmem:[%s485 + $0x328] sm:$0xf]
                  %690 = vst [vmem:[%s486 + $0x194] sm:$0xf] %v689
                  %v691 = vld [vmem:[%s485 + $0x330] sm:$0xf]
                  %692 = vst [vmem:[%s486 + $0x198] sm:$0xf] %v691
                  %v693 = vld [vmem:[%s485 + $0x338] sm:$0xf]
                  %694 = vst [vmem:[%s486 + $0x19c] sm:$0xf] %v693
                  %v695 = vld [vmem:[%s485 + $0x340] sm:$0xf]
                  %696 = vst [vmem:[%s486 + $0x1a0] sm:$0xf] %v695
                  %v697 = vld [vmem:[%s485 + $0x348] sm:$0xf]
                  %698 = vst [vmem:[%s486 + $0x1a4] sm:$0xf] %v697
                  %v699 = vld [vmem:[%s485 + $0x350] sm:$0xf]
                  %700 = vst [vmem:[%s486 + $0x1a8] sm:$0xf] %v699
                  %v701 = vld [vmem:[%s485 + $0x358] sm:$0xf]
                  %702 = vst [vmem:[%s486 + $0x1ac] sm:$0xf] %v701
                  %v703 = vld [vmem:[%s485 + $0x360] sm:$0xf]
                  %704 = vst [vmem:[%s486 + $0x1b0] sm:$0xf] %v703
                  %v705 = vld [vmem:[%s485 + $0x368] sm:$0xf]
                  %706 = vst [vmem:[%s486 + $0x1b4] sm:$0xf] %v705
                  %v707 = vld [vmem:[%s485 + $0x370] sm:$0xf]
                  %708 = vst [vmem:[%s486 + $0x1b8] sm:$0xf] %v707
                  %v709 = vld [vmem:[%s485 + $0x378] sm:$0xf]
                  %710 = vst [vmem:[%s486 + $0x1bc] sm:$0xf] %v709
                  %v711 = vld [vmem:[%s485 + $0x380] sm:$0xf]
                  %712 = vst [vmem:[%s486 + $0x1c0] sm:$0xf] %v711
                  %v713 = vld [vmem:[%s485 + $0x388] sm:$0xf]
                  %714 = vst [vmem:[%s486 + $0x1c4] sm:$0xf] %v713
                  %v715 = vld [vmem:[%s485 + $0x390] sm:$0xf]
                  %716 = vst [vmem:[%s486 + $0x1c8] sm:$0xf] %v715
                  %v717 = vld [vmem:[%s485 + $0x398] sm:$0xf]
                  %718 = vst [vmem:[%s486 + $0x1cc] sm:$0xf] %v717
                  %v719 = vld [vmem:[%s485 + $0x3a0] sm:$0xf]
                  %720 = vst [vmem:[%s486 + $0x1d0] sm:$0xf] %v719
                  %v721 = vld [vmem:[%s485 + $0x3a8] sm:$0xf]
                  %722 = vst [vmem:[%s486 + $0x1d4] sm:$0xf] %v721
                  %v723 = vld [vmem:[%s485 + $0x3b0] sm:$0xf]
                  %724 = vst [vmem:[%s486 + $0x1d8] sm:$0xf] %v723
                  %v725 = vld [vmem:[%s485 + $0x3b8] sm:$0xf]
                  %726 = vst [vmem:[%s486 + $0x1dc] sm:$0xf] %v725
                  %v727 = vld [vmem:[%s485 + $0x3c0] sm:$0xf]
                  %728 = vst [vmem:[%s486 + $0x1e0] sm:$0xf] %v727
                  %v729 = vld [vmem:[%s485 + $0x3c8] sm:$0xf]
                  %730 = vst [vmem:[%s486 + $0x1e4] sm:$0xf] %v729
                  %v731 = vld [vmem:[%s485 + $0x3d0] sm:$0xf]
                  %732 = vst [vmem:[%s486 + $0x1e8] sm:$0xf] %v731
                  %v733 = vld [vmem:[%s485 + $0x3d8] sm:$0xf]
                  %734 = vst [vmem:[%s486 + $0x1ec] sm:$0xf] %v733
                  %v735 = vld [vmem:[%s485 + $0x3e0] sm:$0xf]
                  %736 = vst [vmem:[%s486 + $0x1f0] sm:$0xf] %v735
                  %v737 = vld [vmem:[%s485 + $0x3e8] sm:$0xf]
                  %738 = vst [vmem:[%s486 + $0x1f4] sm:$0xf] %v737
                  %v739 = vld [vmem:[%s485 + $0x3f0] sm:$0xf]
                  %740 = vst [vmem:[%s486 + $0x1f8] sm:$0xf] %v739
                  %v741 = vld [vmem:[%s485 + $0x3f8] sm:$0xf]
                  %742 = vst [vmem:[%s486 + $0x1fc] sm:$0xf] %v741
                  %v743 = vld [vmem:[%s485 + $0x400] sm:$0xf]
                  %744 = vst [vmem:[%s486 + $0x200] sm:$0xf] %v743
                  %v745 = vld [vmem:[%s485 + $0x408] sm:$0xf]
                  %746 = vst [vmem:[%s486 + $0x204] sm:$0xf] %v745
                  %v747 = vld [vmem:[%s485 + $0x410] sm:$0xf]
                  %748 = vst [vmem:[%s486 + $0x208] sm:$0xf] %v747
                  %v749 = vld [vmem:[%s485 + $0x418] sm:$0xf]
                  %750 = vst [vmem:[%s486 + $0x20c] sm:$0xf] %v749
                  %v751 = vld [vmem:[%s485 + $0x420] sm:$0xf]
                  %752 = vst [vmem:[%s486 + $0x210] sm:$0xf] %v751
                  %v753 = vld [vmem:[%s485 + $0x428] sm:$0xf]
                  %754 = vst [vmem:[%s486 + $0x214] sm:$0xf] %v753
                  %v755 = vld [vmem:[%s485 + $0x430] sm:$0xf]
                  %756 = vst [vmem:[%s486 + $0x218] sm:$0xf] %v755
                  %v757 = vld [vmem:[%s485 + $0x438] sm:$0xf]
                  %758 = vst [vmem:[%s486 + $0x21c] sm:$0xf] %v757
                  %v759 = vld [vmem:[%s485 + $0x440] sm:$0xf]
                  %760 = vst [vmem:[%s486 + $0x220] sm:$0xf] %v759
                  %v761 = vld [vmem:[%s485 + $0x448] sm:$0xf]
                  %762 = vst [vmem:[%s486 + $0x224] sm:$0xf] %v761
                  %v763 = vld [vmem:[%s485 + $0x450] sm:$0xf]
                  %764 = vst [vmem:[%s486 + $0x228] sm:$0xf] %v763
                  %v765 = vld [vmem:[%s485 + $0x458] sm:$0xf]
                  %766 = vst [vmem:[%s486 + $0x22c] sm:$0xf] %v765
                  %v767 = vld [vmem:[%s485 + $0x460] sm:$0xf]
                  %768 = vst [vmem:[%s486 + $0x230] sm:$0xf] %v767
                  %v769 = vld [vmem:[%s485 + $0x468] sm:$0xf]
                  %770 = vst [vmem:[%s486 + $0x234] sm:$0xf] %v769
                  %v771 = vld [vmem:[%s485 + $0x470] sm:$0xf]
                  %772 = vst [vmem:[%s486 + $0x238] sm:$0xf] %v771
                  %v773 = vld [vmem:[%s485 + $0x478] sm:$0xf]
                  %774 = vst [vmem:[%s486 + $0x23c] sm:$0xf] %v773
                $region59: #{cnn_forward.7} parent=46 // loop_footer
                  %s484 = sadd.s32 1, %s480
                $region60: #{cnn_forward.7} parent=46 // loop_footer_branch
                  %479 = sbr.rel target = $region56
                $region61: #{cnn_forward.7} parent=46 // loop_exit
                  _
              $region47: #{cnn_forward.7} parent=31 // pred_fallthru
                _
            $region32: #{cnn_forward.7} parent=27 // pred_fallthru
              _
            // Predicated region
            $region33: #{cnn_forward.7} parent=27 // pred_check
              _
            $region34: #{cnn_forward.7} parent=27 // pred_check_branch
              %170 = sbr.rel (0) target = $region36
            $region35: #{cnn_forward.7} parent=27 // pred_region
              loop: start=0, step=1, limit=1
              $region37: #{cnn_forward.7} parent=35 // loop_pre_header
                _
              $region38: #{cnn_forward.7} parent=35 // loop_header
                %s173 = sphi 0, %s177
                %p174 = scmp.ge.s32.totalorder %s173, 1
                %s178 = sphi %s164, %s164
                %s179 = sphi %s162, %s162
              $region39: #{cnn_forward.7} parent=35 // loop_header_branch
                %176 = sbr.rel (%p174) target = $region43
              $region40: #{cnn_forward.7} parent=35 // loop_body
                %v180 = vld [vmem:[%s178] sm:$0xf]
                %181 = vst [vmem:[%s179] sm:$0xf] %v180
                %v182 = vld [vmem:[%s178 + $0x8] sm:$0xf]
                %183 = vst [vmem:[%s179 + $0x4] sm:$0xf] %v182
                %v184 = vld [vmem:[%s178 + $0x10] sm:$0xf]
                %185 = vst [vmem:[%s179 + $0x8] sm:$0xf] %v184
                %v186 = vld [vmem:[%s178 + $0x18] sm:$0xf]
                %187 = vst [vmem:[%s179 + $0xc] sm:$0xf] %v186
                %v188 = vld [vmem:[%s178 + $0x20] sm:$0xf]
                %189 = vst [vmem:[%s179 + $0x10] sm:$0xf] %v188
                %v190 = vld [vmem:[%s178 + $0x28] sm:$0xf]
                %191 = vst [vmem:[%s179 + $0x14] sm:$0xf] %v190
                %v192 = vld [vmem:[%s178 + $0x30] sm:$0xf]
                %193 = vst [vmem:[%s179 + $0x18] sm:$0xf] %v192
                %v194 = vld [vmem:[%s178 + $0x38] sm:$0xf]
                %195 = vst [vmem:[%s179 + $0x1c] sm:$0xf] %v194
                %v196 = vld [vmem:[%s178 + $0x40] sm:$0xf]
                %197 = vst [vmem:[%s179 + $0x20] sm:$0xf] %v196
                %v198 = vld [vmem:[%s178 + $0x48] sm:$0xf]
                %199 = vst [vmem:[%s179 + $0x24] sm:$0xf] %v198
                %v200 = vld [vmem:[%s178 + $0x50] sm:$0xf]
                %201 = vst [vmem:[%s179 + $0x28] sm:$0xf] %v200
                %v202 = vld [vmem:[%s178 + $0x58] sm:$0xf]
                %203 = vst [vmem:[%s179 + $0x2c] sm:$0xf] %v202
                %v204 = vld [vmem:[%s178 + $0x60] sm:$0xf]
                %205 = vst [vmem:[%s179 + $0x30] sm:$0xf] %v204
                %v206 = vld [vmem:[%s178 + $0x68] sm:$0xf]
                %207 = vst [vmem:[%s179 + $0x34] sm:$0xf] %v206
                %v208 = vld [vmem:[%s178 + $0x70] sm:$0xf]
                %209 = vst [vmem:[%s179 + $0x38] sm:$0xf] %v208
                %v210 = vld [vmem:[%s178 + $0x78] sm:$0xf]
                %211 = vst [vmem:[%s179 + $0x3c] sm:$0xf] %v210
                %v212 = vld [vmem:[%s178 + $0x80] sm:$0xf]
                %213 = vst [vmem:[%s179 + $0x40] sm:$0xf] %v212
                %v214 = vld [vmem:[%s178 + $0x88] sm:$0xf]
                %215 = vst [vmem:[%s179 + $0x44] sm:$0xf] %v214
                %v216 = vld [vmem:[%s178 + $0x90] sm:$0xf]
                %217 = vst [vmem:[%s179 + $0x48] sm:$0xf] %v216
                %v218 = vld [vmem:[%s178 + $0x98] sm:$0xf]
                %219 = vst [vmem:[%s179 + $0x4c] sm:$0xf] %v218
                %v220 = vld [vmem:[%s178 + $0xa0] sm:$0xf]
                %221 = vst [vmem:[%s179 + $0x50] sm:$0xf] %v220
                %v222 = vld [vmem:[%s178 + $0xa8] sm:$0xf]
                %223 = vst [vmem:[%s179 + $0x54] sm:$0xf] %v222
                %v224 = vld [vmem:[%s178 + $0xb0] sm:$0xf]
                %225 = vst [vmem:[%s179 + $0x58] sm:$0xf] %v224
                %v226 = vld [vmem:[%s178 + $0xb8] sm:$0xf]
                %227 = vst [vmem:[%s179 + $0x5c] sm:$0xf] %v226
                %v228 = vld [vmem:[%s178 + $0xc0] sm:$0xf]
                %229 = vst [vmem:[%s179 + $0x60] sm:$0xf] %v228
                %v230 = vld [vmem:[%s178 + $0xc8] sm:$0xf]
                %231 = vst [vmem:[%s179 + $0x64] sm:$0xf] %v230
                %v232 = vld [vmem:[%s178 + $0xd0] sm:$0xf]
                %233 = vst [vmem:[%s179 + $0x68] sm:$0xf] %v232
                %v234 = vld [vmem:[%s178 + $0xd8] sm:$0xf]
                %235 = vst [vmem:[%s179 + $0x6c] sm:$0xf] %v234
                %v236 = vld [vmem:[%s178 + $0xe0] sm:$0xf]
                %237 = vst [vmem:[%s179 + $0x70] sm:$0xf] %v236
                %v238 = vld [vmem:[%s178 + $0xe8] sm:$0xf]
                %239 = vst [vmem:[%s179 + $0x74] sm:$0xf] %v238
                %v240 = vld [vmem:[%s178 + $0xf0] sm:$0xf]
                %241 = vst [vmem:[%s179 + $0x78] sm:$0xf] %v240
                %v242 = vld [vmem:[%s178 + $0xf8] sm:$0xf]
                %243 = vst [vmem:[%s179 + $0x7c] sm:$0xf] %v242
                %v244 = vld [vmem:[%s178 + $0x100] sm:$0xf]
                %245 = vst [vmem:[%s179 + $0x80] sm:$0xf] %v244
                %v246 = vld [vmem:[%s178 + $0x108] sm:$0xf]
                %247 = vst [vmem:[%s179 + $0x84] sm:$0xf] %v246
                %v248 = vld [vmem:[%s178 + $0x110] sm:$0xf]
                %249 = vst [vmem:[%s179 + $0x88] sm:$0xf] %v248
                %v250 = vld [vmem:[%s178 + $0x118] sm:$0xf]
                %251 = vst [vmem:[%s179 + $0x8c] sm:$0xf] %v250
                %v252 = vld [vmem:[%s178 + $0x120] sm:$0xf]
                %253 = vst [vmem:[%s179 + $0x90] sm:$0xf] %v252
                %v254 = vld [vmem:[%s178 + $0x128] sm:$0xf]
                %255 = vst [vmem:[%s179 + $0x94] sm:$0xf] %v254
                %v256 = vld [vmem:[%s178 + $0x130] sm:$0xf]
                %257 = vst [vmem:[%s179 + $0x98] sm:$0xf] %v256
                %v258 = vld [vmem:[%s178 + $0x138] sm:$0xf]
                %259 = vst [vmem:[%s179 + $0x9c] sm:$0xf] %v258
                %v260 = vld [vmem:[%s178 + $0x140] sm:$0xf]
                %261 = vst [vmem:[%s179 + $0xa0] sm:$0xf] %v260
                %v262 = vld [vmem:[%s178 + $0x148] sm:$0xf]
                %263 = vst [vmem:[%s179 + $0xa4] sm:$0xf] %v262
                %v264 = vld [vmem:[%s178 + $0x150] sm:$0xf]
                %265 = vst [vmem:[%s179 + $0xa8] sm:$0xf] %v264
                %v266 = vld [vmem:[%s178 + $0x158] sm:$0xf]
                %267 = vst [vmem:[%s179 + $0xac] sm:$0xf] %v266
                %v268 = vld [vmem:[%s178 + $0x160] sm:$0xf]
                %269 = vst [vmem:[%s179 + $0xb0] sm:$0xf] %v268
                %v270 = vld [vmem:[%s178 + $0x168] sm:$0xf]
                %271 = vst [vmem:[%s179 + $0xb4] sm:$0xf] %v270
                %v272 = vld [vmem:[%s178 + $0x170] sm:$0xf]
                %273 = vst [vmem:[%s179 + $0xb8] sm:$0xf] %v272
                %v274 = vld [vmem:[%s178 + $0x178] sm:$0xf]
                %275 = vst [vmem:[%s179 + $0xbc] sm:$0xf] %v274
                %v276 = vld [vmem:[%s178 + $0x180] sm:$0xf]
                %277 = vst [vmem:[%s179 + $0xc0] sm:$0xf] %v276
                %v278 = vld [vmem:[%s178 + $0x188] sm:$0xf]
                %279 = vst [vmem:[%s179 + $0xc4] sm:$0xf] %v278
                %v280 = vld [vmem:[%s178 + $0x190] sm:$0xf]
                %281 = vst [vmem:[%s179 + $0xc8] sm:$0xf] %v280
                %v282 = vld [vmem:[%s178 + $0x198] sm:$0xf]
                %283 = vst [vmem:[%s179 + $0xcc] sm:$0xf] %v282
                %v284 = vld [vmem:[%s178 + $0x1a0] sm:$0xf]
                %285 = vst [vmem:[%s179 + $0xd0] sm:$0xf] %v284
                %v286 = vld [vmem:[%s178 + $0x1a8] sm:$0xf]
                %287 = vst [vmem:[%s179 + $0xd4] sm:$0xf] %v286
                %v288 = vld [vmem:[%s178 + $0x1b0] sm:$0xf]
                %289 = vst [vmem:[%s179 + $0xd8] sm:$0xf] %v288
                %v290 = vld [vmem:[%s178 + $0x1b8] sm:$0xf]
                %291 = vst [vmem:[%s179 + $0xdc] sm:$0xf] %v290
                %v292 = vld [vmem:[%s178 + $0x1c0] sm:$0xf]
                %293 = vst [vmem:[%s179 + $0xe0] sm:$0xf] %v292
                %v294 = vld [vmem:[%s178 + $0x1c8] sm:$0xf]
                %295 = vst [vmem:[%s179 + $0xe4] sm:$0xf] %v294
                %v296 = vld [vmem:[%s178 + $0x1d0] sm:$0xf]
                %297 = vst [vmem:[%s179 + $0xe8] sm:$0xf] %v296
                %v298 = vld [vmem:[%s178 + $0x1d8] sm:$0xf]
                %299 = vst [vmem:[%s179 + $0xec] sm:$0xf] %v298
                %v300 = vld [vmem:[%s178 + $0x1e0] sm:$0xf]
                %301 = vst [vmem:[%s179 + $0xf0] sm:$0xf] %v300
                %v302 = vld [vmem:[%s178 + $0x1e8] sm:$0xf]
                %303 = vst [vmem:[%s179 + $0xf4] sm:$0xf] %v302
                %v304 = vld [vmem:[%s178 + $0x1f0] sm:$0xf]
                %305 = vst [vmem:[%s179 + $0xf8] sm:$0xf] %v304
                %v306 = vld [vmem:[%s178 + $0x1f8] sm:$0xf]
                %307 = vst [vmem:[%s179 + $0xfc] sm:$0xf] %v306
                %v308 = vld [vmem:[%s178 + $0x200] sm:$0xf]
                %309 = vst [vmem:[%s179 + $0x100] sm:$0xf] %v308
                %v310 = vld [vmem:[%s178 + $0x208] sm:$0xf]
                %311 = vst [vmem:[%s179 + $0x104] sm:$0xf] %v310
                %v312 = vld [vmem:[%s178 + $0x210] sm:$0xf]
                %313 = vst [vmem:[%s179 + $0x108] sm:$0xf] %v312
                %v314 = vld [vmem:[%s178 + $0x218] sm:$0xf]
                %315 = vst [vmem:[%s179 + $0x10c] sm:$0xf] %v314
                %v316 = vld [vmem:[%s178 + $0x220] sm:$0xf]
                %317 = vst [vmem:[%s179 + $0x110] sm:$0xf] %v316
                %v318 = vld [vmem:[%s178 + $0x228] sm:$0xf]
                %319 = vst [vmem:[%s179 + $0x114] sm:$0xf] %v318
                %v320 = vld [vmem:[%s178 + $0x230] sm:$0xf]
                %321 = vst [vmem:[%s179 + $0x118] sm:$0xf] %v320
                %v322 = vld [vmem:[%s178 + $0x238] sm:$0xf]
                %323 = vst [vmem:[%s179 + $0x11c] sm:$0xf] %v322
                %v324 = vld [vmem:[%s178 + $0x240] sm:$0xf]
                %325 = vst [vmem:[%s179 + $0x120] sm:$0xf] %v324
                %v326 = vld [vmem:[%s178 + $0x248] sm:$0xf]
                %327 = vst [vmem:[%s179 + $0x124] sm:$0xf] %v326
                %v328 = vld [vmem:[%s178 + $0x250] sm:$0xf]
                %329 = vst [vmem:[%s179 + $0x128] sm:$0xf] %v328
                %v330 = vld [vmem:[%s178 + $0x258] sm:$0xf]
                %331 = vst [vmem:[%s179 + $0x12c] sm:$0xf] %v330
                %v332 = vld [vmem:[%s178 + $0x260] sm:$0xf]
                %333 = vst [vmem:[%s179 + $0x130] sm:$0xf] %v332
                %v334 = vld [vmem:[%s178 + $0x268] sm:$0xf]
                %335 = vst [vmem:[%s179 + $0x134] sm:$0xf] %v334
                %v336 = vld [vmem:[%s178 + $0x270] sm:$0xf]
                %337 = vst [vmem:[%s179 + $0x138] sm:$0xf] %v336
                %v338 = vld [vmem:[%s178 + $0x278] sm:$0xf]
                %339 = vst [vmem:[%s179 + $0x13c] sm:$0xf] %v338
                %v340 = vld [vmem:[%s178 + $0x280] sm:$0xf]
                %341 = vst [vmem:[%s179 + $0x140] sm:$0xf] %v340
                %v342 = vld [vmem:[%s178 + $0x288] sm:$0xf]
                %343 = vst [vmem:[%s179 + $0x144] sm:$0xf] %v342
                %v344 = vld [vmem:[%s178 + $0x290] sm:$0xf]
                %345 = vst [vmem:[%s179 + $0x148] sm:$0xf] %v344
                %v346 = vld [vmem:[%s178 + $0x298] sm:$0xf]
                %347 = vst [vmem:[%s179 + $0x14c] sm:$0xf] %v346
                %v348 = vld [vmem:[%s178 + $0x2a0] sm:$0xf]
                %349 = vst [vmem:[%s179 + $0x150] sm:$0xf] %v348
                %v350 = vld [vmem:[%s178 + $0x2a8] sm:$0xf]
                %351 = vst [vmem:[%s179 + $0x154] sm:$0xf] %v350
                %v352 = vld [vmem:[%s178 + $0x2b0] sm:$0xf]
                %353 = vst [vmem:[%s179 + $0x158] sm:$0xf] %v352
                %v354 = vld [vmem:[%s178 + $0x2b8] sm:$0xf]
                %355 = vst [vmem:[%s179 + $0x15c] sm:$0xf] %v354
                %v356 = vld [vmem:[%s178 + $0x2c0] sm:$0xf]
                %357 = vst [vmem:[%s179 + $0x160] sm:$0xf] %v356
                %v358 = vld [vmem:[%s178 + $0x2c8] sm:$0xf]
                %359 = vst [vmem:[%s179 + $0x164] sm:$0xf] %v358
                %v360 = vld [vmem:[%s178 + $0x2d0] sm:$0xf]
                %361 = vst [vmem:[%s179 + $0x168] sm:$0xf] %v360
                %v362 = vld [vmem:[%s178 + $0x2d8] sm:$0xf]
                %363 = vst [vmem:[%s179 + $0x16c] sm:$0xf] %v362
                %v364 = vld [vmem:[%s178 + $0x2e0] sm:$0xf]
                %365 = vst [vmem:[%s179 + $0x170] sm:$0xf] %v364
                %v366 = vld [vmem:[%s178 + $0x2e8] sm:$0xf]
                %367 = vst [vmem:[%s179 + $0x174] sm:$0xf] %v366
                %v368 = vld [vmem:[%s178 + $0x2f0] sm:$0xf]
                %369 = vst [vmem:[%s179 + $0x178] sm:$0xf] %v368
                %v370 = vld [vmem:[%s178 + $0x2f8] sm:$0xf]
                %371 = vst [vmem:[%s179 + $0x17c] sm:$0xf] %v370
                %v372 = vld [vmem:[%s178 + $0x300] sm:$0xf]
                %373 = vst [vmem:[%s179 + $0x180] sm:$0xf] %v372
                %v374 = vld [vmem:[%s178 + $0x308] sm:$0xf]
                %375 = vst [vmem:[%s179 + $0x184] sm:$0xf] %v374
                %v376 = vld [vmem:[%s178 + $0x310] sm:$0xf]
                %377 = vst [vmem:[%s179 + $0x188] sm:$0xf] %v376
                %v378 = vld [vmem:[%s178 + $0x318] sm:$0xf]
                %379 = vst [vmem:[%s179 + $0x18c] sm:$0xf] %v378
                %v380 = vld [vmem:[%s178 + $0x320] sm:$0xf]
                %381 = vst [vmem:[%s179 + $0x190] sm:$0xf] %v380
                %v382 = vld [vmem:[%s178 + $0x328] sm:$0xf]
                %383 = vst [vmem:[%s179 + $0x194] sm:$0xf] %v382
                %v384 = vld [vmem:[%s178 + $0x330] sm:$0xf]
                %385 = vst [vmem:[%s179 + $0x198] sm:$0xf] %v384
                %v386 = vld [vmem:[%s178 + $0x338] sm:$0xf]
                %387 = vst [vmem:[%s179 + $0x19c] sm:$0xf] %v386
                %v388 = vld [vmem:[%s178 + $0x340] sm:$0xf]
                %389 = vst [vmem:[%s179 + $0x1a0] sm:$0xf] %v388
                %v390 = vld [vmem:[%s178 + $0x348] sm:$0xf]
                %391 = vst [vmem:[%s179 + $0x1a4] sm:$0xf] %v390
                %v392 = vld [vmem:[%s178 + $0x350] sm:$0xf]
                %393 = vst [vmem:[%s179 + $0x1a8] sm:$0xf] %v392
                %v394 = vld [vmem:[%s178 + $0x358] sm:$0xf]
                %395 = vst [vmem:[%s179 + $0x1ac] sm:$0xf] %v394
                %v396 = vld [vmem:[%s178 + $0x360] sm:$0xf]
                %397 = vst [vmem:[%s179 + $0x1b0] sm:$0xf] %v396
                %v398 = vld [vmem:[%s178 + $0x368] sm:$0xf]
                %399 = vst [vmem:[%s179 + $0x1b4] sm:$0xf] %v398
                %v400 = vld [vmem:[%s178 + $0x370] sm:$0xf]
                %401 = vst [vmem:[%s179 + $0x1b8] sm:$0xf] %v400
                %v402 = vld [vmem:[%s178 + $0x378] sm:$0xf]
                %403 = vst [vmem:[%s179 + $0x1bc] sm:$0xf] %v402
                %v404 = vld [vmem:[%s178 + $0x380] sm:$0xf]
                %405 = vst [vmem:[%s179 + $0x1c0] sm:$0xf] %v404
                %v406 = vld [vmem:[%s178 + $0x388] sm:$0xf]
                %407 = vst [vmem:[%s179 + $0x1c4] sm:$0xf] %v406
                %v408 = vld [vmem:[%s178 + $0x390] sm:$0xf]
                %409 = vst [vmem:[%s179 + $0x1c8] sm:$0xf] %v408
                %v410 = vld [vmem:[%s178 + $0x398] sm:$0xf]
                %411 = vst [vmem:[%s179 + $0x1cc] sm:$0xf] %v410
                %v412 = vld [vmem:[%s178 + $0x3a0] sm:$0xf]
                %413 = vst [vmem:[%s179 + $0x1d0] sm:$0xf] %v412
                %v414 = vld [vmem:[%s178 + $0x3a8] sm:$0xf]
                %415 = vst [vmem:[%s179 + $0x1d4] sm:$0xf] %v414
                %v416 = vld [vmem:[%s178 + $0x3b0] sm:$0xf]
                %417 = vst [vmem:[%s179 + $0x1d8] sm:$0xf] %v416
                %v418 = vld [vmem:[%s178 + $0x3b8] sm:$0xf]
                %419 = vst [vmem:[%s179 + $0x1dc] sm:$0xf] %v418
                %v420 = vld [vmem:[%s178 + $0x3c0] sm:$0xf]
                %421 = vst [vmem:[%s179 + $0x1e0] sm:$0xf] %v420
                %v422 = vld [vmem:[%s178 + $0x3c8] sm:$0xf]
                %423 = vst [vmem:[%s179 + $0x1e4] sm:$0xf] %v422
                %v424 = vld [vmem:[%s178 + $0x3d0] sm:$0xf]
                %425 = vst [vmem:[%s179 + $0x1e8] sm:$0xf] %v424
                %v426 = vld [vmem:[%s178 + $0x3d8] sm:$0xf]
                %427 = vst [vmem:[%s179 + $0x1ec] sm:$0xf] %v426
                %v428 = vld [vmem:[%s178 + $0x3e0] sm:$0xf]
                %429 = vst [vmem:[%s179 + $0x1f0] sm:$0xf] %v428
                %v430 = vld [vmem:[%s178 + $0x3e8] sm:$0xf]
                %431 = vst [vmem:[%s179 + $0x1f4] sm:$0xf] %v430
                %v432 = vld [vmem:[%s178 + $0x3f0] sm:$0xf]
                %433 = vst [vmem:[%s179 + $0x1f8] sm:$0xf] %v432
                %v434 = vld [vmem:[%s178 + $0x3f8] sm:$0xf]
                %435 = vst [vmem:[%s179 + $0x1fc] sm:$0xf] %v434
                %v436 = vld [vmem:[%s178 + $0x400] sm:$0xf]
                %437 = vst [vmem:[%s179 + $0x200] sm:$0xf] %v436
                %v438 = vld [vmem:[%s178 + $0x408] sm:$0xf]
                %439 = vst [vmem:[%s179 + $0x204] sm:$0xf] %v438
                %v440 = vld [vmem:[%s178 + $0x410] sm:$0xf]
                %441 = vst [vmem:[%s179 + $0x208] sm:$0xf] %v440
                %v442 = vld [vmem:[%s178 + $0x418] sm:$0xf]
                %443 = vst [vmem:[%s179 + $0x20c] sm:$0xf] %v442
                %v444 = vld [vmem:[%s178 + $0x420] sm:$0xf]
                %445 = vst [vmem:[%s179 + $0x210] sm:$0xf] %v444
                %v446 = vld [vmem:[%s178 + $0x428] sm:$0xf]
                %447 = vst [vmem:[%s179 + $0x214] sm:$0xf] %v446
                %v448 = vld [vmem:[%s178 + $0x430] sm:$0xf]
                %449 = vst [vmem:[%s179 + $0x218] sm:$0xf] %v448
                %v450 = vld [vmem:[%s178 + $0x438] sm:$0xf]
                %451 = vst [vmem:[%s179 + $0x21c] sm:$0xf] %v450
                %v452 = vld [vmem:[%s178 + $0x440] sm:$0xf]
                %453 = vst [vmem:[%s179 + $0x220] sm:$0xf] %v452
                %v454 = vld [vmem:[%s178 + $0x448] sm:$0xf]
                %455 = vst [vmem:[%s179 + $0x224] sm:$0xf] %v454
                %v456 = vld [vmem:[%s178 + $0x450] sm:$0xf]
                %457 = vst [vmem:[%s179 + $0x228] sm:$0xf] %v456
                %v458 = vld [vmem:[%s178 + $0x458] sm:$0xf]
                %459 = vst [vmem:[%s179 + $0x22c] sm:$0xf] %v458
                %v460 = vld [vmem:[%s178 + $0x460] sm:$0xf]
                %461 = vst [vmem:[%s179 + $0x230] sm:$0xf] %v460
                %v462 = vld [vmem:[%s178 + $0x468] sm:$0xf]
                %463 = vst [vmem:[%s179 + $0x234] sm:$0xf] %v462
                %v464 = vld [vmem:[%s178 + $0x470] sm:$0xf]
                %465 = vst [vmem:[%s179 + $0x238] sm:$0xf] %v464
                %v466 = vld [vmem:[%s178 + $0x478] sm:$0xf]
                %467 = vst [vmem:[%s179 + $0x23c] sm:$0xf] %v466
              $region41: #{cnn_forward.7} parent=35 // loop_footer
                %s177 = sadd.s32 1, %s173
              $region42: #{cnn_forward.7} parent=35 // loop_footer_branch
                %172 = sbr.rel target = $region38
              $region43: #{cnn_forward.7} parent=35 // loop_exit
                _
            $region36: #{cnn_forward.7} parent=27 // pred_fallthru
              _
          $region28: #{cnn_forward.7} parent=23 // pred_fallthru
            _
          %775 = vnop
        $region24: #{cnn_forward.7} parent=19 // pred_fallthru
          _
        // Predicated region
        $region62: #{cnn_forward.7} parent=19 // pred_check
          %p776 = pneg %p93
        $region63: #{cnn_forward.7} parent=19 // pred_check_branch
          %778 = sbr.rel (%p776) target = $region65
        $region64: #{cnn_forward.7} parent=19 // pred_region
          %p779 = scmp.lt.s32.totalorder %s17, 1
          %s780 = scalar_select %p779, %s17, 1
          %s781 = scalar_lea.vmem %s2, %s780
        $region65: #{cnn_forward.7} parent=19 // pred_fallthru
          _
      $region20: #{cnn_forward.7} parent=5 // pred_fallthru
        _
      %p782 = scmp.le.s32.totalorder 1, %s9
      %p783 = scmp.lt.s32.totalorder %s9, 3
      %p784 = pnand %p782, %p783
      %p785 = pneg %p784
      // Predicated region
      $region66: #{cnn_forward.7} parent=5 // pred_check
        _
      $region67: #{cnn_forward.7} parent=5 // pred_check_branch
        %787 = sbr.rel (%p784) target = $region69
      $region68: #{cnn_forward.7} parent=5 // pred_region
        %s788 = ssub.s32 %s9, 1
        %s789 = sand.u32 %s60, 1
        %s790 = sand.u32 %s60, 1
        %s791 = smul.addr %s790, 576
        %s792 = scalar_lea.vmem [#allocation2], %s791
        // Predicated region
        $region70: #{cnn_forward.7} parent=68 // pred_check
          %p793 = pneg %p73
        $region71: #{cnn_forward.7} parent=68 // pred_check_branch
          %795 = sbr.rel (%p793) target = $region73
        $region72: #{cnn_forward.7} parent=68 // pred_region
          _
        $region73: #{cnn_forward.7} parent=68 // pred_fallthru
          _
        %s796 = smul.u32 2, %s18
        %p797 = scmp.lt.s32.totalorder %s796, 1
        %s798 = scalar_select %p797, %s796, 1
        %s799 = smul.addr %s798, 9
        %s800 = smul.addr %s799, 4
        %s801 = scalar_lea.vmem %s0, %s800
        %p802 = pneg %p47
        %p803 = pneg %p44
        %s804 = sand.u32 %s60, 1
        %s805 = sand.u32 %s60, 1
        %s806 = smul.addr %s805, 576
        %s807 = scalar_lea.vmem [#allocation2], %s806
        %p808 = pneg %p73
        %p809 = pneg %p70
        %p810 = scmp.lt.s32.totalorder %s19, 1
        %s811 = scalar_select %p810, %s19, 1
        %s812 = scalar_lea.vmem %s2, %s811
        %p813 = pneg %p99
        %p814 = pneg %p96
        %p815 = pneg %p127
        %p816 = pneg %p124
        %s817 = sand.u32 %s114, 1
        %s818 = sand.u32 %s114, 1
        %s819 = smul.addr %s818, 8
        %s820 = scalar_lea.vmem [#allocation3], %s819
        %s821 = smul.u32 2, %s18
        %p822 = scmp.lt.s32.totalorder %s821, 1
        %s823 = scalar_select %p822, %s821, 1
        %s824 = smul.addr %s823, 9
        %s825 = smul.addr %s824, 4
        %s826 = scalar_lea.vmem %s0, %s825
        %s827 = smul.u32 2, %s18
        %p828 = scmp.lt.s32.totalorder %s19, 1
        %s829 = scalar_select %p828, %s19, 1
        %s830 = scalar_lea.vmem %s2, %s829
        %s831 = smul.u32 2, %s18
        %v833 = vld [vmem:[%s826] sm:$0xff]
        %v834 = vld [vmem:[%s826 + $0x8] sm:$0xff]
        %v835 = vld [vmem:[%s826 + $0x10] sm:$0xff]
        %v836 = vld [vmem:[%s826 + $0x18] sm:$0xff]
        %v837 = vld [vmem:[%s826 + $0x20] sm:$0xf]
        %v838 = vld [vmem:[%s826 + $0x24] sm:$0xff]
        %v839 = vld [vmem:[%s826 + $0x2c] sm:$0xff]
        %v840 = vld [vmem:[%s826 + $0x34] sm:$0xff]
        %v841 = vld [vmem:[%s826 + $0x3c] sm:$0xff]
        %v842 = vld [vmem:[%s826 + $0x44] sm:$0xf]
        %v843 = vld [vmem:[%s826 + $0x48] sm:$0xff]
        %v844 = vld [vmem:[%s826 + $0x50] sm:$0xff]
        %v845 = vld [vmem:[%s826 + $0x58] sm:$0xff]
        %v846 = vld [vmem:[%s826 + $0x60] sm:$0xff]
        %v847 = vld [vmem:[%s826 + $0x68] sm:$0xf]
        %v848 = vld [vmem:[%s826 + $0x6c] sm:$0xff]
        %v849 = vld [vmem:[%s826 + $0x74] sm:$0xff]
        %v850 = vld [vmem:[%s826 + $0x7c] sm:$0xff]
        %v851 = vld [vmem:[%s826 + $0x84] sm:$0xff]
        %v852 = vld [vmem:[%s826 + $0x8c] sm:$0xf]
        %v853 = vld [vmem:[%s826 + $0x90] sm:$0xff]
        %v854 = vld [vmem:[%s826 + $0x98] sm:$0xff]
        %v855 = vld [vmem:[%s826 + $0xa0] sm:$0xff]
        %v856 = vld [vmem:[%s826 + $0xa8] sm:$0xff]
        %v857 = vld [vmem:[%s826 + $0xb0] sm:$0xf]
        %v858 = vld [vmem:[%s826 + $0xb4] sm:$0xff]
        %v859 = vld [vmem:[%s826 + $0xbc] sm:$0xff]
        %v860 = vld [vmem:[%s826 + $0xc4] sm:$0xff]
        %v861 = vld [vmem:[%s826 + $0xcc] sm:$0xff]
        %v862 = vld [vmem:[%s826 + $0xd4] sm:$0xf]
        %v863 = vld [vmem:[%s826 + $0xd8] sm:$0xff]
        %v864 = vld [vmem:[%s826 + $0xe0] sm:$0xff]
        %v865 = vld [vmem:[%s826 + $0xe8] sm:$0xff]
        %v866 = vld [vmem:[%s826 + $0xf0] sm:$0xff]
        %v867 = vld [vmem:[%s826 + $0xf8] sm:$0xf]
        %v868 = vld [vmem:[%s826 + $0xfc] sm:$0xff]
        %v869 = vld [vmem:[%s826 + $0x104] sm:$0xff]
        %v870 = vld [vmem:[%s826 + $0x10c] sm:$0xff]
        %v871 = vld [vmem:[%s826 + $0x114] sm:$0xff]
        %v872 = vld [vmem:[%s826 + $0x11c] sm:$0xf]
        %v873 = vld [vmem:[%s792] sm:$0xf]
        %v874 = vld [vmem:[%s792 + $0x4] sm:$0xf]
        %v875 = vld [vmem:[%s792 + $0x8] sm:$0xf]
        %v876 = vld [vmem:[%s792 + $0xc] sm:$0xf]
        %v877 = vld [vmem:[%s792 + $0x10] sm:$0xf]
        %v878 = vld [vmem:[%s792 + $0x14] sm:$0xf]
        %v879 = vld [vmem:[%s792 + $0x18] sm:$0xf]
        %v880 = vld [vmem:[%s792 + $0x1c] sm:$0xf]
        %v881 = vld [vmem:[%s792 + $0x20] sm:$0xf]
        %v882 = vld [vmem:[%s792 + $0x24] sm:$0xf]
        %v883 = vld [vmem:[%s792 + $0x28] sm:$0xf]
        %v884 = vld [vmem:[%s792 + $0x2c] sm:$0xf]
        %v885 = vld [vmem:[%s792 + $0x30] sm:$0xf]
        %v886 = vld [vmem:[%s792 + $0x34] sm:$0xf]
        %v887 = vld [vmem:[%s792 + $0x38] sm:$0xf]
        %v888 = vld [vmem:[%s792 + $0x3c] sm:$0xf]
        %v889 = vld [vmem:[%s792 + $0x40] sm:$0xf]
        %v890 = vld [vmem:[%s792 + $0x44] sm:$0xf]
        %v891 = vld [vmem:[%s792 + $0x48] sm:$0xf]
        %v892 = vld [vmem:[%s792 + $0x4c] sm:$0xf]
        %v893 = vld [vmem:[%s792 + $0x50] sm:$0xf]
        %v894 = vld [vmem:[%s792 + $0x54] sm:$0xf]
        %v895 = vld [vmem:[%s792 + $0x58] sm:$0xf]
        %v896 = vld [vmem:[%s792 + $0x5c] sm:$0xf]
        %v897 = vld [vmem:[%s792 + $0x60] sm:$0xf]
        %v898 = vld [vmem:[%s792 + $0x64] sm:$0xf]
        %v899 = vld [vmem:[%s792 + $0x68] sm:$0xf]
        %v900 = vld [vmem:[%s792 + $0x6c] sm:$0xf]
        %v901 = vld [vmem:[%s792 + $0x70] sm:$0xf]
        %v902 = vld [vmem:[%s792 + $0x74] sm:$0xf]
        %v903 = vld [vmem:[%s792 + $0x78] sm:$0xf]
        %v904 = vld [vmem:[%s792 + $0x7c] sm:$0xf]
        %v905 = vld [vmem:[%s792 + $0x80] sm:$0xf]
        %v906 = vld [vmem:[%s792 + $0x84] sm:$0xf]
        %v907 = vld [vmem:[%s792 + $0x88] sm:$0xf]
        %v908 = vld [vmem:[%s792 + $0x8c] sm:$0xf]
        %v909 = vld [vmem:[%s792 + $0x90] sm:$0xf]
        %v910 = vld [vmem:[%s792 + $0x94] sm:$0xf]
        %v911 = vld [vmem:[%s792 + $0x98] sm:$0xf]
        %v912 = vld [vmem:[%s792 + $0x9c] sm:$0xf]
        %v913 = vld [vmem:[%s792 + $0xa0] sm:$0xf]
        %v914 = vld [vmem:[%s792 + $0xa4] sm:$0xf]
        %v915 = vld [vmem:[%s792 + $0xa8] sm:$0xf]
        %v916 = vld [vmem:[%s792 + $0xac] sm:$0xf]
        %v917 = vld [vmem:[%s792 + $0xb0] sm:$0xf]
        %v918 = vld [vmem:[%s792 + $0xb4] sm:$0xf]
        %v919 = vld [vmem:[%s792 + $0xb8] sm:$0xf]
        %v920 = vld [vmem:[%s792 + $0xbc] sm:$0xf]
        %v921 = vld [vmem:[%s792 + $0xc0] sm:$0xf]
        %v922 = vld [vmem:[%s792 + $0xc4] sm:$0xf]
        %v923 = vld [vmem:[%s792 + $0xc8] sm:$0xf]
        %v924 = vld [vmem:[%s792 + $0xcc] sm:$0xf]
        %v925 = vld [vmem:[%s792 + $0xd0] sm:$0xf]
        %v926 = vld [vmem:[%s792 + $0xd4] sm:$0xf]
        %v927 = vld [vmem:[%s792 + $0xd8] sm:$0xf]
        %v928 = vld [vmem:[%s792 + $0xdc] sm:$0xf]
        %v929 = vld [vmem:[%s792 + $0xe0] sm:$0xf]
        %v930 = vld [vmem:[%s792 + $0xe4] sm:$0xf]
        %v931 = vld [vmem:[%s792 + $0xe8] sm:$0xf]
        %v932 = vld [vmem:[%s792 + $0xec] sm:$0xf]
        %v933 = vld [vmem:[%s792 + $0xf0] sm:$0xf]
        %v934 = vld [vmem:[%s792 + $0xf4] sm:$0xf]
        %v935 = vld [vmem:[%s792 + $0xf8] sm:$0xf]
        %v936 = vld [vmem:[%s792 + $0xfc] sm:$0xf]
        %v937 = vld [vmem:[%s792 + $0x100] sm:$0xf]
        %v938 = vld [vmem:[%s792 + $0x104] sm:$0xf]
        %v939 = vld [vmem:[%s792 + $0x108] sm:$0xf]
        %v940 = vld [vmem:[%s792 + $0x10c] sm:$0xf]
        %v941 = vld [vmem:[%s792 + $0x110] sm:$0xf]
        %v942 = vld [vmem:[%s792 + $0x114] sm:$0xf]
        %v943 = vld [vmem:[%s792 + $0x118] sm:$0xf]
        %v944 = vld [vmem:[%s792 + $0x11c] sm:$0xf]
        %v945 = vld [vmem:[%s792 + $0x120] sm:$0xf]
        %v946 = vld [vmem:[%s792 + $0x124] sm:$0xf]
        %v947 = vld [vmem:[%s792 + $0x128] sm:$0xf]
        %v948 = vld [vmem:[%s792 + $0x12c] sm:$0xf]
        %v949 = vld [vmem:[%s792 + $0x130] sm:$0xf]
        %v950 = vld [vmem:[%s792 + $0x134] sm:$0xf]
        %v951 = vld [vmem:[%s792 + $0x138] sm:$0xf]
        %v952 = vld [vmem:[%s792 + $0x13c] sm:$0xf]
        %v953 = vld [vmem:[%s792 + $0x140] sm:$0xf]
        %v954 = vld [vmem:[%s792 + $0x144] sm:$0xf]
        %v955 = vld [vmem:[%s792 + $0x148] sm:$0xf]
        %v956 = vld [vmem:[%s792 + $0x14c] sm:$0xf]
        %v957 = vld [vmem:[%s792 + $0x150] sm:$0xf]
        %v958 = vld [vmem:[%s792 + $0x154] sm:$0xf]
        %v959 = vld [vmem:[%s792 + $0x158] sm:$0xf]
        %v960 = vld [vmem:[%s792 + $0x15c] sm:$0xf]
        %v961 = vld [vmem:[%s792 + $0x160] sm:$0xf]
        %v962 = vld [vmem:[%s792 + $0x164] sm:$0xf]
        %v963 = vld [vmem:[%s792 + $0x168] sm:$0xf]
        %v964 = vld [vmem:[%s792 + $0x16c] sm:$0xf]
        %v965 = vld [vmem:[%s792 + $0x170] sm:$0xf]
        %v966 = vld [vmem:[%s792 + $0x174] sm:$0xf]
        %v967 = vld [vmem:[%s792 + $0x178] sm:$0xf]
        %v968 = vld [vmem:[%s792 + $0x17c] sm:$0xf]
        %v969 = vld [vmem:[%s792 + $0x180] sm:$0xf]
        %v970 = vld [vmem:[%s792 + $0x184] sm:$0xf]
        %v971 = vld [vmem:[%s792 + $0x188] sm:$0xf]
        %v972 = vld [vmem:[%s792 + $0x18c] sm:$0xf]
        %v973 = vld [vmem:[%s792 + $0x190] sm:$0xf]
        %v974 = vld [vmem:[%s792 + $0x194] sm:$0xf]
        %v975 = vld [vmem:[%s792 + $0x198] sm:$0xf]
        %v976 = vld [vmem:[%s792 + $0x19c] sm:$0xf]
        %v977 = vld [vmem:[%s792 + $0x1a0] sm:$0xf]
        %v978 = vld [vmem:[%s792 + $0x1a4] sm:$0xf]
        %v979 = vld [vmem:[%s792 + $0x1a8] sm:$0xf]
        %v980 = vld [vmem:[%s792 + $0x1ac] sm:$0xf]
        %v981 = vld [vmem:[%s792 + $0x1b0] sm:$0xf]
        %v982 = vld [vmem:[%s792 + $0x1b4] sm:$0xf]
        %v983 = vld [vmem:[%s792 + $0x1b8] sm:$0xf]
        %v984 = vld [vmem:[%s792 + $0x1bc] sm:$0xf]
        %v985 = vld [vmem:[%s792 + $0x1c0] sm:$0xf]
        %v986 = vld [vmem:[%s792 + $0x1c4] sm:$0xf]
        %v987 = vld [vmem:[%s792 + $0x1c8] sm:$0xf]
        %v988 = vld [vmem:[%s792 + $0x1cc] sm:$0xf]
        %v989 = vld [vmem:[%s792 + $0x1d0] sm:$0xf]
        %v990 = vld [vmem:[%s792 + $0x1d4] sm:$0xf]
        %v991 = vld [vmem:[%s792 + $0x1d8] sm:$0xf]
        %v992 = vld [vmem:[%s792 + $0x1dc] sm:$0xf]
        %v993 = vld [vmem:[%s792 + $0x1e0] sm:$0xf]
        %v994 = vld [vmem:[%s792 + $0x1e4] sm:$0xf]
        %v995 = vld [vmem:[%s792 + $0x1e8] sm:$0xf]
        %v996 = vld [vmem:[%s792 + $0x1ec] sm:$0xf]
        %v997 = vld [vmem:[%s792 + $0x1f0] sm:$0xf]
        %v998 = vld [vmem:[%s792 + $0x1f4] sm:$0xf]
        %v999 = vld [vmem:[%s792 + $0x1f8] sm:$0xf]
        %v1000 = vld [vmem:[%s792 + $0x1fc] sm:$0xf]
        %v1001 = vld [vmem:[%s792 + $0x200] sm:$0xf]
        %v1002 = vld [vmem:[%s792 + $0x204] sm:$0xf]
        %v1003 = vld [vmem:[%s792 + $0x208] sm:$0xf]
        %v1004 = vld [vmem:[%s792 + $0x20c] sm:$0xf]
        %v1005 = vld [vmem:[%s792 + $0x210] sm:$0xf]
        %v1006 = vld [vmem:[%s792 + $0x214] sm:$0xf]
        %v1007 = vld [vmem:[%s792 + $0x218] sm:$0xf]
        %v1008 = vld [vmem:[%s792 + $0x21c] sm:$0xf]
        %v1009 = vld [vmem:[%s792 + $0x220] sm:$0xf]
        %v1010 = vld [vmem:[%s792 + $0x224] sm:$0xf]
        %v1011 = vld [vmem:[%s792 + $0x228] sm:$0xf]
        %v1012 = vld [vmem:[%s792 + $0x22c] sm:$0xf]
        %v1013 = vld [vmem:[%s792 + $0x230] sm:$0xf]
        %v1014 = vld [vmem:[%s792 + $0x234] sm:$0xf]
        %v1015 = vld [vmem:[%s792 + $0x238] sm:$0xf]
        %v1016 = vld [vmem:[%s792 + $0x23c] sm:$0xf]
        %v1057 = vunpack.c.l.b16 %v833
        %v1058 = vunpack.c.h.b16 %v833
        %v1059 = vunpack.c.l.b16 %v834
        %v1060 = vunpack.c.h.b16 %v834
        %v1061 = vunpack.c.l.b16 %v835
        %v1062 = vunpack.c.h.b16 %v835
        %v1063 = vunpack.c.l.b16 %v836
        %v1064 = vunpack.c.h.b16 %v836
        %v1065 = vunpack.c.l.b16 %v837
        %v1066 = vunpack.c.l.b16 %v838
        %v1067 = vunpack.c.h.b16 %v838
        %v1068 = vunpack.c.l.b16 %v839
        %v1069 = vunpack.c.h.b16 %v839
        %v1070 = vunpack.c.l.b16 %v840
        %v1071 = vunpack.c.h.b16 %v840
        %v1072 = vunpack.c.l.b16 %v841
        %v1073 = vunpack.c.h.b16 %v841
        %v1074 = vunpack.c.l.b16 %v842
        %v1075 = vunpack.c.l.b16 %v843
        %v1076 = vunpack.c.h.b16 %v843
        %v1077 = vunpack.c.l.b16 %v844
        %v1078 = vunpack.c.h.b16 %v844
        %v1079 = vunpack.c.l.b16 %v845
        %v1080 = vunpack.c.h.b16 %v845
        %v1081 = vunpack.c.l.b16 %v846
        %v1082 = vunpack.c.h.b16 %v846
        %v1083 = vunpack.c.l.b16 %v847
        %v1084 = vunpack.c.l.b16 %v848
        %v1085 = vunpack.c.h.b16 %v848
        %v1086 = vunpack.c.l.b16 %v849
        %v1087 = vunpack.c.h.b16 %v849
        %v1088 = vunpack.c.l.b16 %v850
        %v1089 = vunpack.c.h.b16 %v850
        %v1090 = vunpack.c.l.b16 %v851
        %v1091 = vunpack.c.h.b16 %v851
        %v1092 = vunpack.c.l.b16 %v852
        %v1093 = vunpack.c.l.b16 %v853
        %v1094 = vunpack.c.h.b16 %v853
        %v1095 = vunpack.c.l.b16 %v854
        %v1096 = vunpack.c.h.b16 %v854
        %v1097 = vunpack.c.l.b16 %v855
        %v1098 = vunpack.c.h.b16 %v855
        %v1099 = vunpack.c.l.b16 %v856
        %v1100 = vunpack.c.h.b16 %v856
        %v1101 = vunpack.c.l.b16 %v857
        %v1102 = vunpack.c.l.b16 %v858
        %v1103 = vunpack.c.h.b16 %v858
        %v1104 = vunpack.c.l.b16 %v859
        %v1105 = vunpack.c.h.b16 %v859
        %v1106 = vunpack.c.l.b16 %v860
        %v1107 = vunpack.c.h.b16 %v860
        %v1108 = vunpack.c.l.b16 %v861
        %v1109 = vunpack.c.h.b16 %v861
        %v1110 = vunpack.c.l.b16 %v862
        %v1111 = vunpack.c.l.b16 %v863
        %v1112 = vunpack.c.h.b16 %v863
        %v1113 = vunpack.c.l.b16 %v864
        %v1114 = vunpack.c.h.b16 %v864
        %v1115 = vunpack.c.l.b16 %v865
        %v1116 = vunpack.c.h.b16 %v865
        %v1117 = vunpack.c.l.b16 %v866
        %v1118 = vunpack.c.h.b16 %v866
        %v1119 = vunpack.c.l.b16 %v867
        %v1120 = vunpack.c.l.b16 %v868
        %v1121 = vunpack.c.h.b16 %v868
        %v1122 = vunpack.c.l.b16 %v869
        %v1123 = vunpack.c.h.b16 %v869
        %v1124 = vunpack.c.l.b16 %v870
        %v1125 = vunpack.c.h.b16 %v870
        %v1126 = vunpack.c.l.b16 %v871
        %v1127 = vunpack.c.h.b16 %v871
        %v1128 = vunpack.c.l.b16 %v872
        %v1129 = vpack.c.b16 %v1066, %v1057
        %v1130 = vpack.c.b16 %v1067, %v1058
        %v1131 = vpack.c.b16 %v1068, %v1059
        %v1132 = vpack.c.b16 %v1069, %v1060
        %v1133 = vpack.c.b16 %v1070, %v1061
        %v1134 = vpack.c.b16 %v1071, %v1062
        %v1135 = vpack.c.b16 %v1072, %v1063
        %v1136 = vpack.c.b16 %v1073, %v1064
        %v1137 = vpack.c.b16 %v1074, %v1065
        %v1138 = vpack.c.b16 %v1084, %v1075
        %v1139 = vpack.c.b16 %v1085, %v1076
        %v1140 = vpack.c.b16 %v1086, %v1077
        %v1141 = vpack.c.b16 %v1087, %v1078
        %v1142 = vpack.c.b16 %v1088, %v1079
        %v1143 = vpack.c.b16 %v1089, %v1080
        %v1144 = vpack.c.b16 %v1090, %v1081
        %v1145 = vpack.c.b16 %v1091, %v1082
        %v1146 = vpack.c.b16 %v1092, %v1083
        %v1147 = vpack.c.b16 %v1102, %v1093
        %v1148 = vpack.c.b16 %v1103, %v1094
        %v1149 = vpack.c.b16 %v1104, %v1095
        %v1150 = vpack.c.b16 %v1105, %v1096
        %v1151 = vpack.c.b16 %v1106, %v1097
        %v1152 = vpack.c.b16 %v1107, %v1098
        %v1153 = vpack.c.b16 %v1108, %v1099
        %v1154 = vpack.c.b16 %v1109, %v1100
        %v1155 = vpack.c.b16 %v1110, %v1101
        %v1156 = vpack.c.b16 %v1120, %v1111
        %v1157 = vpack.c.b16 %v1121, %v1112
        %v1158 = vpack.c.b16 %v1122, %v1113
        %v1159 = vpack.c.b16 %v1123, %v1114
        %v1160 = vpack.c.b16 %v1124, %v1115
        %v1161 = vpack.c.b16 %v1125, %v1116
        %v1162 = vpack.c.b16 %v1126, %v1117
        %v1163 = vpack.c.b16 %v1127, %v1118
        %v1164 = vpack.c.b16 %v1128, %v1119
        %v1345 = vunpack.c.l.b16 %v873
        %v1346 = vunpack.c.l.b16 %v874
        %v1347 = vunpack.c.l.b16 %v875
        %v1348 = vunpack.c.l.b16 %v876
        %v1349 = vunpack.c.l.b16 %v877
        %v1350 = vunpack.c.l.b16 %v878
        %v1351 = vunpack.c.l.b16 %v879
        %v1352 = vunpack.c.l.b16 %v880
        %v1353 = vunpack.c.l.b16 %v881
        %v1354 = vunpack.c.l.b16 %v882
        %v1355 = vunpack.c.l.b16 %v883
        %v1356 = vunpack.c.l.b16 %v884
        %v1357 = vunpack.c.l.b16 %v885
        %v1358 = vunpack.c.l.b16 %v886
        %v1359 = vunpack.c.l.b16 %v887
        %v1360 = vunpack.c.l.b16 %v888
        %v1361 = vunpack.c.l.b16 %v889
        %v1362 = vunpack.c.l.b16 %v890
        %v1363 = vunpack.c.l.b16 %v891
        %v1364 = vunpack.c.l.b16 %v892
        %v1365 = vunpack.c.l.b16 %v893
        %v1366 = vunpack.c.l.b16 %v894
        %v1367 = vunpack.c.l.b16 %v895
        %v1368 = vunpack.c.l.b16 %v896
        %v1369 = vunpack.c.l.b16 %v897
        %v1370 = vunpack.c.l.b16 %v898
        %v1371 = vunpack.c.l.b16 %v899
        %v1372 = vunpack.c.l.b16 %v900
        %v1373 = vunpack.c.l.b16 %v901
        %v1374 = vunpack.c.l.b16 %v902
        %v1375 = vunpack.c.l.b16 %v903
        %v1376 = vunpack.c.l.b16 %v904
        %v1377 = vunpack.c.l.b16 %v905
        %v1378 = vunpack.c.l.b16 %v906
        %v1379 = vunpack.c.l.b16 %v907
        %v1380 = vunpack.c.l.b16 %v908
        %v1381 = vunpack.c.l.b16 %v909
        %v1382 = vunpack.c.l.b16 %v910
        %v1383 = vunpack.c.l.b16 %v911
        %v1384 = vunpack.c.l.b16 %v912
        %v1385 = vunpack.c.l.b16 %v913
        %v1386 = vunpack.c.l.b16 %v914
        %v1387 = vunpack.c.l.b16 %v915
        %v1388 = vunpack.c.l.b16 %v916
        %v1389 = vunpack.c.l.b16 %v917
        %v1390 = vunpack.c.l.b16 %v918
        %v1391 = vunpack.c.l.b16 %v919
        %v1392 = vunpack.c.l.b16 %v920
        %v1393 = vunpack.c.l.b16 %v921
        %v1394 = vunpack.c.l.b16 %v922
        %v1395 = vunpack.c.l.b16 %v923
        %v1396 = vunpack.c.l.b16 %v924
        %v1397 = vunpack.c.l.b16 %v925
        %v1398 = vunpack.c.l.b16 %v926
        %v1399 = vunpack.c.l.b16 %v927
        %v1400 = vunpack.c.l.b16 %v928
        %v1401 = vunpack.c.l.b16 %v929
        %v1402 = vunpack.c.l.b16 %v930
        %v1403 = vunpack.c.l.b16 %v931
        %v1404 = vunpack.c.l.b16 %v932
        %v1405 = vunpack.c.l.b16 %v933
        %v1406 = vunpack.c.l.b16 %v934
        %v1407 = vunpack.c.l.b16 %v935
        %v1408 = vunpack.c.l.b16 %v936
        %v1409 = vunpack.c.l.b16 %v937
        %v1410 = vunpack.c.l.b16 %v938
        %v1411 = vunpack.c.l.b16 %v939
        %v1412 = vunpack.c.l.b16 %v940
        %v1413 = vunpack.c.l.b16 %v941
        %v1414 = vunpack.c.l.b16 %v942
        %v1415 = vunpack.c.l.b16 %v943
        %v1416 = vunpack.c.l.b16 %v944
        %v1417 = vunpack.c.l.b16 %v945
        %v1418 = vunpack.c.l.b16 %v946
        %v1419 = vunpack.c.l.b16 %v947
        %v1420 = vunpack.c.l.b16 %v948
        %v1421 = vunpack.c.l.b16 %v949
        %v1422 = vunpack.c.l.b16 %v950
        %v1423 = vunpack.c.l.b16 %v951
        %v1424 = vunpack.c.l.b16 %v952
        %v1425 = vunpack.c.l.b16 %v953
        %v1426 = vunpack.c.l.b16 %v954
        %v1427 = vunpack.c.l.b16 %v955
        %v1428 = vunpack.c.l.b16 %v956
        %v1429 = vunpack.c.l.b16 %v957
        %v1430 = vunpack.c.l.b16 %v958
        %v1431 = vunpack.c.l.b16 %v959
        %v1432 = vunpack.c.l.b16 %v960
        %v1433 = vunpack.c.l.b16 %v961
        %v1434 = vunpack.c.l.b16 %v962
        %v1435 = vunpack.c.l.b16 %v963
        %v1436 = vunpack.c.l.b16 %v964
        %v1437 = vunpack.c.l.b16 %v965
        %v1438 = vunpack.c.l.b16 %v966
        %v1439 = vunpack.c.l.b16 %v967
        %v1440 = vunpack.c.l.b16 %v968
        %v1441 = vunpack.c.l.b16 %v969
        %v1442 = vunpack.c.l.b16 %v970
        %v1443 = vunpack.c.l.b16 %v971
        %v1444 = vunpack.c.l.b16 %v972
        %v1445 = vunpack.c.l.b16 %v973
        %v1446 = vunpack.c.l.b16 %v974
        %v1447 = vunpack.c.l.b16 %v975
        %v1448 = vunpack.c.l.b16 %v976
        %v1449 = vunpack.c.l.b16 %v977
        %v1450 = vunpack.c.l.b16 %v978
        %v1451 = vunpack.c.l.b16 %v979
        %v1452 = vunpack.c.l.b16 %v980
        %v1453 = vunpack.c.l.b16 %v981
        %v1454 = vunpack.c.l.b16 %v982
        %v1455 = vunpack.c.l.b16 %v983
        %v1456 = vunpack.c.l.b16 %v984
        %v1457 = vunpack.c.l.b16 %v985
        %v1458 = vunpack.c.l.b16 %v986
        %v1459 = vunpack.c.l.b16 %v987
        %v1460 = vunpack.c.l.b16 %v988
        %v1461 = vunpack.c.l.b16 %v989
        %v1462 = vunpack.c.l.b16 %v990
        %v1463 = vunpack.c.l.b16 %v991
        %v1464 = vunpack.c.l.b16 %v992
        %v1465 = vunpack.c.l.b16 %v993
        %v1466 = vunpack.c.l.b16 %v994
        %v1467 = vunpack.c.l.b16 %v995
        %v1468 = vunpack.c.l.b16 %v996
        %v1469 = vunpack.c.l.b16 %v997
        %v1470 = vunpack.c.l.b16 %v998
        %v1471 = vunpack.c.l.b16 %v999
        %v1472 = vunpack.c.l.b16 %v1000
        %v1473 = vunpack.c.l.b16 %v1001
        %v1474 = vunpack.c.l.b16 %v1002
        %v1475 = vunpack.c.l.b16 %v1003
        %v1476 = vunpack.c.l.b16 %v1004
        %v1477 = vunpack.c.l.b16 %v1005
        %v1478 = vunpack.c.l.b16 %v1006
        %v1479 = vunpack.c.l.b16 %v1007
        %v1480 = vunpack.c.l.b16 %v1008
        %v1481 = vunpack.c.l.b16 %v1009
        %v1482 = vunpack.c.l.b16 %v1010
        %v1483 = vunpack.c.l.b16 %v1011
        %v1484 = vunpack.c.l.b16 %v1012
        %v1485 = vunpack.c.l.b16 %v1013
        %v1486 = vunpack.c.l.b16 %v1014
        %v1487 = vunpack.c.l.b16 %v1015
        %v1488 = vunpack.c.l.b16 %v1016
        %v1489 = vpack.c.b16 %v1346, %v1345
        %v1490 = vpack.c.b16 %v1348, %v1347
        %v1491 = vpack.c.b16 %v1350, %v1349
        %v1492 = vpack.c.b16 %v1352, %v1351
        %v1493 = vpack.c.b16 %v1354, %v1353
        %v1494 = vpack.c.b16 %v1356, %v1355
        %v1495 = vpack.c.b16 %v1358, %v1357
        %v1496 = vpack.c.b16 %v1360, %v1359
        %v1497 = vpack.c.b16 %v1362, %v1361
        %v1498 = vpack.c.b16 %v1364, %v1363
        %v1499 = vpack.c.b16 %v1366, %v1365
        %v1500 = vpack.c.b16 %v1368, %v1367
        %v1501 = vpack.c.b16 %v1370, %v1369
        %v1502 = vpack.c.b16 %v1372, %v1371
        %v1503 = vpack.c.b16 %v1374, %v1373
        %v1504 = vpack.c.b16 %v1376, %v1375
        %v1505 = vpack.c.b16 %v1378, %v1377
        %v1506 = vpack.c.b16 %v1380, %v1379
        %v1507 = vpack.c.b16 %v1382, %v1381
        %v1508 = vpack.c.b16 %v1384, %v1383
        %v1509 = vpack.c.b16 %v1386, %v1385
        %v1510 = vpack.c.b16 %v1388, %v1387
        %v1511 = vpack.c.b16 %v1390, %v1389
        %v1512 = vpack.c.b16 %v1392, %v1391
        %v1513 = vpack.c.b16 %v1394, %v1393
        %v1514 = vpack.c.b16 %v1396, %v1395
        %v1515 = vpack.c.b16 %v1398, %v1397
        %v1516 = vpack.c.b16 %v1400, %v1399
        %v1517 = vpack.c.b16 %v1402, %v1401
        %v1518 = vpack.c.b16 %v1404, %v1403
        %v1519 = vpack.c.b16 %v1406, %v1405
        %v1520 = vpack.c.b16 %v1408, %v1407
        %v1521 = vpack.c.b16 %v1410, %v1409
        %v1522 = vpack.c.b16 %v1412, %v1411
        %v1523 = vpack.c.b16 %v1414, %v1413
        %v1524 = vpack.c.b16 %v1416, %v1415
        %v1525 = vpack.c.b16 %v1418, %v1417
        %v1526 = vpack.c.b16 %v1420, %v1419
        %v1527 = vpack.c.b16 %v1422, %v1421
        %v1528 = vpack.c.b16 %v1424, %v1423
        %v1529 = vpack.c.b16 %v1426, %v1425
        %v1530 = vpack.c.b16 %v1428, %v1427
        %v1531 = vpack.c.b16 %v1430, %v1429
        %v1532 = vpack.c.b16 %v1432, %v1431
        %v1533 = vpack.c.b16 %v1434, %v1433
        %v1534 = vpack.c.b16 %v1436, %v1435
        %v1535 = vpack.c.b16 %v1438, %v1437
        %v1536 = vpack.c.b16 %v1440, %v1439
        %v1537 = vpack.c.b16 %v1442, %v1441
        %v1538 = vpack.c.b16 %v1444, %v1443
        %v1539 = vpack.c.b16 %v1446, %v1445
        %v1540 = vpack.c.b16 %v1448, %v1447
        %v1541 = vpack.c.b16 %v1450, %v1449
        %v1542 = vpack.c.b16 %v1452, %v1451
        %v1543 = vpack.c.b16 %v1454, %v1453
        %v1544 = vpack.c.b16 %v1456, %v1455
        %v1545 = vpack.c.b16 %v1458, %v1457
        %v1546 = vpack.c.b16 %v1460, %v1459
        %v1547 = vpack.c.b16 %v1462, %v1461
        %v1548 = vpack.c.b16 %v1464, %v1463
        %v1549 = vpack.c.b16 %v1466, %v1465
        %v1550 = vpack.c.b16 %v1468, %v1467
        %v1551 = vpack.c.b16 %v1470, %v1469
        %v1552 = vpack.c.b16 %v1472, %v1471
        %v1553 = vpack.c.b16 %v1474, %v1473
        %v1554 = vpack.c.b16 %v1476, %v1475
        %v1555 = vpack.c.b16 %v1478, %v1477
        %v1556 = vpack.c.b16 %v1480, %v1479
        %v1557 = vpack.c.b16 %v1482, %v1481
        %v1558 = vpack.c.b16 %v1484, %v1483
        %v1559 = vpack.c.b16 %v1486, %v1485
        %v1560 = vpack.c.b16 %v1488, %v1487
        %1633 = vmatprep.subr.bf16.mxu0 0
        %1634 = vmatpush1.bf16.msra.mxu0 %v1489
        %1635 = vmatprep.subr.bf16.mxu0 0
        %1636 = vmatpush1.bf16.msra.mxu0 %v1490
        %1637 = vmatprep.subr.bf16.mxu0 0
        %1638 = vmatpush1.bf16.msra.mxu0 %v1491
        %1639 = vmatprep.subr.bf16.mxu0 0
        %1640 = vmatpush1.bf16.msra.mxu0 %v1492
        %1641 = vmatprep.subr.bf16.mxu0 0
        %1642 = vmatpush1.bf16.msra.mxu0 %v1493
        %1643 = vmatprep.subr.bf16.mxu0 0
        %1644 = vmatpush1.bf16.msra.mxu0 %v1494
        %1645 = vmatprep.subr.bf16.mxu0 0
        %1646 = vmatpush1.bf16.msra.mxu0 %v1495
        %1647 = vmatprep.subr.bf16.mxu0 0
        %1648 = vmatpush1.bf16.msra.mxu0 %v1496
        %1649 = vmatprep.subr.bf16.mxu0 0
        %1650 = vmatpush1.bf16.msra.mxu0 %v1497
        %1651 = vmatprep.subr.bf16.mxu0 0
        %1652 = vmatpush1.bf16.msra.mxu0 %v1498
        %1653 = vmatprep.subr.bf16.mxu0 0
        %1654 = vmatpush1.bf16.msra.mxu0 %v1499
        %1655 = vmatprep.subr.bf16.mxu0 0
        %1656 = vmatpush1.bf16.msra.mxu0 %v1500
        %1657 = vmatprep.subr.bf16.mxu0 0
        %1658 = vmatpush1.bf16.msra.mxu0 %v1501
        %1659 = vmatprep.subr.bf16.mxu0 0
        %1660 = vmatpush1.bf16.msra.mxu0 %v1502
        %1661 = vmatprep.subr.bf16.mxu0 0
        %1662 = vmatpush1.bf16.msra.mxu0 %v1503
        %1663 = vmatprep.subr.bf16.mxu0 0
        %1664 = vmatpush1.bf16.msra.mxu0 %v1504
        %1665 = vmatprep.mubr.bf16.mxu0 %v1130
        %1666 = vmatmul.mubr.bf16.gmra.mrb[0].mxu0 %v1129
        %v1667 = vpop.f32.mrb[0].mxu0
        %v1668 = vadd.f32 0.0, %v1667
        %v1669 = vpop.f32.mrb[0].mxu0
        %v1670 = vpop.f32.mrb[0].mxu0
        %v1671 = vadd.f32 0.0, %v1670
        %v1672 = vpop.f32.mrb[0].mxu0
        %1673 = vmatprep.mubr.bf16.mxu0 %v1139
        %1674 = vmatmul.mubr.bf16.gmra.mrb[0].mxu0 %v1138
        %v1675 = vpop.f32.mrb[0].mxu0
        %v1676 = vadd.f32 0.0, %v1675
        %v1677 = vpop.f32.mrb[0].mxu0
        %v1678 = vpop.f32.mrb[0].mxu0
        %v1679 = vadd.f32 0.0, %v1678
        %v1680 = vpop.f32.mrb[0].mxu0
        %1681 = vmatprep.mubr.bf16.mxu0 %v1148
        %1682 = vmatmul.mubr.bf16.gmra.mrb[0].mxu0 %v1147
        %v1683 = vpop.f32.mrb[0].mxu0
        %v1684 = vadd.f32 0.0, %v1683
        %v1685 = vpop.f32.mrb[0].mxu0
        %v1686 = vpop.f32.mrb[0].mxu0
        %v1687 = vadd.f32 0.0, %v1686
        %v1688 = vpop.f32.mrb[0].mxu0
        %1689 = vmatprep.mubr.bf16.mxu0 %v1157
        %1690 = vmatmul.mubr.bf16.gmra.mrb[0].mxu0 %v1156
        %v1691 = vpop.f32.mrb[0].mxu0
        %v1692 = vadd.f32 0.0, %v1691
        %v1693 = vpop.f32.mrb[0].mxu0
        %v1694 = vpop.f32.mrb[0].mxu0
        %v1695 = vadd.f32 0.0, %v1694
        %v1696 = vpop.f32.mrb[0].mxu0
        %1697 = vdwg.mxu0
        %1698 = vmatprep.subr.bf16.mxu0 0
        %1699 = vmatpush1.bf16.msra.mxu0 %v1505
        %1700 = vmatprep.subr.bf16.mxu0 0
        %1701 = vmatpush1.bf16.msra.mxu0 %v1506
        %1702 = vmatprep.subr.bf16.mxu0 0
        %1703 = vmatpush1.bf16.msra.mxu0 %v1507
        %1704 = vmatprep.subr.bf16.mxu0 0
        %1705 = vmatpush1.bf16.msra.mxu0 %v1508
        %1706 = vmatprep.subr.bf16.mxu0 0
        %1707 = vmatpush1.bf16.msra.mxu0 %v1509
        %1708 = vmatprep.subr.bf16.mxu0 0
        %1709 = vmatpush1.bf16.msra.mxu0 %v1510
        %1710 = vmatprep.subr.bf16.mxu0 0
        %1711 = vmatpush1.bf16.msra.mxu0 %v1511
        %1712 = vmatprep.subr.bf16.mxu0 0
        %1713 = vmatpush1.bf16.msra.mxu0 %v1512
        %1714 = vmatprep.subr.bf16.mxu0 0
        %1715 = vmatpush1.bf16.msra.mxu0 %v1513
        %1716 = vmatprep.subr.bf16.mxu0 0
        %1717 = vmatpush1.bf16.msra.mxu0 %v1514
        %1718 = vmatprep.subr.bf16.mxu0 0
        %1719 = vmatpush1.bf16.msra.mxu0 %v1515
        %1720 = vmatprep.subr.bf16.mxu0 0
        %1721 = vmatpush1.bf16.msra.mxu0 %v1516
        %1722 = vmatprep.subr.bf16.mxu0 0
        %1723 = vmatpush1.bf16.msra.mxu0 %v1517
        %1724 = vmatprep.subr.bf16.mxu0 0
        %1725 = vmatpush1.bf16.msra.mxu0 %v1518
        %1726 = vmatprep.subr.bf16.mxu0 0
        %1727 = vmatpush1.bf16.msra.mxu0 %v1519
        %1728 = vmatprep.subr.bf16.mxu0 0
        %1729 = vmatpush1.bf16.msra.mxu0 %v1520
        %1730 = vmatprep.mubr.bf16.mxu0 %v1132
        %1731 = vmatmul.mubr.bf16.gmra.mrb[0].mxu0 %v1131
        %v1732 = vpop.f32.mrb[0].mxu0
        %v1733 = vadd.f32 %v1668, %v1732
        %v1734 = vpop.f32.mrb[0].mxu0
        %v1735 = vpop.f32.mrb[0].mxu0
        %v1736 = vadd.f32 %v1671, %v1735
        %v1737 = vpop.f32.mrb[0].mxu0
        %1738 = vmatprep.mubr.bf16.mxu0 %v1141
        %1739 = vmatmul.mubr.bf16.gmra.mrb[0].mxu0 %v1140
        %v1740 = vpop.f32.mrb[0].mxu0
        %v1741 = vadd.f32 %v1676, %v1740
        %v1742 = vpop.f32.mrb[0].mxu0
        %v1743 = vpop.f32.mrb[0].mxu0
        %v1744 = vadd.f32 %v1679, %v1743
        %v1745 = vpop.f32.mrb[0].mxu0
        %1746 = vmatprep.mubr.bf16.mxu0 %v1150
        %1747 = vmatmul.mubr.bf16.gmra.mrb[0].mxu0 %v1149
        %v1748 = vpop.f32.mrb[0].mxu0
        %v1749 = vadd.f32 %v1684, %v1748
        %v1750 = vpop.f32.mrb[0].mxu0
        %v1751 = vpop.f32.mrb[0].mxu0
        %v1752 = vadd.f32 %v1687, %v1751
        %v1753 = vpop.f32.mrb[0].mxu0
        %1754 = vmatprep.mubr.bf16.mxu0 %v1159
        %1755 = vmatmul.mubr.bf16.gmra.mrb[0].mxu0 %v1158
        %v1756 = vpop.f32.mrb[0].mxu0
        %v1757 = vadd.f32 %v1692, %v1756
        %v1758 = vpop.f32.mrb[0].mxu0
        %v1759 = vpop.f32.mrb[0].mxu0
        %v1760 = vadd.f32 %v1695, %v1759
        %v1761 = vpop.f32.mrb[0].mxu0
        %1762 = vdwg.mxu0
        %1763 = vmatprep.subr.bf16.mxu0 0
        %1764 = vmatpush1.bf16.msra.mxu0 %v1521
        %1765 = vmatprep.subr.bf16.mxu0 0
        %1766 = vmatpush1.bf16.msra.mxu0 %v1522
        %1767 = vmatprep.subr.bf16.mxu0 0
        %1768 = vmatpush1.bf16.msra.mxu0 %v1523
        %1769 = vmatprep.subr.bf16.mxu0 0
        %1770 = vmatpush1.bf16.msra.mxu0 %v1524
        %1771 = vmatprep.subr.bf16.mxu0 0
        %1772 = vmatpush1.bf16.msra.mxu0 %v1525
        %1773 = vmatprep.subr.bf16.mxu0 0
        %1774 = vmatpush1.bf16.msra.mxu0 %v1526
        %1775 = vmatprep.subr.bf16.mxu0 0
        %1776 = vmatpush1.bf16.msra.mxu0 %v1527
        %1777 = vmatprep.subr.bf16.mxu0 0
        %1778 = vmatpush1.bf16.msra.mxu0 %v1528
        %1779 = vmatprep.subr.bf16.mxu0 0
        %1780 = vmatpush1.bf16.msra.mxu0 %v1529
        %1781 = vmatprep.subr.bf16.mxu0 0
        %1782 = vmatpush1.bf16.msra.mxu0 %v1530
        %1783 = vmatprep.subr.bf16.mxu0 0
        %1784 = vmatpush1.bf16.msra.mxu0 %v1531
        %1785 = vmatprep.subr.bf16.mxu0 0
        %1786 = vmatpush1.bf16.msra.mxu0 %v1532
        %1787 = vmatprep.subr.bf16.mxu0 0
        %1788 = vmatpush1.bf16.msra.mxu0 %v1533
        %1789 = vmatprep.subr.bf16.mxu0 0
        %1790 = vmatpush1.bf16.msra.mxu0 %v1534
        %1791 = vmatprep.subr.bf16.mxu0 0
        %1792 = vmatpush1.bf16.msra.mxu0 %v1535
        %1793 = vmatprep.subr.bf16.mxu0 0
        %1794 = vmatpush1.bf16.msra.mxu0 %v1536
        %1795 = vmatprep.mubr.bf16.mxu0 %v1134
        %1796 = vmatmul.mubr.bf16.gmra.mrb[0].mxu0 %v1133
        %v1797 = vpop.f32.mrb[0].mxu0
        %v1798 = vadd.f32 %v1733, %v1797
        %v1799 = vpop.f32.mrb[0].mxu0
        %v1800 = vpop.f32.mrb[0].mxu0
        %v1801 = vadd.f32 %v1736, %v1800
        %v1802 = vpop.f32.mrb[0].mxu0
        %1803 = vmatprep.mubr.bf16.mxu0 %v1143
        %1804 = vmatmul.mubr.bf16.gmra.mrb[0].mxu0 %v1142
        %v1805 = vpop.f32.mrb[0].mxu0
        %v1806 = vadd.f32 %v1741, %v1805
        %v1807 = vpop.f32.mrb[0].mxu0
        %v1808 = vpop.f32.mrb[0].mxu0
        %v1809 = vadd.f32 %v1744, %v1808
        %v1810 = vpop.f32.mrb[0].mxu0
        %1811 = vmatprep.mubr.bf16.mxu0 %v1152
        %1812 = vmatmul.mubr.bf16.gmra.mrb[0].mxu0 %v1151
        %v1813 = vpop.f32.mrb[0].mxu0
        %v1814 = vadd.f32 %v1749, %v1813
        %v1815 = vpop.f32.mrb[0].mxu0
        %v1816 = vpop.f32.mrb[0].mxu0
        %v1817 = vadd.f32 %v1752, %v1816
        %v1818 = vpop.f32.mrb[0].mxu0
        %1819 = vmatprep.mubr.bf16.mxu0 %v1161
        %1820 = vmatmul.mubr.bf16.gmra.mrb[0].mxu0 %v1160
        %v1821 = vpop.f32.mrb[0].mxu0
        %v1822 = vadd.f32 %v1757, %v1821
        %v1823 = vpop.f32.mrb[0].mxu0
        %v1824 = vpop.f32.mrb[0].mxu0
        %v1825 = vadd.f32 %v1760, %v1824
        %v1826 = vpop.f32.mrb[0].mxu0
        %1827 = vdwg.mxu0
        %1828 = vmatprep.subr.bf16.mxu0 0
        %1829 = vmatpush1.bf16.msra.mxu0 %v1537
        %1830 = vmatprep.subr.bf16.mxu0 0
        %1831 = vmatpush1.bf16.msra.mxu0 %v1538
        %1832 = vmatprep.subr.bf16.mxu0 0
        %1833 = vmatpush1.bf16.msra.mxu0 %v1539
        %1834 = vmatprep.subr.bf16.mxu0 0
        %1835 = vmatpush1.bf16.msra.mxu0 %v1540
        %1836 = vmatprep.subr.bf16.mxu0 0
        %1837 = vmatpush1.bf16.msra.mxu0 %v1541
        %1838 = vmatprep.subr.bf16.mxu0 0
        %1839 = vmatpush1.bf16.msra.mxu0 %v1542
        %1840 = vmatprep.subr.bf16.mxu0 0
        %1841 = vmatpush1.bf16.msra.mxu0 %v1543
        %1842 = vmatprep.subr.bf16.mxu0 0
        %1843 = vmatpush1.bf16.msra.mxu0 %v1544
        %1844 = vmatprep.subr.bf16.mxu0 0
        %1845 = vmatpush1.bf16.msra.mxu0 %v1545
        %1846 = vmatprep.subr.bf16.mxu0 0
        %1847 = vmatpush1.bf16.msra.mxu0 %v1546
        %1848 = vmatprep.subr.bf16.mxu0 0
        %1849 = vmatpush1.bf16.msra.mxu0 %v1547
        %1850 = vmatprep.subr.bf16.mxu0 0
        %1851 = vmatpush1.bf16.msra.mxu0 %v1548
        %1852 = vmatprep.subr.bf16.mxu0 0
        %1853 = vmatpush1.bf16.msra.mxu0 %v1549
        %1854 = vmatprep.subr.bf16.mxu0 0
        %1855 = vmatpush1.bf16.msra.mxu0 %v1550
        %1856 = vmatprep.subr.bf16.mxu0 0
        %1857 = vmatpush1.bf16.msra.mxu0 %v1551
        %1858 = vmatprep.subr.bf16.mxu0 0
        %1859 = vmatpush1.bf16.msra.mxu0 %v1552
        %1860 = vmatprep.mubr.bf16.mxu0 %v1136
        %1861 = vmatmul.mubr.bf16.gmra.mrb[0].mxu0 %v1135
        %v1862 = vpop.f32.mrb[0].mxu0
        %v1863 = vadd.f32 %v1798, %v1862
        %v1864 = vpop.f32.mrb[0].mxu0
        %v1865 = vpop.f32.mrb[0].mxu0
        %v1866 = vadd.f32 %v1801, %v1865
        %v1867 = vpop.f32.mrb[0].mxu0
        %1868 = vmatprep.mubr.bf16.mxu0 %v1145
        %1869 = vmatmul.mubr.bf16.gmra.mrb[0].mxu0 %v1144
        %v1870 = vpop.f32.mrb[0].mxu0
        %v1871 = vadd.f32 %v1806, %v1870
        %v1872 = vpop.f32.mrb[0].mxu0
        %v1873 = vpop.f32.mrb[0].mxu0
        %v1874 = vadd.f32 %v1809, %v1873
        %v1875 = vpop.f32.mrb[0].mxu0
        %1876 = vmatprep.mubr.bf16.mxu0 %v1154
        %1877 = vmatmul.mubr.bf16.gmra.mrb[0].mxu0 %v1153
        %v1878 = vpop.f32.mrb[0].mxu0
        %v1879 = vadd.f32 %v1814, %v1878
        %v1880 = vpop.f32.mrb[0].mxu0
        %v1881 = vpop.f32.mrb[0].mxu0
        %v1882 = vadd.f32 %v1817, %v1881
        %v1883 = vpop.f32.mrb[0].mxu0
        %1884 = vmatprep.mubr.bf16.mxu0 %v1163
        %1885 = vmatmul.mubr.bf16.gmra.mrb[0].mxu0 %v1162
        %v1886 = vpop.f32.mrb[0].mxu0
        %v1887 = vadd.f32 %v1822, %v1886
        %v1888 = vpop.f32.mrb[0].mxu0
        %v1889 = vpop.f32.mrb[0].mxu0
        %v1890 = vadd.f32 %v1825, %v1889
        %v1891 = vpop.f32.mrb[0].mxu0
        %1892 = vdwg.mxu0
        %1893 = vmatprep.subr.bf16.mxu0 0
        %1894 = vmatpush1.bf16.msra.mxu0 %v1553
        %1895 = vmatprep.subr.bf16.mxu0 0
        %1896 = vmatpush1.bf16.msra.mxu0 %v1554
        %1897 = vmatprep.subr.bf16.mxu0 0
        %1898 = vmatpush1.bf16.msra.mxu0 %v1555
        %1899 = vmatprep.subr.bf16.mxu0 0
        %1900 = vmatpush1.bf16.msra.mxu0 %v1556
        %1901 = vmatprep.subr.bf16.mxu0 0
        %1902 = vmatpush1.bf16.msra.mxu0 %v1557
        %1903 = vmatprep.subr.bf16.mxu0 0
        %1904 = vmatpush1.bf16.msra.mxu0 %v1558
        %1905 = vmatprep.subr.bf16.mxu0 0
        %1906 = vmatpush1.bf16.msra.mxu0 %v1559
        %1907 = vmatprep.subr.bf16.mxu0 0
        %1908 = vmatpush1.bf16.msra.mxu0 %v1560
        %1909 = vmatprep.subr.bf16.mxu0 0
        %1910 = vmatpush1.bf16.msra.mxu0 0
        %1911 = vmatprep.subr.bf16.mxu0 0
        %1912 = vmatpush1.bf16.msra.mxu0 0
        %1913 = vmatprep.subr.bf16.mxu0 0
        %1914 = vmatpush1.bf16.msra.mxu0 0
        %1915 = vmatprep.subr.bf16.mxu0 0
        %1916 = vmatpush1.bf16.msra.mxu0 0
        %1917 = vmatprep.subr.bf16.mxu0 0
        %1918 = vmatpush1.bf16.msra.mxu0 0
        %1919 = vmatprep.subr.bf16.mxu0 0
        %1920 = vmatpush1.bf16.msra.mxu0 0
        %1921 = vmatprep.subr.bf16.mxu0 0
        %1922 = vmatpush1.bf16.msra.mxu0 0
        %1923 = vmatprep.subr.bf16.mxu0 0
        %1924 = vmatpush1.bf16.msra.mxu0 0
        %1925 = vmatprep.mubr.bf16.mxu0 0
        %1926 = vmatmul.mubr.bf16.gmra.mrb[0].mxu0 %v1137
        %v1927 = vpop.f32.mrb[0].mxu0
        %v1928 = vadd.f32 %v1863, %v1927
        %v1929 = vpop.f32.mrb[0].mxu0
        %v1930 = vpop.f32.mrb[0].mxu0
        %v1931 = vadd.f32 %v1866, %v1930
        %v1932 = vpop.f32.mrb[0].mxu0
        %1933 = vmatprep.mubr.bf16.mxu0 0
        %1934 = vmatmul.mubr.bf16.gmra.mrb[0].mxu0 %v1146
        %v1935 = vpop.f32.mrb[0].mxu0
        %v1936 = vadd.f32 %v1871, %v1935
        %v1937 = vpop.f32.mrb[0].mxu0
        %v1938 = vpop.f32.mrb[0].mxu0
        %v1939 = vadd.f32 %v1874, %v1938
        %v1940 = vpop.f32.mrb[0].mxu0
        %1941 = vmatprep.mubr.bf16.mxu0 0
        %1942 = vmatmul.mubr.bf16.gmra.mrb[0].mxu0 %v1155
        %v1943 = vpop.f32.mrb[0].mxu0
        %v1944 = vadd.f32 %v1879, %v1943
        %v1945 = vpop.f32.mrb[0].mxu0
        %v1946 = vpop.f32.mrb[0].mxu0
        %v1947 = vadd.f32 %v1882, %v1946
        %v1948 = vpop.f32.mrb[0].mxu0
        %1949 = vmatprep.mubr.bf16.mxu0 0
        %1950 = vmatmul.mubr.bf16.gmra.mrb[0].mxu0 %v1164
        %v1951 = vpop.f32.mrb[0].mxu0
        %v1952 = vadd.f32 %v1887, %v1951
        %v1953 = vpop.f32.mrb[0].mxu0
        %v1954 = vpop.f32.mrb[0].mxu0
        %v1955 = vadd.f32 %v1890, %v1954
        %v1956 = vpop.f32.mrb[0].mxu0
        %1957 = vdwg.mxu0
        %v1958 = vmax.f32 %v1928, %v1936
        %v1959 = vmax.f32 %v1931, %v1939
        %v1960 = vmax.f32 %v1958, %v1944
        %v1961 = vmax.f32 %v1959, %v1947
        %v1962 = vmax.f32 %v1960, %v1952
        %v1963 = vmax.f32 %v1961, %v1955
        %v1964 = vld [vmem:[%s830] sm:$0x1]
        %v1966 = vlaneseq
        %v1967 = vshrl.u32 %v1966, 7
        %v1968 = vsub.s32 0, %v1967
        %v1969 = vrot.slane %v1964, %v1968
        %v1971 = vadd.f32 %v1962, %v1969
        %v1972 = vadd.f32 %v1963, %v1969
        %v1973 = vmax.f32 %v1971, 0.0
        %v1974 = vmax.f32 %v1972, 0.0
        %v1975 = vpack.c.bf16 %v1974, %v1973
        %v1977 = vunpack.c.l.b16 %v1975
        %v1978 = vunpack.c.h.b16 %v1975
        %v1979 = vpack.c.b16 %v1977, %v1977
        %v1980 = vpack.c.b16 %v1978, %v1978
        %1983 = vst [vmem:[%s820] sm:$0xf] %v1979
        %1984 = vst [vmem:[%s820 + $0x4] sm:$0xf] %v1980
        %s1985 = sand.u32 %s114, 1
        %s1986 = sand.u32 %s114, 1
        %s1987 = smul.addr %s1986, 8
        %s1988 = scalar_lea.vmem [#allocation3], %s1987
        // Predicated region
        $region74: #{cnn_forward.7} parent=68 // pred_check
          %p1989 = pneg %p124
        $region75: #{cnn_forward.7} parent=68 // pred_check_branch
          %1991 = sbr.rel (%p1989) target = $region77
        $region76: #{cnn_forward.7} parent=68 // pred_region
          %s1992 = smul.u32 2, %s18
          %s1993 = smul.addr %s1992, 2
          %s1994 = sadd.s32 %s19, %s1993
          %s1995 = smul.addr %s1994, 4
          %s1996 = scalar_lea.vmem %s3, %s1995
          // Predicated region
          $region78: #{cnn_forward.7} parent=76 // pred_check
            _
          $region79: #{cnn_forward.7} parent=76 // pred_check_branch
            %1998 = sbr.rel (0) target = $region81
          $region80: #{cnn_forward.7} parent=76 // pred_region
            // Predicated region
            $region82: #{cnn_forward.7} parent=80 // pred_check
              _
            $region83: #{cnn_forward.7} parent=80 // pred_check_branch
              %2000 = sbr.rel target = $region85
            $region84: #{cnn_forward.7} parent=80 // pred_region
              // Predicated region
              $region97: #{cnn_forward.7} parent=84 // pred_check
                _
              $region98: #{cnn_forward.7} parent=84 // pred_check_branch
                %2017 = sbr.rel (0) target = $region100
              $region99: #{cnn_forward.7} parent=84 // pred_region
                loop: start=0, step=1, limit=1
                $region101: #{cnn_forward.7} parent=99 // loop_pre_header
                  _
                $region102: #{cnn_forward.7} parent=99 // loop_header
                  %s2019 = sphi 0, %s2023
                  %p2020 = scmp.ge.s32.totalorder %s2019, 1
                  %s2024 = sphi %s1988, %s1988
                  %s2025 = sphi %s1996, %s1996
                $region103: #{cnn_forward.7} parent=99 // loop_header_branch
                  %2022 = sbr.rel (%p2020) target = $region107
                $region104: #{cnn_forward.7} parent=99 // loop_body
                  _
                $region105: #{cnn_forward.7} parent=99 // loop_footer
                  %s2023 = sadd.s32 1, %s2019
                $region106: #{cnn_forward.7} parent=99 // loop_footer_branch
                  %2018 = sbr.rel target = $region102
                $region107: #{cnn_forward.7} parent=99 // loop_exit
                  _
                loop: start=0, step=1, limit=1
                $region108: #{cnn_forward.7} parent=99 // loop_pre_header
                  _
                $region109: #{cnn_forward.7} parent=99 // loop_header
                  %s2028 = sphi 0, %s2032
                  %p2029 = scmp.ge.s32.totalorder %s2028, 1
                  %s2033 = sphi %s1988, %s1988
                  %s2034 = sphi %s1996, %s1996
                $region110: #{cnn_forward.7} parent=99 // loop_header_branch
                  %2031 = sbr.rel (%p2029) target = $region114
                $region111: #{cnn_forward.7} parent=99 // loop_body
                  %v2035 = vld [vmem:[%s2033] sm:$0xf]
                  %2036 = vst [vmem:[%s2034] sm:$0xf] %v2035
                  %v2037 = vld [vmem:[%s2033 + $0x4] sm:$0xf]
                  %2038 = vst [vmem:[%s2034 + $0x8] sm:$0xf] %v2037
                $region112: #{cnn_forward.7} parent=99 // loop_footer
                  %s2032 = sadd.s32 1, %s2028
                $region113: #{cnn_forward.7} parent=99 // loop_footer_branch
                  %2027 = sbr.rel target = $region109
                $region114: #{cnn_forward.7} parent=99 // loop_exit
                  _
              $region100: #{cnn_forward.7} parent=84 // pred_fallthru
                _
            $region85: #{cnn_forward.7} parent=80 // pred_fallthru
              _
            // Predicated region
            $region86: #{cnn_forward.7} parent=80 // pred_check
              _
            $region87: #{cnn_forward.7} parent=80 // pred_check_branch
              %2002 = sbr.rel (0) target = $region89
            $region88: #{cnn_forward.7} parent=80 // pred_region
              loop: start=0, step=1, limit=1
              $region90: #{cnn_forward.7} parent=88 // loop_pre_header
                _
              $region91: #{cnn_forward.7} parent=88 // loop_header
                %s2005 = sphi 0, %s2009
                %p2006 = scmp.ge.s32.totalorder %s2005, 1
                %s2010 = sphi %s1988, %s1988
                %s2011 = sphi %s1996, %s1996
              $region92: #{cnn_forward.7} parent=88 // loop_header_branch
                %2008 = sbr.rel (%p2006) target = $region96
              $region93: #{cnn_forward.7} parent=88 // loop_body
                %v2012 = vld [vmem:[%s2010] sm:$0xf]
                %2013 = vst [vmem:[%s2011] sm:$0xf] %v2012
                %v2014 = vld [vmem:[%s2010 + $0x4] sm:$0xf]
                %2015 = vst [vmem:[%s2011 + $0x8] sm:$0xf] %v2014
              $region94: #{cnn_forward.7} parent=88 // loop_footer
                %s2009 = sadd.s32 1, %s2005
              $region95: #{cnn_forward.7} parent=88 // loop_footer_branch
                %2004 = sbr.rel target = $region91
              $region96: #{cnn_forward.7} parent=88 // loop_exit
                _
            $region89: #{cnn_forward.7} parent=80 // pred_fallthru
              _
          $region81: #{cnn_forward.7} parent=76 // pred_fallthru
            _
          %2039 = vnop
        $region77: #{cnn_forward.7} parent=68 // pred_fallthru
          _
      $region69: #{cnn_forward.7} parent=5 // pred_fallthru
        _
      %p2040 = scmp.le.s32.totalorder 2, %s9
      // Predicated region
      $region115: #{cnn_forward.7} parent=5 // pred_check
        %p2041 = pneg %p2040
      $region116: #{cnn_forward.7} parent=5 // pred_check_branch
        %2043 = sbr.rel (%p2041) target = $region118
      $region117: #{cnn_forward.7} parent=5 // pred_region
        %s2044 = ssub.s32 %s9, 2
        // Predicated region
        $region119: #{cnn_forward.7} parent=117 // pred_check
          %p2045 = pneg %p130
        $region120: #{cnn_forward.7} parent=117 // pred_check_branch
          %2047 = sbr.rel (%p2045) target = $region122
        $region121: #{cnn_forward.7} parent=117 // pred_region
          %s2048 = sand.u32 %s115, 1
          %s2049 = sand.u32 %s115, 1
          %s2050 = smul.addr %s2049, 8
          %s2051 = scalar_lea.vmem [#allocation3], %s2050
        $region122: #{cnn_forward.7} parent=117 // pred_fallthru
          _
      $region118: #{cnn_forward.7} parent=5 // pred_fallthru
        _
    $region6: #{cnn_forward.7} parent=1 // loop_footer
      %s13 = sadd.s32 1, %s9
    $region7: #{cnn_forward.7} parent=1 // loop_footer_branch
      %8 = sbr.rel target = $region3
    $region8: #{cnn_forward.7} parent=1 // loop_exit
      _

// kernel: cnn_forward.8
$region0: #{cnn_forward.8}
  #allocation0 [shape = 'u32[]', space=smem, size = 0x4, offset = 0x4, fixed_abs, tag = 'smem constant byte address 0x4 - core index']
  #allocation1 [shape = 'u32[144,128]{1,0:T(1,128)}', space=vmem, size = 0x12000, scoped, tag = 'internal scratch']
  %s0 = inlined_call_operand.vmem [shape: bf16[1,32,1024], index: 0, kind: input, shape index: {}]
  %s1 = inlined_call_operand.vmem [shape: bf16[1024,512], index: 1, kind: input, shape index: {}]
  %s2 = inlined_call_operand.vmem [shape: f32[1,512], index: 2, kind: input, shape index: {}]
  %s3 = inlined_call_operand.vmem [shape: bf16[32,512], index: 3, kind: output, shape index: {}]
  %s4 = sld [smem:[#allocation0]]
  $region123: #{cnn_forward.8} parent=0
    _
  %s6 = ssub.s32 1, %s4
  %s7 = scalar_select 0, %s6, %s4
  $region1: #{cnn_forward.8} parent=0
    #allocation2 [shape = 'u8[524288]{0}', space=vmem, size = 0x80000, scoped, tag = 'input window, operand 1']
    #allocation3 [shape = 'u8[16384]{0}', space=vmem, size = 0x4000, scoped, tag = 'output window, operand 0']
    loop: start=0, step=1, limit=6
    $region2: #{cnn_forward.8} parent=1 // loop_pre_header
      _
    $region3: #{cnn_forward.8} parent=1 // loop_header
      %s9 = sphi 0, %s13
      %p10 = scmp.ge.s32.totalorder %s9, 6
      %s16 = sphi 0, %s28
      %s17 = sphi 0, %s24
      %s18 = sphi 0, %s16
      %s19 = sphi 0, %s17
      %s20 = sphi 0, %s18
      %s21 = sphi 0, %s19
      %s31 = sphi 0, %s33
      %s34 = sphi 0, %s31
      %s35 = sphi 0, %s34
      %s51 = sphi 0, %s35
      %s57 = sphi 0, %s59
      %s60 = sphi 0, %s57
      %s61 = sphi 0, %s60
      %s77 = sphi 0, %s61
      %s83 = sphi 0, %s85
      %s86 = sphi 0, %s83
      %s87 = sphi 0, %s86
      %s103 = sphi 0, %s87
      %s111 = sphi 0, %s113
      %s114 = sphi 0, %s111
      %s115 = sphi 0, %s114
      %s131 = sphi 0, %s115
    $region4: #{cnn_forward.8} parent=1 // loop_header_branch
      %12 = sbr.rel (%p10) target = $region8
    $region5: #{cnn_forward.8} parent=1 // loop_body
      %s14 = ssub.s32 %s9, 1
      %s15 = ssub.s32 %s9, 2
      %s22 = sadd.s32 1, %s17
      %p23 = scmp.ge.s32.totalorder %s22, 4
      %s24 = scalar_select %p23, 0, %s22
      %s25 = sadd.s32 1, %s16
      %s26 = scalar_select %p23, %s25, %s16
      %p27 = scmp.ge.s32.totalorder %s26, 1
      %s28 = scalar_select %p27, 0, %s26
      %s29 = ssub.s32 %s16, %s28
      %p30 = scmp.eq.s32.totalorder %s29, 0
      %s32 = sadd.s32 %s31, 1
      %s33 = scalar_select %p30, %s31, %s32
      %p36 = pneg %p30
      %p37 = scmp.eq.s32.totalorder %s9, 3
      %p38 = por %p36, %p37
      %p39 = scmp.ne.s32.totalorder %s31, %s34
      %p40 = scmp.eq.s32.totalorder %s9, 0
      %p41 = por %p39, %p40
      %p42 = scmp.ne.s32.totalorder %s31, %s34
      %p43 = scmp.eq.s32.totalorder %s14, 3
      %p44 = por %p42, %p43
      %p45 = scmp.ne.s32.totalorder %s34, %s35
      %p46 = scmp.eq.s32.totalorder %s14, 0
      %p47 = por %p45, %p46
      %p48 = scmp.ne.s32.totalorder %s34, %s35
      %p49 = scmp.eq.s32.totalorder %s15, 3
      %p50 = por %p48, %p49
      %p52 = scmp.ne.s32.totalorder %s35, %s51
      %p53 = scmp.eq.s32.totalorder %s15, 0
      %p54 = por %p52, %p53
      %s55 = ssub.s32 %s17, %s24
      %p56 = scmp.eq.s32.totalorder %s55, 0
      %s58 = sadd.s32 %s57, 1
      %s59 = scalar_select %p56, %s57, %s58
      %p62 = pneg %p56
      %p63 = scmp.eq.s32.totalorder %s9, 3
      %p64 = por %p62, %p63
      %p65 = scmp.ne.s32.totalorder %s57, %s60
      %p66 = scmp.eq.s32.totalorder %s9, 0
      %p67 = por %p65, %p66
      %p68 = scmp.ne.s32.totalorder %s57, %s60
      %p69 = scmp.eq.s32.totalorder %s14, 3
      %p70 = por %p68, %p69
      %p71 = scmp.ne.s32.totalorder %s60, %s61
      %p72 = scmp.eq.s32.totalorder %s14, 0
      %p73 = por %p71, %p72
      %p74 = scmp.ne.s32.totalorder %s60, %s61
      %p75 = scmp.eq.s32.totalorder %s15, 3
      %p76 = por %p74, %p75
      %p78 = scmp.ne.s32.totalorder %s61, %s77
      %p79 = scmp.eq.s32.totalorder %s15, 0
      %p80 = por %p78, %p79
      %s81 = ssub.s32 %s17, %s24
      %p82 = scmp.eq.s32.totalorder %s81, 0
      %s84 = sadd.s32 %s83, 1
      %s85 = scalar_select %p82, %s83, %s84
      %p88 = pneg %p82
      %p89 = scmp.eq.s32.totalorder %s9, 3
      %p90 = por %p88, %p89
      %p91 = scmp.ne.s32.totalorder %s83, %s86
      %p92 = scmp.eq.s32.totalorder %s9, 0
      %p93 = por %p91, %p92
      %p94 = scmp.ne.s32.totalorder %s83, %s86
      %p95 = scmp.eq.s32.totalorder %s14, 3
      %p96 = por %p94, %p95
      %p97 = scmp.ne.s32.totalorder %s86, %s87
      %p98 = scmp.eq.s32.totalorder %s14, 0
      %p99 = por %p97, %p98
      %p100 = scmp.ne.s32.totalorder %s86, %s87
      %p101 = scmp.eq.s32.totalorder %s15, 3
      %p102 = por %p100, %p101
      %p104 = scmp.ne.s32.totalorder %s87, %s103
      %p105 = scmp.eq.s32.totalorder %s15, 0
      %p106 = por %p104, %p105
      %s107 = ssub.s32 %s16, %s28
      %s108 = ssub.s32 %s17, %s24
      %s109 = sor.u32 %s107, %s108
      %p110 = scmp.eq.s32.totalorder %s109, 0
      %s112 = sadd.s32 %s111, 1
      %s113 = scalar_select %p110, %s111, %s112
      %p116 = pneg %p110
      %p117 = scmp.eq.s32.totalorder %s9, 3
      %p118 = por %p116, %p117
      %p119 = scmp.ne.s32.totalorder %s111, %s114
      %p120 = scmp.eq.s32.totalorder %s9, 0
      %p121 = por %p119, %p120
      %p122 = scmp.ne.s32.totalorder %s111, %s114
      %p123 = scmp.eq.s32.totalorder %s14, 3
      %p124 = por %p122, %p123
      %p125 = scmp.ne.s32.totalorder %s114, %s115
      %p126 = scmp.eq.s32.totalorder %s14, 0
      %p127 = por %p125, %p126
      %p128 = scmp.ne.s32.totalorder %s114, %s115
      %p129 = scmp.eq.s32.totalorder %s15, 3
      %p130 = por %p128, %p129
      %p132 = scmp.ne.s32.totalorder %s115, %s131
      %p133 = scmp.eq.s32.totalorder %s15, 0
      %p134 = por %p132, %p133
      %p135 = scmp.le.s32.totalorder 1, %s9
      %p136 = scmp.lt.s32.totalorder %s9, 5
      %p137 = pnand %p135, %p136
      %p138 = pneg %p137
      // Predicated region
      $region9: #{cnn_forward.8} parent=5 // pred_check
        _
      $region10: #{cnn_forward.8} parent=5 // pred_check_branch
        %140 = sbr.rel (%p137) target = $region12
      $region11: #{cnn_forward.8} parent=5 // pred_region
        %s141 = ssub.s32 %s9, 1
        // Predicated region
        $region13: #{cnn_forward.8} parent=11 // pred_check
          %p142 = pneg %p47
        $region14: #{cnn_forward.8} parent=11 // pred_check_branch
          %144 = sbr.rel (%p142) target = $region16
        $region15: #{cnn_forward.8} parent=11 // pred_region
          %s145 = smul.u32 4, %s18
          %p146 = scmp.lt.s32.totalorder %s145, 3
          %s147 = scalar_select %p146, %s145, 3
          %s148 = smul.addr %s147, 8
          %s149 = smul.addr %s148, 4
          %s150 = scalar_lea.vmem %s0, %s149
          %s151 = smul.u32 4, %s18
        $region16: #{cnn_forward.8} parent=11 // pred_fallthru
          _
      $region12: #{cnn_forward.8} parent=5 // pred_fallthru
        _
      %p152 = scmp.lt.s32.totalorder %s9, 4
      // Predicated region
      $region17: #{cnn_forward.8} parent=5 // pred_check
        %p153 = pneg %p152
      $region18: #{cnn_forward.8} parent=5 // pred_check_branch
        %155 = sbr.rel (%p153) target = $region20
      $region19: #{cnn_forward.8} parent=5 // pred_region
        // Predicated region
        $region21: #{cnn_forward.8} parent=19 // pred_check
          %p156 = pneg %p67
        $region22: #{cnn_forward.8} parent=19 // pred_check_branch
          %158 = sbr.rel (%p156) target = $region24
        $region23: #{cnn_forward.8} parent=19 // pred_region
          %s159 = sand.u32 %s57, 1
          %s160 = sand.u32 %s57, 1
          %s161 = smul.addr %s160, 512
          %s162 = scalar_lea.vmem [#allocation2], %s161
          %s163 = smul.addr %s17, 4
          %s164 = scalar_lea.vmem %s1, %s163
          // Predicated region
          $region25: #{cnn_forward.8} parent=23 // pred_check
            _
          $region26: #{cnn_forward.8} parent=23 // pred_check_branch
            %166 = sbr.rel (0) target = $region28
          $region27: #{cnn_forward.8} parent=23 // pred_region
            // Predicated region
            $region29: #{cnn_forward.8} parent=27 // pred_check
              _
            $region30: #{cnn_forward.8} parent=27 // pred_check_branch
              %168 = sbr.rel target = $region32
            $region31: #{cnn_forward.8} parent=27 // pred_region
              // Predicated region
              $region44: #{cnn_forward.8} parent=31 // pred_check
                _
              $region45: #{cnn_forward.8} parent=31 // pred_check_branch
                %437 = sbr.rel (0) target = $region47
              $region46: #{cnn_forward.8} parent=31 // pred_region
                loop: start=0, step=1, limit=1
                $region48: #{cnn_forward.8} parent=46 // loop_pre_header
                  _
                $region49: #{cnn_forward.8} parent=46 // loop_header
                  %s439 = sphi 0, %s443
                  %p440 = scmp.ge.s32.totalorder %s439, 1
                  %s444 = sphi %s164, %s164
                  %s445 = sphi %s162, %s162
                $region50: #{cnn_forward.8} parent=46 // loop_header_branch
                  %442 = sbr.rel (%p440) target = $region54
                $region51: #{cnn_forward.8} parent=46 // loop_body
                  _
                $region52: #{cnn_forward.8} parent=46 // loop_footer
                  %s443 = sadd.s32 1, %s439
                $region53: #{cnn_forward.8} parent=46 // loop_footer_branch
                  %438 = sbr.rel target = $region49
                $region54: #{cnn_forward.8} parent=46 // loop_exit
                  _
                loop: start=0, step=1, limit=1
                $region55: #{cnn_forward.8} parent=46 // loop_pre_header
                  _
                $region56: #{cnn_forward.8} parent=46 // loop_header
                  %s448 = sphi 0, %s452
                  %p449 = scmp.ge.s32.totalorder %s448, 1
                  %s453 = sphi %s164, %s164
                  %s454 = sphi %s162, %s162
                $region57: #{cnn_forward.8} parent=46 // loop_header_branch
                  %451 = sbr.rel (%p449) target = $region61
                $region58: #{cnn_forward.8} parent=46 // loop_body
                  %v455 = vld [vmem:[%s453] sm:$0xf]
                  %456 = vst [vmem:[%s454] sm:$0xf] %v455
                  %v457 = vld [vmem:[%s453 + $0x10] sm:$0xf]
                  %458 = vst [vmem:[%s454 + $0x4] sm:$0xf] %v457
                  %v459 = vld [vmem:[%s453 + $0x20] sm:$0xf]
                  %460 = vst [vmem:[%s454 + $0x8] sm:$0xf] %v459
                  %v461 = vld [vmem:[%s453 + $0x30] sm:$0xf]
                  %462 = vst [vmem:[%s454 + $0xc] sm:$0xf] %v461
                  %v463 = vld [vmem:[%s453 + $0x40] sm:$0xf]
                  %464 = vst [vmem:[%s454 + $0x10] sm:$0xf] %v463
                  %v465 = vld [vmem:[%s453 + $0x50] sm:$0xf]
                  %466 = vst [vmem:[%s454 + $0x14] sm:$0xf] %v465
                  %v467 = vld [vmem:[%s453 + $0x60] sm:$0xf]
                  %468 = vst [vmem:[%s454 + $0x18] sm:$0xf] %v467
                  %v469 = vld [vmem:[%s453 + $0x70] sm:$0xf]
                  %470 = vst [vmem:[%s454 + $0x1c] sm:$0xf] %v469
                  %v471 = vld [vmem:[%s453 + $0x80] sm:$0xf]
                  %472 = vst [vmem:[%s454 + $0x20] sm:$0xf] %v471
                  %v473 = vld [vmem:[%s453 + $0x90] sm:$0xf]
                  %474 = vst [vmem:[%s454 + $0x24] sm:$0xf] %v473
                  %v475 = vld [vmem:[%s453 + $0xa0] sm:$0xf]
                  %476 = vst [vmem:[%s454 + $0x28] sm:$0xf] %v475
                  %v477 = vld [vmem:[%s453 + $0xb0] sm:$0xf]
                  %478 = vst [vmem:[%s454 + $0x2c] sm:$0xf] %v477
                  %v479 = vld [vmem:[%s453 + $0xc0] sm:$0xf]
                  %480 = vst [vmem:[%s454 + $0x30] sm:$0xf] %v479
                  %v481 = vld [vmem:[%s453 + $0xd0] sm:$0xf]
                  %482 = vst [vmem:[%s454 + $0x34] sm:$0xf] %v481
                  %v483 = vld [vmem:[%s453 + $0xe0] sm:$0xf]
                  %484 = vst [vmem:[%s454 + $0x38] sm:$0xf] %v483
                  %v485 = vld [vmem:[%s453 + $0xf0] sm:$0xf]
                  %486 = vst [vmem:[%s454 + $0x3c] sm:$0xf] %v485
                  %v487 = vld [vmem:[%s453 + $0x100] sm:$0xf]
                  %488 = vst [vmem:[%s454 + $0x40] sm:$0xf] %v487
                  %v489 = vld [vmem:[%s453 + $0x110] sm:$0xf]
                  %490 = vst [vmem:[%s454 + $0x44] sm:$0xf] %v489
                  %v491 = vld [vmem:[%s453 + $0x120] sm:$0xf]
                  %492 = vst [vmem:[%s454 + $0x48] sm:$0xf] %v491
                  %v493 = vld [vmem:[%s453 + $0x130] sm:$0xf]
                  %494 = vst [vmem:[%s454 + $0x4c] sm:$0xf] %v493
                  %v495 = vld [vmem:[%s453 + $0x140] sm:$0xf]
                  %496 = vst [vmem:[%s454 + $0x50] sm:$0xf] %v495
                  %v497 = vld [vmem:[%s453 + $0x150] sm:$0xf]
                  %498 = vst [vmem:[%s454 + $0x54] sm:$0xf] %v497
                  %v499 = vld [vmem:[%s453 + $0x160] sm:$0xf]
                  %500 = vst [vmem:[%s454 + $0x58] sm:$0xf] %v499
                  %v501 = vld [vmem:[%s453 + $0x170] sm:$0xf]
                  %502 = vst [vmem:[%s454 + $0x5c] sm:$0xf] %v501
                  %v503 = vld [vmem:[%s453 + $0x180] sm:$0xf]
                  %504 = vst [vmem:[%s454 + $0x60] sm:$0xf] %v503
                  %v505 = vld [vmem:[%s453 + $0x190] sm:$0xf]
                  %506 = vst [vmem:[%s454 + $0x64] sm:$0xf] %v505
                  %v507 = vld [vmem:[%s453 + $0x1a0] sm:$0xf]
                  %508 = vst [vmem:[%s454 + $0x68] sm:$0xf] %v507
                  %v509 = vld [vmem:[%s453 + $0x1b0] sm:$0xf]
                  %510 = vst [vmem:[%s454 + $0x6c] sm:$0xf] %v509
                  %v511 = vld [vmem:[%s453 + $0x1c0] sm:$0xf]
                  %512 = vst [vmem:[%s454 + $0x70] sm:$0xf] %v511
                  %v513 = vld [vmem:[%s453 + $0x1d0] sm:$0xf]
                  %514 = vst [vmem:[%s454 + $0x74] sm:$0xf] %v513
                  %v515 = vld [vmem:[%s453 + $0x1e0] sm:$0xf]
                  %516 = vst [vmem:[%s454 + $0x78] sm:$0xf] %v515
                  %v517 = vld [vmem:[%s453 + $0x1f0] sm:$0xf]
                  %518 = vst [vmem:[%s454 + $0x7c] sm:$0xf] %v517
                  %v519 = vld [vmem:[%s453 + $0x200] sm:$0xf]
                  %520 = vst [vmem:[%s454 + $0x80] sm:$0xf] %v519
                  %v521 = vld [vmem:[%s453 + $0x210] sm:$0xf]
                  %522 = vst [vmem:[%s454 + $0x84] sm:$0xf] %v521
                  %v523 = vld [vmem:[%s453 + $0x220] sm:$0xf]
                  %524 = vst [vmem:[%s454 + $0x88] sm:$0xf] %v523
                  %v525 = vld [vmem:[%s453 + $0x230] sm:$0xf]
                  %526 = vst [vmem:[%s454 + $0x8c] sm:$0xf] %v525
                  %v527 = vld [vmem:[%s453 + $0x240] sm:$0xf]
                  %528 = vst [vmem:[%s454 + $0x90] sm:$0xf] %v527
                  %v529 = vld [vmem:[%s453 + $0x250] sm:$0xf]
                  %530 = vst [vmem:[%s454 + $0x94] sm:$0xf] %v529
                  %v531 = vld [vmem:[%s453 + $0x260] sm:$0xf]
                  %532 = vst [vmem:[%s454 + $0x98] sm:$0xf] %v531
                  %v533 = vld [vmem:[%s453 + $0x270] sm:$0xf]
                  %534 = vst [vmem:[%s454 + $0x9c] sm:$0xf] %v533
                  %v535 = vld [vmem:[%s453 + $0x280] sm:$0xf]
                  %536 = vst [vmem:[%s454 + $0xa0] sm:$0xf] %v535
                  %v537 = vld [vmem:[%s453 + $0x290] sm:$0xf]
                  %538 = vst [vmem:[%s454 + $0xa4] sm:$0xf] %v537
                  %v539 = vld [vmem:[%s453 + $0x2a0] sm:$0xf]
                  %540 = vst [vmem:[%s454 + $0xa8] sm:$0xf] %v539
                  %v541 = vld [vmem:[%s453 + $0x2b0] sm:$0xf]
                  %542 = vst [vmem:[%s454 + $0xac] sm:$0xf] %v541
                  %v543 = vld [vmem:[%s453 + $0x2c0] sm:$0xf]
                  %544 = vst [vmem:[%s454 + $0xb0] sm:$0xf] %v543
                  %v545 = vld [vmem:[%s453 + $0x2d0] sm:$0xf]
                  %546 = vst [vmem:[%s454 + $0xb4] sm:$0xf] %v545
                  %v547 = vld [vmem:[%s453 + $0x2e0] sm:$0xf]
                  %548 = vst [vmem:[%s454 + $0xb8] sm:$0xf] %v547
                  %v549 = vld [vmem:[%s453 + $0x2f0] sm:$0xf]
                  %550 = vst [vmem:[%s454 + $0xbc] sm:$0xf] %v549
                  %v551 = vld [vmem:[%s453 + $0x300] sm:$0xf]
                  %552 = vst [vmem:[%s454 + $0xc0] sm:$0xf] %v551
                  %v553 = vld [vmem:[%s453 + $0x310] sm:$0xf]
                  %554 = vst [vmem:[%s454 + $0xc4] sm:$0xf] %v553
                  %v555 = vld [vmem:[%s453 + $0x320] sm:$0xf]
                  %556 = vst [vmem:[%s454 + $0xc8] sm:$0xf] %v555
                  %v557 = vld [vmem:[%s453 + $0x330] sm:$0xf]
                  %558 = vst [vmem:[%s454 + $0xcc] sm:$0xf] %v557
                  %v559 = vld [vmem:[%s453 + $0x340] sm:$0xf]
                  %560 = vst [vmem:[%s454 + $0xd0] sm:$0xf] %v559
                  %v561 = vld [vmem:[%s453 + $0x350] sm:$0xf]
                  %562 = vst [vmem:[%s454 + $0xd4] sm:$0xf] %v561
                  %v563 = vld [vmem:[%s453 + $0x360] sm:$0xf]
                  %564 = vst [vmem:[%s454 + $0xd8] sm:$0xf] %v563
                  %v565 = vld [vmem:[%s453 + $0x370] sm:$0xf]
                  %566 = vst [vmem:[%s454 + $0xdc] sm:$0xf] %v565
                  %v567 = vld [vmem:[%s453 + $0x380] sm:$0xf]
                  %568 = vst [vmem:[%s454 + $0xe0] sm:$0xf] %v567
                  %v569 = vld [vmem:[%s453 + $0x390] sm:$0xf]
                  %570 = vst [vmem:[%s454 + $0xe4] sm:$0xf] %v569
                  %v571 = vld [vmem:[%s453 + $0x3a0] sm:$0xf]
                  %572 = vst [vmem:[%s454 + $0xe8] sm:$0xf] %v571
                  %v573 = vld [vmem:[%s453 + $0x3b0] sm:$0xf]
                  %574 = vst [vmem:[%s454 + $0xec] sm:$0xf] %v573
                  %v575 = vld [vmem:[%s453 + $0x3c0] sm:$0xf]
                  %576 = vst [vmem:[%s454 + $0xf0] sm:$0xf] %v575
                  %v577 = vld [vmem:[%s453 + $0x3d0] sm:$0xf]
                  %578 = vst [vmem:[%s454 + $0xf4] sm:$0xf] %v577
                  %v579 = vld [vmem:[%s453 + $0x3e0] sm:$0xf]
                  %580 = vst [vmem:[%s454 + $0xf8] sm:$0xf] %v579
                  %v581 = vld [vmem:[%s453 + $0x3f0] sm:$0xf]
                  %582 = vst [vmem:[%s454 + $0xfc] sm:$0xf] %v581
                  %v583 = vld [vmem:[%s453 + $0x400] sm:$0xf]
                  %584 = vst [vmem:[%s454 + $0x100] sm:$0xf] %v583
                  %v585 = vld [vmem:[%s453 + $0x410] sm:$0xf]
                  %586 = vst [vmem:[%s454 + $0x104] sm:$0xf] %v585
                  %v587 = vld [vmem:[%s453 + $0x420] sm:$0xf]
                  %588 = vst [vmem:[%s454 + $0x108] sm:$0xf] %v587
                  %v589 = vld [vmem:[%s453 + $0x430] sm:$0xf]
                  %590 = vst [vmem:[%s454 + $0x10c] sm:$0xf] %v589
                  %v591 = vld [vmem:[%s453 + $0x440] sm:$0xf]
                  %592 = vst [vmem:[%s454 + $0x110] sm:$0xf] %v591
                  %v593 = vld [vmem:[%s453 + $0x450] sm:$0xf]
                  %594 = vst [vmem:[%s454 + $0x114] sm:$0xf] %v593
                  %v595 = vld [vmem:[%s453 + $0x460] sm:$0xf]
                  %596 = vst [vmem:[%s454 + $0x118] sm:$0xf] %v595
                  %v597 = vld [vmem:[%s453 + $0x470] sm:$0xf]
                  %598 = vst [vmem:[%s454 + $0x11c] sm:$0xf] %v597
                  %v599 = vld [vmem:[%s453 + $0x480] sm:$0xf]
                  %600 = vst [vmem:[%s454 + $0x120] sm:$0xf] %v599
                  %v601 = vld [vmem:[%s453 + $0x490] sm:$0xf]
                  %602 = vst [vmem:[%s454 + $0x124] sm:$0xf] %v601
                  %v603 = vld [vmem:[%s453 + $0x4a0] sm:$0xf]
                  %604 = vst [vmem:[%s454 + $0x128] sm:$0xf] %v603
                  %v605 = vld [vmem:[%s453 + $0x4b0] sm:$0xf]
                  %606 = vst [vmem:[%s454 + $0x12c] sm:$0xf] %v605
                  %v607 = vld [vmem:[%s453 + $0x4c0] sm:$0xf]
                  %608 = vst [vmem:[%s454 + $0x130] sm:$0xf] %v607
                  %v609 = vld [vmem:[%s453 + $0x4d0] sm:$0xf]
                  %610 = vst [vmem:[%s454 + $0x134] sm:$0xf] %v609
                  %v611 = vld [vmem:[%s453 + $0x4e0] sm:$0xf]
                  %612 = vst [vmem:[%s454 + $0x138] sm:$0xf] %v611
                  %v613 = vld [vmem:[%s453 + $0x4f0] sm:$0xf]
                  %614 = vst [vmem:[%s454 + $0x13c] sm:$0xf] %v613
                  %v615 = vld [vmem:[%s453 + $0x500] sm:$0xf]
                  %616 = vst [vmem:[%s454 + $0x140] sm:$0xf] %v615
                  %v617 = vld [vmem:[%s453 + $0x510] sm:$0xf]
                  %618 = vst [vmem:[%s454 + $0x144] sm:$0xf] %v617
                  %v619 = vld [vmem:[%s453 + $0x520] sm:$0xf]
                  %620 = vst [vmem:[%s454 + $0x148] sm:$0xf] %v619
                  %v621 = vld [vmem:[%s453 + $0x530] sm:$0xf]
                  %622 = vst [vmem:[%s454 + $0x14c] sm:$0xf] %v621
                  %v623 = vld [vmem:[%s453 + $0x540] sm:$0xf]
                  %624 = vst [vmem:[%s454 + $0x150] sm:$0xf] %v623
                  %v625 = vld [vmem:[%s453 + $0x550] sm:$0xf]
                  %626 = vst [vmem:[%s454 + $0x154] sm:$0xf] %v625
                  %v627 = vld [vmem:[%s453 + $0x560] sm:$0xf]
                  %628 = vst [vmem:[%s454 + $0x158] sm:$0xf] %v627
                  %v629 = vld [vmem:[%s453 + $0x570] sm:$0xf]
                  %630 = vst [vmem:[%s454 + $0x15c] sm:$0xf] %v629
                  %v631 = vld [vmem:[%s453 + $0x580] sm:$0xf]
                  %632 = vst [vmem:[%s454 + $0x160] sm:$0xf] %v631
                  %v633 = vld [vmem:[%s453 + $0x590] sm:$0xf]
                  %634 = vst [vmem:[%s454 + $0x164] sm:$0xf] %v633
                  %v635 = vld [vmem:[%s453 + $0x5a0] sm:$0xf]
                  %636 = vst [vmem:[%s454 + $0x168] sm:$0xf] %v635
                  %v637 = vld [vmem:[%s453 + $0x5b0] sm:$0xf]
                  %638 = vst [vmem:[%s454 + $0x16c] sm:$0xf] %v637
                  %v639 = vld [vmem:[%s453 + $0x5c0] sm:$0xf]
                  %640 = vst [vmem:[%s454 + $0x170] sm:$0xf] %v639
                  %v641 = vld [vmem:[%s453 + $0x5d0] sm:$0xf]
                  %642 = vst [vmem:[%s454 + $0x174] sm:$0xf] %v641
                  %v643 = vld [vmem:[%s453 + $0x5e0] sm:$0xf]
                  %644 = vst [vmem:[%s454 + $0x178] sm:$0xf] %v643
                  %v645 = vld [vmem:[%s453 + $0x5f0] sm:$0xf]
                  %646 = vst [vmem:[%s454 + $0x17c] sm:$0xf] %v645
                  %v647 = vld [vmem:[%s453 + $0x600] sm:$0xf]
                  %648 = vst [vmem:[%s454 + $0x180] sm:$0xf] %v647
                  %v649 = vld [vmem:[%s453 + $0x610] sm:$0xf]
                  %650 = vst [vmem:[%s454 + $0x184] sm:$0xf] %v649
                  %v651 = vld [vmem:[%s453 + $0x620] sm:$0xf]
                  %652 = vst [vmem:[%s454 + $0x188] sm:$0xf] %v651
                  %v653 = vld [vmem:[%s453 + $0x630] sm:$0xf]
                  %654 = vst [vmem:[%s454 + $0x18c] sm:$0xf] %v653
                  %v655 = vld [vmem:[%s453 + $0x640] sm:$0xf]
                  %656 = vst [vmem:[%s454 + $0x190] sm:$0xf] %v655
                  %v657 = vld [vmem:[%s453 + $0x650] sm:$0xf]
                  %658 = vst [vmem:[%s454 + $0x194] sm:$0xf] %v657
                  %v659 = vld [vmem:[%s453 + $0x660] sm:$0xf]
                  %660 = vst [vmem:[%s454 + $0x198] sm:$0xf] %v659
                  %v661 = vld [vmem:[%s453 + $0x670] sm:$0xf]
                  %662 = vst [vmem:[%s454 + $0x19c] sm:$0xf] %v661
                  %v663 = vld [vmem:[%s453 + $0x680] sm:$0xf]
                  %664 = vst [vmem:[%s454 + $0x1a0] sm:$0xf] %v663
                  %v665 = vld [vmem:[%s453 + $0x690] sm:$0xf]
                  %666 = vst [vmem:[%s454 + $0x1a4] sm:$0xf] %v665
                  %v667 = vld [vmem:[%s453 + $0x6a0] sm:$0xf]
                  %668 = vst [vmem:[%s454 + $0x1a8] sm:$0xf] %v667
                  %v669 = vld [vmem:[%s453 + $0x6b0] sm:$0xf]
                  %670 = vst [vmem:[%s454 + $0x1ac] sm:$0xf] %v669
                  %v671 = vld [vmem:[%s453 + $0x6c0] sm:$0xf]
                  %672 = vst [vmem:[%s454 + $0x1b0] sm:$0xf] %v671
                  %v673 = vld [vmem:[%s453 + $0x6d0] sm:$0xf]
                  %674 = vst [vmem:[%s454 + $0x1b4] sm:$0xf] %v673
                  %v675 = vld [vmem:[%s453 + $0x6e0] sm:$0xf]
                  %676 = vst [vmem:[%s454 + $0x1b8] sm:$0xf] %v675
                  %v677 = vld [vmem:[%s453 + $0x6f0] sm:$0xf]
                  %678 = vst [vmem:[%s454 + $0x1bc] sm:$0xf] %v677
                  %v679 = vld [vmem:[%s453 + $0x700] sm:$0xf]
                  %680 = vst [vmem:[%s454 + $0x1c0] sm:$0xf] %v679
                  %v681 = vld [vmem:[%s453 + $0x710] sm:$0xf]
                  %682 = vst [vmem:[%s454 + $0x1c4] sm:$0xf] %v681
                  %v683 = vld [vmem:[%s453 + $0x720] sm:$0xf]
                  %684 = vst [vmem:[%s454 + $0x1c8] sm:$0xf] %v683
                  %v685 = vld [vmem:[%s453 + $0x730] sm:$0xf]
                  %686 = vst [vmem:[%s454 + $0x1cc] sm:$0xf] %v685
                  %v687 = vld [vmem:[%s453 + $0x740] sm:$0xf]
                  %688 = vst [vmem:[%s454 + $0x1d0] sm:$0xf] %v687
                  %v689 = vld [vmem:[%s453 + $0x750] sm:$0xf]
                  %690 = vst [vmem:[%s454 + $0x1d4] sm:$0xf] %v689
                  %v691 = vld [vmem:[%s453 + $0x760] sm:$0xf]
                  %692 = vst [vmem:[%s454 + $0x1d8] sm:$0xf] %v691
                  %v693 = vld [vmem:[%s453 + $0x770] sm:$0xf]
                  %694 = vst [vmem:[%s454 + $0x1dc] sm:$0xf] %v693
                  %v695 = vld [vmem:[%s453 + $0x780] sm:$0xf]
                  %696 = vst [vmem:[%s454 + $0x1e0] sm:$0xf] %v695
                  %v697 = vld [vmem:[%s453 + $0x790] sm:$0xf]
                  %698 = vst [vmem:[%s454 + $0x1e4] sm:$0xf] %v697
                  %v699 = vld [vmem:[%s453 + $0x7a0] sm:$0xf]
                  %700 = vst [vmem:[%s454 + $0x1e8] sm:$0xf] %v699
                  %v701 = vld [vmem:[%s453 + $0x7b0] sm:$0xf]
                  %702 = vst [vmem:[%s454 + $0x1ec] sm:$0xf] %v701
                  %v703 = vld [vmem:[%s453 + $0x7c0] sm:$0xf]
                  %704 = vst [vmem:[%s454 + $0x1f0] sm:$0xf] %v703
                  %v705 = vld [vmem:[%s453 + $0x7d0] sm:$0xf]
                  %706 = vst [vmem:[%s454 + $0x1f4] sm:$0xf] %v705
                  %v707 = vld [vmem:[%s453 + $0x7e0] sm:$0xf]
                  %708 = vst [vmem:[%s454 + $0x1f8] sm:$0xf] %v707
                  %v709 = vld [vmem:[%s453 + $0x7f0] sm:$0xf]
                  %710 = vst [vmem:[%s454 + $0x1fc] sm:$0xf] %v709
                $region59: #{cnn_forward.8} parent=46 // loop_footer
                  %s452 = sadd.s32 1, %s448
                $region60: #{cnn_forward.8} parent=46 // loop_footer_branch
                  %447 = sbr.rel target = $region56
                $region61: #{cnn_forward.8} parent=46 // loop_exit
                  _
              $region47: #{cnn_forward.8} parent=31 // pred_fallthru
                _
            $region32: #{cnn_forward.8} parent=27 // pred_fallthru
              _
            // Predicated region
            $region33: #{cnn_forward.8} parent=27 // pred_check
              _
            $region34: #{cnn_forward.8} parent=27 // pred_check_branch
              %170 = sbr.rel (0) target = $region36
            $region35: #{cnn_forward.8} parent=27 // pred_region
              loop: start=0, step=1, limit=1
              $region37: #{cnn_forward.8} parent=35 // loop_pre_header
                _
              $region38: #{cnn_forward.8} parent=35 // loop_header
                %s173 = sphi 0, %s177
                %p174 = scmp.ge.s32.totalorder %s173, 1
                %s178 = sphi %s164, %s164
                %s179 = sphi %s162, %s162
              $region39: #{cnn_forward.8} parent=35 // loop_header_branch
                %176 = sbr.rel (%p174) target = $region43
              $region40: #{cnn_forward.8} parent=35 // loop_body
                %v180 = vld [vmem:[%s178] sm:$0xf]
                %181 = vst [vmem:[%s179] sm:$0xf] %v180
                %v182 = vld [vmem:[%s178 + $0x10] sm:$0xf]
                %183 = vst [vmem:[%s179 + $0x4] sm:$0xf] %v182
                %v184 = vld [vmem:[%s178 + $0x20] sm:$0xf]
                %185 = vst [vmem:[%s179 + $0x8] sm:$0xf] %v184
                %v186 = vld [vmem:[%s178 + $0x30] sm:$0xf]
                %187 = vst [vmem:[%s179 + $0xc] sm:$0xf] %v186
                %v188 = vld [vmem:[%s178 + $0x40] sm:$0xf]
                %189 = vst [vmem:[%s179 + $0x10] sm:$0xf] %v188
                %v190 = vld [vmem:[%s178 + $0x50] sm:$0xf]
                %191 = vst [vmem:[%s179 + $0x14] sm:$0xf] %v190
                %v192 = vld [vmem:[%s178 + $0x60] sm:$0xf]
                %193 = vst [vmem:[%s179 + $0x18] sm:$0xf] %v192
                %v194 = vld [vmem:[%s178 + $0x70] sm:$0xf]
                %195 = vst [vmem:[%s179 + $0x1c] sm:$0xf] %v194
                %v196 = vld [vmem:[%s178 + $0x80] sm:$0xf]
                %197 = vst [vmem:[%s179 + $0x20] sm:$0xf] %v196
                %v198 = vld [vmem:[%s178 + $0x90] sm:$0xf]
                %199 = vst [vmem:[%s179 + $0x24] sm:$0xf] %v198
                %v200 = vld [vmem:[%s178 + $0xa0] sm:$0xf]
                %201 = vst [vmem:[%s179 + $0x28] sm:$0xf] %v200
                %v202 = vld [vmem:[%s178 + $0xb0] sm:$0xf]
                %203 = vst [vmem:[%s179 + $0x2c] sm:$0xf] %v202
                %v204 = vld [vmem:[%s178 + $0xc0] sm:$0xf]
                %205 = vst [vmem:[%s179 + $0x30] sm:$0xf] %v204
                %v206 = vld [vmem:[%s178 + $0xd0] sm:$0xf]
                %207 = vst [vmem:[%s179 + $0x34] sm:$0xf] %v206
                %v208 = vld [vmem:[%s178 + $0xe0] sm:$0xf]
                %209 = vst [vmem:[%s179 + $0x38] sm:$0xf] %v208
                %v210 = vld [vmem:[%s178 + $0xf0] sm:$0xf]
                %211 = vst [vmem:[%s179 + $0x3c] sm:$0xf] %v210
                %v212 = vld [vmem:[%s178 + $0x100] sm:$0xf]
                %213 = vst [vmem:[%s179 + $0x40] sm:$0xf] %v212
                %v214 = vld [vmem:[%s178 + $0x110] sm:$0xf]
                %215 = vst [vmem:[%s179 + $0x44] sm:$0xf] %v214
                %v216 = vld [vmem:[%s178 + $0x120] sm:$0xf]
                %217 = vst [vmem:[%s179 + $0x48] sm:$0xf] %v216
                %v218 = vld [vmem:[%s178 + $0x130] sm:$0xf]
                %219 = vst [vmem:[%s179 + $0x4c] sm:$0xf] %v218
                %v220 = vld [vmem:[%s178 + $0x140] sm:$0xf]
                %221 = vst [vmem:[%s179 + $0x50] sm:$0xf] %v220
                %v222 = vld [vmem:[%s178 + $0x150] sm:$0xf]
                %223 = vst [vmem:[%s179 + $0x54] sm:$0xf] %v222
                %v224 = vld [vmem:[%s178 + $0x160] sm:$0xf]
                %225 = vst [vmem:[%s179 + $0x58] sm:$0xf] %v224
                %v226 = vld [vmem:[%s178 + $0x170] sm:$0xf]
                %227 = vst [vmem:[%s179 + $0x5c] sm:$0xf] %v226
                %v228 = vld [vmem:[%s178 + $0x180] sm:$0xf]
                %229 = vst [vmem:[%s179 + $0x60] sm:$0xf] %v228
                %v230 = vld [vmem:[%s178 + $0x190] sm:$0xf]
                %231 = vst [vmem:[%s179 + $0x64] sm:$0xf] %v230
                %v232 = vld [vmem:[%s178 + $0x1a0] sm:$0xf]
                %233 = vst [vmem:[%s179 + $0x68] sm:$0xf] %v232
                %v234 = vld [vmem:[%s178 + $0x1b0] sm:$0xf]
                %235 = vst [vmem:[%s179 + $0x6c] sm:$0xf] %v234
                %v236 = vld [vmem:[%s178 + $0x1c0] sm:$0xf]
                %237 = vst [vmem:[%s179 + $0x70] sm:$0xf] %v236
                %v238 = vld [vmem:[%s178 + $0x1d0] sm:$0xf]
                %239 = vst [vmem:[%s179 + $0x74] sm:$0xf] %v238
                %v240 = vld [vmem:[%s178 + $0x1e0] sm:$0xf]
                %241 = vst [vmem:[%s179 + $0x78] sm:$0xf] %v240
                %v242 = vld [vmem:[%s178 + $0x1f0] sm:$0xf]
                %243 = vst [vmem:[%s179 + $0x7c] sm:$0xf] %v242
                %v244 = vld [vmem:[%s178 + $0x200] sm:$0xf]
                %245 = vst [vmem:[%s179 + $0x80] sm:$0xf] %v244
                %v246 = vld [vmem:[%s178 + $0x210] sm:$0xf]
                %247 = vst [vmem:[%s179 + $0x84] sm:$0xf] %v246
                %v248 = vld [vmem:[%s178 + $0x220] sm:$0xf]
                %249 = vst [vmem:[%s179 + $0x88] sm:$0xf] %v248
                %v250 = vld [vmem:[%s178 + $0x230] sm:$0xf]
                %251 = vst [vmem:[%s179 + $0x8c] sm:$0xf] %v250
                %v252 = vld [vmem:[%s178 + $0x240] sm:$0xf]
                %253 = vst [vmem:[%s179 + $0x90] sm:$0xf] %v252
                %v254 = vld [vmem:[%s178 + $0x250] sm:$0xf]
                %255 = vst [vmem:[%s179 + $0x94] sm:$0xf] %v254
                %v256 = vld [vmem:[%s178 + $0x260] sm:$0xf]
                %257 = vst [vmem:[%s179 + $0x98] sm:$0xf] %v256
                %v258 = vld [vmem:[%s178 + $0x270] sm:$0xf]
                %259 = vst [vmem:[%s179 + $0x9c] sm:$0xf] %v258
                %v260 = vld [vmem:[%s178 + $0x280] sm:$0xf]
                %261 = vst [vmem:[%s179 + $0xa0] sm:$0xf] %v260
                %v262 = vld [vmem:[%s178 + $0x290] sm:$0xf]
                %263 = vst [vmem:[%s179 + $0xa4] sm:$0xf] %v262
                %v264 = vld [vmem:[%s178 + $0x2a0] sm:$0xf]
                %265 = vst [vmem:[%s179 + $0xa8] sm:$0xf] %v264
                %v266 = vld [vmem:[%s178 + $0x2b0] sm:$0xf]
                %267 = vst [vmem:[%s179 + $0xac] sm:$0xf] %v266
                %v268 = vld [vmem:[%s178 + $0x2c0] sm:$0xf]
                %269 = vst [vmem:[%s179 + $0xb0] sm:$0xf] %v268
                %v270 = vld [vmem:[%s178 + $0x2d0] sm:$0xf]
                %271 = vst [vmem:[%s179 + $0xb4] sm:$0xf] %v270
                %v272 = vld [vmem:[%s178 + $0x2e0] sm:$0xf]
                %273 = vst [vmem:[%s179 + $0xb8] sm:$0xf] %v272
                %v274 = vld [vmem:[%s178 + $0x2f0] sm:$0xf]
                %275 = vst [vmem:[%s179 + $0xbc] sm:$0xf] %v274
                %v276 = vld [vmem:[%s178 + $0x300] sm:$0xf]
                %277 = vst [vmem:[%s179 + $0xc0] sm:$0xf] %v276
                %v278 = vld [vmem:[%s178 + $0x310] sm:$0xf]
                %279 = vst [vmem:[%s179 + $0xc4] sm:$0xf] %v278
                %v280 = vld [vmem:[%s178 + $0x320] sm:$0xf]
                %281 = vst [vmem:[%s179 + $0xc8] sm:$0xf] %v280
                %v282 = vld [vmem:[%s178 + $0x330] sm:$0xf]
                %283 = vst [vmem:[%s179 + $0xcc] sm:$0xf] %v282
                %v284 = vld [vmem:[%s178 + $0x340] sm:$0xf]
                %285 = vst [vmem:[%s179 + $0xd0] sm:$0xf] %v284
                %v286 = vld [vmem:[%s178 + $0x350] sm:$0xf]
                %287 = vst [vmem:[%s179 + $0xd4] sm:$0xf] %v286
                %v288 = vld [vmem:[%s178 + $0x360] sm:$0xf]
                %289 = vst [vmem:[%s179 + $0xd8] sm:$0xf] %v288
                %v290 = vld [vmem:[%s178 + $0x370] sm:$0xf]
                %291 = vst [vmem:[%s179 + $0xdc] sm:$0xf] %v290
                %v292 = vld [vmem:[%s178 + $0x380] sm:$0xf]
                %293 = vst [vmem:[%s179 + $0xe0] sm:$0xf] %v292
                %v294 = vld [vmem:[%s178 + $0x390] sm:$0xf]
                %295 = vst [vmem:[%s179 + $0xe4] sm:$0xf] %v294
                %v296 = vld [vmem:[%s178 + $0x3a0] sm:$0xf]
                %297 = vst [vmem:[%s179 + $0xe8] sm:$0xf] %v296
                %v298 = vld [vmem:[%s178 + $0x3b0] sm:$0xf]
                %299 = vst [vmem:[%s179 + $0xec] sm:$0xf] %v298
                %v300 = vld [vmem:[%s178 + $0x3c0] sm:$0xf]
                %301 = vst [vmem:[%s179 + $0xf0] sm:$0xf] %v300
                %v302 = vld [vmem:[%s178 + $0x3d0] sm:$0xf]
                %303 = vst [vmem:[%s179 + $0xf4] sm:$0xf] %v302
                %v304 = vld [vmem:[%s178 + $0x3e0] sm:$0xf]
                %305 = vst [vmem:[%s179 + $0xf8] sm:$0xf] %v304
                %v306 = vld [vmem:[%s178 + $0x3f0] sm:$0xf]
                %307 = vst [vmem:[%s179 + $0xfc] sm:$0xf] %v306
                %v308 = vld [vmem:[%s178 + $0x400] sm:$0xf]
                %309 = vst [vmem:[%s179 + $0x100] sm:$0xf] %v308
                %v310 = vld [vmem:[%s178 + $0x410] sm:$0xf]
                %311 = vst [vmem:[%s179 + $0x104] sm:$0xf] %v310
                %v312 = vld [vmem:[%s178 + $0x420] sm:$0xf]
                %313 = vst [vmem:[%s179 + $0x108] sm:$0xf] %v312
                %v314 = vld [vmem:[%s178 + $0x430] sm:$0xf]
                %315 = vst [vmem:[%s179 + $0x10c] sm:$0xf] %v314
                %v316 = vld [vmem:[%s178 + $0x440] sm:$0xf]
                %317 = vst [vmem:[%s179 + $0x110] sm:$0xf] %v316
                %v318 = vld [vmem:[%s178 + $0x450] sm:$0xf]
                %319 = vst [vmem:[%s179 + $0x114] sm:$0xf] %v318
                %v320 = vld [vmem:[%s178 + $0x460] sm:$0xf]
                %321 = vst [vmem:[%s179 + $0x118] sm:$0xf] %v320
                %v322 = vld [vmem:[%s178 + $0x470] sm:$0xf]
                %323 = vst [vmem:[%s179 + $0x11c] sm:$0xf] %v322
                %v324 = vld [vmem:[%s178 + $0x480] sm:$0xf]
                %325 = vst [vmem:[%s179 + $0x120] sm:$0xf] %v324
                %v326 = vld [vmem:[%s178 + $0x490] sm:$0xf]
                %327 = vst [vmem:[%s179 + $0x124] sm:$0xf] %v326
                %v328 = vld [vmem:[%s178 + $0x4a0] sm:$0xf]
                %329 = vst [vmem:[%s179 + $0x128] sm:$0xf] %v328
                %v330 = vld [vmem:[%s178 + $0x4b0] sm:$0xf]
                %331 = vst [vmem:[%s179 + $0x12c] sm:$0xf] %v330
                %v332 = vld [vmem:[%s178 + $0x4c0] sm:$0xf]
                %333 = vst [vmem:[%s179 + $0x130] sm:$0xf] %v332
                %v334 = vld [vmem:[%s178 + $0x4d0] sm:$0xf]
                %335 = vst [vmem:[%s179 + $0x134] sm:$0xf] %v334
                %v336 = vld [vmem:[%s178 + $0x4e0] sm:$0xf]
                %337 = vst [vmem:[%s179 + $0x138] sm:$0xf] %v336
                %v338 = vld [vmem:[%s178 + $0x4f0] sm:$0xf]
                %339 = vst [vmem:[%s179 + $0x13c] sm:$0xf] %v338
                %v340 = vld [vmem:[%s178 + $0x500] sm:$0xf]
                %341 = vst [vmem:[%s179 + $0x140] sm:$0xf] %v340
                %v342 = vld [vmem:[%s178 + $0x510] sm:$0xf]
                %343 = vst [vmem:[%s179 + $0x144] sm:$0xf] %v342
                %v344 = vld [vmem:[%s178 + $0x520] sm:$0xf]
                %345 = vst [vmem:[%s179 + $0x148] sm:$0xf] %v344
                %v346 = vld [vmem:[%s178 + $0x530] sm:$0xf]
                %347 = vst [vmem:[%s179 + $0x14c] sm:$0xf] %v346
                %v348 = vld [vmem:[%s178 + $0x540] sm:$0xf]
                %349 = vst [vmem:[%s179 + $0x150] sm:$0xf] %v348
                %v350 = vld [vmem:[%s178 + $0x550] sm:$0xf]
                %351 = vst [vmem:[%s179 + $0x154] sm:$0xf] %v350
                %v352 = vld [vmem:[%s178 + $0x560] sm:$0xf]
                %353 = vst [vmem:[%s179 + $0x158] sm:$0xf] %v352
                %v354 = vld [vmem:[%s178 + $0x570] sm:$0xf]
                %355 = vst [vmem:[%s179 + $0x15c] sm:$0xf] %v354
                %v356 = vld [vmem:[%s178 + $0x580] sm:$0xf]
                %357 = vst [vmem:[%s179 + $0x160] sm:$0xf] %v356
                %v358 = vld [vmem:[%s178 + $0x590] sm:$0xf]
                %359 = vst [vmem:[%s179 + $0x164] sm:$0xf] %v358
                %v360 = vld [vmem:[%s178 + $0x5a0] sm:$0xf]
                %361 = vst [vmem:[%s179 + $0x168] sm:$0xf] %v360
                %v362 = vld [vmem:[%s178 + $0x5b0] sm:$0xf]
                %363 = vst [vmem:[%s179 + $0x16c] sm:$0xf] %v362
                %v364 = vld [vmem:[%s178 + $0x5c0] sm:$0xf]
                %365 = vst [vmem:[%s179 + $0x170] sm:$0xf] %v364
                %v366 = vld [vmem:[%s178 + $0x5d0] sm:$0xf]
                %367 = vst [vmem:[%s179 + $0x174] sm:$0xf] %v366
                %v368 = vld [vmem:[%s178 + $0x5e0] sm:$0xf]
                %369 = vst [vmem:[%s179 + $0x178] sm:$0xf] %v368
                %v370 = vld [vmem:[%s178 + $0x5f0] sm:$0xf]
                %371 = vst [vmem:[%s179 + $0x17c] sm:$0xf] %v370
                %v372 = vld [vmem:[%s178 + $0x600] sm:$0xf]
                %373 = vst [vmem:[%s179 + $0x180] sm:$0xf] %v372
                %v374 = vld [vmem:[%s178 + $0x610] sm:$0xf]
                %375 = vst [vmem:[%s179 + $0x184] sm:$0xf] %v374
                %v376 = vld [vmem:[%s178 + $0x620] sm:$0xf]
                %377 = vst [vmem:[%s179 + $0x188] sm:$0xf] %v376
                %v378 = vld [vmem:[%s178 + $0x630] sm:$0xf]
                %379 = vst [vmem:[%s179 + $0x18c] sm:$0xf] %v378
                %v380 = vld [vmem:[%s178 + $0x640] sm:$0xf]
                %381 = vst [vmem:[%s179 + $0x190] sm:$0xf] %v380
                %v382 = vld [vmem:[%s178 + $0x650] sm:$0xf]
                %383 = vst [vmem:[%s179 + $0x194] sm:$0xf] %v382
                %v384 = vld [vmem:[%s178 + $0x660] sm:$0xf]
                %385 = vst [vmem:[%s179 + $0x198] sm:$0xf] %v384
                %v386 = vld [vmem:[%s178 + $0x670] sm:$0xf]
                %387 = vst [vmem:[%s179 + $0x19c] sm:$0xf] %v386
                %v388 = vld [vmem:[%s178 + $0x680] sm:$0xf]
                %389 = vst [vmem:[%s179 + $0x1a0] sm:$0xf] %v388
                %v390 = vld [vmem:[%s178 + $0x690] sm:$0xf]
                %391 = vst [vmem:[%s179 + $0x1a4] sm:$0xf] %v390
                %v392 = vld [vmem:[%s178 + $0x6a0] sm:$0xf]
                %393 = vst [vmem:[%s179 + $0x1a8] sm:$0xf] %v392
                %v394 = vld [vmem:[%s178 + $0x6b0] sm:$0xf]
                %395 = vst [vmem:[%s179 + $0x1ac] sm:$0xf] %v394
                %v396 = vld [vmem:[%s178 + $0x6c0] sm:$0xf]
                %397 = vst [vmem:[%s179 + $0x1b0] sm:$0xf] %v396
                %v398 = vld [vmem:[%s178 + $0x6d0] sm:$0xf]
                %399 = vst [vmem:[%s179 + $0x1b4] sm:$0xf] %v398
                %v400 = vld [vmem:[%s178 + $0x6e0] sm:$0xf]
                %401 = vst [vmem:[%s179 + $0x1b8] sm:$0xf] %v400
                %v402 = vld [vmem:[%s178 + $0x6f0] sm:$0xf]
                %403 = vst [vmem:[%s179 + $0x1bc] sm:$0xf] %v402
                %v404 = vld [vmem:[%s178 + $0x700] sm:$0xf]
                %405 = vst [vmem:[%s179 + $0x1c0] sm:$0xf] %v404
                %v406 = vld [vmem:[%s178 + $0x710] sm:$0xf]
                %407 = vst [vmem:[%s179 + $0x1c4] sm:$0xf] %v406
                %v408 = vld [vmem:[%s178 + $0x720] sm:$0xf]
                %409 = vst [vmem:[%s179 + $0x1c8] sm:$0xf] %v408
                %v410 = vld [vmem:[%s178 + $0x730] sm:$0xf]
                %411 = vst [vmem:[%s179 + $0x1cc] sm:$0xf] %v410
                %v412 = vld [vmem:[%s178 + $0x740] sm:$0xf]
                %413 = vst [vmem:[%s179 + $0x1d0] sm:$0xf] %v412
                %v414 = vld [vmem:[%s178 + $0x750] sm:$0xf]
                %415 = vst [vmem:[%s179 + $0x1d4] sm:$0xf] %v414
                %v416 = vld [vmem:[%s178 + $0x760] sm:$0xf]
                %417 = vst [vmem:[%s179 + $0x1d8] sm:$0xf] %v416
                %v418 = vld [vmem:[%s178 + $0x770] sm:$0xf]
                %419 = vst [vmem:[%s179 + $0x1dc] sm:$0xf] %v418
                %v420 = vld [vmem:[%s178 + $0x780] sm:$0xf]
                %421 = vst [vmem:[%s179 + $0x1e0] sm:$0xf] %v420
                %v422 = vld [vmem:[%s178 + $0x790] sm:$0xf]
                %423 = vst [vmem:[%s179 + $0x1e4] sm:$0xf] %v422
                %v424 = vld [vmem:[%s178 + $0x7a0] sm:$0xf]
                %425 = vst [vmem:[%s179 + $0x1e8] sm:$0xf] %v424
                %v426 = vld [vmem:[%s178 + $0x7b0] sm:$0xf]
                %427 = vst [vmem:[%s179 + $0x1ec] sm:$0xf] %v426
                %v428 = vld [vmem:[%s178 + $0x7c0] sm:$0xf]
                %429 = vst [vmem:[%s179 + $0x1f0] sm:$0xf] %v428
                %v430 = vld [vmem:[%s178 + $0x7d0] sm:$0xf]
                %431 = vst [vmem:[%s179 + $0x1f4] sm:$0xf] %v430
                %v432 = vld [vmem:[%s178 + $0x7e0] sm:$0xf]
                %433 = vst [vmem:[%s179 + $0x1f8] sm:$0xf] %v432
                %v434 = vld [vmem:[%s178 + $0x7f0] sm:$0xf]
                %435 = vst [vmem:[%s179 + $0x1fc] sm:$0xf] %v434
              $region41: #{cnn_forward.8} parent=35 // loop_footer
                %s177 = sadd.s32 1, %s173
              $region42: #{cnn_forward.8} parent=35 // loop_footer_branch
                %172 = sbr.rel target = $region38
              $region43: #{cnn_forward.8} parent=35 // loop_exit
                _
            $region36: #{cnn_forward.8} parent=27 // pred_fallthru
              _
          $region28: #{cnn_forward.8} parent=23 // pred_fallthru
            _
          %711 = vnop
        $region24: #{cnn_forward.8} parent=19 // pred_fallthru
          _
        // Predicated region
        $region62: #{cnn_forward.8} parent=19 // pred_check
          %p712 = pneg %p93
        $region63: #{cnn_forward.8} parent=19 // pred_check_branch
          %714 = sbr.rel (%p712) target = $region65
        $region64: #{cnn_forward.8} parent=19 // pred_region
          %p715 = scmp.lt.s32.totalorder %s17, 3
          %s716 = scalar_select %p715, %s17, 3
          %s717 = scalar_lea.vmem %s2, %s716
        $region65: #{cnn_forward.8} parent=19 // pred_fallthru
          _
      $region20: #{cnn_forward.8} parent=5 // pred_fallthru
        _
      %p718 = scmp.le.s32.totalorder 1, %s9
      %p719 = scmp.lt.s32.totalorder %s9, 5
      %p720 = pnand %p718, %p719
      %p721 = pneg %p720
      // Predicated region
      $region66: #{cnn_forward.8} parent=5 // pred_check
        _
      $region67: #{cnn_forward.8} parent=5 // pred_check_branch
        %723 = sbr.rel (%p720) target = $region69
      $region68: #{cnn_forward.8} parent=5 // pred_region
        %s724 = ssub.s32 %s9, 1
        %s725 = sand.u32 %s60, 1
        %s726 = sand.u32 %s60, 1
        %s727 = smul.addr %s726, 512
        %s728 = scalar_lea.vmem [#allocation2], %s727
        // Predicated region
        $region70: #{cnn_forward.8} parent=68 // pred_check
          %p729 = pneg %p73
        $region71: #{cnn_forward.8} parent=68 // pred_check_branch
          %731 = sbr.rel (%p729) target = $region73
        $region72: #{cnn_forward.8} parent=68 // pred_region
          _
        $region73: #{cnn_forward.8} parent=68 // pred_fallthru
          _
        %s732 = smul.u32 4, %s18
        %p733 = scmp.lt.s32.totalorder %s732, 3
        %s734 = scalar_select %p733, %s732, 3
        %s735 = smul.addr %s734, 8
        %s736 = smul.addr %s735, 4
        %s737 = scalar_lea.vmem %s0, %s736
        %p738 = pneg %p47
        %p739 = pneg %p44
        %s740 = sand.u32 %s60, 1
        %s741 = sand.u32 %s60, 1
        %s742 = smul.addr %s741, 512
        %s743 = scalar_lea.vmem [#allocation2], %s742
        %p744 = pneg %p73
        %p745 = pneg %p70
        %p746 = scmp.lt.s32.totalorder %s19, 3
        %s747 = scalar_select %p746, %s19, 3
        %s748 = scalar_lea.vmem %s2, %s747
        %p749 = pneg %p99
        %p750 = pneg %p96
        %p751 = pneg %p127
        %p752 = pneg %p124
        %s753 = sand.u32 %s114, 1
        %s754 = sand.u32 %s114, 1
        %s755 = smul.addr %s754, 16
        %s756 = scalar_lea.vmem [#allocation3], %s755
        %s757 = smul.u32 4, %s18
        %p758 = scmp.lt.s32.totalorder %s757, 3
        %s759 = scalar_select %p758, %s757, 3
        %s760 = smul.addr %s759, 8
        %s761 = smul.addr %s760, 4
        %s762 = scalar_lea.vmem %s0, %s761
        %s763 = smul.u32 4, %s18
        %p764 = scmp.lt.s32.totalorder %s19, 3
        %s765 = scalar_select %p764, %s19, 3
        %s766 = scalar_lea.vmem %s2, %s765
        %s767 = smul.u32 4, %s18
        %v769 = vld [vmem:[%s762] sm:$0xff]
        %v770 = vld [vmem:[%s762 + $0x8] sm:$0xff]
        %v771 = vld [vmem:[%s762 + $0x10] sm:$0xff]
        %v772 = vld [vmem:[%s762 + $0x18] sm:$0xff]
        %v773 = vld [vmem:[%s762 + $0x20] sm:$0xff]
        %v774 = vld [vmem:[%s762 + $0x28] sm:$0xff]
        %v775 = vld [vmem:[%s762 + $0x30] sm:$0xff]
        %v776 = vld [vmem:[%s762 + $0x38] sm:$0xff]
        %v777 = vld [vmem:[%s762 + $0x40] sm:$0xff]
        %v778 = vld [vmem:[%s762 + $0x48] sm:$0xff]
        %v779 = vld [vmem:[%s762 + $0x50] sm:$0xff]
        %v780 = vld [vmem:[%s762 + $0x58] sm:$0xff]
        %v781 = vld [vmem:[%s762 + $0x60] sm:$0xff]
        %v782 = vld [vmem:[%s762 + $0x68] sm:$0xff]
        %v783 = vld [vmem:[%s762 + $0x70] sm:$0xff]
        %v784 = vld [vmem:[%s762 + $0x78] sm:$0xff]
        %v785 = vld [vmem:[%s728] sm:$0xf]
        %v786 = vld [vmem:[%s728 + $0x4] sm:$0xf]
        %v787 = vld [vmem:[%s728 + $0x8] sm:$0xf]
        %v788 = vld [vmem:[%s728 + $0xc] sm:$0xf]
        %v789 = vld [vmem:[%s728 + $0x10] sm:$0xf]
        %v790 = vld [vmem:[%s728 + $0x14] sm:$0xf]
        %v791 = vld [vmem:[%s728 + $0x18] sm:$0xf]
        %v792 = vld [vmem:[%s728 + $0x1c] sm:$0xf]
        %v793 = vld [vmem:[%s728 + $0x20] sm:$0xf]
        %v794 = vld [vmem:[%s728 + $0x24] sm:$0xf]
        %v795 = vld [vmem:[%s728 + $0x28] sm:$0xf]
        %v796 = vld [vmem:[%s728 + $0x2c] sm:$0xf]
        %v797 = vld [vmem:[%s728 + $0x30] sm:$0xf]
        %v798 = vld [vmem:[%s728 + $0x34] sm:$0xf]
        %v799 = vld [vmem:[%s728 + $0x38] sm:$0xf]
        %v800 = vld [vmem:[%s728 + $0x3c] sm:$0xf]
        %v801 = vld [vmem:[%s728 + $0x40] sm:$0xf]
        %v802 = vld [vmem:[%s728 + $0x44] sm:$0xf]
        %v803 = vld [vmem:[%s728 + $0x48] sm:$0xf]
        %v804 = vld [vmem:[%s728 + $0x4c] sm:$0xf]
        %v805 = vld [vmem:[%s728 + $0x50] sm:$0xf]
        %v806 = vld [vmem:[%s728 + $0x54] sm:$0xf]
        %v807 = vld [vmem:[%s728 + $0x58] sm:$0xf]
        %v808 = vld [vmem:[%s728 + $0x5c] sm:$0xf]
        %v809 = vld [vmem:[%s728 + $0x60] sm:$0xf]
        %v810 = vld [vmem:[%s728 + $0x64] sm:$0xf]
        %v811 = vld [vmem:[%s728 + $0x68] sm:$0xf]
        %v812 = vld [vmem:[%s728 + $0x6c] sm:$0xf]
        %v813 = vld [vmem:[%s728 + $0x70] sm:$0xf]
        %v814 = vld [vmem:[%s728 + $0x74] sm:$0xf]
        %v815 = vld [vmem:[%s728 + $0x78] sm:$0xf]
        %v816 = vld [vmem:[%s728 + $0x7c] sm:$0xf]
        %v817 = vld [vmem:[%s728 + $0x80] sm:$0xf]
        %v818 = vld [vmem:[%s728 + $0x84] sm:$0xf]
        %v819 = vld [vmem:[%s728 + $0x88] sm:$0xf]
        %v820 = vld [vmem:[%s728 + $0x8c] sm:$0xf]
        %v821 = vld [vmem:[%s728 + $0x90] sm:$0xf]
        %v822 = vld [vmem:[%s728 + $0x94] sm:$0xf]
        %v823 = vld [vmem:[%s728 + $0x98] sm:$0xf]
        %v824 = vld [vmem:[%s728 + $0x9c] sm:$0xf]
        %v825 = vld [vmem:[%s728 + $0xa0] sm:$0xf]
        %v826 = vld [vmem:[%s728 + $0xa4] sm:$0xf]
        %v827 = vld [vmem:[%s728 + $0xa8] sm:$0xf]
        %v828 = vld [vmem:[%s728 + $0xac] sm:$0xf]
        %v829 = vld [vmem:[%s728 + $0xb0] sm:$0xf]
        %v830 = vld [vmem:[%s728 + $0xb4] sm:$0xf]
        %v831 = vld [vmem:[%s728 + $0xb8] sm:$0xf]
        %v832 = vld [vmem:[%s728 + $0xbc] sm:$0xf]
        %v833 = vld [vmem:[%s728 + $0xc0] sm:$0xf]
        %v834 = vld [vmem:[%s728 + $0xc4] sm:$0xf]
        %v835 = vld [vmem:[%s728 + $0xc8] sm:$0xf]
        %v836 = vld [vmem:[%s728 + $0xcc] sm:$0xf]
        %v837 = vld [vmem:[%s728 + $0xd0] sm:$0xf]
        %v838 = vld [vmem:[%s728 + $0xd4] sm:$0xf]
        %v839 = vld [vmem:[%s728 + $0xd8] sm:$0xf]
        %v840 = vld [vmem:[%s728 + $0xdc] sm:$0xf]
        %v841 = vld [vmem:[%s728 + $0xe0] sm:$0xf]
        %v842 = vld [vmem:[%s728 + $0xe4] sm:$0xf]
        %v843 = vld [vmem:[%s728 + $0xe8] sm:$0xf]
        %v844 = vld [vmem:[%s728 + $0xec] sm:$0xf]
        %v845 = vld [vmem:[%s728 + $0xf0] sm:$0xf]
        %v846 = vld [vmem:[%s728 + $0xf4] sm:$0xf]
        %v847 = vld [vmem:[%s728 + $0xf8] sm:$0xf]
        %v848 = vld [vmem:[%s728 + $0xfc] sm:$0xf]
        %v849 = vld [vmem:[%s728 + $0x100] sm:$0xf]
        %v850 = vld [vmem:[%s728 + $0x104] sm:$0xf]
        %v851 = vld [vmem:[%s728 + $0x108] sm:$0xf]
        %v852 = vld [vmem:[%s728 + $0x10c] sm:$0xf]
        %v853 = vld [vmem:[%s728 + $0x110] sm:$0xf]
        %v854 = vld [vmem:[%s728 + $0x114] sm:$0xf]
        %v855 = vld [vmem:[%s728 + $0x118] sm:$0xf]
        %v856 = vld [vmem:[%s728 + $0x11c] sm:$0xf]
        %v857 = vld [vmem:[%s728 + $0x120] sm:$0xf]
        %v858 = vld [vmem:[%s728 + $0x124] sm:$0xf]
        %v859 = vld [vmem:[%s728 + $0x128] sm:$0xf]
        %v860 = vld [vmem:[%s728 + $0x12c] sm:$0xf]
        %v861 = vld [vmem:[%s728 + $0x130] sm:$0xf]
        %v862 = vld [vmem:[%s728 + $0x134] sm:$0xf]
        %v863 = vld [vmem:[%s728 + $0x138] sm:$0xf]
        %v864 = vld [vmem:[%s728 + $0x13c] sm:$0xf]
        %v865 = vld [vmem:[%s728 + $0x140] sm:$0xf]
        %v866 = vld [vmem:[%s728 + $0x144] sm:$0xf]
        %v867 = vld [vmem:[%s728 + $0x148] sm:$0xf]
        %v868 = vld [vmem:[%s728 + $0x14c] sm:$0xf]
        %v869 = vld [vmem:[%s728 + $0x150] sm:$0xf]
        %v870 = vld [vmem:[%s728 + $0x154] sm:$0xf]
        %v871 = vld [vmem:[%s728 + $0x158] sm:$0xf]
        %v872 = vld [vmem:[%s728 + $0x15c] sm:$0xf]
        %v873 = vld [vmem:[%s728 + $0x160] sm:$0xf]
        %v874 = vld [vmem:[%s728 + $0x164] sm:$0xf]
        %v875 = vld [vmem:[%s728 + $0x168] sm:$0xf]
        %v876 = vld [vmem:[%s728 + $0x16c] sm:$0xf]
        %v877 = vld [vmem:[%s728 + $0x170] sm:$0xf]
        %v878 = vld [vmem:[%s728 + $0x174] sm:$0xf]
        %v879 = vld [vmem:[%s728 + $0x178] sm:$0xf]
        %v880 = vld [vmem:[%s728 + $0x17c] sm:$0xf]
        %v881 = vld [vmem:[%s728 + $0x180] sm:$0xf]
        %v882 = vld [vmem:[%s728 + $0x184] sm:$0xf]
        %v883 = vld [vmem:[%s728 + $0x188] sm:$0xf]
        %v884 = vld [vmem:[%s728 + $0x18c] sm:$0xf]
        %v885 = vld [vmem:[%s728 + $0x190] sm:$0xf]
        %v886 = vld [vmem:[%s728 + $0x194] sm:$0xf]
        %v887 = vld [vmem:[%s728 + $0x198] sm:$0xf]
        %v888 = vld [vmem:[%s728 + $0x19c] sm:$0xf]
        %v889 = vld [vmem:[%s728 + $0x1a0] sm:$0xf]
        %v890 = vld [vmem:[%s728 + $0x1a4] sm:$0xf]
        %v891 = vld [vmem:[%s728 + $0x1a8] sm:$0xf]
        %v892 = vld [vmem:[%s728 + $0x1ac] sm:$0xf]
        %v893 = vld [vmem:[%s728 + $0x1b0] sm:$0xf]
        %v894 = vld [vmem:[%s728 + $0x1b4] sm:$0xf]
        %v895 = vld [vmem:[%s728 + $0x1b8] sm:$0xf]
        %v896 = vld [vmem:[%s728 + $0x1bc] sm:$0xf]
        %v897 = vld [vmem:[%s728 + $0x1c0] sm:$0xf]
        %v898 = vld [vmem:[%s728 + $0x1c4] sm:$0xf]
        %v899 = vld [vmem:[%s728 + $0x1c8] sm:$0xf]
        %v900 = vld [vmem:[%s728 + $0x1cc] sm:$0xf]
        %v901 = vld [vmem:[%s728 + $0x1d0] sm:$0xf]
        %v902 = vld [vmem:[%s728 + $0x1d4] sm:$0xf]
        %v903 = vld [vmem:[%s728 + $0x1d8] sm:$0xf]
        %v904 = vld [vmem:[%s728 + $0x1dc] sm:$0xf]
        %v905 = vld [vmem:[%s728 + $0x1e0] sm:$0xf]
        %v906 = vld [vmem:[%s728 + $0x1e4] sm:$0xf]
        %v907 = vld [vmem:[%s728 + $0x1e8] sm:$0xf]
        %v908 = vld [vmem:[%s728 + $0x1ec] sm:$0xf]
        %v909 = vld [vmem:[%s728 + $0x1f0] sm:$0xf]
        %v910 = vld [vmem:[%s728 + $0x1f4] sm:$0xf]
        %v911 = vld [vmem:[%s728 + $0x1f8] sm:$0xf]
        %v912 = vld [vmem:[%s728 + $0x1fc] sm:$0xf]
        %v913 = vld [vmem:[%s766] sm:$0x1]
        %v915 = vlaneseq
        %v916 = vshrl.u32 %v915, 7
        %v917 = vsub.s32 0, %v916
        %v918 = vrot.slane %v913, %v917
        %v936 = vunpack.c.l.b16 %v769
        %v937 = vunpack.c.h.b16 %v769
        %v938 = vunpack.c.l.b16 %v770
        %v939 = vunpack.c.h.b16 %v770
        %v940 = vunpack.c.l.b16 %v771
        %v941 = vunpack.c.h.b16 %v771
        %v942 = vunpack.c.l.b16 %v772
        %v943 = vunpack.c.h.b16 %v772
        %v944 = vunpack.c.l.b16 %v773
        %v945 = vunpack.c.h.b16 %v773
        %v946 = vunpack.c.l.b16 %v774
        %v947 = vunpack.c.h.b16 %v774
        %v948 = vunpack.c.l.b16 %v775
        %v949 = vunpack.c.h.b16 %v775
        %v950 = vunpack.c.l.b16 %v776
        %v951 = vunpack.c.h.b16 %v776
        %v952 = vunpack.c.l.b16 %v777
        %v953 = vunpack.c.h.b16 %v777
        %v954 = vunpack.c.l.b16 %v778
        %v955 = vunpack.c.h.b16 %v778
        %v956 = vunpack.c.l.b16 %v779
        %v957 = vunpack.c.h.b16 %v779
        %v958 = vunpack.c.l.b16 %v780
        %v959 = vunpack.c.h.b16 %v780
        %v960 = vunpack.c.l.b16 %v781
        %v961 = vunpack.c.h.b16 %v781
        %v962 = vunpack.c.l.b16 %v782
        %v963 = vunpack.c.h.b16 %v782
        %v964 = vunpack.c.l.b16 %v783
        %v965 = vunpack.c.h.b16 %v783
        %v966 = vunpack.c.l.b16 %v784
        %v967 = vunpack.c.h.b16 %v784
        %v968 = vpack.c.b16 %v944, %v936
        %v969 = vpack.c.b16 %v945, %v937
        %v970 = vpack.c.b16 %v946, %v938
        %v971 = vpack.c.b16 %v947, %v939
        %v972 = vpack.c.b16 %v948, %v940
        %v973 = vpack.c.b16 %v949, %v941
        %v974 = vpack.c.b16 %v950, %v942
        %v975 = vpack.c.b16 %v951, %v943
        %v976 = vpack.c.b16 %v960, %v952
        %v977 = vpack.c.b16 %v961, %v953
        %v978 = vpack.c.b16 %v962, %v954
        %v979 = vpack.c.b16 %v963, %v955
        %v980 = vpack.c.b16 %v964, %v956
        %v981 = vpack.c.b16 %v965, %v957
        %v982 = vpack.c.b16 %v966, %v958
        %v983 = vpack.c.b16 %v967, %v959
        %v1128 = vunpack.c.l.b16 %v785
        %v1129 = vunpack.c.l.b16 %v786
        %v1130 = vunpack.c.l.b16 %v787
        %v1131 = vunpack.c.l.b16 %v788
        %v1132 = vunpack.c.l.b16 %v789
        %v1133 = vunpack.c.l.b16 %v790
        %v1134 = vunpack.c.l.b16 %v791
        %v1135 = vunpack.c.l.b16 %v792
        %v1136 = vunpack.c.l.b16 %v793
        %v1137 = vunpack.c.l.b16 %v794
        %v1138 = vunpack.c.l.b16 %v795
        %v1139 = vunpack.c.l.b16 %v796
        %v1140 = vunpack.c.l.b16 %v797
        %v1141 = vunpack.c.l.b16 %v798
        %v1142 = vunpack.c.l.b16 %v799
        %v1143 = vunpack.c.l.b16 %v800
        %v1144 = vunpack.c.l.b16 %v801
        %v1145 = vunpack.c.l.b16 %v802
        %v1146 = vunpack.c.l.b16 %v803
        %v1147 = vunpack.c.l.b16 %v804
        %v1148 = vunpack.c.l.b16 %v805
        %v1149 = vunpack.c.l.b16 %v806
        %v1150 = vunpack.c.l.b16 %v807
        %v1151 = vunpack.c.l.b16 %v808
        %v1152 = vunpack.c.l.b16 %v809
        %v1153 = vunpack.c.l.b16 %v810
        %v1154 = vunpack.c.l.b16 %v811
        %v1155 = vunpack.c.l.b16 %v812
        %v1156 = vunpack.c.l.b16 %v813
        %v1157 = vunpack.c.l.b16 %v814
        %v1158 = vunpack.c.l.b16 %v815
        %v1159 = vunpack.c.l.b16 %v816
        %v1160 = vunpack.c.l.b16 %v817
        %v1161 = vunpack.c.l.b16 %v818
        %v1162 = vunpack.c.l.b16 %v819
        %v1163 = vunpack.c.l.b16 %v820
        %v1164 = vunpack.c.l.b16 %v821
        %v1165 = vunpack.c.l.b16 %v822
        %v1166 = vunpack.c.l.b16 %v823
        %v1167 = vunpack.c.l.b16 %v824
        %v1168 = vunpack.c.l.b16 %v825
        %v1169 = vunpack.c.l.b16 %v826
        %v1170 = vunpack.c.l.b16 %v827
        %v1171 = vunpack.c.l.b16 %v828
        %v1172 = vunpack.c.l.b16 %v829
        %v1173 = vunpack.c.l.b16 %v830
        %v1174 = vunpack.c.l.b16 %v831
        %v1175 = vunpack.c.l.b16 %v832
        %v1176 = vunpack.c.l.b16 %v833
        %v1177 = vunpack.c.l.b16 %v834
        %v1178 = vunpack.c.l.b16 %v835
        %v1179 = vunpack.c.l.b16 %v836
        %v1180 = vunpack.c.l.b16 %v837
        %v1181 = vunpack.c.l.b16 %v838
        %v1182 = vunpack.c.l.b16 %v839
        %v1183 = vunpack.c.l.b16 %v840
        %v1184 = vunpack.c.l.b16 %v841
        %v1185 = vunpack.c.l.b16 %v842
        %v1186 = vunpack.c.l.b16 %v843
        %v1187 = vunpack.c.l.b16 %v844
        %v1188 = vunpack.c.l.b16 %v845
        %v1189 = vunpack.c.l.b16 %v846
        %v1190 = vunpack.c.l.b16 %v847
        %v1191 = vunpack.c.l.b16 %v848
        %v1192 = vunpack.c.l.b16 %v849
        %v1193 = vunpack.c.l.b16 %v850
        %v1194 = vunpack.c.l.b16 %v851
        %v1195 = vunpack.c.l.b16 %v852
        %v1196 = vunpack.c.l.b16 %v853
        %v1197 = vunpack.c.l.b16 %v854
        %v1198 = vunpack.c.l.b16 %v855
        %v1199 = vunpack.c.l.b16 %v856
        %v1200 = vunpack.c.l.b16 %v857
        %v1201 = vunpack.c.l.b16 %v858
        %v1202 = vunpack.c.l.b16 %v859
        %v1203 = vunpack.c.l.b16 %v860
        %v1204 = vunpack.c.l.b16 %v861
        %v1205 = vunpack.c.l.b16 %v862
        %v1206 = vunpack.c.l.b16 %v863
        %v1207 = vunpack.c.l.b16 %v864
        %v1208 = vunpack.c.l.b16 %v865
        %v1209 = vunpack.c.l.b16 %v866
        %v1210 = vunpack.c.l.b16 %v867
        %v1211 = vunpack.c.l.b16 %v868
        %v1212 = vunpack.c.l.b16 %v869
        %v1213 = vunpack.c.l.b16 %v870
        %v1214 = vunpack.c.l.b16 %v871
        %v1215 = vunpack.c.l.b16 %v872
        %v1216 = vunpack.c.l.b16 %v873
        %v1217 = vunpack.c.l.b16 %v874
        %v1218 = vunpack.c.l.b16 %v875
        %v1219 = vunpack.c.l.b16 %v876
        %v1220 = vunpack.c.l.b16 %v877
        %v1221 = vunpack.c.l.b16 %v878
        %v1222 = vunpack.c.l.b16 %v879
        %v1223 = vunpack.c.l.b16 %v880
        %v1224 = vunpack.c.l.b16 %v881
        %v1225 = vunpack.c.l.b16 %v882
        %v1226 = vunpack.c.l.b16 %v883
        %v1227 = vunpack.c.l.b16 %v884
        %v1228 = vunpack.c.l.b16 %v885
        %v1229 = vunpack.c.l.b16 %v886
        %v1230 = vunpack.c.l.b16 %v887
        %v1231 = vunpack.c.l.b16 %v888
        %v1232 = vunpack.c.l.b16 %v889
        %v1233 = vunpack.c.l.b16 %v890
        %v1234 = vunpack.c.l.b16 %v891
        %v1235 = vunpack.c.l.b16 %v892
        %v1236 = vunpack.c.l.b16 %v893
        %v1237 = vunpack.c.l.b16 %v894
        %v1238 = vunpack.c.l.b16 %v895
        %v1239 = vunpack.c.l.b16 %v896
        %v1240 = vunpack.c.l.b16 %v897
        %v1241 = vunpack.c.l.b16 %v898
        %v1242 = vunpack.c.l.b16 %v899
        %v1243 = vunpack.c.l.b16 %v900
        %v1244 = vunpack.c.l.b16 %v901
        %v1245 = vunpack.c.l.b16 %v902
        %v1246 = vunpack.c.l.b16 %v903
        %v1247 = vunpack.c.l.b16 %v904
        %v1248 = vunpack.c.l.b16 %v905
        %v1249 = vunpack.c.l.b16 %v906
        %v1250 = vunpack.c.l.b16 %v907
        %v1251 = vunpack.c.l.b16 %v908
        %v1252 = vunpack.c.l.b16 %v909
        %v1253 = vunpack.c.l.b16 %v910
        %v1254 = vunpack.c.l.b16 %v911
        %v1255 = vunpack.c.l.b16 %v912
        %v1256 = vpack.c.b16 %v1129, %v1128
        %v1257 = vpack.c.b16 %v1131, %v1130
        %v1258 = vpack.c.b16 %v1133, %v1132
        %v1259 = vpack.c.b16 %v1135, %v1134
        %v1260 = vpack.c.b16 %v1137, %v1136
        %v1261 = vpack.c.b16 %v1139, %v1138
        %v1262 = vpack.c.b16 %v1141, %v1140
        %v1263 = vpack.c.b16 %v1143, %v1142
        %v1264 = vpack.c.b16 %v1145, %v1144
        %v1265 = vpack.c.b16 %v1147, %v1146
        %v1266 = vpack.c.b16 %v1149, %v1148
        %v1267 = vpack.c.b16 %v1151, %v1150
        %v1268 = vpack.c.b16 %v1153, %v1152
        %v1269 = vpack.c.b16 %v1155, %v1154
        %v1270 = vpack.c.b16 %v1157, %v1156
        %v1271 = vpack.c.b16 %v1159, %v1158
        %v1272 = vpack.c.b16 %v1161, %v1160
        %v1273 = vpack.c.b16 %v1163, %v1162
        %v1274 = vpack.c.b16 %v1165, %v1164
        %v1275 = vpack.c.b16 %v1167, %v1166
        %v1276 = vpack.c.b16 %v1169, %v1168
        %v1277 = vpack.c.b16 %v1171, %v1170
        %v1278 = vpack.c.b16 %v1173, %v1172
        %v1279 = vpack.c.b16 %v1175, %v1174
        %v1280 = vpack.c.b16 %v1177, %v1176
        %v1281 = vpack.c.b16 %v1179, %v1178
        %v1282 = vpack.c.b16 %v1181, %v1180
        %v1283 = vpack.c.b16 %v1183, %v1182
        %v1284 = vpack.c.b16 %v1185, %v1184
        %v1285 = vpack.c.b16 %v1187, %v1186
        %v1286 = vpack.c.b16 %v1189, %v1188
        %v1287 = vpack.c.b16 %v1191, %v1190
        %v1288 = vpack.c.b16 %v1193, %v1192
        %v1289 = vpack.c.b16 %v1195, %v1194
        %v1290 = vpack.c.b16 %v1197, %v1196
        %v1291 = vpack.c.b16 %v1199, %v1198
        %v1292 = vpack.c.b16 %v1201, %v1200
        %v1293 = vpack.c.b16 %v1203, %v1202
        %v1294 = vpack.c.b16 %v1205, %v1204
        %v1295 = vpack.c.b16 %v1207, %v1206
        %v1296 = vpack.c.b16 %v1209, %v1208
        %v1297 = vpack.c.b16 %v1211, %v1210
        %v1298 = vpack.c.b16 %v1213, %v1212
        %v1299 = vpack.c.b16 %v1215, %v1214
        %v1300 = vpack.c.b16 %v1217, %v1216
        %v1301 = vpack.c.b16 %v1219, %v1218
        %v1302 = vpack.c.b16 %v1221, %v1220
        %v1303 = vpack.c.b16 %v1223, %v1222
        %v1304 = vpack.c.b16 %v1225, %v1224
        %v1305 = vpack.c.b16 %v1227, %v1226
        %v1306 = vpack.c.b16 %v1229, %v1228
        %v1307 = vpack.c.b16 %v1231, %v1230
        %v1308 = vpack.c.b16 %v1233, %v1232
        %v1309 = vpack.c.b16 %v1235, %v1234
        %v1310 = vpack.c.b16 %v1237, %v1236
        %v1311 = vpack.c.b16 %v1239, %v1238
        %v1312 = vpack.c.b16 %v1241, %v1240
        %v1313 = vpack.c.b16 %v1243, %v1242
        %v1314 = vpack.c.b16 %v1245, %v1244
        %v1315 = vpack.c.b16 %v1247, %v1246
        %v1316 = vpack.c.b16 %v1249, %v1248
        %v1317 = vpack.c.b16 %v1251, %v1250
        %v1318 = vpack.c.b16 %v1253, %v1252
        %v1319 = vpack.c.b16 %v1255, %v1254
        %1384 = vmatprep.subr.bf16.mxu0 0
        %1385 = vmatpush1.bf16.msra.mxu0 %v1256
        %1386 = vmatprep.subr.bf16.mxu0 0
        %1387 = vmatpush1.bf16.msra.mxu0 %v1257
        %1388 = vmatprep.subr.bf16.mxu0 0
        %1389 = vmatpush1.bf16.msra.mxu0 %v1258
        %1390 = vmatprep.subr.bf16.mxu0 0
        %1391 = vmatpush1.bf16.msra.mxu0 %v1259
        %1392 = vmatprep.subr.bf16.mxu0 0
        %1393 = vmatpush1.bf16.msra.mxu0 %v1260
        %1394 = vmatprep.subr.bf16.mxu0 0
        %1395 = vmatpush1.bf16.msra.mxu0 %v1261
        %1396 = vmatprep.subr.bf16.mxu0 0
        %1397 = vmatpush1.bf16.msra.mxu0 %v1262
        %1398 = vmatprep.subr.bf16.mxu0 0
        %1399 = vmatpush1.bf16.msra.mxu0 %v1263
        %1400 = vmatprep.subr.bf16.mxu0 0
        %1401 = vmatpush1.bf16.msra.mxu0 %v1264
        %1402 = vmatprep.subr.bf16.mxu0 0
        %1403 = vmatpush1.bf16.msra.mxu0 %v1265
        %1404 = vmatprep.subr.bf16.mxu0 0
        %1405 = vmatpush1.bf16.msra.mxu0 %v1266
        %1406 = vmatprep.subr.bf16.mxu0 0
        %1407 = vmatpush1.bf16.msra.mxu0 %v1267
        %1408 = vmatprep.subr.bf16.mxu0 0
        %1409 = vmatpush1.bf16.msra.mxu0 %v1268
        %1410 = vmatprep.subr.bf16.mxu0 0
        %1411 = vmatpush1.bf16.msra.mxu0 %v1269
        %1412 = vmatprep.subr.bf16.mxu0 0
        %1413 = vmatpush1.bf16.msra.mxu0 %v1270
        %1414 = vmatprep.subr.bf16.mxu0 0
        %1415 = vmatpush1.bf16.msra.mxu0 %v1271
        %1416 = vmatprep.mubr.bf16.mxu0 %v969
        %1417 = vmatmul.mubr.bf16.gmra.mrb[0].mxu0 %v968
        %v1418 = vpop.f32.mrb[0].mxu0
        %v1419 = vadd.f32 %v918, %v1418
        %v1420 = vpop.f32.mrb[0].mxu0
        %v1421 = vpop.f32.mrb[0].mxu0
        %v1422 = vadd.f32 %v918, %v1421
        %v1423 = vpop.f32.mrb[0].mxu0
        %1424 = vmatprep.mubr.bf16.mxu0 %v977
        %1425 = vmatmul.mubr.bf16.gmra.mrb[0].mxu0 %v976
        %v1426 = vpop.f32.mrb[0].mxu0
        %v1427 = vadd.f32 %v918, %v1426
        %v1428 = vpop.f32.mrb[0].mxu0
        %v1429 = vpop.f32.mrb[0].mxu0
        %v1430 = vadd.f32 %v918, %v1429
        %v1431 = vpop.f32.mrb[0].mxu0
        %1432 = vdwg.mxu0
        %1433 = vmatprep.subr.bf16.mxu0 0
        %1434 = vmatpush1.bf16.msra.mxu0 %v1272
        %1435 = vmatprep.subr.bf16.mxu0 0
        %1436 = vmatpush1.bf16.msra.mxu0 %v1273
        %1437 = vmatprep.subr.bf16.mxu0 0
        %1438 = vmatpush1.bf16.msra.mxu0 %v1274
        %1439 = vmatprep.subr.bf16.mxu0 0
        %1440 = vmatpush1.bf16.msra.mxu0 %v1275
        %1441 = vmatprep.subr.bf16.mxu0 0
        %1442 = vmatpush1.bf16.msra.mxu0 %v1276
        %1443 = vmatprep.subr.bf16.mxu0 0
        %1444 = vmatpush1.bf16.msra.mxu0 %v1277
        %1445 = vmatprep.subr.bf16.mxu0 0
        %1446 = vmatpush1.bf16.msra.mxu0 %v1278
        %1447 = vmatprep.subr.bf16.mxu0 0
        %1448 = vmatpush1.bf16.msra.mxu0 %v1279
        %1449 = vmatprep.subr.bf16.mxu0 0
        %1450 = vmatpush1.bf16.msra.mxu0 %v1280
        %1451 = vmatprep.subr.bf16.mxu0 0
        %1452 = vmatpush1.bf16.msra.mxu0 %v1281
        %1453 = vmatprep.subr.bf16.mxu0 0
        %1454 = vmatpush1.bf16.msra.mxu0 %v1282
        %1455 = vmatprep.subr.bf16.mxu0 0
        %1456 = vmatpush1.bf16.msra.mxu0 %v1283
        %1457 = vmatprep.subr.bf16.mxu0 0
        %1458 = vmatpush1.bf16.msra.mxu0 %v1284
        %1459 = vmatprep.subr.bf16.mxu0 0
        %1460 = vmatpush1.bf16.msra.mxu0 %v1285
        %1461 = vmatprep.subr.bf16.mxu0 0
        %1462 = vmatpush1.bf16.msra.mxu0 %v1286
        %1463 = vmatprep.subr.bf16.mxu0 0
        %1464 = vmatpush1.bf16.msra.mxu0 %v1287
        %1465 = vmatprep.mubr.bf16.mxu0 %v971
        %1466 = vmatmul.mubr.bf16.gmra.mrb[0].mxu0 %v970
        %v1467 = vpop.f32.mrb[0].mxu0
        %v1468 = vadd.f32 %v1419, %v1467
        %v1469 = vpop.f32.mrb[0].mxu0
        %v1470 = vpop.f32.mrb[0].mxu0
        %v1471 = vadd.f32 %v1422, %v1470
        %v1472 = vpop.f32.mrb[0].mxu0
        %1473 = vmatprep.mubr.bf16.mxu0 %v979
        %1474 = vmatmul.mubr.bf16.gmra.mrb[0].mxu0 %v978
        %v1475 = vpop.f32.mrb[0].mxu0
        %v1476 = vadd.f32 %v1427, %v1475
        %v1477 = vpop.f32.mrb[0].mxu0
        %v1478 = vpop.f32.mrb[0].mxu0
        %v1479 = vadd.f32 %v1430, %v1478
        %v1480 = vpop.f32.mrb[0].mxu0
        %1481 = vdwg.mxu0
        %1482 = vmatprep.subr.bf16.mxu0 0
        %1483 = vmatpush1.bf16.msra.mxu0 %v1288
        %1484 = vmatprep.subr.bf16.mxu0 0
        %1485 = vmatpush1.bf16.msra.mxu0 %v1289
        %1486 = vmatprep.subr.bf16.mxu0 0
        %1487 = vmatpush1.bf16.msra.mxu0 %v1290
        %1488 = vmatprep.subr.bf16.mxu0 0
        %1489 = vmatpush1.bf16.msra.mxu0 %v1291
        %1490 = vmatprep.subr.bf16.mxu0 0
        %1491 = vmatpush1.bf16.msra.mxu0 %v1292
        %1492 = vmatprep.subr.bf16.mxu0 0
        %1493 = vmatpush1.bf16.msra.mxu0 %v1293
        %1494 = vmatprep.subr.bf16.mxu0 0
        %1495 = vmatpush1.bf16.msra.mxu0 %v1294
        %1496 = vmatprep.subr.bf16.mxu0 0
        %1497 = vmatpush1.bf16.msra.mxu0 %v1295
        %1498 = vmatprep.subr.bf16.mxu0 0
        %1499 = vmatpush1.bf16.msra.mxu0 %v1296
        %1500 = vmatprep.subr.bf16.mxu0 0
        %1501 = vmatpush1.bf16.msra.mxu0 %v1297
        %1502 = vmatprep.subr.bf16.mxu0 0
        %1503 = vmatpush1.bf16.msra.mxu0 %v1298
        %1504 = vmatprep.subr.bf16.mxu0 0
        %1505 = vmatpush1.bf16.msra.mxu0 %v1299
        %1506 = vmatprep.subr.bf16.mxu0 0
        %1507 = vmatpush1.bf16.msra.mxu0 %v1300
        %1508 = vmatprep.subr.bf16.mxu0 0
        %1509 = vmatpush1.bf16.msra.mxu0 %v1301
        %1510 = vmatprep.subr.bf16.mxu0 0
        %1511 = vmatpush1.bf16.msra.mxu0 %v1302
        %1512 = vmatprep.subr.bf16.mxu0 0
        %1513 = vmatpush1.bf16.msra.mxu0 %v1303
        %1514 = vmatprep.mubr.bf16.mxu0 %v973
        %1515 = vmatmul.mubr.bf16.gmra.mrb[0].mxu0 %v972
        %v1516 = vpop.f32.mrb[0].mxu0
        %v1517 = vadd.f32 %v1468, %v1516
        %v1518 = vpop.f32.mrb[0].mxu0
        %v1519 = vpop.f32.mrb[0].mxu0
        %v1520 = vadd.f32 %v1471, %v1519
        %v1521 = vpop.f32.mrb[0].mxu0
        %1522 = vmatprep.mubr.bf16.mxu0 %v981
        %1523 = vmatmul.mubr.bf16.gmra.mrb[0].mxu0 %v980
        %v1524 = vpop.f32.mrb[0].mxu0
        %v1525 = vadd.f32 %v1476, %v1524
        %v1526 = vpop.f32.mrb[0].mxu0
        %v1527 = vpop.f32.mrb[0].mxu0
        %v1528 = vadd.f32 %v1479, %v1527
        %v1529 = vpop.f32.mrb[0].mxu0
        %1530 = vdwg.mxu0
        %1531 = vmatprep.subr.bf16.mxu0 0
        %1532 = vmatpush1.bf16.msra.mxu0 %v1304
        %1533 = vmatprep.subr.bf16.mxu0 0
        %1534 = vmatpush1.bf16.msra.mxu0 %v1305
        %1535 = vmatprep.subr.bf16.mxu0 0
        %1536 = vmatpush1.bf16.msra.mxu0 %v1306
        %1537 = vmatprep.subr.bf16.mxu0 0
        %1538 = vmatpush1.bf16.msra.mxu0 %v1307
        %1539 = vmatprep.subr.bf16.mxu0 0
        %1540 = vmatpush1.bf16.msra.mxu0 %v1308
        %1541 = vmatprep.subr.bf16.mxu0 0
        %1542 = vmatpush1.bf16.msra.mxu0 %v1309
        %1543 = vmatprep.subr.bf16.mxu0 0
        %1544 = vmatpush1.bf16.msra.mxu0 %v1310
        %1545 = vmatprep.subr.bf16.mxu0 0
        %1546 = vmatpush1.bf16.msra.mxu0 %v1311
        %1547 = vmatprep.subr.bf16.mxu0 0
        %1548 = vmatpush1.bf16.msra.mxu0 %v1312
        %1549 = vmatprep.subr.bf16.mxu0 0
        %1550 = vmatpush1.bf16.msra.mxu0 %v1313
        %1551 = vmatprep.subr.bf16.mxu0 0
        %1552 = vmatpush1.bf16.msra.mxu0 %v1314
        %1553 = vmatprep.subr.bf16.mxu0 0
        %1554 = vmatpush1.bf16.msra.mxu0 %v1315
        %1555 = vmatprep.subr.bf16.mxu0 0
        %1556 = vmatpush1.bf16.msra.mxu0 %v1316
        %1557 = vmatprep.subr.bf16.mxu0 0
        %1558 = vmatpush1.bf16.msra.mxu0 %v1317
        %1559 = vmatprep.subr.bf16.mxu0 0
        %1560 = vmatpush1.bf16.msra.mxu0 %v1318
        %1561 = vmatprep.subr.bf16.mxu0 0
        %1562 = vmatpush1.bf16.msra.mxu0 %v1319
        %1563 = vmatprep.mubr.bf16.mxu0 %v975
        %1564 = vmatmul.mubr.bf16.gmra.mrb[0].mxu0 %v974
        %v1565 = vpop.f32.mrb[0].mxu0
        %v1566 = vadd.f32 %v1517, %v1565
        %v1567 = vpop.f32.mrb[0].mxu0
        %v1568 = vpop.f32.mrb[0].mxu0
        %v1569 = vadd.f32 %v1520, %v1568
        %v1570 = vpop.f32.mrb[0].mxu0
        %1571 = vmatprep.mubr.bf16.mxu0 %v983
        %1572 = vmatmul.mubr.bf16.gmra.mrb[0].mxu0 %v982
        %v1573 = vpop.f32.mrb[0].mxu0
        %v1574 = vadd.f32 %v1525, %v1573
        %v1575 = vpop.f32.mrb[0].mxu0
        %v1576 = vpop.f32.mrb[0].mxu0
        %v1577 = vadd.f32 %v1528, %v1576
        %v1578 = vpop.f32.mrb[0].mxu0
        %1579 = vdwg.mxu0
        %v1580 = vmax.f32 %v1566, 0.0
        %v1581 = vmax.f32 %v1569, 0.0
        %v1582 = vmax.f32 %v1574, 0.0
        %v1583 = vmax.f32 %v1577, 0.0
        %v1584 = vpack.c.bf16 %v1581, %v1580
        %v1585 = vpack.c.bf16 %v1583, %v1582
        %v1588 = vunpack.c.l.b16 %v1584
        %v1589 = vunpack.c.h.b16 %v1584
        %v1590 = vunpack.c.l.b16 %v1585
        %v1591 = vunpack.c.h.b16 %v1585
        %v1592 = vpack.c.b16 %v1588, %v1588
        %v1593 = vpack.c.b16 %v1589, %v1589
        %v1594 = vpack.c.b16 %v1590, %v1590
        %v1595 = vpack.c.b16 %v1591, %v1591
        %1600 = vst [vmem:[%s756] sm:$0xf] %v1592
        %1601 = vst [vmem:[%s756 + $0x4] sm:$0xf] %v1593
        %1602 = vst [vmem:[%s756 + $0x8] sm:$0xf] %v1594
        %1603 = vst [vmem:[%s756 + $0xc] sm:$0xf] %v1595
        %s1604 = sand.u32 %s114, 1
        %s1605 = sand.u32 %s114, 1
        %s1606 = smul.addr %s1605, 16
        %s1607 = scalar_lea.vmem [#allocation3], %s1606
        // Predicated region
        $region74: #{cnn_forward.8} parent=68 // pred_check
          %p1608 = pneg %p124
        $region75: #{cnn_forward.8} parent=68 // pred_check_branch
          %1610 = sbr.rel (%p1608) target = $region77
        $region76: #{cnn_forward.8} parent=68 // pred_region
          %s1611 = smul.u32 4, %s18
          %s1612 = smul.addr %s1611, 4
          %s1613 = sadd.s32 %s19, %s1612
          %s1614 = smul.addr %s1613, 4
          %s1615 = scalar_lea.vmem %s3, %s1614
          // Predicated region
          $region78: #{cnn_forward.8} parent=76 // pred_check
            _
          $region79: #{cnn_forward.8} parent=76 // pred_check_branch
            %1617 = sbr.rel (0) target = $region81
          $region80: #{cnn_forward.8} parent=76 // pred_region
            // Predicated region
            $region82: #{cnn_forward.8} parent=80 // pred_check
              _
            $region83: #{cnn_forward.8} parent=80 // pred_check_branch
              %1619 = sbr.rel target = $region85
            $region84: #{cnn_forward.8} parent=80 // pred_region
              // Predicated region
              $region97: #{cnn_forward.8} parent=84 // pred_check
                _
              $region98: #{cnn_forward.8} parent=84 // pred_check_branch
                %1640 = sbr.rel (0) target = $region100
              $region99: #{cnn_forward.8} parent=84 // pred_region
                loop: start=0, step=1, limit=1
                $region101: #{cnn_forward.8} parent=99 // loop_pre_header
                  _
                $region102: #{cnn_forward.8} parent=99 // loop_header
                  %s1642 = sphi 0, %s1646
                  %p1643 = scmp.ge.s32.totalorder %s1642, 1
                  %s1647 = sphi %s1607, %s1607
                  %s1648 = sphi %s1615, %s1615
                $region103: #{cnn_forward.8} parent=99 // loop_header_branch
                  %1645 = sbr.rel (%p1643) target = $region107
                $region104: #{cnn_forward.8} parent=99 // loop_body
                  _
                $region105: #{cnn_forward.8} parent=99 // loop_footer
                  %s1646 = sadd.s32 1, %s1642
                $region106: #{cnn_forward.8} parent=99 // loop_footer_branch
                  %1641 = sbr.rel target = $region102
                $region107: #{cnn_forward.8} parent=99 // loop_exit
                  _
                loop: start=0, step=1, limit=1
                $region108: #{cnn_forward.8} parent=99 // loop_pre_header
                  _
                $region109: #{cnn_forward.8} parent=99 // loop_header
                  %s1651 = sphi 0, %s1655
                  %p1652 = scmp.ge.s32.totalorder %s1651, 1
                  %s1656 = sphi %s1607, %s1607
                  %s1657 = sphi %s1615, %s1615
                $region110: #{cnn_forward.8} parent=99 // loop_header_branch
                  %1654 = sbr.rel (%p1652) target = $region114
                $region111: #{cnn_forward.8} parent=99 // loop_body
                  %v1658 = vld [vmem:[%s1656] sm:$0xf]
                  %1659 = vst [vmem:[%s1657] sm:$0xf] %v1658
                  %v1660 = vld [vmem:[%s1656 + $0x4] sm:$0xf]
                  %1661 = vst [vmem:[%s1657 + $0x10] sm:$0xf] %v1660
                  %v1662 = vld [vmem:[%s1656 + $0x8] sm:$0xf]
                  %1663 = vst [vmem:[%s1657 + $0x20] sm:$0xf] %v1662
                  %v1664 = vld [vmem:[%s1656 + $0xc] sm:$0xf]
                  %1665 = vst [vmem:[%s1657 + $0x30] sm:$0xf] %v1664
                $region112: #{cnn_forward.8} parent=99 // loop_footer
                  %s1655 = sadd.s32 1, %s1651
                $region113: #{cnn_forward.8} parent=99 // loop_footer_branch
                  %1650 = sbr.rel target = $region109
                $region114: #{cnn_forward.8} parent=99 // loop_exit
                  _
              $region100: #{cnn_forward.8} parent=84 // pred_fallthru
                _
            $region85: #{cnn_forward.8} parent=80 // pred_fallthru
              _
            // Predicated region
            $region86: #{cnn_forward.8} parent=80 // pred_check
              _
            $region87: #{cnn_forward.8} parent=80 // pred_check_branch
              %1621 = sbr.rel (0) target = $region89
            $region88: #{cnn_forward.8} parent=80 // pred_region
              loop: start=0, step=1, limit=1
              $region90: #{cnn_forward.8} parent=88 // loop_pre_header
                _
              $region91: #{cnn_forward.8} parent=88 // loop_header
                %s1624 = sphi 0, %s1628
                %p1625 = scmp.ge.s32.totalorder %s1624, 1
                %s1629 = sphi %s1607, %s1607
                %s1630 = sphi %s1615, %s1615
              $region92: #{cnn_forward.8} parent=88 // loop_header_branch
                %1627 = sbr.rel (%p1625) target = $region96
              $region93: #{cnn_forward.8} parent=88 // loop_body
                %v1631 = vld [vmem:[%s1629] sm:$0xf]
                %1632 = vst [vmem:[%s1630] sm:$0xf] %v1631
                %v1633 = vld [vmem:[%s1629 + $0x4] sm:$0xf]
                %1634 = vst [vmem:[%s1630 + $0x10] sm:$0xf] %v1633
                %v1635 = vld [vmem:[%s1629 + $0x8] sm:$0xf]
                %1636 = vst [vmem:[%s1630 + $0x20] sm:$0xf] %v1635
                %v1637 = vld [vmem:[%s1629 + $0xc] sm:$0xf]
                %1638 = vst [vmem:[%s1630 + $0x30] sm:$0xf] %v1637
              $region94: #{cnn_forward.8} parent=88 // loop_footer
                %s1628 = sadd.s32 1, %s1624
              $region95: #{cnn_forward.8} parent=88 // loop_footer_branch
                %1623 = sbr.rel target = $region91
              $region96: #{cnn_forward.8} parent=88 // loop_exit
                _
            $region89: #{cnn_forward.8} parent=80 // pred_fallthru
              _
          $region81: #{cnn_forward.8} parent=76 // pred_fallthru
            _
          %1666 = vnop
        $region77: #{cnn_forward.8} parent=68 // pred_fallthru
          _
      $region69: #{cnn_forward.8} parent=5 // pred_fallthru
        _
      %p1667 = scmp.le.s32.totalorder 2, %s9
      // Predicated region
      $region115: #{cnn_forward.8} parent=5 // pred_check
        %p1668 = pneg %p1667
      $region116: #{cnn_forward.8} parent=5 // pred_check_branch
        %1670 = sbr.rel (%p1668) target = $region118
      $region117: #{cnn_forward.8} parent=5 // pred_region
        %s1671 = ssub.s32 %s9, 2
        // Predicated region
        $region119: #{cnn_forward.8} parent=117 // pred_check
          %p1672 = pneg %p130
        $region120: #{cnn_forward.8} parent=117 // pred_check_branch
          %1674 = sbr.rel (%p1672) target = $region122
        $region121: #{cnn_forward.8} parent=117 // pred_region
          %s1675 = sand.u32 %s115, 1
          %s1676 = sand.u32 %s115, 1
          %s1677 = smul.addr %s1676, 16
          %s1678 = scalar_lea.vmem [#allocation3], %s1677
        $region122: #{cnn_forward.8} parent=117 // pred_fallthru
          _
      $region118: #{cnn_forward.8} parent=5 // pred_fallthru
        _
    $region6: #{cnn_forward.8} parent=1 // loop_footer
      %s13 = sadd.s32 1, %s9
    $region7: #{cnn_forward.8} parent=1 // loop_footer_branch
      %8 = sbr.rel target = $region3
    $region8: #{cnn_forward.8} parent=1 // loop_exit
      _

// kernel: cnn_forward.9
$region0: #{cnn_forward.9}
  #allocation0 [shape = 'u32[]', space=smem, size = 0x4, offset = 0x4, fixed_abs, tag = 'smem constant byte address 0x4 - core index']
  #allocation1 [shape = 'u32[144,128]{1,0:T(1,128)}', space=vmem, size = 0x12000, scoped, tag = 'internal scratch']
  %s0 = inlined_call_operand.vmem [shape: bf16[1,16,4608], index: 0, kind: input, shape index: {}]
  %s1 = inlined_call_operand.vmem [shape: bf16[4608,128], index: 1, kind: input, shape index: {}]
  %s2 = inlined_call_operand.vmem [shape: f32[1,128], index: 2, kind: input, shape index: {}]
  %s3 = inlined_call_operand.vmem [shape: f32[16,128], index: 3, kind: output, shape index: {}]
  %s4 = sld [smem:[#allocation0]]
  $region22: #{cnn_forward.9} parent=0
    _
  %s6 = ssub.s32 1, %s4
  %s7 = scalar_select 0, %s6, %s4
  // Predicated region
  $region2: #{cnn_forward.9} parent=0 // pred_check
    _
  $region3: #{cnn_forward.9} parent=0 // pred_check_branch
    %9 = sbr.rel (0) target = $region5
  $region4: #{cnn_forward.9} parent=0 // pred_region
    _
  $region5: #{cnn_forward.9} parent=0 // pred_fallthru
    _
  // Predicated region
  $region6: #{cnn_forward.9} parent=0 // pred_check
    _
  $region7: #{cnn_forward.9} parent=0 // pred_check_branch
    %11 = sbr.rel (0) target = $region9
  $region8: #{cnn_forward.9} parent=0 // pred_region
    _
  $region9: #{cnn_forward.9} parent=0 // pred_fallthru
    _
  // Predicated region
  $region10: #{cnn_forward.9} parent=0 // pred_check
    _
  $region11: #{cnn_forward.9} parent=0 // pred_check_branch
    %13 = sbr.rel (0) target = $region13
  $region12: #{cnn_forward.9} parent=0 // pred_region
    _
  $region13: #{cnn_forward.9} parent=0 // pred_fallthru
    _
  %v15 = vld [vmem:[%s0] sm:$0xff]
  %v16 = vld [vmem:[%s0 + $0x8] sm:$0xff]
  %v17 = vld [vmem:[%s0 + $0x10] sm:$0xff]
  %v18 = vld [vmem:[%s0 + $0x18] sm:$0xff]
  %v19 = vld [vmem:[%s0 + $0x20] sm:$0xff]
  %v20 = vld [vmem:[%s0 + $0x28] sm:$0xff]
  %v21 = vld [vmem:[%s0 + $0x30] sm:$0xff]
  %v22 = vld [vmem:[%s0 + $0x38] sm:$0xff]
  %v23 = vld [vmem:[%s0 + $0x40] sm:$0xff]
  %v24 = vld [vmem:[%s0 + $0x48] sm:$0xff]
  %v25 = vld [vmem:[%s0 + $0x50] sm:$0xff]
  %v26 = vld [vmem:[%s0 + $0x58] sm:$0xff]
  %v27 = vld [vmem:[%s0 + $0x60] sm:$0xff]
  %v28 = vld [vmem:[%s0 + $0x68] sm:$0xff]
  %v29 = vld [vmem:[%s0 + $0x70] sm:$0xff]
  %v30 = vld [vmem:[%s0 + $0x78] sm:$0xff]
  %v31 = vld [vmem:[%s0 + $0x80] sm:$0xff]
  %v32 = vld [vmem:[%s0 + $0x88] sm:$0xff]
  %v33 = vld [vmem:[%s0 + $0x90] sm:$0xff]
  %v34 = vld [vmem:[%s0 + $0x98] sm:$0xff]
  %v35 = vld [vmem:[%s0 + $0xa0] sm:$0xff]
  %v36 = vld [vmem:[%s0 + $0xa8] sm:$0xff]
  %v37 = vld [vmem:[%s0 + $0xb0] sm:$0xff]
  %v38 = vld [vmem:[%s0 + $0xb8] sm:$0xff]
  %v39 = vld [vmem:[%s0 + $0xc0] sm:$0xff]
  %v40 = vld [vmem:[%s0 + $0xc8] sm:$0xff]
  %v41 = vld [vmem:[%s0 + $0xd0] sm:$0xff]
  %v42 = vld [vmem:[%s0 + $0xd8] sm:$0xff]
  %v43 = vld [vmem:[%s0 + $0xe0] sm:$0xff]
  %v44 = vld [vmem:[%s0 + $0xe8] sm:$0xff]
  %v45 = vld [vmem:[%s0 + $0xf0] sm:$0xff]
  %v46 = vld [vmem:[%s0 + $0xf8] sm:$0xff]
  %v47 = vld [vmem:[%s0 + $0x100] sm:$0xff]
  %v48 = vld [vmem:[%s0 + $0x108] sm:$0xff]
  %v49 = vld [vmem:[%s0 + $0x110] sm:$0xff]
  %v50 = vld [vmem:[%s0 + $0x118] sm:$0xff]
  %v51 = vld [vmem:[%s1] sm:$0xf]
  %v52 = vld [vmem:[%s1 + $0x4] sm:$0xf]
  %v53 = vld [vmem:[%s1 + $0x8] sm:$0xf]
  %v54 = vld [vmem:[%s1 + $0xc] sm:$0xf]
  %v55 = vld [vmem:[%s1 + $0x10] sm:$0xf]
  %v56 = vld [vmem:[%s1 + $0x14] sm:$0xf]
  %v57 = vld [vmem:[%s1 + $0x18] sm:$0xf]
  %v58 = vld [vmem:[%s1 + $0x1c] sm:$0xf]
  %v59 = vld [vmem:[%s1 + $0x20] sm:$0xf]
  %v60 = vld [vmem:[%s1 + $0x24] sm:$0xf]
  %v61 = vld [vmem:[%s1 + $0x28] sm:$0xf]
  %v62 = vld [vmem:[%s1 + $0x2c] sm:$0xf]
  %v63 = vld [vmem:[%s1 + $0x30] sm:$0xf]
  %v64 = vld [vmem:[%s1 + $0x34] sm:$0xf]
  %v65 = vld [vmem:[%s1 + $0x38] sm:$0xf]
  %v66 = vld [vmem:[%s1 + $0x3c] sm:$0xf]
  %v67 = vld [vmem:[%s1 + $0x40] sm:$0xf]
  %v68 = vld [vmem:[%s1 + $0x44] sm:$0xf]
  %v69 = vld [vmem:[%s1 + $0x48] sm:$0xf]
  %v70 = vld [vmem:[%s1 + $0x4c] sm:$0xf]
  %v71 = vld [vmem:[%s1 + $0x50] sm:$0xf]
  %v72 = vld [vmem:[%s1 + $0x54] sm:$0xf]
  %v73 = vld [vmem:[%s1 + $0x58] sm:$0xf]
  %v74 = vld [vmem:[%s1 + $0x5c] sm:$0xf]
  %v75 = vld [vmem:[%s1 + $0x60] sm:$0xf]
  %v76 = vld [vmem:[%s1 + $0x64] sm:$0xf]
  %v77 = vld [vmem:[%s1 + $0x68] sm:$0xf]
  %v78 = vld [vmem:[%s1 + $0x6c] sm:$0xf]
  %v79 = vld [vmem:[%s1 + $0x70] sm:$0xf]
  %v80 = vld [vmem:[%s1 + $0x74] sm:$0xf]
  %v81 = vld [vmem:[%s1 + $0x78] sm:$0xf]
  %v82 = vld [vmem:[%s1 + $0x7c] sm:$0xf]
  %v83 = vld [vmem:[%s1 + $0x80] sm:$0xf]
  %v84 = vld [vmem:[%s1 + $0x84] sm:$0xf]
  %v85 = vld [vmem:[%s1 + $0x88] sm:$0xf]
  %v86 = vld [vmem:[%s1 + $0x8c] sm:$0xf]
  %v87 = vld [vmem:[%s1 + $0x90] sm:$0xf]
  %v88 = vld [vmem:[%s1 + $0x94] sm:$0xf]
  %v89 = vld [vmem:[%s1 + $0x98] sm:$0xf]
  %v90 = vld [vmem:[%s1 + $0x9c] sm:$0xf]
  %v91 = vld [vmem:[%s1 + $0xa0] sm:$0xf]
  %v92 = vld [vmem:[%s1 + $0xa4] sm:$0xf]
  %v93 = vld [vmem:[%s1 + $0xa8] sm:$0xf]
  %v94 = vld [vmem:[%s1 + $0xac] sm:$0xf]
  %v95 = vld [vmem:[%s1 + $0xb0] sm:$0xf]
  %v96 = vld [vmem:[%s1 + $0xb4] sm:$0xf]
  %v97 = vld [vmem:[%s1 + $0xb8] sm:$0xf]
  %v98 = vld [vmem:[%s1 + $0xbc] sm:$0xf]
  %v99 = vld [vmem:[%s1 + $0xc0] sm:$0xf]
  %v100 = vld [vmem:[%s1 + $0xc4] sm:$0xf]
  %v101 = vld [vmem:[%s1 + $0xc8] sm:$0xf]
  %v102 = vld [vmem:[%s1 + $0xcc] sm:$0xf]
  %v103 = vld [vmem:[%s1 + $0xd0] sm:$0xf]
  %v104 = vld [vmem:[%s1 + $0xd4] sm:$0xf]
  %v105 = vld [vmem:[%s1 + $0xd8] sm:$0xf]
  %v106 = vld [vmem:[%s1 + $0xdc] sm:$0xf]
  %v107 = vld [vmem:[%s1 + $0xe0] sm:$0xf]
  %v108 = vld [vmem:[%s1 + $0xe4] sm:$0xf]
  %v109 = vld [vmem:[%s1 + $0xe8] sm:$0xf]
  %v110 = vld [vmem:[%s1 + $0xec] sm:$0xf]
  %v111 = vld [vmem:[%s1 + $0xf0] sm:$0xf]
  %v112 = vld [vmem:[%s1 + $0xf4] sm:$0xf]
  %v113 = vld [vmem:[%s1 + $0xf8] sm:$0xf]
  %v114 = vld [vmem:[%s1 + $0xfc] sm:$0xf]
  %v115 = vld [vmem:[%s1 + $0x100] sm:$0xf]
  %v116 = vld [vmem:[%s1 + $0x104] sm:$0xf]
  %v117 = vld [vmem:[%s1 + $0x108] sm:$0xf]
  %v118 = vld [vmem:[%s1 + $0x10c] sm:$0xf]
  %v119 = vld [vmem:[%s1 + $0x110] sm:$0xf]
  %v120 = vld [vmem:[%s1 + $0x114] sm:$0xf]
  %v121 = vld [vmem:[%s1 + $0x118] sm:$0xf]
  %v122 = vld [vmem:[%s1 + $0x11c] sm:$0xf]
  %v123 = vld [vmem:[%s1 + $0x120] sm:$0xf]
  %v124 = vld [vmem:[%s1 + $0x124] sm:$0xf]
  %v125 = vld [vmem:[%s1 + $0x128] sm:$0xf]
  %v126 = vld [vmem:[%s1 + $0x12c] sm:$0xf]
  %v127 = vld [vmem:[%s1 + $0x130] sm:$0xf]
  %v128 = vld [vmem:[%s1 + $0x134] sm:$0xf]
  %v129 = vld [vmem:[%s1 + $0x138] sm:$0xf]
  %v130 = vld [vmem:[%s1 + $0x13c] sm:$0xf]
  %v131 = vld [vmem:[%s1 + $0x140] sm:$0xf]
  %v132 = vld [vmem:[%s1 + $0x144] sm:$0xf]
  %v133 = vld [vmem:[%s1 + $0x148] sm:$0xf]
  %v134 = vld [vmem:[%s1 + $0x14c] sm:$0xf]
  %v135 = vld [vmem:[%s1 + $0x150] sm:$0xf]
  %v136 = vld [vmem:[%s1 + $0x154] sm:$0xf]
  %v137 = vld [vmem:[%s1 + $0x158] sm:$0xf]
  %v138 = vld [vmem:[%s1 + $0x15c] sm:$0xf]
  %v139 = vld [vmem:[%s1 + $0x160] sm:$0xf]
  %v140 = vld [vmem:[%s1 + $0x164] sm:$0xf]
  %v141 = vld [vmem:[%s1 + $0x168] sm:$0xf]
  %v142 = vld [vmem:[%s1 + $0x16c] sm:$0xf]
  %v143 = vld [vmem:[%s1 + $0x170] sm:$0xf]
  %v144 = vld [vmem:[%s1 + $0x174] sm:$0xf]
  %v145 = vld [vmem:[%s1 + $0x178] sm:$0xf]
  %v146 = vld [vmem:[%s1 + $0x17c] sm:$0xf]
  %v147 = vld [vmem:[%s1 + $0x180] sm:$0xf]
  %v148 = vld [vmem:[%s1 + $0x184] sm:$0xf]
  %v149 = vld [vmem:[%s1 + $0x188] sm:$0xf]
  %v150 = vld [vmem:[%s1 + $0x18c] sm:$0xf]
  %v151 = vld [vmem:[%s1 + $0x190] sm:$0xf]
  %v152 = vld [vmem:[%s1 + $0x194] sm:$0xf]
  %v153 = vld [vmem:[%s1 + $0x198] sm:$0xf]
  %v154 = vld [vmem:[%s1 + $0x19c] sm:$0xf]
  %v155 = vld [vmem:[%s1 + $0x1a0] sm:$0xf]
  %v156 = vld [vmem:[%s1 + $0x1a4] sm:$0xf]
  %v157 = vld [vmem:[%s1 + $0x1a8] sm:$0xf]
  %v158 = vld [vmem:[%s1 + $0x1ac] sm:$0xf]
  %v159 = vld [vmem:[%s1 + $0x1b0] sm:$0xf]
  %v160 = vld [vmem:[%s1 + $0x1b4] sm:$0xf]
  %v161 = vld [vmem:[%s1 + $0x1b8] sm:$0xf]
  %v162 = vld [vmem:[%s1 + $0x1bc] sm:$0xf]
  %v163 = vld [vmem:[%s1 + $0x1c0] sm:$0xf]
  %v164 = vld [vmem:[%s1 + $0x1c4] sm:$0xf]
  %v165 = vld [vmem:[%s1 + $0x1c8] sm:$0xf]
  %v166 = vld [vmem:[%s1 + $0x1cc] sm:$0xf]
  %v167 = vld [vmem:[%s1 + $0x1d0] sm:$0xf]
  %v168 = vld [vmem:[%s1 + $0x1d4] sm:$0xf]
  %v169 = vld [vmem:[%s1 + $0x1d8] sm:$0xf]
  %v170 = vld [vmem:[%s1 + $0x1dc] sm:$0xf]
  %v171 = vld [vmem:[%s1 + $0x1e0] sm:$0xf]
  %v172 = vld [vmem:[%s1 + $0x1e4] sm:$0xf]
  %v173 = vld [vmem:[%s1 + $0x1e8] sm:$0xf]
  %v174 = vld [vmem:[%s1 + $0x1ec] sm:$0xf]
  %v175 = vld [vmem:[%s1 + $0x1f0] sm:$0xf]
  %v176 = vld [vmem:[%s1 + $0x1f4] sm:$0xf]
  %v177 = vld [vmem:[%s1 + $0x1f8] sm:$0xf]
  %v178 = vld [vmem:[%s1 + $0x1fc] sm:$0xf]
  %v179 = vld [vmem:[%s1 + $0x200] sm:$0xf]
  %v180 = vld [vmem:[%s1 + $0x204] sm:$0xf]
  %v181 = vld [vmem:[%s1 + $0x208] sm:$0xf]
  %v182 = vld [vmem:[%s1 + $0x20c] sm:$0xf]
  %v183 = vld [vmem:[%s1 + $0x210] sm:$0xf]
  %v184 = vld [vmem:[%s1 + $0x214] sm:$0xf]
  %v185 = vld [vmem:[%s1 + $0x218] sm:$0xf]
  %v186 = vld [vmem:[%s1 + $0x21c] sm:$0xf]
  %v187 = vld [vmem:[%s1 + $0x220] sm:$0xf]
  %v188 = vld [vmem:[%s1 + $0x224] sm:$0xf]
  %v189 = vld [vmem:[%s1 + $0x228] sm:$0xf]
  %v190 = vld [vmem:[%s1 + $0x22c] sm:$0xf]
  %v191 = vld [vmem:[%s1 + $0x230] sm:$0xf]
  %v192 = vld [vmem:[%s1 + $0x234] sm:$0xf]
  %v193 = vld [vmem:[%s1 + $0x238] sm:$0xf]
  %v194 = vld [vmem:[%s1 + $0x23c] sm:$0xf]
  %v195 = vld [vmem:[%s1 + $0x240] sm:$0xf]
  %v196 = vld [vmem:[%s1 + $0x244] sm:$0xf]
  %v197 = vld [vmem:[%s1 + $0x248] sm:$0xf]
  %v198 = vld [vmem:[%s1 + $0x24c] sm:$0xf]
  %v199 = vld [vmem:[%s1 + $0x250] sm:$0xf]
  %v200 = vld [vmem:[%s1 + $0x254] sm:$0xf]
  %v201 = vld [vmem:[%s1 + $0x258] sm:$0xf]
  %v202 = vld [vmem:[%s1 + $0x25c] sm:$0xf]
  %v203 = vld [vmem:[%s1 + $0x260] sm:$0xf]
  %v204 = vld [vmem:[%s1 + $0x264] sm:$0xf]
  %v205 = vld [vmem:[%s1 + $0x268] sm:$0xf]
  %v206 = vld [vmem:[%s1 + $0x26c] sm:$0xf]
  %v207 = vld [vmem:[%s1 + $0x270] sm:$0xf]
  %v208 = vld [vmem:[%s1 + $0x274] sm:$0xf]
  %v209 = vld [vmem:[%s1 + $0x278] sm:$0xf]
  %v210 = vld [vmem:[%s1 + $0x27c] sm:$0xf]
  %v211 = vld [vmem:[%s1 + $0x280] sm:$0xf]
  %v212 = vld [vmem:[%s1 + $0x284] sm:$0xf]
  %v213 = vld [vmem:[%s1 + $0x288] sm:$0xf]
  %v214 = vld [vmem:[%s1 + $0x28c] sm:$0xf]
  %v215 = vld [vmem:[%s1 + $0x290] sm:$0xf]
  %v216 = vld [vmem:[%s1 + $0x294] sm:$0xf]
  %v217 = vld [vmem:[%s1 + $0x298] sm:$0xf]
  %v218 = vld [vmem:[%s1 + $0x29c] sm:$0xf]
  %v219 = vld [vmem:[%s1 + $0x2a0] sm:$0xf]
  %v220 = vld [vmem:[%s1 + $0x2a4] sm:$0xf]
  %v221 = vld [vmem:[%s1 + $0x2a8] sm:$0xf]
  %v222 = vld [vmem:[%s1 + $0x2ac] sm:$0xf]
  %v223 = vld [vmem:[%s1 + $0x2b0] sm:$0xf]
  %v224 = vld [vmem:[%s1 + $0x2b4] sm:$0xf]
  %v225 = vld [vmem:[%s1 + $0x2b8] sm:$0xf]
  %v226 = vld [vmem:[%s1 + $0x2bc] sm:$0xf]
  %v227 = vld [vmem:[%s1 + $0x2c0] sm:$0xf]
  %v228 = vld [vmem:[%s1 + $0x2c4] sm:$0xf]
  %v229 = vld [vmem:[%s1 + $0x2c8] sm:$0xf]
  %v230 = vld [vmem:[%s1 + $0x2cc] sm:$0xf]
  %v231 = vld [vmem:[%s1 + $0x2d0] sm:$0xf]
  %v232 = vld [vmem:[%s1 + $0x2d4] sm:$0xf]
  %v233 = vld [vmem:[%s1 + $0x2d8] sm:$0xf]
  %v234 = vld [vmem:[%s1 + $0x2dc] sm:$0xf]
  %v235 = vld [vmem:[%s1 + $0x2e0] sm:$0xf]
  %v236 = vld [vmem:[%s1 + $0x2e4] sm:$0xf]
  %v237 = vld [vmem:[%s1 + $0x2e8] sm:$0xf]
  %v238 = vld [vmem:[%s1 + $0x2ec] sm:$0xf]
  %v239 = vld [vmem:[%s1 + $0x2f0] sm:$0xf]
  %v240 = vld [vmem:[%s1 + $0x2f4] sm:$0xf]
  %v241 = vld [vmem:[%s1 + $0x2f8] sm:$0xf]
  %v242 = vld [vmem:[%s1 + $0x2fc] sm:$0xf]
  %v243 = vld [vmem:[%s1 + $0x300] sm:$0xf]
  %v244 = vld [vmem:[%s1 + $0x304] sm:$0xf]
  %v245 = vld [vmem:[%s1 + $0x308] sm:$0xf]
  %v246 = vld [vmem:[%s1 + $0x30c] sm:$0xf]
  %v247 = vld [vmem:[%s1 + $0x310] sm:$0xf]
  %v248 = vld [vmem:[%s1 + $0x314] sm:$0xf]
  %v249 = vld [vmem:[%s1 + $0x318] sm:$0xf]
  %v250 = vld [vmem:[%s1 + $0x31c] sm:$0xf]
  %v251 = vld [vmem:[%s1 + $0x320] sm:$0xf]
  %v252 = vld [vmem:[%s1 + $0x324] sm:$0xf]
  %v253 = vld [vmem:[%s1 + $0x328] sm:$0xf]
  %v254 = vld [vmem:[%s1 + $0x32c] sm:$0xf]
  %v255 = vld [vmem:[%s1 + $0x330] sm:$0xf]
  %v256 = vld [vmem:[%s1 + $0x334] sm:$0xf]
  %v257 = vld [vmem:[%s1 + $0x338] sm:$0xf]
  %v258 = vld [vmem:[%s1 + $0x33c] sm:$0xf]
  %v259 = vld [vmem:[%s1 + $0x340] sm:$0xf]
  %v260 = vld [vmem:[%s1 + $0x344] sm:$0xf]
  %v261 = vld [vmem:[%s1 + $0x348] sm:$0xf]
  %v262 = vld [vmem:[%s1 + $0x34c] sm:$0xf]
  %v263 = vld [vmem:[%s1 + $0x350] sm:$0xf]
  %v264 = vld [vmem:[%s1 + $0x354] sm:$0xf]
  %v265 = vld [vmem:[%s1 + $0x358] sm:$0xf]
  %v266 = vld [vmem:[%s1 + $0x35c] sm:$0xf]
  %v267 = vld [vmem:[%s1 + $0x360] sm:$0xf]
  %v268 = vld [vmem:[%s1 + $0x364] sm:$0xf]
  %v269 = vld [vmem:[%s1 + $0x368] sm:$0xf]
  %v270 = vld [vmem:[%s1 + $0x36c] sm:$0xf]
  %v271 = vld [vmem:[%s1 + $0x370] sm:$0xf]
  %v272 = vld [vmem:[%s1 + $0x374] sm:$0xf]
  %v273 = vld [vmem:[%s1 + $0x378] sm:$0xf]
  %v274 = vld [vmem:[%s1 + $0x37c] sm:$0xf]
  %v275 = vld [vmem:[%s1 + $0x380] sm:$0xf]
  %v276 = vld [vmem:[%s1 + $0x384] sm:$0xf]
  %v277 = vld [vmem:[%s1 + $0x388] sm:$0xf]
  %v278 = vld [vmem:[%s1 + $0x38c] sm:$0xf]
  %v279 = vld [vmem:[%s1 + $0x390] sm:$0xf]
  %v280 = vld [vmem:[%s1 + $0x394] sm:$0xf]
  %v281 = vld [vmem:[%s1 + $0x398] sm:$0xf]
  %v282 = vld [vmem:[%s1 + $0x39c] sm:$0xf]
  %v283 = vld [vmem:[%s1 + $0x3a0] sm:$0xf]
  %v284 = vld [vmem:[%s1 + $0x3a4] sm:$0xf]
  %v285 = vld [vmem:[%s1 + $0x3a8] sm:$0xf]
  %v286 = vld [vmem:[%s1 + $0x3ac] sm:$0xf]
  %v287 = vld [vmem:[%s1 + $0x3b0] sm:$0xf]
  %v288 = vld [vmem:[%s1 + $0x3b4] sm:$0xf]
  %v289 = vld [vmem:[%s1 + $0x3b8] sm:$0xf]
  %v290 = vld [vmem:[%s1 + $0x3bc] sm:$0xf]
  %v291 = vld [vmem:[%s1 + $0x3c0] sm:$0xf]
  %v292 = vld [vmem:[%s1 + $0x3c4] sm:$0xf]
  %v293 = vld [vmem:[%s1 + $0x3c8] sm:$0xf]
  %v294 = vld [vmem:[%s1 + $0x3cc] sm:$0xf]
  %v295 = vld [vmem:[%s1 + $0x3d0] sm:$0xf]
  %v296 = vld [vmem:[%s1 + $0x3d4] sm:$0xf]
  %v297 = vld [vmem:[%s1 + $0x3d8] sm:$0xf]
  %v298 = vld [vmem:[%s1 + $0x3dc] sm:$0xf]
  %v299 = vld [vmem:[%s1 + $0x3e0] sm:$0xf]
  %v300 = vld [vmem:[%s1 + $0x3e4] sm:$0xf]
  %v301 = vld [vmem:[%s1 + $0x3e8] sm:$0xf]
  %v302 = vld [vmem:[%s1 + $0x3ec] sm:$0xf]
  %v303 = vld [vmem:[%s1 + $0x3f0] sm:$0xf]
  %v304 = vld [vmem:[%s1 + $0x3f4] sm:$0xf]
  %v305 = vld [vmem:[%s1 + $0x3f8] sm:$0xf]
  %v306 = vld [vmem:[%s1 + $0x3fc] sm:$0xf]
  %v307 = vld [vmem:[%s1 + $0x400] sm:$0xf]
  %v308 = vld [vmem:[%s1 + $0x404] sm:$0xf]
  %v309 = vld [vmem:[%s1 + $0x408] sm:$0xf]
  %v310 = vld [vmem:[%s1 + $0x40c] sm:$0xf]
  %v311 = vld [vmem:[%s1 + $0x410] sm:$0xf]
  %v312 = vld [vmem:[%s1 + $0x414] sm:$0xf]
  %v313 = vld [vmem:[%s1 + $0x418] sm:$0xf]
  %v314 = vld [vmem:[%s1 + $0x41c] sm:$0xf]
  %v315 = vld [vmem:[%s1 + $0x420] sm:$0xf]
  %v316 = vld [vmem:[%s1 + $0x424] sm:$0xf]
  %v317 = vld [vmem:[%s1 + $0x428] sm:$0xf]
  %v318 = vld [vmem:[%s1 + $0x42c] sm:$0xf]
  %v319 = vld [vmem:[%s1 + $0x430] sm:$0xf]
  %v320 = vld [vmem:[%s1 + $0x434] sm:$0xf]
  %v321 = vld [vmem:[%s1 + $0x438] sm:$0xf]
  %v322 = vld [vmem:[%s1 + $0x43c] sm:$0xf]
  %v323 = vld [vmem:[%s1 + $0x440] sm:$0xf]
  %v324 = vld [vmem:[%s1 + $0x444] sm:$0xf]
  %v325 = vld [vmem:[%s1 + $0x448] sm:$0xf]
  %v326 = vld [vmem:[%s1 + $0x44c] sm:$0xf]
  %v327 = vld [vmem:[%s1 + $0x450] sm:$0xf]
  %v328 = vld [vmem:[%s1 + $0x454] sm:$0xf]
  %v329 = vld [vmem:[%s1 + $0x458] sm:$0xf]
  %v330 = vld [vmem:[%s1 + $0x45c] sm:$0xf]
  %v331 = vld [vmem:[%s1 + $0x460] sm:$0xf]
  %v332 = vld [vmem:[%s1 + $0x464] sm:$0xf]
  %v333 = vld [vmem:[%s1 + $0x468] sm:$0xf]
  %v334 = vld [vmem:[%s1 + $0x46c] sm:$0xf]
  %v335 = vld [vmem:[%s1 + $0x470] sm:$0xf]
  %v336 = vld [vmem:[%s1 + $0x474] sm:$0xf]
  %v337 = vld [vmem:[%s1 + $0x478] sm:$0xf]
  %v338 = vld [vmem:[%s1 + $0x47c] sm:$0xf]
  %v339 = vld [vmem:[%s1 + $0x480] sm:$0xf]
  %v340 = vld [vmem:[%s1 + $0x484] sm:$0xf]
  %v341 = vld [vmem:[%s1 + $0x488] sm:$0xf]
  %v342 = vld [vmem:[%s1 + $0x48c] sm:$0xf]
  %v343 = vld [vmem:[%s1 + $0x490] sm:$0xf]
  %v344 = vld [vmem:[%s1 + $0x494] sm:$0xf]
  %v345 = vld [vmem:[%s1 + $0x498] sm:$0xf]
  %v346 = vld [vmem:[%s1 + $0x49c] sm:$0xf]
  %v347 = vld [vmem:[%s1 + $0x4a0] sm:$0xf]
  %v348 = vld [vmem:[%s1 + $0x4a4] sm:$0xf]
  %v349 = vld [vmem:[%s1 + $0x4a8] sm:$0xf]
  %v350 = vld [vmem:[%s1 + $0x4ac] sm:$0xf]
  %v351 = vld [vmem:[%s1 + $0x4b0] sm:$0xf]
  %v352 = vld [vmem:[%s1 + $0x4b4] sm:$0xf]
  %v353 = vld [vmem:[%s1 + $0x4b8] sm:$0xf]
  %v354 = vld [vmem:[%s1 + $0x4bc] sm:$0xf]
  %v355 = vld [vmem:[%s1 + $0x4c0] sm:$0xf]
  %v356 = vld [vmem:[%s1 + $0x4c4] sm:$0xf]
  %v357 = vld [vmem:[%s1 + $0x4c8] sm:$0xf]
  %v358 = vld [vmem:[%s1 + $0x4cc] sm:$0xf]
  %v359 = vld [vmem:[%s1 + $0x4d0] sm:$0xf]
  %v360 = vld [vmem:[%s1 + $0x4d4] sm:$0xf]
  %v361 = vld [vmem:[%s1 + $0x4d8] sm:$0xf]
  %v362 = vld [vmem:[%s1 + $0x4dc] sm:$0xf]
  %v363 = vld [vmem:[%s1 + $0x4e0] sm:$0xf]
  %v364 = vld [vmem:[%s1 + $0x4e4] sm:$0xf]
  %v365 = vld [vmem:[%s1 + $0x4e8] sm:$0xf]
  %v366 = vld [vmem:[%s1 + $0x4ec] sm:$0xf]
  %v367 = vld [vmem:[%s1 + $0x4f0] sm:$0xf]
  %v368 = vld [vmem:[%s1 + $0x4f4] sm:$0xf]
  %v369 = vld [vmem:[%s1 + $0x4f8] sm:$0xf]
  %v370 = vld [vmem:[%s1 + $0x4fc] sm:$0xf]
  %v371 = vld [vmem:[%s1 + $0x500] sm:$0xf]
  %v372 = vld [vmem:[%s1 + $0x504] sm:$0xf]
  %v373 = vld [vmem:[%s1 + $0x508] sm:$0xf]
  %v374 = vld [vmem:[%s1 + $0x50c] sm:$0xf]
  %v375 = vld [vmem:[%s1 + $0x510] sm:$0xf]
  %v376 = vld [vmem:[%s1 + $0x514] sm:$0xf]
  %v377 = vld [vmem:[%s1 + $0x518] sm:$0xf]
  %v378 = vld [vmem:[%s1 + $0x51c] sm:$0xf]
  %v379 = vld [vmem:[%s1 + $0x520] sm:$0xf]
  %v380 = vld [vmem:[%s1 + $0x524] sm:$0xf]
  %v381 = vld [vmem:[%s1 + $0x528] sm:$0xf]
  %v382 = vld [vmem:[%s1 + $0x52c] sm:$0xf]
  %v383 = vld [vmem:[%s1 + $0x530] sm:$0xf]
  %v384 = vld [vmem:[%s1 + $0x534] sm:$0xf]
  %v385 = vld [vmem:[%s1 + $0x538] sm:$0xf]
  %v386 = vld [vmem:[%s1 + $0x53c] sm:$0xf]
  %v387 = vld [vmem:[%s1 + $0x540] sm:$0xf]
  %v388 = vld [vmem:[%s1 + $0x544] sm:$0xf]
  %v389 = vld [vmem:[%s1 + $0x548] sm:$0xf]
  %v390 = vld [vmem:[%s1 + $0x54c] sm:$0xf]
  %v391 = vld [vmem:[%s1 + $0x550] sm:$0xf]
  %v392 = vld [vmem:[%s1 + $0x554] sm:$0xf]
  %v393 = vld [vmem:[%s1 + $0x558] sm:$0xf]
  %v394 = vld [vmem:[%s1 + $0x55c] sm:$0xf]
  %v395 = vld [vmem:[%s1 + $0x560] sm:$0xf]
  %v396 = vld [vmem:[%s1 + $0x564] sm:$0xf]
  %v397 = vld [vmem:[%s1 + $0x568] sm:$0xf]
  %v398 = vld [vmem:[%s1 + $0x56c] sm:$0xf]
  %v399 = vld [vmem:[%s1 + $0x570] sm:$0xf]
  %v400 = vld [vmem:[%s1 + $0x574] sm:$0xf]
  %v401 = vld [vmem:[%s1 + $0x578] sm:$0xf]
  %v402 = vld [vmem:[%s1 + $0x57c] sm:$0xf]
  %v403 = vld [vmem:[%s1 + $0x580] sm:$0xf]
  %v404 = vld [vmem:[%s1 + $0x584] sm:$0xf]
  %v405 = vld [vmem:[%s1 + $0x588] sm:$0xf]
  %v406 = vld [vmem:[%s1 + $0x58c] sm:$0xf]
  %v407 = vld [vmem:[%s1 + $0x590] sm:$0xf]
  %v408 = vld [vmem:[%s1 + $0x594] sm:$0xf]
  %v409 = vld [vmem:[%s1 + $0x598] sm:$0xf]
  %v410 = vld [vmem:[%s1 + $0x59c] sm:$0xf]
  %v411 = vld [vmem:[%s1 + $0x5a0] sm:$0xf]
  %v412 = vld [vmem:[%s1 + $0x5a4] sm:$0xf]
  %v413 = vld [vmem:[%s1 + $0x5a8] sm:$0xf]
  %v414 = vld [vmem:[%s1 + $0x5ac] sm:$0xf]
  %v415 = vld [vmem:[%s1 + $0x5b0] sm:$0xf]
  %v416 = vld [vmem:[%s1 + $0x5b4] sm:$0xf]
  %v417 = vld [vmem:[%s1 + $0x5b8] sm:$0xf]
  %v418 = vld [vmem:[%s1 + $0x5bc] sm:$0xf]
  %v419 = vld [vmem:[%s1 + $0x5c0] sm:$0xf]
  %v420 = vld [vmem:[%s1 + $0x5c4] sm:$0xf]
  %v421 = vld [vmem:[%s1 + $0x5c8] sm:$0xf]
  %v422 = vld [vmem:[%s1 + $0x5cc] sm:$0xf]
  %v423 = vld [vmem:[%s1 + $0x5d0] sm:$0xf]
  %v424 = vld [vmem:[%s1 + $0x5d4] sm:$0xf]
  %v425 = vld [vmem:[%s1 + $0x5d8] sm:$0xf]
  %v426 = vld [vmem:[%s1 + $0x5dc] sm:$0xf]
  %v427 = vld [vmem:[%s1 + $0x5e0] sm:$0xf]
  %v428 = vld [vmem:[%s1 + $0x5e4] sm:$0xf]
  %v429 = vld [vmem:[%s1 + $0x5e8] sm:$0xf]
  %v430 = vld [vmem:[%s1 + $0x5ec] sm:$0xf]
  %v431 = vld [vmem:[%s1 + $0x5f0] sm:$0xf]
  %v432 = vld [vmem:[%s1 + $0x5f4] sm:$0xf]
  %v433 = vld [vmem:[%s1 + $0x5f8] sm:$0xf]
  %v434 = vld [vmem:[%s1 + $0x5fc] sm:$0xf]
  %v435 = vld [vmem:[%s1 + $0x600] sm:$0xf]
  %v436 = vld [vmem:[%s1 + $0x604] sm:$0xf]
  %v437 = vld [vmem:[%s1 + $0x608] sm:$0xf]
  %v438 = vld [vmem:[%s1 + $0x60c] sm:$0xf]
  %v439 = vld [vmem:[%s1 + $0x610] sm:$0xf]
  %v440 = vld [vmem:[%s1 + $0x614] sm:$0xf]
  %v441 = vld [vmem:[%s1 + $0x618] sm:$0xf]
  %v442 = vld [vmem:[%s1 + $0x61c] sm:$0xf]
  %v443 = vld [vmem:[%s1 + $0x620] sm:$0xf]
  %v444 = vld [vmem:[%s1 + $0x624] sm:$0xf]
  %v445 = vld [vmem:[%s1 + $0x628] sm:$0xf]
  %v446 = vld [vmem:[%s1 + $0x62c] sm:$0xf]
  %v447 = vld [vmem:[%s1 + $0x630] sm:$0xf]
  %v448 = vld [vmem:[%s1 + $0x634] sm:$0xf]
  %v449 = vld [vmem:[%s1 + $0x638] sm:$0xf]
  %v450 = vld [vmem:[%s1 + $0x63c] sm:$0xf]
  %v451 = vld [vmem:[%s1 + $0x640] sm:$0xf]
  %v452 = vld [vmem:[%s1 + $0x644] sm:$0xf]
  %v453 = vld [vmem:[%s1 + $0x648] sm:$0xf]
  %v454 = vld [vmem:[%s1 + $0x64c] sm:$0xf]
  %v455 = vld [vmem:[%s1 + $0x650] sm:$0xf]
  %v456 = vld [vmem:[%s1 + $0x654] sm:$0xf]
  %v457 = vld [vmem:[%s1 + $0x658] sm:$0xf]
  %v458 = vld [vmem:[%s1 + $0x65c] sm:$0xf]
  %v459 = vld [vmem:[%s1 + $0x660] sm:$0xf]
  %v460 = vld [vmem:[%s1 + $0x664] sm:$0xf]
  %v461 = vld [vmem:[%s1 + $0x668] sm:$0xf]
  %v462 = vld [vmem:[%s1 + $0x66c] sm:$0xf]
  %v463 = vld [vmem:[%s1 + $0x670] sm:$0xf]
  %v464 = vld [vmem:[%s1 + $0x674] sm:$0xf]
  %v465 = vld [vmem:[%s1 + $0x678] sm:$0xf]
  %v466 = vld [vmem:[%s1 + $0x67c] sm:$0xf]
  %v467 = vld [vmem:[%s1 + $0x680] sm:$0xf]
  %v468 = vld [vmem:[%s1 + $0x684] sm:$0xf]
  %v469 = vld [vmem:[%s1 + $0x688] sm:$0xf]
  %v470 = vld [vmem:[%s1 + $0x68c] sm:$0xf]
  %v471 = vld [vmem:[%s1 + $0x690] sm:$0xf]
  %v472 = vld [vmem:[%s1 + $0x694] sm:$0xf]
  %v473 = vld [vmem:[%s1 + $0x698] sm:$0xf]
  %v474 = vld [vmem:[%s1 + $0x69c] sm:$0xf]
  %v475 = vld [vmem:[%s1 + $0x6a0] sm:$0xf]
  %v476 = vld [vmem:[%s1 + $0x6a4] sm:$0xf]
  %v477 = vld [vmem:[%s1 + $0x6a8] sm:$0xf]
  %v478 = vld [vmem:[%s1 + $0x6ac] sm:$0xf]
  %v479 = vld [vmem:[%s1 + $0x6b0] sm:$0xf]
  %v480 = vld [vmem:[%s1 + $0x6b4] sm:$0xf]
  %v481 = vld [vmem:[%s1 + $0x6b8] sm:$0xf]
  %v482 = vld [vmem:[%s1 + $0x6bc] sm:$0xf]
  %v483 = vld [vmem:[%s1 + $0x6c0] sm:$0xf]
  %v484 = vld [vmem:[%s1 + $0x6c4] sm:$0xf]
  %v485 = vld [vmem:[%s1 + $0x6c8] sm:$0xf]
  %v486 = vld [vmem:[%s1 + $0x6cc] sm:$0xf]
  %v487 = vld [vmem:[%s1 + $0x6d0] sm:$0xf]
  %v488 = vld [vmem:[%s1 + $0x6d4] sm:$0xf]
  %v489 = vld [vmem:[%s1 + $0x6d8] sm:$0xf]
  %v490 = vld [vmem:[%s1 + $0x6dc] sm:$0xf]
  %v491 = vld [vmem:[%s1 + $0x6e0] sm:$0xf]
  %v492 = vld [vmem:[%s1 + $0x6e4] sm:$0xf]
  %v493 = vld [vmem:[%s1 + $0x6e8] sm:$0xf]
  %v494 = vld [vmem:[%s1 + $0x6ec] sm:$0xf]
  %v495 = vld [vmem:[%s1 + $0x6f0] sm:$0xf]
  %v496 = vld [vmem:[%s1 + $0x6f4] sm:$0xf]
  %v497 = vld [vmem:[%s1 + $0x6f8] sm:$0xf]
  %v498 = vld [vmem:[%s1 + $0x6fc] sm:$0xf]
  %v499 = vld [vmem:[%s1 + $0x700] sm:$0xf]
  %v500 = vld [vmem:[%s1 + $0x704] sm:$0xf]
  %v501 = vld [vmem:[%s1 + $0x708] sm:$0xf]
  %v502 = vld [vmem:[%s1 + $0x70c] sm:$0xf]
  %v503 = vld [vmem:[%s1 + $0x710] sm:$0xf]
  %v504 = vld [vmem:[%s1 + $0x714] sm:$0xf]
  %v505 = vld [vmem:[%s1 + $0x718] sm:$0xf]
  %v506 = vld [vmem:[%s1 + $0x71c] sm:$0xf]
  %v507 = vld [vmem:[%s1 + $0x720] sm:$0xf]
  %v508 = vld [vmem:[%s1 + $0x724] sm:$0xf]
  %v509 = vld [vmem:[%s1 + $0x728] sm:$0xf]
  %v510 = vld [vmem:[%s1 + $0x72c] sm:$0xf]
  %v511 = vld [vmem:[%s1 + $0x730] sm:$0xf]
  %v512 = vld [vmem:[%s1 + $0x734] sm:$0xf]
  %v513 = vld [vmem:[%s1 + $0x738] sm:$0xf]
  %v514 = vld [vmem:[%s1 + $0x73c] sm:$0xf]
  %v515 = vld [vmem:[%s1 + $0x740] sm:$0xf]
  %v516 = vld [vmem:[%s1 + $0x744] sm:$0xf]
  %v517 = vld [vmem:[%s1 + $0x748] sm:$0xf]
  %v518 = vld [vmem:[%s1 + $0x74c] sm:$0xf]
  %v519 = vld [vmem:[%s1 + $0x750] sm:$0xf]
  %v520 = vld [vmem:[%s1 + $0x754] sm:$0xf]
  %v521 = vld [vmem:[%s1 + $0x758] sm:$0xf]
  %v522 = vld [vmem:[%s1 + $0x75c] sm:$0xf]
  %v523 = vld [vmem:[%s1 + $0x760] sm:$0xf]
  %v524 = vld [vmem:[%s1 + $0x764] sm:$0xf]
  %v525 = vld [vmem:[%s1 + $0x768] sm:$0xf]
  %v526 = vld [vmem:[%s1 + $0x76c] sm:$0xf]
  %v527 = vld [vmem:[%s1 + $0x770] sm:$0xf]
  %v528 = vld [vmem:[%s1 + $0x774] sm:$0xf]
  %v529 = vld [vmem:[%s1 + $0x778] sm:$0xf]
  %v530 = vld [vmem:[%s1 + $0x77c] sm:$0xf]
  %v531 = vld [vmem:[%s1 + $0x780] sm:$0xf]
  %v532 = vld [vmem:[%s1 + $0x784] sm:$0xf]
  %v533 = vld [vmem:[%s1 + $0x788] sm:$0xf]
  %v534 = vld [vmem:[%s1 + $0x78c] sm:$0xf]
  %v535 = vld [vmem:[%s1 + $0x790] sm:$0xf]
  %v536 = vld [vmem:[%s1 + $0x794] sm:$0xf]
  %v537 = vld [vmem:[%s1 + $0x798] sm:$0xf]
  %v538 = vld [vmem:[%s1 + $0x79c] sm:$0xf]
  %v539 = vld [vmem:[%s1 + $0x7a0] sm:$0xf]
  %v540 = vld [vmem:[%s1 + $0x7a4] sm:$0xf]
  %v541 = vld [vmem:[%s1 + $0x7a8] sm:$0xf]
  %v542 = vld [vmem:[%s1 + $0x7ac] sm:$0xf]
  %v543 = vld [vmem:[%s1 + $0x7b0] sm:$0xf]
  %v544 = vld [vmem:[%s1 + $0x7b4] sm:$0xf]
  %v545 = vld [vmem:[%s1 + $0x7b8] sm:$0xf]
  %v546 = vld [vmem:[%s1 + $0x7bc] sm:$0xf]
  %v547 = vld [vmem:[%s1 + $0x7c0] sm:$0xf]
  %v548 = vld [vmem:[%s1 + $0x7c4] sm:$0xf]
  %v549 = vld [vmem:[%s1 + $0x7c8] sm:$0xf]
  %v550 = vld [vmem:[%s1 + $0x7cc] sm:$0xf]
  %v551 = vld [vmem:[%s1 + $0x7d0] sm:$0xf]
  %v552 = vld [vmem:[%s1 + $0x7d4] sm:$0xf]
  %v553 = vld [vmem:[%s1 + $0x7d8] sm:$0xf]
  %v554 = vld [vmem:[%s1 + $0x7dc] sm:$0xf]
  %v555 = vld [vmem:[%s1 + $0x7e0] sm:$0xf]
  %v556 = vld [vmem:[%s1 + $0x7e4] sm:$0xf]
  %v557 = vld [vmem:[%s1 + $0x7e8] sm:$0xf]
  %v558 = vld [vmem:[%s1 + $0x7ec] sm:$0xf]
  %v559 = vld [vmem:[%s1 + $0x7f0] sm:$0xf]
  %v560 = vld [vmem:[%s1 + $0x7f4] sm:$0xf]
  %v561 = vld [vmem:[%s1 + $0x7f8] sm:$0xf]
  %v562 = vld [vmem:[%s1 + $0x7fc] sm:$0xf]
  %v563 = vld [vmem:[%s1 + $0x800] sm:$0xf]
  %v564 = vld [vmem:[%s1 + $0x804] sm:$0xf]
  %v565 = vld [vmem:[%s1 + $0x808] sm:$0xf]
  %v566 = vld [vmem:[%s1 + $0x80c] sm:$0xf]
  %v567 = vld [vmem:[%s1 + $0x810] sm:$0xf]
  %v568 = vld [vmem:[%s1 + $0x814] sm:$0xf]
  %v569 = vld [vmem:[%s1 + $0x818] sm:$0xf]
  %v570 = vld [vmem:[%s1 + $0x81c] sm:$0xf]
  %v571 = vld [vmem:[%s1 + $0x820] sm:$0xf]
  %v572 = vld [vmem:[%s1 + $0x824] sm:$0xf]
  %v573 = vld [vmem:[%s1 + $0x828] sm:$0xf]
  %v574 = vld [vmem:[%s1 + $0x82c] sm:$0xf]
  %v575 = vld [vmem:[%s1 + $0x830] sm:$0xf]
  %v576 = vld [vmem:[%s1 + $0x834] sm:$0xf]
  %v577 = vld [vmem:[%s1 + $0x838] sm:$0xf]
  %v578 = vld [vmem:[%s1 + $0x83c] sm:$0xf]
  %v579 = vld [vmem:[%s1 + $0x840] sm:$0xf]
  %v580 = vld [vmem:[%s1 + $0x844] sm:$0xf]
  %v581 = vld [vmem:[%s1 + $0x848] sm:$0xf]
  %v582 = vld [vmem:[%s1 + $0x84c] sm:$0xf]
  %v583 = vld [vmem:[%s1 + $0x850] sm:$0xf]
  %v584 = vld [vmem:[%s1 + $0x854] sm:$0xf]
  %v585 = vld [vmem:[%s1 + $0x858] sm:$0xf]
  %v586 = vld [vmem:[%s1 + $0x85c] sm:$0xf]
  %v587 = vld [vmem:[%s1 + $0x860] sm:$0xf]
  %v588 = vld [vmem:[%s1 + $0x864] sm:$0xf]
  %v589 = vld [vmem:[%s1 + $0x868] sm:$0xf]
  %v590 = vld [vmem:[%s1 + $0x86c] sm:$0xf]
  %v591 = vld [vmem:[%s1 + $0x870] sm:$0xf]
  %v592 = vld [vmem:[%s1 + $0x874] sm:$0xf]
  %v593 = vld [vmem:[%s1 + $0x878] sm:$0xf]
  %v594 = vld [vmem:[%s1 + $0x87c] sm:$0xf]
  %v595 = vld [vmem:[%s1 + $0x880] sm:$0xf]
  %v596 = vld [vmem:[%s1 + $0x884] sm:$0xf]
  %v597 = vld [vmem:[%s1 + $0x888] sm:$0xf]
  %v598 = vld [vmem:[%s1 + $0x88c] sm:$0xf]
  %v599 = vld [vmem:[%s1 + $0x890] sm:$0xf]
  %v600 = vld [vmem:[%s1 + $0x894] sm:$0xf]
  %v601 = vld [vmem:[%s1 + $0x898] sm:$0xf]
  %v602 = vld [vmem:[%s1 + $0x89c] sm:$0xf]
  %v603 = vld [vmem:[%s1 + $0x8a0] sm:$0xf]
  %v604 = vld [vmem:[%s1 + $0x8a4] sm:$0xf]
  %v605 = vld [vmem:[%s1 + $0x8a8] sm:$0xf]
  %v606 = vld [vmem:[%s1 + $0x8ac] sm:$0xf]
  %v607 = vld [vmem:[%s1 + $0x8b0] sm:$0xf]
  %v608 = vld [vmem:[%s1 + $0x8b4] sm:$0xf]
  %v609 = vld [vmem:[%s1 + $0x8b8] sm:$0xf]
  %v610 = vld [vmem:[%s1 + $0x8bc] sm:$0xf]
  %v611 = vld [vmem:[%s1 + $0x8c0] sm:$0xf]
  %v612 = vld [vmem:[%s1 + $0x8c4] sm:$0xf]
  %v613 = vld [vmem:[%s1 + $0x8c8] sm:$0xf]
  %v614 = vld [vmem:[%s1 + $0x8cc] sm:$0xf]
  %v615 = vld [vmem:[%s1 + $0x8d0] sm:$0xf]
  %v616 = vld [vmem:[%s1 + $0x8d4] sm:$0xf]
  %v617 = vld [vmem:[%s1 + $0x8d8] sm:$0xf]
  %v618 = vld [vmem:[%s1 + $0x8dc] sm:$0xf]
  %v619 = vld [vmem:[%s1 + $0x8e0] sm:$0xf]
  %v620 = vld [vmem:[%s1 + $0x8e4] sm:$0xf]
  %v621 = vld [vmem:[%s1 + $0x8e8] sm:$0xf]
  %v622 = vld [vmem:[%s1 + $0x8ec] sm:$0xf]
  %v623 = vld [vmem:[%s1 + $0x8f0] sm:$0xf]
  %v624 = vld [vmem:[%s1 + $0x8f4] sm:$0xf]
  %v625 = vld [vmem:[%s1 + $0x8f8] sm:$0xf]
  %v626 = vld [vmem:[%s1 + $0x8fc] sm:$0xf]
  %v627 = vld [vmem:[%s2] sm:$0x1]
  %v629 = vlaneseq
  %v630 = vshrl.u32 %v629, 7
  %v631 = vsub.s32 0, %v630
  %v632 = vrot.slane %v627, %v631
  %v670 = vunpack.c.l.b16 %v15
  %v671 = vunpack.c.h.b16 %v15
  %v672 = vunpack.c.l.b16 %v16
  %v673 = vunpack.c.h.b16 %v16
  %v674 = vunpack.c.l.b16 %v17
  %v675 = vunpack.c.h.b16 %v17
  %v676 = vunpack.c.l.b16 %v18
  %v677 = vunpack.c.h.b16 %v18
  %v678 = vunpack.c.l.b16 %v19
  %v679 = vunpack.c.h.b16 %v19
  %v680 = vunpack.c.l.b16 %v20
  %v681 = vunpack.c.h.b16 %v20
  %v682 = vunpack.c.l.b16 %v21
  %v683 = vunpack.c.h.b16 %v21
  %v684 = vunpack.c.l.b16 %v22
  %v685 = vunpack.c.h.b16 %v22
  %v686 = vunpack.c.l.b16 %v23
  %v687 = vunpack.c.h.b16 %v23
  %v688 = vunpack.c.l.b16 %v24
  %v689 = vunpack.c.h.b16 %v24
  %v690 = vunpack.c.l.b16 %v25
  %v691 = vunpack.c.h.b16 %v25
  %v692 = vunpack.c.l.b16 %v26
  %v693 = vunpack.c.h.b16 %v26
  %v694 = vunpack.c.l.b16 %v27
  %v695 = vunpack.c.h.b16 %v27
  %v696 = vunpack.c.l.b16 %v28
  %v697 = vunpack.c.h.b16 %v28
  %v698 = vunpack.c.l.b16 %v29
  %v699 = vunpack.c.h.b16 %v29
  %v700 = vunpack.c.l.b16 %v30
  %v701 = vunpack.c.h.b16 %v30
  %v702 = vunpack.c.l.b16 %v31
  %v703 = vunpack.c.h.b16 %v31
  %v704 = vunpack.c.l.b16 %v32
  %v705 = vunpack.c.h.b16 %v32
  %v706 = vunpack.c.l.b16 %v33
  %v707 = vunpack.c.h.b16 %v33
  %v708 = vunpack.c.l.b16 %v34
  %v709 = vunpack.c.h.b16 %v34
  %v710 = vunpack.c.l.b16 %v35
  %v711 = vunpack.c.h.b16 %v35
  %v712 = vunpack.c.l.b16 %v36
  %v713 = vunpack.c.h.b16 %v36
  %v714 = vunpack.c.l.b16 %v37
  %v715 = vunpack.c.h.b16 %v37
  %v716 = vunpack.c.l.b16 %v38
  %v717 = vunpack.c.h.b16 %v38
  %v718 = vunpack.c.l.b16 %v39
  %v719 = vunpack.c.h.b16 %v39
  %v720 = vunpack.c.l.b16 %v40
  %v721 = vunpack.c.h.b16 %v40
  %v722 = vunpack.c.l.b16 %v41
  %v723 = vunpack.c.h.b16 %v41
  %v724 = vunpack.c.l.b16 %v42
  %v725 = vunpack.c.h.b16 %v42
  %v726 = vunpack.c.l.b16 %v43
  %v727 = vunpack.c.h.b16 %v43
  %v728 = vunpack.c.l.b16 %v44
  %v729 = vunpack.c.h.b16 %v44
  %v730 = vunpack.c.l.b16 %v45
  %v731 = vunpack.c.h.b16 %v45
  %v732 = vunpack.c.l.b16 %v46
  %v733 = vunpack.c.h.b16 %v46
  %v734 = vunpack.c.l.b16 %v47
  %v735 = vunpack.c.h.b16 %v47
  %v736 = vunpack.c.l.b16 %v48
  %v737 = vunpack.c.h.b16 %v48
  %v738 = vunpack.c.l.b16 %v49
  %v739 = vunpack.c.h.b16 %v49
  %v740 = vunpack.c.l.b16 %v50
  %v741 = vunpack.c.h.b16 %v50
  %v742 = vpack.c.b16 %v706, %v670
  %v743 = vpack.c.b16 %v707, %v671
  %v744 = vpack.c.b16 %v708, %v672
  %v745 = vpack.c.b16 %v709, %v673
  %v746 = vpack.c.b16 %v710, %v674
  %v747 = vpack.c.b16 %v711, %v675
  %v748 = vpack.c.b16 %v712, %v676
  %v749 = vpack.c.b16 %v713, %v677
  %v750 = vpack.c.b16 %v714, %v678
  %v751 = vpack.c.b16 %v715, %v679
  %v752 = vpack.c.b16 %v716, %v680
  %v753 = vpack.c.b16 %v717, %v681
  %v754 = vpack.c.b16 %v718, %v682
  %v755 = vpack.c.b16 %v719, %v683
  %v756 = vpack.c.b16 %v720, %v684
  %v757 = vpack.c.b16 %v721, %v685
  %v758 = vpack.c.b16 %v722, %v686
  %v759 = vpack.c.b16 %v723, %v687
  %v760 = vpack.c.b16 %v724, %v688
  %v761 = vpack.c.b16 %v725, %v689
  %v762 = vpack.c.b16 %v726, %v690
  %v763 = vpack.c.b16 %v727, %v691
  %v764 = vpack.c.b16 %v728, %v692
  %v765 = vpack.c.b16 %v729, %v693
  %v766 = vpack.c.b16 %v730, %v694
  %v767 = vpack.c.b16 %v731, %v695
  %v768 = vpack.c.b16 %v732, %v696
  %v769 = vpack.c.b16 %v733, %v697
  %v770 = vpack.c.b16 %v734, %v698
  %v771 = vpack.c.b16 %v735, %v699
  %v772 = vpack.c.b16 %v736, %v700
  %v773 = vpack.c.b16 %v737, %v701
  %v774 = vpack.c.b16 %v738, %v702
  %v775 = vpack.c.b16 %v739, %v703
  %v776 = vpack.c.b16 %v740, %v704
  %v777 = vpack.c.b16 %v741, %v705
  %v1390 = vunpack.c.l.b16 %v51
  %v1391 = vunpack.c.l.b16 %v52
  %v1392 = vunpack.c.l.b16 %v53
  %v1393 = vunpack.c.l.b16 %v54
  %v1394 = vunpack.c.l.b16 %v55
  %v1395 = vunpack.c.l.b16 %v56
  %v1396 = vunpack.c.l.b16 %v57
  %v1397 = vunpack.c.l.b16 %v58
  %v1398 = vunpack.c.l.b16 %v59
  %v1399 = vunpack.c.l.b16 %v60
  %v1400 = vunpack.c.l.b16 %v61
  %v1401 = vunpack.c.l.b16 %v62
  %v1402 = vunpack.c.l.b16 %v63
  %v1403 = vunpack.c.l.b16 %v64
  %v1404 = vunpack.c.l.b16 %v65
  %v1405 = vunpack.c.l.b16 %v66
  %v1406 = vunpack.c.l.b16 %v67
  %v1407 = vunpack.c.l.b16 %v68
  %v1408 = vunpack.c.l.b16 %v69
  %v1409 = vunpack.c.l.b16 %v70
  %v1410 = vunpack.c.l.b16 %v71
  %v1411 = vunpack.c.l.b16 %v72
  %v1412 = vunpack.c.l.b16 %v73
  %v1413 = vunpack.c.l.b16 %v74
  %v1414 = vunpack.c.l.b16 %v75
  %v1415 = vunpack.c.l.b16 %v76
  %v1416 = vunpack.c.l.b16 %v77
  %v1417 = vunpack.c.l.b16 %v78
  %v1418 = vunpack.c.l.b16 %v79
  %v1419 = vunpack.c.l.b16 %v80
  %v1420 = vunpack.c.l.b16 %v81
  %v1421 = vunpack.c.l.b16 %v82
  %v1422 = vunpack.c.l.b16 %v83
  %v1423 = vunpack.c.l.b16 %v84
  %v1424 = vunpack.c.l.b16 %v85
  %v1425 = vunpack.c.l.b16 %v86
  %v1426 = vunpack.c.l.b16 %v87
  %v1427 = vunpack.c.l.b16 %v88
  %v1428 = vunpack.c.l.b16 %v89
  %v1429 = vunpack.c.l.b16 %v90
  %v1430 = vunpack.c.l.b16 %v91
  %v1431 = vunpack.c.l.b16 %v92
  %v1432 = vunpack.c.l.b16 %v93
  %v1433 = vunpack.c.l.b16 %v94
  %v1434 = vunpack.c.l.b16 %v95
  %v1435 = vunpack.c.l.b16 %v96
  %v1436 = vunpack.c.l.b16 %v97
  %v1437 = vunpack.c.l.b16 %v98
  %v1438 = vunpack.c.l.b16 %v99
  %v1439 = vunpack.c.l.b16 %v100
  %v1440 = vunpack.c.l.b16 %v101
  %v1441 = vunpack.c.l.b16 %v102
  %v1442 = vunpack.c.l.b16 %v103
  %v1443 = vunpack.c.l.b16 %v104
  %v1444 = vunpack.c.l.b16 %v105
  %v1445 = vunpack.c.l.b16 %v106
  %v1446 = vunpack.c.l.b16 %v107
  %v1447 = vunpack.c.l.b16 %v108
  %v1448 = vunpack.c.l.b16 %v109
  %v1449 = vunpack.c.l.b16 %v110
  %v1450 = vunpack.c.l.b16 %v111
  %v1451 = vunpack.c.l.b16 %v112
  %v1452 = vunpack.c.l.b16 %v113
  %v1453 = vunpack.c.l.b16 %v114
  %v1454 = vunpack.c.l.b16 %v115
  %v1455 = vunpack.c.l.b16 %v116
  %v1456 = vunpack.c.l.b16 %v117
  %v1457 = vunpack.c.l.b16 %v118
  %v1458 = vunpack.c.l.b16 %v119
  %v1459 = vunpack.c.l.b16 %v120
  %v1460 = vunpack.c.l.b16 %v121
  %v1461 = vunpack.c.l.b16 %v122
  %v1462 = vunpack.c.l.b16 %v123
  %v1463 = vunpack.c.l.b16 %v124
  %v1464 = vunpack.c.l.b16 %v125
  %v1465 = vunpack.c.l.b16 %v126
  %v1466 = vunpack.c.l.b16 %v127
  %v1467 = vunpack.c.l.b16 %v128
  %v1468 = vunpack.c.l.b16 %v129
  %v1469 = vunpack.c.l.b16 %v130
  %v1470 = vunpack.c.l.b16 %v131
  %v1471 = vunpack.c.l.b16 %v132
  %v1472 = vunpack.c.l.b16 %v133
  %v1473 = vunpack.c.l.b16 %v134
  %v1474 = vunpack.c.l.b16 %v135
  %v1475 = vunpack.c.l.b16 %v136
  %v1476 = vunpack.c.l.b16 %v137
  %v1477 = vunpack.c.l.b16 %v138
  %v1478 = vunpack.c.l.b16 %v139
  %v1479 = vunpack.c.l.b16 %v140
  %v1480 = vunpack.c.l.b16 %v141
  %v1481 = vunpack.c.l.b16 %v142
  %v1482 = vunpack.c.l.b16 %v143
  %v1483 = vunpack.c.l.b16 %v144
  %v1484 = vunpack.c.l.b16 %v145
  %v1485 = vunpack.c.l.b16 %v146
  %v1486 = vunpack.c.l.b16 %v147
  %v1487 = vunpack.c.l.b16 %v148
  %v1488 = vunpack.c.l.b16 %v149
  %v1489 = vunpack.c.l.b16 %v150
  %v1490 = vunpack.c.l.b16 %v151
  %v1491 = vunpack.c.l.b16 %v152
  %v1492 = vunpack.c.l.b16 %v153
  %v1493 = vunpack.c.l.b16 %v154
  %v1494 = vunpack.c.l.b16 %v155
  %v1495 = vunpack.c.l.b16 %v156
  %v1496 = vunpack.c.l.b16 %v157
  %v1497 = vunpack.c.l.b16 %v158
  %v1498 = vunpack.c.l.b16 %v159
  %v1499 = vunpack.c.l.b16 %v160
  %v1500 = vunpack.c.l.b16 %v161
  %v1501 = vunpack.c.l.b16 %v162
  %v1502 = vunpack.c.l.b16 %v163
  %v1503 = vunpack.c.l.b16 %v164
  %v1504 = vunpack.c.l.b16 %v165
  %v1505 = vunpack.c.l.b16 %v166
  %v1506 = vunpack.c.l.b16 %v167
  %v1507 = vunpack.c.l.b16 %v168
  %v1508 = vunpack.c.l.b16 %v169
  %v1509 = vunpack.c.l.b16 %v170
  %v1510 = vunpack.c.l.b16 %v171
  %v1511 = vunpack.c.l.b16 %v172
  %v1512 = vunpack.c.l.b16 %v173
  %v1513 = vunpack.c.l.b16 %v174
  %v1514 = vunpack.c.l.b16 %v175
  %v1515 = vunpack.c.l.b16 %v176
  %v1516 = vunpack.c.l.b16 %v177
  %v1517 = vunpack.c.l.b16 %v178
  %v1518 = vunpack.c.l.b16 %v179
  %v1519 = vunpack.c.l.b16 %v180
  %v1520 = vunpack.c.l.b16 %v181
  %v1521 = vunpack.c.l.b16 %v182
  %v1522 = vunpack.c.l.b16 %v183
  %v1523 = vunpack.c.l.b16 %v184
  %v1524 = vunpack.c.l.b16 %v185
  %v1525 = vunpack.c.l.b16 %v186
  %v1526 = vunpack.c.l.b16 %v187
  %v1527 = vunpack.c.l.b16 %v188
  %v1528 = vunpack.c.l.b16 %v189
  %v1529 = vunpack.c.l.b16 %v190
  %v1530 = vunpack.c.l.b16 %v191
  %v1531 = vunpack.c.l.b16 %v192
  %v1532 = vunpack.c.l.b16 %v193
  %v1533 = vunpack.c.l.b16 %v194
  %v1534 = vunpack.c.l.b16 %v195
  %v1535 = vunpack.c.l.b16 %v196
  %v1536 = vunpack.c.l.b16 %v197
  %v1537 = vunpack.c.l.b16 %v198
  %v1538 = vunpack.c.l.b16 %v199
  %v1539 = vunpack.c.l.b16 %v200
  %v1540 = vunpack.c.l.b16 %v201
  %v1541 = vunpack.c.l.b16 %v202
  %v1542 = vunpack.c.l.b16 %v203
  %v1543 = vunpack.c.l.b16 %v204
  %v1544 = vunpack.c.l.b16 %v205
  %v1545 = vunpack.c.l.b16 %v206
  %v1546 = vunpack.c.l.b16 %v207
  %v1547 = vunpack.c.l.b16 %v208
  %v1548 = vunpack.c.l.b16 %v209
  %v1549 = vunpack.c.l.b16 %v210
  %v1550 = vunpack.c.l.b16 %v211
  %v1551 = vunpack.c.l.b16 %v212
  %v1552 = vunpack.c.l.b16 %v213
  %v1553 = vunpack.c.l.b16 %v214
  %v1554 = vunpack.c.l.b16 %v215
  %v1555 = vunpack.c.l.b16 %v216
  %v1556 = vunpack.c.l.b16 %v217
  %v1557 = vunpack.c.l.b16 %v218
  %v1558 = vunpack.c.l.b16 %v219
  %v1559 = vunpack.c.l.b16 %v220
  %v1560 = vunpack.c.l.b16 %v221
  %v1561 = vunpack.c.l.b16 %v222
  %v1562 = vunpack.c.l.b16 %v223
  %v1563 = vunpack.c.l.b16 %v224
  %v1564 = vunpack.c.l.b16 %v225
  %v1565 = vunpack.c.l.b16 %v226
  %v1566 = vunpack.c.l.b16 %v227
  %v1567 = vunpack.c.l.b16 %v228
  %v1568 = vunpack.c.l.b16 %v229
  %v1569 = vunpack.c.l.b16 %v230
  %v1570 = vunpack.c.l.b16 %v231
  %v1571 = vunpack.c.l.b16 %v232
  %v1572 = vunpack.c.l.b16 %v233
  %v1573 = vunpack.c.l.b16 %v234
  %v1574 = vunpack.c.l.b16 %v235
  %v1575 = vunpack.c.l.b16 %v236
  %v1576 = vunpack.c.l.b16 %v237
  %v1577 = vunpack.c.l.b16 %v238
  %v1578 = vunpack.c.l.b16 %v239
  %v1579 = vunpack.c.l.b16 %v240
  %v1580 = vunpack.c.l.b16 %v241
  %v1581 = vunpack.c.l.b16 %v242
  %v1582 = vunpack.c.l.b16 %v243
  %v1583 = vunpack.c.l.b16 %v244
  %v1584 = vunpack.c.l.b16 %v245
  %v1585 = vunpack.c.l.b16 %v246
  %v1586 = vunpack.c.l.b16 %v247
  %v1587 = vunpack.c.l.b16 %v248
  %v1588 = vunpack.c.l.b16 %v249
  %v1589 = vunpack.c.l.b16 %v250
  %v1590 = vunpack.c.l.b16 %v251
  %v1591 = vunpack.c.l.b16 %v252
  %v1592 = vunpack.c.l.b16 %v253
  %v1593 = vunpack.c.l.b16 %v254
  %v1594 = vunpack.c.l.b16 %v255
  %v1595 = vunpack.c.l.b16 %v256
  %v1596 = vunpack.c.l.b16 %v257
  %v1597 = vunpack.c.l.b16 %v258
  %v1598 = vunpack.c.l.b16 %v259
  %v1599 = vunpack.c.l.b16 %v260
  %v1600 = vunpack.c.l.b16 %v261
  %v1601 = vunpack.c.l.b16 %v262
  %v1602 = vunpack.c.l.b16 %v263
  %v1603 = vunpack.c.l.b16 %v264
  %v1604 = vunpack.c.l.b16 %v265
  %v1605 = vunpack.c.l.b16 %v266
  %v1606 = vunpack.c.l.b16 %v267
  %v1607 = vunpack.c.l.b16 %v268
  %v1608 = vunpack.c.l.b16 %v269
  %v1609 = vunpack.c.l.b16 %v270
  %v1610 = vunpack.c.l.b16 %v271
  %v1611 = vunpack.c.l.b16 %v272
  %v1612 = vunpack.c.l.b16 %v273
  %v1613 = vunpack.c.l.b16 %v274
  %v1614 = vunpack.c.l.b16 %v275
  %v1615 = vunpack.c.l.b16 %v276
  %v1616 = vunpack.c.l.b16 %v277
  %v1617 = vunpack.c.l.b16 %v278
  %v1618 = vunpack.c.l.b16 %v279
  %v1619 = vunpack.c.l.b16 %v280
  %v1620 = vunpack.c.l.b16 %v281
  %v1621 = vunpack.c.l.b16 %v282
  %v1622 = vunpack.c.l.b16 %v283
  %v1623 = vunpack.c.l.b16 %v284
  %v1624 = vunpack.c.l.b16 %v285
  %v1625 = vunpack.c.l.b16 %v286
  %v1626 = vunpack.c.l.b16 %v287
  %v1627 = vunpack.c.l.b16 %v288
  %v1628 = vunpack.c.l.b16 %v289
  %v1629 = vunpack.c.l.b16 %v290
  %v1630 = vunpack.c.l.b16 %v291
  %v1631 = vunpack.c.l.b16 %v292
  %v1632 = vunpack.c.l.b16 %v293
  %v1633 = vunpack.c.l.b16 %v294
  %v1634 = vunpack.c.l.b16 %v295
  %v1635 = vunpack.c.l.b16 %v296
  %v1636 = vunpack.c.l.b16 %v297
  %v1637 = vunpack.c.l.b16 %v298
  %v1638 = vunpack.c.l.b16 %v299
  %v1639 = vunpack.c.l.b16 %v300
  %v1640 = vunpack.c.l.b16 %v301
  %v1641 = vunpack.c.l.b16 %v302
  %v1642 = vunpack.c.l.b16 %v303
  %v1643 = vunpack.c.l.b16 %v304
  %v1644 = vunpack.c.l.b16 %v305
  %v1645 = vunpack.c.l.b16 %v306
  %v1646 = vunpack.c.l.b16 %v307
  %v1647 = vunpack.c.l.b16 %v308
  %v1648 = vunpack.c.l.b16 %v309
  %v1649 = vunpack.c.l.b16 %v310
  %v1650 = vunpack.c.l.b16 %v311
  %v1651 = vunpack.c.l.b16 %v312
  %v1652 = vunpack.c.l.b16 %v313
  %v1653 = vunpack.c.l.b16 %v314
  %v1654 = vunpack.c.l.b16 %v315
  %v1655 = vunpack.c.l.b16 %v316
  %v1656 = vunpack.c.l.b16 %v317
  %v1657 = vunpack.c.l.b16 %v318
  %v1658 = vunpack.c.l.b16 %v319
  %v1659 = vunpack.c.l.b16 %v320
  %v1660 = vunpack.c.l.b16 %v321
  %v1661 = vunpack.c.l.b16 %v322
  %v1662 = vunpack.c.l.b16 %v323
  %v1663 = vunpack.c.l.b16 %v324
  %v1664 = vunpack.c.l.b16 %v325
  %v1665 = vunpack.c.l.b16 %v326
  %v1666 = vunpack.c.l.b16 %v327
  %v1667 = vunpack.c.l.b16 %v328
  %v1668 = vunpack.c.l.b16 %v329
  %v1669 = vunpack.c.l.b16 %v330
  %v1670 = vunpack.c.l.b16 %v331
  %v1671 = vunpack.c.l.b16 %v332
  %v1672 = vunpack.c.l.b16 %v333
  %v1673 = vunpack.c.l.b16 %v334
  %v1674 = vunpack.c.l.b16 %v335
  %v1675 = vunpack.c.l.b16 %v336
  %v1676 = vunpack.c.l.b16 %v337
  %v1677 = vunpack.c.l.b16 %v338
  %v1678 = vunpack.c.l.b16 %v339
  %v1679 = vunpack.c.l.b16 %v340
  %v1680 = vunpack.c.l.b16 %v341
  %v1681 = vunpack.c.l.b16 %v342
  %v1682 = vunpack.c.l.b16 %v343
  %v1683 = vunpack.c.l.b16 %v344
  %v1684 = vunpack.c.l.b16 %v345
  %v1685 = vunpack.c.l.b16 %v346
  %v1686 = vunpack.c.l.b16 %v347
  %v1687 = vunpack.c.l.b16 %v348
  %v1688 = vunpack.c.l.b16 %v349
  %v1689 = vunpack.c.l.b16 %v350
  %v1690 = vunpack.c.l.b16 %v351
  %v1691 = vunpack.c.l.b16 %v352
  %v1692 = vunpack.c.l.b16 %v353
  %v1693 = vunpack.c.l.b16 %v354
  %v1694 = vunpack.c.l.b16 %v355
  %v1695 = vunpack.c.l.b16 %v356
  %v1696 = vunpack.c.l.b16 %v357
  %v1697 = vunpack.c.l.b16 %v358
  %v1698 = vunpack.c.l.b16 %v359
  %v1699 = vunpack.c.l.b16 %v360
  %v1700 = vunpack.c.l.b16 %v361
  %v1701 = vunpack.c.l.b16 %v362
  %v1702 = vunpack.c.l.b16 %v363
  %v1703 = vunpack.c.l.b16 %v364
  %v1704 = vunpack.c.l.b16 %v365
  %v1705 = vunpack.c.l.b16 %v366
  %v1706 = vunpack.c.l.b16 %v367
  %v1707 = vunpack.c.l.b16 %v368
  %v1708 = vunpack.c.l.b16 %v369
  %v1709 = vunpack.c.l.b16 %v370
  %v1710 = vunpack.c.l.b16 %v371
  %v1711 = vunpack.c.l.b16 %v372
  %v1712 = vunpack.c.l.b16 %v373
  %v1713 = vunpack.c.l.b16 %v374
  %v1714 = vunpack.c.l.b16 %v375
  %v1715 = vunpack.c.l.b16 %v376
  %v1716 = vunpack.c.l.b16 %v377
  %v1717 = vunpack.c.l.b16 %v378
  %v1718 = vunpack.c.l.b16 %v379
  %v1719 = vunpack.c.l.b16 %v380
  %v1720 = vunpack.c.l.b16 %v381
  %v1721 = vunpack.c.l.b16 %v382
  %v1722 = vunpack.c.l.b16 %v383
  %v1723 = vunpack.c.l.b16 %v384
  %v1724 = vunpack.c.l.b16 %v385
  %v1725 = vunpack.c.l.b16 %v386
  %v1726 = vunpack.c.l.b16 %v387
  %v1727 = vunpack.c.l.b16 %v388
  %v1728 = vunpack.c.l.b16 %v389
  %v1729 = vunpack.c.l.b16 %v390
  %v1730 = vunpack.c.l.b16 %v391
  %v1731 = vunpack.c.l.b16 %v392
  %v1732 = vunpack.c.l.b16 %v393
  %v1733 = vunpack.c.l.b16 %v394
  %v1734 = vunpack.c.l.b16 %v395
  %v1735 = vunpack.c.l.b16 %v396
  %v1736 = vunpack.c.l.b16 %v397
  %v1737 = vunpack.c.l.b16 %v398
  %v1738 = vunpack.c.l.b16 %v399
  %v1739 = vunpack.c.l.b16 %v400
  %v1740 = vunpack.c.l.b16 %v401
  %v1741 = vunpack.c.l.b16 %v402
  %v1742 = vunpack.c.l.b16 %v403
  %v1743 = vunpack.c.l.b16 %v404
  %v1744 = vunpack.c.l.b16 %v405
  %v1745 = vunpack.c.l.b16 %v406
  %v1746 = vunpack.c.l.b16 %v407
  %v1747 = vunpack.c.l.b16 %v408
  %v1748 = vunpack.c.l.b16 %v409
  %v1749 = vunpack.c.l.b16 %v410
  %v1750 = vunpack.c.l.b16 %v411
  %v1751 = vunpack.c.l.b16 %v412
  %v1752 = vunpack.c.l.b16 %v413
  %v1753 = vunpack.c.l.b16 %v414
  %v1754 = vunpack.c.l.b16 %v415
  %v1755 = vunpack.c.l.b16 %v416
  %v1756 = vunpack.c.l.b16 %v417
  %v1757 = vunpack.c.l.b16 %v418
  %v1758 = vunpack.c.l.b16 %v419
  %v1759 = vunpack.c.l.b16 %v420
  %v1760 = vunpack.c.l.b16 %v421
  %v1761 = vunpack.c.l.b16 %v422
  %v1762 = vunpack.c.l.b16 %v423
  %v1763 = vunpack.c.l.b16 %v424
  %v1764 = vunpack.c.l.b16 %v425
  %v1765 = vunpack.c.l.b16 %v426
  %v1766 = vunpack.c.l.b16 %v427
  %v1767 = vunpack.c.l.b16 %v428
  %v1768 = vunpack.c.l.b16 %v429
  %v1769 = vunpack.c.l.b16 %v430
  %v1770 = vunpack.c.l.b16 %v431
  %v1771 = vunpack.c.l.b16 %v432
  %v1772 = vunpack.c.l.b16 %v433
  %v1773 = vunpack.c.l.b16 %v434
  %v1774 = vunpack.c.l.b16 %v435
  %v1775 = vunpack.c.l.b16 %v436
  %v1776 = vunpack.c.l.b16 %v437
  %v1777 = vunpack.c.l.b16 %v438
  %v1778 = vunpack.c.l.b16 %v439
  %v1779 = vunpack.c.l.b16 %v440
  %v1780 = vunpack.c.l.b16 %v441
  %v1781 = vunpack.c.l.b16 %v442
  %v1782 = vunpack.c.l.b16 %v443
  %v1783 = vunpack.c.l.b16 %v444
  %v1784 = vunpack.c.l.b16 %v445
  %v1785 = vunpack.c.l.b16 %v446
  %v1786 = vunpack.c.l.b16 %v447
  %v1787 = vunpack.c.l.b16 %v448
  %v1788 = vunpack.c.l.b16 %v449
  %v1789 = vunpack.c.l.b16 %v450
  %v1790 = vunpack.c.l.b16 %v451
  %v1791 = vunpack.c.l.b16 %v452
  %v1792 = vunpack.c.l.b16 %v453
  %v1793 = vunpack.c.l.b16 %v454
  %v1794 = vunpack.c.l.b16 %v455
  %v1795 = vunpack.c.l.b16 %v456
  %v1796 = vunpack.c.l.b16 %v457
  %v1797 = vunpack.c.l.b16 %v458
  %v1798 = vunpack.c.l.b16 %v459
  %v1799 = vunpack.c.l.b16 %v460
  %v1800 = vunpack.c.l.b16 %v461
  %v1801 = vunpack.c.l.b16 %v462
  %v1802 = vunpack.c.l.b16 %v463
  %v1803 = vunpack.c.l.b16 %v464
  %v1804 = vunpack.c.l.b16 %v465
  %v1805 = vunpack.c.l.b16 %v466
  %v1806 = vunpack.c.l.b16 %v467
  %v1807 = vunpack.c.l.b16 %v468
  %v1808 = vunpack.c.l.b16 %v469
  %v1809 = vunpack.c.l.b16 %v470
  %v1810 = vunpack.c.l.b16 %v471
  %v1811 = vunpack.c.l.b16 %v472
  %v1812 = vunpack.c.l.b16 %v473
  %v1813 = vunpack.c.l.b16 %v474
  %v1814 = vunpack.c.l.b16 %v475
  %v1815 = vunpack.c.l.b16 %v476
  %v1816 = vunpack.c.l.b16 %v477
  %v1817 = vunpack.c.l.b16 %v478
  %v1818 = vunpack.c.l.b16 %v479
  %v1819 = vunpack.c.l.b16 %v480
  %v1820 = vunpack.c.l.b16 %v481
  %v1821 = vunpack.c.l.b16 %v482
  %v1822 = vunpack.c.l.b16 %v483
  %v1823 = vunpack.c.l.b16 %v484
  %v1824 = vunpack.c.l.b16 %v485
  %v1825 = vunpack.c.l.b16 %v486
  %v1826 = vunpack.c.l.b16 %v487
  %v1827 = vunpack.c.l.b16 %v488
  %v1828 = vunpack.c.l.b16 %v489
  %v1829 = vunpack.c.l.b16 %v490
  %v1830 = vunpack.c.l.b16 %v491
  %v1831 = vunpack.c.l.b16 %v492
  %v1832 = vunpack.c.l.b16 %v493
  %v1833 = vunpack.c.l.b16 %v494
  %v1834 = vunpack.c.l.b16 %v495
  %v1835 = vunpack.c.l.b16 %v496
  %v1836 = vunpack.c.l.b16 %v497
  %v1837 = vunpack.c.l.b16 %v498
  %v1838 = vunpack.c.l.b16 %v499
  %v1839 = vunpack.c.l.b16 %v500
  %v1840 = vunpack.c.l.b16 %v501
  %v1841 = vunpack.c.l.b16 %v502
  %v1842 = vunpack.c.l.b16 %v503
  %v1843 = vunpack.c.l.b16 %v504
  %v1844 = vunpack.c.l.b16 %v505
  %v1845 = vunpack.c.l.b16 %v506
  %v1846 = vunpack.c.l.b16 %v507
  %v1847 = vunpack.c.l.b16 %v508
  %v1848 = vunpack.c.l.b16 %v509
  %v1849 = vunpack.c.l.b16 %v510
  %v1850 = vunpack.c.l.b16 %v511
  %v1851 = vunpack.c.l.b16 %v512
  %v1852 = vunpack.c.l.b16 %v513
  %v1853 = vunpack.c.l.b16 %v514
  %v1854 = vunpack.c.l.b16 %v515
  %v1855 = vunpack.c.l.b16 %v516
  %v1856 = vunpack.c.l.b16 %v517
  %v1857 = vunpack.c.l.b16 %v518
  %v1858 = vunpack.c.l.b16 %v519
  %v1859 = vunpack.c.l.b16 %v520
  %v1860 = vunpack.c.l.b16 %v521
  %v1861 = vunpack.c.l.b16 %v522
  %v1862 = vunpack.c.l.b16 %v523
  %v1863 = vunpack.c.l.b16 %v524
  %v1864 = vunpack.c.l.b16 %v525
  %v1865 = vunpack.c.l.b16 %v526
  %v1866 = vunpack.c.l.b16 %v527
  %v1867 = vunpack.c.l.b16 %v528
  %v1868 = vunpack.c.l.b16 %v529
  %v1869 = vunpack.c.l.b16 %v530
  %v1870 = vunpack.c.l.b16 %v531
  %v1871 = vunpack.c.l.b16 %v532
  %v1872 = vunpack.c.l.b16 %v533
  %v1873 = vunpack.c.l.b16 %v534
  %v1874 = vunpack.c.l.b16 %v535
  %v1875 = vunpack.c.l.b16 %v536
  %v1876 = vunpack.c.l.b16 %v537
  %v1877 = vunpack.c.l.b16 %v538
  %v1878 = vunpack.c.l.b16 %v539
  %v1879 = vunpack.c.l.b16 %v540
  %v1880 = vunpack.c.l.b16 %v541
  %v1881 = vunpack.c.l.b16 %v542
  %v1882 = vunpack.c.l.b16 %v543
  %v1883 = vunpack.c.l.b16 %v544
  %v1884 = vunpack.c.l.b16 %v545
  %v1885 = vunpack.c.l.b16 %v546
  %v1886 = vunpack.c.l.b16 %v547
  %v1887 = vunpack.c.l.b16 %v548
  %v1888 = vunpack.c.l.b16 %v549
  %v1889 = vunpack.c.l.b16 %v550
  %v1890 = vunpack.c.l.b16 %v551
  %v1891 = vunpack.c.l.b16 %v552
  %v1892 = vunpack.c.l.b16 %v553
  %v1893 = vunpack.c.l.b16 %v554
  %v1894 = vunpack.c.l.b16 %v555
  %v1895 = vunpack.c.l.b16 %v556
  %v1896 = vunpack.c.l.b16 %v557
  %v1897 = vunpack.c.l.b16 %v558
  %v1898 = vunpack.c.l.b16 %v559
  %v1899 = vunpack.c.l.b16 %v560
  %v1900 = vunpack.c.l.b16 %v561
  %v1901 = vunpack.c.l.b16 %v562
  %v1902 = vunpack.c.l.b16 %v563
  %v1903 = vunpack.c.l.b16 %v564
  %v1904 = vunpack.c.l.b16 %v565
  %v1905 = vunpack.c.l.b16 %v566
  %v1906 = vunpack.c.l.b16 %v567
  %v1907 = vunpack.c.l.b16 %v568
  %v1908 = vunpack.c.l.b16 %v569
  %v1909 = vunpack.c.l.b16 %v570
  %v1910 = vunpack.c.l.b16 %v571
  %v1911 = vunpack.c.l.b16 %v572
  %v1912 = vunpack.c.l.b16 %v573
  %v1913 = vunpack.c.l.b16 %v574
  %v1914 = vunpack.c.l.b16 %v575
  %v1915 = vunpack.c.l.b16 %v576
  %v1916 = vunpack.c.l.b16 %v577
  %v1917 = vunpack.c.l.b16 %v578
  %v1918 = vunpack.c.l.b16 %v579
  %v1919 = vunpack.c.l.b16 %v580
  %v1920 = vunpack.c.l.b16 %v581
  %v1921 = vunpack.c.l.b16 %v582
  %v1922 = vunpack.c.l.b16 %v583
  %v1923 = vunpack.c.l.b16 %v584
  %v1924 = vunpack.c.l.b16 %v585
  %v1925 = vunpack.c.l.b16 %v586
  %v1926 = vunpack.c.l.b16 %v587
  %v1927 = vunpack.c.l.b16 %v588
  %v1928 = vunpack.c.l.b16 %v589
  %v1929 = vunpack.c.l.b16 %v590
  %v1930 = vunpack.c.l.b16 %v591
  %v1931 = vunpack.c.l.b16 %v592
  %v1932 = vunpack.c.l.b16 %v593
  %v1933 = vunpack.c.l.b16 %v594
  %v1934 = vunpack.c.l.b16 %v595
  %v1935 = vunpack.c.l.b16 %v596
  %v1936 = vunpack.c.l.b16 %v597
  %v1937 = vunpack.c.l.b16 %v598
  %v1938 = vunpack.c.l.b16 %v599
  %v1939 = vunpack.c.l.b16 %v600
  %v1940 = vunpack.c.l.b16 %v601
  %v1941 = vunpack.c.l.b16 %v602
  %v1942 = vunpack.c.l.b16 %v603
  %v1943 = vunpack.c.l.b16 %v604
  %v1944 = vunpack.c.l.b16 %v605
  %v1945 = vunpack.c.l.b16 %v606
  %v1946 = vunpack.c.l.b16 %v607
  %v1947 = vunpack.c.l.b16 %v608
  %v1948 = vunpack.c.l.b16 %v609
  %v1949 = vunpack.c.l.b16 %v610
  %v1950 = vunpack.c.l.b16 %v611
  %v1951 = vunpack.c.l.b16 %v612
  %v1952 = vunpack.c.l.b16 %v613
  %v1953 = vunpack.c.l.b16 %v614
  %v1954 = vunpack.c.l.b16 %v615
  %v1955 = vunpack.c.l.b16 %v616
  %v1956 = vunpack.c.l.b16 %v617
  %v1957 = vunpack.c.l.b16 %v618
  %v1958 = vunpack.c.l.b16 %v619
  %v1959 = vunpack.c.l.b16 %v620
  %v1960 = vunpack.c.l.b16 %v621
  %v1961 = vunpack.c.l.b16 %v622
  %v1962 = vunpack.c.l.b16 %v623
  %v1963 = vunpack.c.l.b16 %v624
  %v1964 = vunpack.c.l.b16 %v625
  %v1965 = vunpack.c.l.b16 %v626
  %v1966 = vpack.c.b16 %v1391, %v1390
  %v1967 = vpack.c.b16 %v1393, %v1392
  %v1968 = vpack.c.b16 %v1395, %v1394
  %v1969 = vpack.c.b16 %v1397, %v1396
  %v1970 = vpack.c.b16 %v1399, %v1398
  %v1971 = vpack.c.b16 %v1401, %v1400
  %v1972 = vpack.c.b16 %v1403, %v1402
  %v1973 = vpack.c.b16 %v1405, %v1404
  %v1974 = vpack.c.b16 %v1407, %v1406
  %v1975 = vpack.c.b16 %v1409, %v1408
  %v1976 = vpack.c.b16 %v1411, %v1410
  %v1977 = vpack.c.b16 %v1413, %v1412
  %v1978 = vpack.c.b16 %v1415, %v1414
  %v1979 = vpack.c.b16 %v1417, %v1416
  %v1980 = vpack.c.b16 %v1419, %v1418
  %v1981 = vpack.c.b16 %v1421, %v1420
  %v1982 = vpack.c.b16 %v1423, %v1422
  %v1983 = vpack.c.b16 %v1425, %v1424
  %v1984 = vpack.c.b16 %v1427, %v1426
  %v1985 = vpack.c.b16 %v1429, %v1428
  %v1986 = vpack.c.b16 %v1431, %v1430
  %v1987 = vpack.c.b16 %v1433, %v1432
  %v1988 = vpack.c.b16 %v1435, %v1434
  %v1989 = vpack.c.b16 %v1437, %v1436
  %v1990 = vpack.c.b16 %v1439, %v1438
  %v1991 = vpack.c.b16 %v1441, %v1440
  %v1992 = vpack.c.b16 %v1443, %v1442
  %v1993 = vpack.c.b16 %v1445, %v1444
  %v1994 = vpack.c.b16 %v1447, %v1446
  %v1995 = vpack.c.b16 %v1449, %v1448
  %v1996 = vpack.c.b16 %v1451, %v1450
  %v1997 = vpack.c.b16 %v1453, %v1452
  %v1998 = vpack.c.b16 %v1455, %v1454
  %v1999 = vpack.c.b16 %v1457, %v1456
  %v2000 = vpack.c.b16 %v1459, %v1458
  %v2001 = vpack.c.b16 %v1461, %v1460
  %v2002 = vpack.c.b16 %v1463, %v1462
  %v2003 = vpack.c.b16 %v1465, %v1464
  %v2004 = vpack.c.b16 %v1467, %v1466
  %v2005 = vpack.c.b16 %v1469, %v1468
  %v2006 = vpack.c.b16 %v1471, %v1470
  %v2007 = vpack.c.b16 %v1473, %v1472
  %v2008 = vpack.c.b16 %v1475, %v1474
  %v2009 = vpack.c.b16 %v1477, %v1476
  %v2010 = vpack.c.b16 %v1479, %v1478
  %v2011 = vpack.c.b16 %v1481, %v1480
  %v2012 = vpack.c.b16 %v1483, %v1482
  %v2013 = vpack.c.b16 %v1485, %v1484
  %v2014 = vpack.c.b16 %v1487, %v1486
  %v2015 = vpack.c.b16 %v1489, %v1488
  %v2016 = vpack.c.b16 %v1491, %v1490
  %v2017 = vpack.c.b16 %v1493, %v1492
  %v2018 = vpack.c.b16 %v1495, %v1494
  %v2019 = vpack.c.b16 %v1497, %v1496
  %v2020 = vpack.c.b16 %v1499, %v1498
  %v2021 = vpack.c.b16 %v1501, %v1500
  %v2022 = vpack.c.b16 %v1503, %v1502
  %v2023 = vpack.c.b16 %v1505, %v1504
  %v2024 = vpack.c.b16 %v1507, %v1506
  %v2025 = vpack.c.b16 %v1509, %v1508
  %v2026 = vpack.c.b16 %v1511, %v1510
  %v2027 = vpack.c.b16 %v1513, %v1512
  %v2028 = vpack.c.b16 %v1515, %v1514
  %v2029 = vpack.c.b16 %v1517, %v1516
  %v2030 = vpack.c.b16 %v1519, %v1518
  %v2031 = vpack.c.b16 %v1521, %v1520
  %v2032 = vpack.c.b16 %v1523, %v1522
  %v2033 = vpack.c.b16 %v1525, %v1524
  %v2034 = vpack.c.b16 %v1527, %v1526
  %v2035 = vpack.c.b16 %v1529, %v1528
  %v2036 = vpack.c.b16 %v1531, %v1530
  %v2037 = vpack.c.b16 %v1533, %v1532
  %v2038 = vpack.c.b16 %v1535, %v1534
  %v2039 = vpack.c.b16 %v1537, %v1536
  %v2040 = vpack.c.b16 %v1539, %v1538
  %v2041 = vpack.c.b16 %v1541, %v1540
  %v2042 = vpack.c.b16 %v1543, %v1542
  %v2043 = vpack.c.b16 %v1545, %v1544
  %v2044 = vpack.c.b16 %v1547, %v1546
  %v2045 = vpack.c.b16 %v1549, %v1548
  %v2046 = vpack.c.b16 %v1551, %v1550
  %v2047 = vpack.c.b16 %v1553, %v1552
  %v2048 = vpack.c.b16 %v1555, %v1554
  %v2049 = vpack.c.b16 %v1557, %v1556
  %v2050 = vpack.c.b16 %v1559, %v1558
  %v2051 = vpack.c.b16 %v1561, %v1560
  %v2052 = vpack.c.b16 %v1563, %v1562
  %v2053 = vpack.c.b16 %v1565, %v1564
  %v2054 = vpack.c.b16 %v1567, %v1566
  %v2055 = vpack.c.b16 %v1569, %v1568
  %v2056 = vpack.c.b16 %v1571, %v1570
  %v2057 = vpack.c.b16 %v1573, %v1572
  %v2058 = vpack.c.b16 %v1575, %v1574
  %v2059 = vpack.c.b16 %v1577, %v1576
  %v2060 = vpack.c.b16 %v1579, %v1578
  %v2061 = vpack.c.b16 %v1581, %v1580
  %v2062 = vpack.c.b16 %v1583, %v1582
  %v2063 = vpack.c.b16 %v1585, %v1584
  %v2064 = vpack.c.b16 %v1587, %v1586
  %v2065 = vpack.c.b16 %v1589, %v1588
  %v2066 = vpack.c.b16 %v1591, %v1590
  %v2067 = vpack.c.b16 %v1593, %v1592
  %v2068 = vpack.c.b16 %v1595, %v1594
  %v2069 = vpack.c.b16 %v1597, %v1596
  %v2070 = vpack.c.b16 %v1599, %v1598
  %v2071 = vpack.c.b16 %v1601, %v1600
  %v2072 = vpack.c.b16 %v1603, %v1602
  %v2073 = vpack.c.b16 %v1605, %v1604
  %v2074 = vpack.c.b16 %v1607, %v1606
  %v2075 = vpack.c.b16 %v1609, %v1608
  %v2076 = vpack.c.b16 %v1611, %v1610
  %v2077 = vpack.c.b16 %v1613, %v1612
  %v2078 = vpack.c.b16 %v1615, %v1614
  %v2079 = vpack.c.b16 %v1617, %v1616
  %v2080 = vpack.c.b16 %v1619, %v1618
  %v2081 = vpack.c.b16 %v1621, %v1620
  %v2082 = vpack.c.b16 %v1623, %v1622
  %v2083 = vpack.c.b16 %v1625, %v1624
  %v2084 = vpack.c.b16 %v1627, %v1626
  %v2085 = vpack.c.b16 %v1629, %v1628
  %v2086 = vpack.c.b16 %v1631, %v1630
  %v2087 = vpack.c.b16 %v1633, %v1632
  %v2088 = vpack.c.b16 %v1635, %v1634
  %v2089 = vpack.c.b16 %v1637, %v1636
  %v2090 = vpack.c.b16 %v1639, %v1638
  %v2091 = vpack.c.b16 %v1641, %v1640
  %v2092 = vpack.c.b16 %v1643, %v1642
  %v2093 = vpack.c.b16 %v1645, %v1644
  %v2094 = vpack.c.b16 %v1647, %v1646
  %v2095 = vpack.c.b16 %v1649, %v1648
  %v2096 = vpack.c.b16 %v1651, %v1650
  %v2097 = vpack.c.b16 %v1653, %v1652
  %v2098 = vpack.c.b16 %v1655, %v1654
  %v2099 = vpack.c.b16 %v1657, %v1656
  %v2100 = vpack.c.b16 %v1659, %v1658
  %v2101 = vpack.c.b16 %v1661, %v1660
  %v2102 = vpack.c.b16 %v1663, %v1662
  %v2103 = vpack.c.b16 %v1665, %v1664
  %v2104 = vpack.c.b16 %v1667, %v1666
  %v2105 = vpack.c.b16 %v1669, %v1668
  %v2106 = vpack.c.b16 %v1671, %v1670
  %v2107 = vpack.c.b16 %v1673, %v1672
  %v2108 = vpack.c.b16 %v1675, %v1674
  %v2109 = vpack.c.b16 %v1677, %v1676
  %v2110 = vpack.c.b16 %v1679, %v1678
  %v2111 = vpack.c.b16 %v1681, %v1680
  %v2112 = vpack.c.b16 %v1683, %v1682
  %v2113 = vpack.c.b16 %v1685, %v1684
  %v2114 = vpack.c.b16 %v1687, %v1686
  %v2115 = vpack.c.b16 %v1689, %v1688
  %v2116 = vpack.c.b16 %v1691, %v1690
  %v2117 = vpack.c.b16 %v1693, %v1692
  %v2118 = vpack.c.b16 %v1695, %v1694
  %v2119 = vpack.c.b16 %v1697, %v1696
  %v2120 = vpack.c.b16 %v1699, %v1698
  %v2121 = vpack.c.b16 %v1701, %v1700
  %v2122 = vpack.c.b16 %v1703, %v1702
  %v2123 = vpack.c.b16 %v1705, %v1704
  %v2124 = vpack.c.b16 %v1707, %v1706
  %v2125 = vpack.c.b16 %v1709, %v1708
  %v2126 = vpack.c.b16 %v1711, %v1710
  %v2127 = vpack.c.b16 %v1713, %v1712
  %v2128 = vpack.c.b16 %v1715, %v1714
  %v2129 = vpack.c.b16 %v1717, %v1716
  %v2130 = vpack.c.b16 %v1719, %v1718
  %v2131 = vpack.c.b16 %v1721, %v1720
  %v2132 = vpack.c.b16 %v1723, %v1722
  %v2133 = vpack.c.b16 %v1725, %v1724
  %v2134 = vpack.c.b16 %v1727, %v1726
  %v2135 = vpack.c.b16 %v1729, %v1728
  %v2136 = vpack.c.b16 %v1731, %v1730
  %v2137 = vpack.c.b16 %v1733, %v1732
  %v2138 = vpack.c.b16 %v1735, %v1734
  %v2139 = vpack.c.b16 %v1737, %v1736
  %v2140 = vpack.c.b16 %v1739, %v1738
  %v2141 = vpack.c.b16 %v1741, %v1740
  %v2142 = vpack.c.b16 %v1743, %v1742
  %v2143 = vpack.c.b16 %v1745, %v1744
  %v2144 = vpack.c.b16 %v1747, %v1746
  %v2145 = vpack.c.b16 %v1749, %v1748
  %v2146 = vpack.c.b16 %v1751, %v1750
  %v2147 = vpack.c.b16 %v1753, %v1752
  %v2148 = vpack.c.b16 %v1755, %v1754
  %v2149 = vpack.c.b16 %v1757, %v1756
  %v2150 = vpack.c.b16 %v1759, %v1758
  %v2151 = vpack.c.b16 %v1761, %v1760
  %v2152 = vpack.c.b16 %v1763, %v1762
  %v2153 = vpack.c.b16 %v1765, %v1764
  %v2154 = vpack.c.b16 %v1767, %v1766
  %v2155 = vpack.c.b16 %v1769, %v1768
  %v2156 = vpack.c.b16 %v1771, %v1770
  %v2157 = vpack.c.b16 %v1773, %v1772
  %v2158 = vpack.c.b16 %v1775, %v1774
  %v2159 = vpack.c.b16 %v1777, %v1776
  %v2160 = vpack.c.b16 %v1779, %v1778
  %v2161 = vpack.c.b16 %v1781, %v1780
  %v2162 = vpack.c.b16 %v1783, %v1782
  %v2163 = vpack.c.b16 %v1785, %v1784
  %v2164 = vpack.c.b16 %v1787, %v1786
  %v2165 = vpack.c.b16 %v1789, %v1788
  %v2166 = vpack.c.b16 %v1791, %v1790
  %v2167 = vpack.c.b16 %v1793, %v1792
  %v2168 = vpack.c.b16 %v1795, %v1794
  %v2169 = vpack.c.b16 %v1797, %v1796
  %v2170 = vpack.c.b16 %v1799, %v1798
  %v2171 = vpack.c.b16 %v1801, %v1800
  %v2172 = vpack.c.b16 %v1803, %v1802
  %v2173 = vpack.c.b16 %v1805, %v1804
  %v2174 = vpack.c.b16 %v1807, %v1806
  %v2175 = vpack.c.b16 %v1809, %v1808
  %v2176 = vpack.c.b16 %v1811, %v1810
  %v2177 = vpack.c.b16 %v1813, %v1812
  %v2178 = vpack.c.b16 %v1815, %v1814
  %v2179 = vpack.c.b16 %v1817, %v1816
  %v2180 = vpack.c.b16 %v1819, %v1818
  %v2181 = vpack.c.b16 %v1821, %v1820
  %v2182 = vpack.c.b16 %v1823, %v1822
  %v2183 = vpack.c.b16 %v1825, %v1824
  %v2184 = vpack.c.b16 %v1827, %v1826
  %v2185 = vpack.c.b16 %v1829, %v1828
  %v2186 = vpack.c.b16 %v1831, %v1830
  %v2187 = vpack.c.b16 %v1833, %v1832
  %v2188 = vpack.c.b16 %v1835, %v1834
  %v2189 = vpack.c.b16 %v1837, %v1836
  %v2190 = vpack.c.b16 %v1839, %v1838
  %v2191 = vpack.c.b16 %v1841, %v1840
  %v2192 = vpack.c.b16 %v1843, %v1842
  %v2193 = vpack.c.b16 %v1845, %v1844
  %v2194 = vpack.c.b16 %v1847, %v1846
  %v2195 = vpack.c.b16 %v1849, %v1848
  %v2196 = vpack.c.b16 %v1851, %v1850
  %v2197 = vpack.c.b16 %v1853, %v1852
  %v2198 = vpack.c.b16 %v1855, %v1854
  %v2199 = vpack.c.b16 %v1857, %v1856
  %v2200 = vpack.c.b16 %v1859, %v1858
  %v2201 = vpack.c.b16 %v1861, %v1860
  %v2202 = vpack.c.b16 %v1863, %v1862
  %v2203 = vpack.c.b16 %v1865, %v1864
  %v2204 = vpack.c.b16 %v1867, %v1866
  %v2205 = vpack.c.b16 %v1869, %v1868
  %v2206 = vpack.c.b16 %v1871, %v1870
  %v2207 = vpack.c.b16 %v1873, %v1872
  %v2208 = vpack.c.b16 %v1875, %v1874
  %v2209 = vpack.c.b16 %v1877, %v1876
  %v2210 = vpack.c.b16 %v1879, %v1878
  %v2211 = vpack.c.b16 %v1881, %v1880
  %v2212 = vpack.c.b16 %v1883, %v1882
  %v2213 = vpack.c.b16 %v1885, %v1884
  %v2214 = vpack.c.b16 %v1887, %v1886
  %v2215 = vpack.c.b16 %v1889, %v1888
  %v2216 = vpack.c.b16 %v1891, %v1890
  %v2217 = vpack.c.b16 %v1893, %v1892
  %v2218 = vpack.c.b16 %v1895, %v1894
  %v2219 = vpack.c.b16 %v1897, %v1896
  %v2220 = vpack.c.b16 %v1899, %v1898
  %v2221 = vpack.c.b16 %v1901, %v1900
  %v2222 = vpack.c.b16 %v1903, %v1902
  %v2223 = vpack.c.b16 %v1905, %v1904
  %v2224 = vpack.c.b16 %v1907, %v1906
  %v2225 = vpack.c.b16 %v1909, %v1908
  %v2226 = vpack.c.b16 %v1911, %v1910
  %v2227 = vpack.c.b16 %v1913, %v1912
  %v2228 = vpack.c.b16 %v1915, %v1914
  %v2229 = vpack.c.b16 %v1917, %v1916
  %v2230 = vpack.c.b16 %v1919, %v1918
  %v2231 = vpack.c.b16 %v1921, %v1920
  %v2232 = vpack.c.b16 %v1923, %v1922
  %v2233 = vpack.c.b16 %v1925, %v1924
  %v2234 = vpack.c.b16 %v1927, %v1926
  %v2235 = vpack.c.b16 %v1929, %v1928
  %v2236 = vpack.c.b16 %v1931, %v1930
  %v2237 = vpack.c.b16 %v1933, %v1932
  %v2238 = vpack.c.b16 %v1935, %v1934
  %v2239 = vpack.c.b16 %v1937, %v1936
  %v2240 = vpack.c.b16 %v1939, %v1938
  %v2241 = vpack.c.b16 %v1941, %v1940
  %v2242 = vpack.c.b16 %v1943, %v1942
  %v2243 = vpack.c.b16 %v1945, %v1944
  %v2244 = vpack.c.b16 %v1947, %v1946
  %v2245 = vpack.c.b16 %v1949, %v1948
  %v2246 = vpack.c.b16 %v1951, %v1950
  %v2247 = vpack.c.b16 %v1953, %v1952
  %v2248 = vpack.c.b16 %v1955, %v1954
  %v2249 = vpack.c.b16 %v1957, %v1956
  %v2250 = vpack.c.b16 %v1959, %v1958
  %v2251 = vpack.c.b16 %v1961, %v1960
  %v2252 = vpack.c.b16 %v1963, %v1962
  %v2253 = vpack.c.b16 %v1965, %v1964
  %2542 = vmatprep.subr.bf16.mxu0 0
  %2543 = vmatpush1.bf16.msra.mxu0 %v1966
  %2544 = vmatprep.subr.bf16.mxu0 0
  %2545 = vmatpush1.bf16.msra.mxu0 %v1967
  %2546 = vmatprep.subr.bf16.mxu0 0
  %2547 = vmatpush1.bf16.msra.mxu0 %v1968
  %2548 = vmatprep.subr.bf16.mxu0 0
  %2549 = vmatpush1.bf16.msra.mxu0 %v1969
  %2550 = vmatprep.subr.bf16.mxu0 0
  %2551 = vmatpush1.bf16.msra.mxu0 %v1970
  %2552 = vmatprep.subr.bf16.mxu0 0
  %2553 = vmatpush1.bf16.msra.mxu0 %v1971
  %2554 = vmatprep.subr.bf16.mxu0 0
  %2555 = vmatpush1.bf16.msra.mxu0 %v1972
  %2556 = vmatprep.subr.bf16.mxu0 0
  %2557 = vmatpush1.bf16.msra.mxu0 %v1973
  %2558 = vmatprep.subr.bf16.mxu0 0
  %2559 = vmatpush1.bf16.msra.mxu0 %v1974
  %2560 = vmatprep.subr.bf16.mxu0 0
  %2561 = vmatpush1.bf16.msra.mxu0 %v1975
  %2562 = vmatprep.subr.bf16.mxu0 0
  %2563 = vmatpush1.bf16.msra.mxu0 %v1976
  %2564 = vmatprep.subr.bf16.mxu0 0
  %2565 = vmatpush1.bf16.msra.mxu0 %v1977
  %2566 = vmatprep.subr.bf16.mxu0 0
  %2567 = vmatpush1.bf16.msra.mxu0 %v1978
  %2568 = vmatprep.subr.bf16.mxu0 0
  %2569 = vmatpush1.bf16.msra.mxu0 %v1979
  %2570 = vmatprep.subr.bf16.mxu0 0
  %2571 = vmatpush1.bf16.msra.mxu0 %v1980
  %2572 = vmatprep.subr.bf16.mxu0 0
  %2573 = vmatpush1.bf16.msra.mxu0 %v1981
  %2574 = vmatprep.mubr.bf16.mxu0 %v743
  %2575 = vmatmul.mubr.bf16.gmra.mrb[0].mxu0 %v742
  %v2576 = vpop.f32.mrb[0].mxu0
  %v2577 = vadd.f32 %v632, %v2576
  %v2578 = vpop.f32.mrb[0].mxu0
  %v2579 = vpop.f32.mrb[0].mxu0
  %v2580 = vadd.f32 %v632, %v2579
  %v2581 = vpop.f32.mrb[0].mxu0
  %2582 = vdwg.mxu0
  %2583 = vmatprep.subr.bf16.mxu0 0
  %2584 = vmatpush1.bf16.msra.mxu0 %v1982
  %2585 = vmatprep.subr.bf16.mxu0 0
  %2586 = vmatpush1.bf16.msra.mxu0 %v1983
  %2587 = vmatprep.subr.bf16.mxu0 0
  %2588 = vmatpush1.bf16.msra.mxu0 %v1984
  %2589 = vmatprep.subr.bf16.mxu0 0
  %2590 = vmatpush1.bf16.msra.mxu0 %v1985
  %2591 = vmatprep.subr.bf16.mxu0 0
  %2592 = vmatpush1.bf16.msra.mxu0 %v1986
  %2593 = vmatprep.subr.bf16.mxu0 0
  %2594 = vmatpush1.bf16.msra.mxu0 %v1987
  %2595 = vmatprep.subr.bf16.mxu0 0
  %2596 = vmatpush1.bf16.msra.mxu0 %v1988
  %2597 = vmatprep.subr.bf16.mxu0 0
  %2598 = vmatpush1.bf16.msra.mxu0 %v1989
  %2599 = vmatprep.subr.bf16.mxu0 0
  %2600 = vmatpush1.bf16.msra.mxu0 %v1990
  %2601 = vmatprep.subr.bf16.mxu0 0
  %2602 = vmatpush1.bf16.msra.mxu0 %v1991
  %2603 = vmatprep.subr.bf16.mxu0 0
  %2604 = vmatpush1.bf16.msra.mxu0 %v1992
  %2605 = vmatprep.subr.bf16.mxu0 0
  %2606 = vmatpush1.bf16.msra.mxu0 %v1993
  %2607 = vmatprep.subr.bf16.mxu0 0
  %2608 = vmatpush1.bf16.msra.mxu0 %v1994
  %2609 = vmatprep.subr.bf16.mxu0 0
  %2610 = vmatpush1.bf16.msra.mxu0 %v1995
  %2611 = vmatprep.subr.bf16.mxu0 0
  %2612 = vmatpush1.bf16.msra.mxu0 %v1996
  %2613 = vmatprep.subr.bf16.mxu0 0
  %2614 = vmatpush1.bf16.msra.mxu0 %v1997
  %2615 = vmatprep.mubr.bf16.mxu0 %v745
  %2616 = vmatmul.mubr.bf16.gmra.mrb[0].mxu0 %v744
  %v2617 = vpop.f32.mrb[0].mxu0
  %v2618 = vadd.f32 %v2577, %v2617
  %v2619 = vpop.f32.mrb[0].mxu0
  %v2620 = vpop.f32.mrb[0].mxu0
  %v2621 = vadd.f32 %v2580, %v2620
  %v2622 = vpop.f32.mrb[0].mxu0
  %2623 = vdwg.mxu0
  %2624 = vmatprep.subr.bf16.mxu0 0
  %2625 = vmatpush1.bf16.msra.mxu0 %v1998
  %2626 = vmatprep.subr.bf16.mxu0 0
  %2627 = vmatpush1.bf16.msra.mxu0 %v1999
  %2628 = vmatprep.subr.bf16.mxu0 0
  %2629 = vmatpush1.bf16.msra.mxu0 %v2000
  %2630 = vmatprep.subr.bf16.mxu0 0
  %2631 = vmatpush1.bf16.msra.mxu0 %v2001
  %2632 = vmatprep.subr.bf16.mxu0 0
  %2633 = vmatpush1.bf16.msra.mxu0 %v2002
  %2634 = vmatprep.subr.bf16.mxu0 0
  %2635 = vmatpush1.bf16.msra.mxu0 %v2003
  %2636 = vmatprep.subr.bf16.mxu0 0
  %2637 = vmatpush1.bf16.msra.mxu0 %v2004
  %2638 = vmatprep.subr.bf16.mxu0 0
  %2639 = vmatpush1.bf16.msra.mxu0 %v2005
  %2640 = vmatprep.subr.bf16.mxu0 0
  %2641 = vmatpush1.bf16.msra.mxu0 %v2006
  %2642 = vmatprep.subr.bf16.mxu0 0
  %2643 = vmatpush1.bf16.msra.mxu0 %v2007
  %2644 = vmatprep.subr.bf16.mxu0 0
  %2645 = vmatpush1.bf16.msra.mxu0 %v2008
  %2646 = vmatprep.subr.bf16.mxu0 0
  %2647 = vmatpush1.bf16.msra.mxu0 %v2009
  %2648 = vmatprep.subr.bf16.mxu0 0
  %2649 = vmatpush1.bf16.msra.mxu0 %v2010
  %2650 = vmatprep.subr.bf16.mxu0 0
  %2651 = vmatpush1.bf16.msra.mxu0 %v2011
  %2652 = vmatprep.subr.bf16.mxu0 0
  %2653 = vmatpush1.bf16.msra.mxu0 %v2012
  %2654 = vmatprep.subr.bf16.mxu0 0
  %2655 = vmatpush1.bf16.msra.mxu0 %v2013
  %2656 = vmatprep.mubr.bf16.mxu0 %v747
  %2657 = vmatmul.mubr.bf16.gmra.mrb[0].mxu0 %v746
  %v2658 = vpop.f32.mrb[0].mxu0
  %v2659 = vadd.f32 %v2618, %v2658
  %v2660 = vpop.f32.mrb[0].mxu0
  %v2661 = vpop.f32.mrb[0].mxu0
  %v2662 = vadd.f32 %v2621, %v2661
  %v2663 = vpop.f32.mrb[0].mxu0
  %2664 = vdwg.mxu0
  %2665 = vmatprep.subr.bf16.mxu0 0
  %2666 = vmatpush1.bf16.msra.mxu0 %v2014
  %2667 = vmatprep.subr.bf16.mxu0 0
  %2668 = vmatpush1.bf16.msra.mxu0 %v2015
  %2669 = vmatprep.subr.bf16.mxu0 0
  %2670 = vmatpush1.bf16.msra.mxu0 %v2016
  %2671 = vmatprep.subr.bf16.mxu0 0
  %2672 = vmatpush1.bf16.msra.mxu0 %v2017
  %2673 = vmatprep.subr.bf16.mxu0 0
  %2674 = vmatpush1.bf16.msra.mxu0 %v2018
  %2675 = vmatprep.subr.bf16.mxu0 0
  %2676 = vmatpush1.bf16.msra.mxu0 %v2019
  %2677 = vmatprep.subr.bf16.mxu0 0
  %2678 = vmatpush1.bf16.msra.mxu0 %v2020
  %2679 = vmatprep.subr.bf16.mxu0 0
  %2680 = vmatpush1.bf16.msra.mxu0 %v2021
  %2681 = vmatprep.subr.bf16.mxu0 0
  %2682 = vmatpush1.bf16.msra.mxu0 %v2022
  %2683 = vmatprep.subr.bf16.mxu0 0
  %2684 = vmatpush1.bf16.msra.mxu0 %v2023
  %2685 = vmatprep.subr.bf16.mxu0 0
  %2686 = vmatpush1.bf16.msra.mxu0 %v2024
  %2687 = vmatprep.subr.bf16.mxu0 0
  %2688 = vmatpush1.bf16.msra.mxu0 %v2025
  %2689 = vmatprep.subr.bf16.mxu0 0
  %2690 = vmatpush1.bf16.msra.mxu0 %v2026
  %2691 = vmatprep.subr.bf16.mxu0 0
  %2692 = vmatpush1.bf16.msra.mxu0 %v2027
  %2693 = vmatprep.subr.bf16.mxu0 0
  %2694 = vmatpush1.bf16.msra.mxu0 %v2028
  %2695 = vmatprep.subr.bf16.mxu0 0
  %2696 = vmatpush1.bf16.msra.mxu0 %v2029
  %2697 = vmatprep.mubr.bf16.mxu0 %v749
  %2698 = vmatmul.mubr.bf16.gmra.mrb[0].mxu0 %v748
  %v2699 = vpop.f32.mrb[0].mxu0
  %v2700 = vadd.f32 %v2659, %v2699
  %v2701 = vpop.f32.mrb[0].mxu0
  %v2702 = vpop.f32.mrb[0].mxu0
  %v2703 = vadd.f32 %v2662, %v2702
  %v2704 = vpop.f32.mrb[0].mxu0
  %2705 = vdwg.mxu0
  %2706 = vmatprep.subr.bf16.mxu0 0
  %2707 = vmatpush1.bf16.msra.mxu0 %v2030
  %2708 = vmatprep.subr.bf16.mxu0 0
  %2709 = vmatpush1.bf16.msra.mxu0 %v2031
  %2710 = vmatprep.subr.bf16.mxu0 0
  %2711 = vmatpush1.bf16.msra.mxu0 %v2032
  %2712 = vmatprep.subr.bf16.mxu0 0
  %2713 = vmatpush1.bf16.msra.mxu0 %v2033
  %2714 = vmatprep.subr.bf16.mxu0 0
  %2715 = vmatpush1.bf16.msra.mxu0 %v2034
  %2716 = vmatprep.subr.bf16.mxu0 0
  %2717 = vmatpush1.bf16.msra.mxu0 %v2035
  %2718 = vmatprep.subr.bf16.mxu0 0
  %2719 = vmatpush1.bf16.msra.mxu0 %v2036
  %2720 = vmatprep.subr.bf16.mxu0 0
  %2721 = vmatpush1.bf16.msra.mxu0 %v2037
  %2722 = vmatprep.subr.bf16.mxu0 0
  %2723 = vmatpush1.bf16.msra.mxu0 %v2038
  %2724 = vmatprep.subr.bf16.mxu0 0
  %2725 = vmatpush1.bf16.msra.mxu0 %v2039
  %2726 = vmatprep.subr.bf16.mxu0 0
  %2727 = vmatpush1.bf16.msra.mxu0 %v2040
  %2728 = vmatprep.subr.bf16.mxu0 0
  %2729 = vmatpush1.bf16.msra.mxu0 %v2041
  %2730 = vmatprep.subr.bf16.mxu0 0
  %2731 = vmatpush1.bf16.msra.mxu0 %v2042
  %2732 = vmatprep.subr.bf16.mxu0 0
  %2733 = vmatpush1.bf16.msra.mxu0 %v2043
  %2734 = vmatprep.subr.bf16.mxu0 0
  %2735 = vmatpush1.bf16.msra.mxu0 %v2044
  %2736 = vmatprep.subr.bf16.mxu0 0
  %2737 = vmatpush1.bf16.msra.mxu0 %v2045
  %2738 = vmatprep.mubr.bf16.mxu0 %v751
  %2739 = vmatmul.mubr.bf16.gmra.mrb[0].mxu0 %v750
  %v2740 = vpop.f32.mrb[0].mxu0
  %v2741 = vadd.f32 %v2700, %v2740
  %v2742 = vpop.f32.mrb[0].mxu0
  %v2743 = vpop.f32.mrb[0].mxu0
  %v2744 = vadd.f32 %v2703, %v2743
  %v2745 = vpop.f32.mrb[0].mxu0
  %2746 = vdwg.mxu0
  %2747 = vmatprep.subr.bf16.mxu0 0
  %2748 = vmatpush1.bf16.msra.mxu0 %v2046
  %2749 = vmatprep.subr.bf16.mxu0 0
  %2750 = vmatpush1.bf16.msra.mxu0 %v2047
  %2751 = vmatprep.subr.bf16.mxu0 0
  %2752 = vmatpush1.bf16.msra.mxu0 %v2048
  %2753 = vmatprep.subr.bf16.mxu0 0
  %2754 = vmatpush1.bf16.msra.mxu0 %v2049
  %2755 = vmatprep.subr.bf16.mxu0 0
  %2756 = vmatpush1.bf16.msra.mxu0 %v2050
  %2757 = vmatprep.subr.bf16.mxu0 0
  %2758 = vmatpush1.bf16.msra.mxu0 %v2051
  %2759 = vmatprep.subr.bf16.mxu0 0
  %2760 = vmatpush1.bf16.msra.mxu0 %v2052
  %2761 = vmatprep.subr.bf16.mxu0 0
  %2762 = vmatpush1.bf16.msra.mxu0 %v2053
  %2763 = vmatprep.subr.bf16.mxu0 0
  %2764 = vmatpush1.bf16.msra.mxu0 %v2054
  %2765 = vmatprep.subr.bf16.mxu0 0
  %2766 = vmatpush1.bf16.msra.mxu0 %v2055
  %2767 = vmatprep.subr.bf16.mxu0 0
  %2768 = vmatpush1.bf16.msra.mxu0 %v2056
  %2769 = vmatprep.subr.bf16.mxu0 0
  %2770 = vmatpush1.bf16.msra.mxu0 %v2057
  %2771 = vmatprep.subr.bf16.mxu0 0
  %2772 = vmatpush1.bf16.msra.mxu0 %v2058
  %2773 = vmatprep.subr.bf16.mxu0 0
  %2774 = vmatpush1.bf16.msra.mxu0 %v2059
  %2775 = vmatprep.subr.bf16.mxu0 0
  %2776 = vmatpush1.bf16.msra.mxu0 %v2060
  %2777 = vmatprep.subr.bf16.mxu0 0
  %2778 = vmatpush1.bf16.msra.mxu0 %v2061
  %2779 = vmatprep.mubr.bf16.mxu0 %v753
  %2780 = vmatmul.mubr.bf16.gmra.mrb[0].mxu0 %v752
  %v2781 = vpop.f32.mrb[0].mxu0
  %v2782 = vadd.f32 %v2741, %v2781
  %v2783 = vpop.f32.mrb[0].mxu0
  %v2784 = vpop.f32.mrb[0].mxu0
  %v2785 = vadd.f32 %v2744, %v2784
  %v2786 = vpop.f32.mrb[0].mxu0
  %2787 = vdwg.mxu0
  %2788 = vmatprep.subr.bf16.mxu0 0
  %2789 = vmatpush1.bf16.msra.mxu0 %v2062
  %2790 = vmatprep.subr.bf16.mxu0 0
  %2791 = vmatpush1.bf16.msra.mxu0 %v2063
  %2792 = vmatprep.subr.bf16.mxu0 0
  %2793 = vmatpush1.bf16.msra.mxu0 %v2064
  %2794 = vmatprep.subr.bf16.mxu0 0
  %2795 = vmatpush1.bf16.msra.mxu0 %v2065
  %2796 = vmatprep.subr.bf16.mxu0 0
  %2797 = vmatpush1.bf16.msra.mxu0 %v2066
  %2798 = vmatprep.subr.bf16.mxu0 0
  %2799 = vmatpush1.bf16.msra.mxu0 %v2067
  %2800 = vmatprep.subr.bf16.mxu0 0
  %2801 = vmatpush1.bf16.msra.mxu0 %v2068
  %2802 = vmatprep.subr.bf16.mxu0 0
  %2803 = vmatpush1.bf16.msra.mxu0 %v2069
  %2804 = vmatprep.subr.bf16.mxu0 0
  %2805 = vmatpush1.bf16.msra.mxu0 %v2070
  %2806 = vmatprep.subr.bf16.mxu0 0
  %2807 = vmatpush1.bf16.msra.mxu0 %v2071
  %2808 = vmatprep.subr.bf16.mxu0 0
  %2809 = vmatpush1.bf16.msra.mxu0 %v2072
  %2810 = vmatprep.subr.bf16.mxu0 0
  %2811 = vmatpush1.bf16.msra.mxu0 %v2073
  %2812 = vmatprep.subr.bf16.mxu0 0
  %2813 = vmatpush1.bf16.msra.mxu0 %v2074
  %2814 = vmatprep.subr.bf16.mxu0 0
  %2815 = vmatpush1.bf16.msra.mxu0 %v2075
  %2816 = vmatprep.subr.bf16.mxu0 0
  %2817 = vmatpush1.bf16.msra.mxu0 %v2076
  %2818 = vmatprep.subr.bf16.mxu0 0
  %2819 = vmatpush1.bf16.msra.mxu0 %v2077
  %2820 = vmatprep.mubr.bf16.mxu0 %v755
  %2821 = vmatmul.mubr.bf16.gmra.mrb[0].mxu0 %v754
  %v2822 = vpop.f32.mrb[0].mxu0
  %v2823 = vadd.f32 %v2782, %v2822
  %v2824 = vpop.f32.mrb[0].mxu0
  %v2825 = vpop.f32.mrb[0].mxu0
  %v2826 = vadd.f32 %v2785, %v2825
  %v2827 = vpop.f32.mrb[0].mxu0
  %2828 = vdwg.mxu0
  %2829 = vmatprep.subr.bf16.mxu0 0
  %2830 = vmatpush1.bf16.msra.mxu0 %v2078
  %2831 = vmatprep.subr.bf16.mxu0 0
  %2832 = vmatpush1.bf16.msra.mxu0 %v2079
  %2833 = vmatprep.subr.bf16.mxu0 0
  %2834 = vmatpush1.bf16.msra.mxu0 %v2080
  %2835 = vmatprep.subr.bf16.mxu0 0
  %2836 = vmatpush1.bf16.msra.mxu0 %v2081
  %2837 = vmatprep.subr.bf16.mxu0 0
  %2838 = vmatpush1.bf16.msra.mxu0 %v2082
  %2839 = vmatprep.subr.bf16.mxu0 0
  %2840 = vmatpush1.bf16.msra.mxu0 %v2083
  %2841 = vmatprep.subr.bf16.mxu0 0
  %2842 = vmatpush1.bf16.msra.mxu0 %v2084
  %2843 = vmatprep.subr.bf16.mxu0 0
  %2844 = vmatpush1.bf16.msra.mxu0 %v2085
  %2845 = vmatprep.subr.bf16.mxu0 0
  %2846 = vmatpush1.bf16.msra.mxu0 %v2086
  %2847 = vmatprep.subr.bf16.mxu0 0
  %2848 = vmatpush1.bf16.msra.mxu0 %v2087
  %2849 = vmatprep.subr.bf16.mxu0 0
  %2850 = vmatpush1.bf16.msra.mxu0 %v2088
  %2851 = vmatprep.subr.bf16.mxu0 0
  %2852 = vmatpush1.bf16.msra.mxu0 %v2089
  %2853 = vmatprep.subr.bf16.mxu0 0
  %2854 = vmatpush1.bf16.msra.mxu0 %v2090
  %2855 = vmatprep.subr.bf16.mxu0 0
  %2856 = vmatpush1.bf16.msra.mxu0 %v2091
  %2857 = vmatprep.subr.bf16.mxu0 0
  %2858 = vmatpush1.bf16.msra.mxu0 %v2092
  %2859 = vmatprep.subr.bf16.mxu0 0
  %2860 = vmatpush1.bf16.msra.mxu0 %v2093
  %2861 = vmatprep.mubr.bf16.mxu0 %v757
  %2862 = vmatmul.mubr.bf16.gmra.mrb[0].mxu0 %v756
  %v2863 = vpop.f32.mrb[0].mxu0
  %v2864 = vadd.f32 %v2823, %v2863
  %v2865 = vpop.f32.mrb[0].mxu0
  %v2866 = vpop.f32.mrb[0].mxu0
  %v2867 = vadd.f32 %v2826, %v2866
  %v2868 = vpop.f32.mrb[0].mxu0
  %2869 = vdwg.mxu0
  %2870 = vmatprep.subr.bf16.mxu0 0
  %2871 = vmatpush1.bf16.msra.mxu0 %v2094
  %2872 = vmatprep.subr.bf16.mxu0 0
  %2873 = vmatpush1.bf16.msra.mxu0 %v2095
  %2874 = vmatprep.subr.bf16.mxu0 0
  %2875 = vmatpush1.bf16.msra.mxu0 %v2096
  %2876 = vmatprep.subr.bf16.mxu0 0
  %2877 = vmatpush1.bf16.msra.mxu0 %v2097
  %2878 = vmatprep.subr.bf16.mxu0 0
  %2879 = vmatpush1.bf16.msra.mxu0 %v2098
  %2880 = vmatprep.subr.bf16.mxu0 0
  %2881 = vmatpush1.bf16.msra.mxu0 %v2099
  %2882 = vmatprep.subr.bf16.mxu0 0
  %2883 = vmatpush1.bf16.msra.mxu0 %v2100
  %2884 = vmatprep.subr.bf16.mxu0 0
  %2885 = vmatpush1.bf16.msra.mxu0 %v2101
  %2886 = vmatprep.subr.bf16.mxu0 0
  %2887 = vmatpush1.bf16.msra.mxu0 %v2102
  %2888 = vmatprep.subr.bf16.mxu0 0
  %2889 = vmatpush1.bf16.msra.mxu0 %v2103
  %2890 = vmatprep.subr.bf16.mxu0 0
  %2891 = vmatpush1.bf16.msra.mxu0 %v2104
  %2892 = vmatprep.subr.bf16.mxu0 0
  %2893 = vmatpush1.bf16.msra.mxu0 %v2105
  %2894 = vmatprep.subr.bf16.mxu0 0
  %2895 = vmatpush1.bf16.msra.mxu0 %v2106
  %2896 = vmatprep.subr.bf16.mxu0 0
  %2897 = vmatpush1.bf16.msra.mxu0 %v2107
  %2898 = vmatprep.subr.bf16.mxu0 0
  %2899 = vmatpush1.bf16.msra.mxu0 %v2108
  %2900 = vmatprep.subr.bf16.mxu0 0
  %2901 = vmatpush1.bf16.msra.mxu0 %v2109
  %2902 = vmatprep.mubr.bf16.mxu0 %v759
  %2903 = vmatmul.mubr.bf16.gmra.mrb[0].mxu0 %v758
  %v2904 = vpop.f32.mrb[0].mxu0
  %v2905 = vadd.f32 %v2864, %v2904
  %v2906 = vpop.f32.mrb[0].mxu0
  %v2907 = vpop.f32.mrb[0].mxu0
  %v2908 = vadd.f32 %v2867, %v2907
  %v2909 = vpop.f32.mrb[0].mxu0
  %2910 = vdwg.mxu0
  %2911 = vmatprep.subr.bf16.mxu0 0
  %2912 = vmatpush1.bf16.msra.mxu0 %v2110
  %2913 = vmatprep.subr.bf16.mxu0 0
  %2914 = vmatpush1.bf16.msra.mxu0 %v2111
  %2915 = vmatprep.subr.bf16.mxu0 0
  %2916 = vmatpush1.bf16.msra.mxu0 %v2112
  %2917 = vmatprep.subr.bf16.mxu0 0
  %2918 = vmatpush1.bf16.msra.mxu0 %v2113
  %2919 = vmatprep.subr.bf16.mxu0 0
  %2920 = vmatpush1.bf16.msra.mxu0 %v2114
  %2921 = vmatprep.subr.bf16.mxu0 0
  %2922 = vmatpush1.bf16.msra.mxu0 %v2115
  %2923 = vmatprep.subr.bf16.mxu0 0
  %2924 = vmatpush1.bf16.msra.mxu0 %v2116
  %2925 = vmatprep.subr.bf16.mxu0 0
  %2926 = vmatpush1.bf16.msra.mxu0 %v2117
  %2927 = vmatprep.subr.bf16.mxu0 0
  %2928 = vmatpush1.bf16.msra.mxu0 %v2118
  %2929 = vmatprep.subr.bf16.mxu0 0
  %2930 = vmatpush1.bf16.msra.mxu0 %v2119
  %2931 = vmatprep.subr.bf16.mxu0 0
  %2932 = vmatpush1.bf16.msra.mxu0 %v2120
  %2933 = vmatprep.subr.bf16.mxu0 0
  %2934 = vmatpush1.bf16.msra.mxu0 %v2121
  %2935 = vmatprep.subr.bf16.mxu0 0
  %2936 = vmatpush1.bf16.msra.mxu0 %v2122
  %2937 = vmatprep.subr.bf16.mxu0 0
  %2938 = vmatpush1.bf16.msra.mxu0 %v2123
  %2939 = vmatprep.subr.bf16.mxu0 0
  %2940 = vmatpush1.bf16.msra.mxu0 %v2124
  %2941 = vmatprep.subr.bf16.mxu0 0
  %2942 = vmatpush1.bf16.msra.mxu0 %v2125
  %2943 = vmatprep.mubr.bf16.mxu0 %v761
  %2944 = vmatmul.mubr.bf16.gmra.mrb[0].mxu0 %v760
  %v2945 = vpop.f32.mrb[0].mxu0
  %v2946 = vadd.f32 %v2905, %v2945
  %v2947 = vpop.f32.mrb[0].mxu0
  %v2948 = vpop.f32.mrb[0].mxu0
  %v2949 = vadd.f32 %v2908, %v2948
  %v2950 = vpop.f32.mrb[0].mxu0
  %2951 = vdwg.mxu0
  %2952 = vmatprep.subr.bf16.mxu0 0
  %2953 = vmatpush1.bf16.msra.mxu0 %v2126
  %2954 = vmatprep.subr.bf16.mxu0 0
  %2955 = vmatpush1.bf16.msra.mxu0 %v2127
  %2956 = vmatprep.subr.bf16.mxu0 0
  %2957 = vmatpush1.bf16.msra.mxu0 %v2128
  %2958 = vmatprep.subr.bf16.mxu0 0
  %2959 = vmatpush1.bf16.msra.mxu0 %v2129
  %2960 = vmatprep.subr.bf16.mxu0 0
  %2961 = vmatpush1.bf16.msra.mxu0 %v2130
  %2962 = vmatprep.subr.bf16.mxu0 0
  %2963 = vmatpush1.bf16.msra.mxu0 %v2131
  %2964 = vmatprep.subr.bf16.mxu0 0
  %2965 = vmatpush1.bf16.msra.mxu0 %v2132
  %2966 = vmatprep.subr.bf16.mxu0 0
  %2967 = vmatpush1.bf16.msra.mxu0 %v2133
  %2968 = vmatprep.subr.bf16.mxu0 0
  %2969 = vmatpush1.bf16.msra.mxu0 %v2134
  %2970 = vmatprep.subr.bf16.mxu0 0
  %2971 = vmatpush1.bf16.msra.mxu0 %v2135
  %2972 = vmatprep.subr.bf16.mxu0 0
  %2973 = vmatpush1.bf16.msra.mxu0 %v2136
  %2974 = vmatprep.subr.bf16.mxu0 0
  %2975 = vmatpush1.bf16.msra.mxu0 %v2137
  %2976 = vmatprep.subr.bf16.mxu0 0
  %2977 = vmatpush1.bf16.msra.mxu0 %v2138
  %2978 = vmatprep.subr.bf16.mxu0 0
  %2979 = vmatpush1.bf16.msra.mxu0 %v2139
  %2980 = vmatprep.subr.bf16.mxu0 0
  %2981 = vmatpush1.bf16.msra.mxu0 %v2140
  %2982 = vmatprep.subr.bf16.mxu0 0
  %2983 = vmatpush1.bf16.msra.mxu0 %v2141
  %2984 = vmatprep.mubr.bf16.mxu0 %v763
  %2985 = vmatmul.mubr.bf16.gmra.mrb[0].mxu0 %v762
  %v2986 = vpop.f32.mrb[0].mxu0
  %v2987 = vadd.f32 %v2946, %v2986
  %v2988 = vpop.f32.mrb[0].mxu0
  %v2989 = vpop.f32.mrb[0].mxu0
  %v2990 = vadd.f32 %v2949, %v2989
  %v2991 = vpop.f32.mrb[0].mxu0
  %2992 = vdwg.mxu0
  %2993 = vmatprep.subr.bf16.mxu0 0
  %2994 = vmatpush1.bf16.msra.mxu0 %v2142
  %2995 = vmatprep.subr.bf16.mxu0 0
  %2996 = vmatpush1.bf16.msra.mxu0 %v2143
  %2997 = vmatprep.subr.bf16.mxu0 0
  %2998 = vmatpush1.bf16.msra.mxu0 %v2144
  %2999 = vmatprep.subr.bf16.mxu0 0
  %3000 = vmatpush1.bf16.msra.mxu0 %v2145
  %3001 = vmatprep.subr.bf16.mxu0 0
  %3002 = vmatpush1.bf16.msra.mxu0 %v2146
  %3003 = vmatprep.subr.bf16.mxu0 0
  %3004 = vmatpush1.bf16.msra.mxu0 %v2147
  %3005 = vmatprep.subr.bf16.mxu0 0
  %3006 = vmatpush1.bf16.msra.mxu0 %v2148
  %3007 = vmatprep.subr.bf16.mxu0 0
  %3008 = vmatpush1.bf16.msra.mxu0 %v2149
  %3009 = vmatprep.subr.bf16.mxu0 0
  %3010 = vmatpush1.bf16.msra.mxu0 %v2150
  %3011 = vmatprep.subr.bf16.mxu0 0
  %3012 = vmatpush1.bf16.msra.mxu0 %v2151
  %3013 = vmatprep.subr.bf16.mxu0 0
  %3014 = vmatpush1.bf16.msra.mxu0 %v2152
  %3015 = vmatprep.subr.bf16.mxu0 0
  %3016 = vmatpush1.bf16.msra.mxu0 %v2153
  %3017 = vmatprep.subr.bf16.mxu0 0
  %3018 = vmatpush1.bf16.msra.mxu0 %v2154
  %3019 = vmatprep.subr.bf16.mxu0 0
  %3020 = vmatpush1.bf16.msra.mxu0 %v2155
  %3021 = vmatprep.subr.bf16.mxu0 0
  %3022 = vmatpush1.bf16.msra.mxu0 %v2156
  %3023 = vmatprep.subr.bf16.mxu0 0
  %3024 = vmatpush1.bf16.msra.mxu0 %v2157
  %3025 = vmatprep.mubr.bf16.mxu0 %v765
  %3026 = vmatmul.mubr.bf16.gmra.mrb[0].mxu0 %v764
  %v3027 = vpop.f32.mrb[0].mxu0
  %v3028 = vadd.f32 %v2987, %v3027
  %v3029 = vpop.f32.mrb[0].mxu0
  %v3030 = vpop.f32.mrb[0].mxu0
  %v3031 = vadd.f32 %v2990, %v3030
  %v3032 = vpop.f32.mrb[0].mxu0
  %3033 = vdwg.mxu0
  %3034 = vmatprep.subr.bf16.mxu0 0
  %3035 = vmatpush1.bf16.msra.mxu0 %v2158
  %3036 = vmatprep.subr.bf16.mxu0 0
  %3037 = vmatpush1.bf16.msra.mxu0 %v2159
  %3038 = vmatprep.subr.bf16.mxu0 0
  %3039 = vmatpush1.bf16.msra.mxu0 %v2160
  %3040 = vmatprep.subr.bf16.mxu0 0
  %3041 = vmatpush1.bf16.msra.mxu0 %v2161
  %3042 = vmatprep.subr.bf16.mxu0 0
  %3043 = vmatpush1.bf16.msra.mxu0 %v2162
  %3044 = vmatprep.subr.bf16.mxu0 0
  %3045 = vmatpush1.bf16.msra.mxu0 %v2163
  %3046 = vmatprep.subr.bf16.mxu0 0
  %3047 = vmatpush1.bf16.msra.mxu0 %v2164
  %3048 = vmatprep.subr.bf16.mxu0 0
  %3049 = vmatpush1.bf16.msra.mxu0 %v2165
  %3050 = vmatprep.subr.bf16.mxu0 0
  %3051 = vmatpush1.bf16.msra.mxu0 %v2166
  %3052 = vmatprep.subr.bf16.mxu0 0
  %3053 = vmatpush1.bf16.msra.mxu0 %v2167
  %3054 = vmatprep.subr.bf16.mxu0 0
  %3055 = vmatpush1.bf16.msra.mxu0 %v2168
  %3056 = vmatprep.subr.bf16.mxu0 0
  %3057 = vmatpush1.bf16.msra.mxu0 %v2169
  %3058 = vmatprep.subr.bf16.mxu0 0
  %3059 = vmatpush1.bf16.msra.mxu0 %v2170
  %3060 = vmatprep.subr.bf16.mxu0 0
  %3061 = vmatpush1.bf16.msra.mxu0 %v2171
  %3062 = vmatprep.subr.bf16.mxu0 0
  %3063 = vmatpush1.bf16.msra.mxu0 %v2172
  %3064 = vmatprep.subr.bf16.mxu0 0
  %3065 = vmatpush1.bf16.msra.mxu0 %v2173
  %3066 = vmatprep.mubr.bf16.mxu0 %v767
  %3067 = vmatmul.mubr.bf16.gmra.mrb[0].mxu0 %v766
  %v3068 = vpop.f32.mrb[0].mxu0
  %v3069 = vadd.f32 %v3028, %v3068
  %v3070 = vpop.f32.mrb[0].mxu0
  %v3071 = vpop.f32.mrb[0].mxu0
  %v3072 = vadd.f32 %v3031, %v3071
  %v3073 = vpop.f32.mrb[0].mxu0
  %3074 = vdwg.mxu0
  %3075 = vmatprep.subr.bf16.mxu0 0
  %3076 = vmatpush1.bf16.msra.mxu0 %v2174
  %3077 = vmatprep.subr.bf16.mxu0 0
  %3078 = vmatpush1.bf16.msra.mxu0 %v2175
  %3079 = vmatprep.subr.bf16.mxu0 0
  %3080 = vmatpush1.bf16.msra.mxu0 %v2176
  %3081 = vmatprep.subr.bf16.mxu0 0
  %3082 = vmatpush1.bf16.msra.mxu0 %v2177
  %3083 = vmatprep.subr.bf16.mxu0 0
  %3084 = vmatpush1.bf16.msra.mxu0 %v2178
  %3085 = vmatprep.subr.bf16.mxu0 0
  %3086 = vmatpush1.bf16.msra.mxu0 %v2179
  %3087 = vmatprep.subr.bf16.mxu0 0
  %3088 = vmatpush1.bf16.msra.mxu0 %v2180
  %3089 = vmatprep.subr.bf16.mxu0 0
  %3090 = vmatpush1.bf16.msra.mxu0 %v2181
  %3091 = vmatprep.subr.bf16.mxu0 0
  %3092 = vmatpush1.bf16.msra.mxu0 %v2182
  %3093 = vmatprep.subr.bf16.mxu0 0
  %3094 = vmatpush1.bf16.msra.mxu0 %v2183
  %3095 = vmatprep.subr.bf16.mxu0 0
  %3096 = vmatpush1.bf16.msra.mxu0 %v2184
  %3097 = vmatprep.subr.bf16.mxu0 0
  %3098 = vmatpush1.bf16.msra.mxu0 %v2185
  %3099 = vmatprep.subr.bf16.mxu0 0
  %3100 = vmatpush1.bf16.msra.mxu0 %v2186
  %3101 = vmatprep.subr.bf16.mxu0 0
  %3102 = vmatpush1.bf16.msra.mxu0 %v2187
  %3103 = vmatprep.subr.bf16.mxu0 0
  %3104 = vmatpush1.bf16.msra.mxu0 %v2188
  %3105 = vmatprep.subr.bf16.mxu0 0
  %3106 = vmatpush1.bf16.msra.mxu0 %v2189
  %3107 = vmatprep.mubr.bf16.mxu0 %v769
  %3108 = vmatmul.mubr.bf16.gmra.mrb[0].mxu0 %v768
  %v3109 = vpop.f32.mrb[0].mxu0
  %v3110 = vadd.f32 %v3069, %v3109
  %v3111 = vpop.f32.mrb[0].mxu0
  %v3112 = vpop.f32.mrb[0].mxu0
  %v3113 = vadd.f32 %v3072, %v3112
  %v3114 = vpop.f32.mrb[0].mxu0
  %3115 = vdwg.mxu0
  %3116 = vmatprep.subr.bf16.mxu0 0
  %3117 = vmatpush1.bf16.msra.mxu0 %v2190
  %3118 = vmatprep.subr.bf16.mxu0 0
  %3119 = vmatpush1.bf16.msra.mxu0 %v2191
  %3120 = vmatprep.subr.bf16.mxu0 0
  %3121 = vmatpush1.bf16.msra.mxu0 %v2192
  %3122 = vmatprep.subr.bf16.mxu0 0
  %3123 = vmatpush1.bf16.msra.mxu0 %v2193
  %3124 = vmatprep.subr.bf16.mxu0 0
  %3125 = vmatpush1.bf16.msra.mxu0 %v2194
  %3126 = vmatprep.subr.bf16.mxu0 0
  %3127 = vmatpush1.bf16.msra.mxu0 %v2195
  %3128 = vmatprep.subr.bf16.mxu0 0
  %3129 = vmatpush1.bf16.msra.mxu0 %v2196
  %3130 = vmatprep.subr.bf16.mxu0 0
  %3131 = vmatpush1.bf16.msra.mxu0 %v2197
  %3132 = vmatprep.subr.bf16.mxu0 0
  %3133 = vmatpush1.bf16.msra.mxu0 %v2198
  %3134 = vmatprep.subr.bf16.mxu0 0
  %3135 = vmatpush1.bf16.msra.mxu0 %v2199
  %3136 = vmatprep.subr.bf16.mxu0 0
  %3137 = vmatpush1.bf16.msra.mxu0 %v2200
  %3138 = vmatprep.subr.bf16.mxu0 0
  %3139 = vmatpush1.bf16.msra.mxu0 %v2201
  %3140 = vmatprep.subr.bf16.mxu0 0
  %3141 = vmatpush1.bf16.msra.mxu0 %v2202
  %3142 = vmatprep.subr.bf16.mxu0 0
  %3143 = vmatpush1.bf16.msra.mxu0 %v2203
  %3144 = vmatprep.subr.bf16.mxu0 0
  %3145 = vmatpush1.bf16.msra.mxu0 %v2204
  %3146 = vmatprep.subr.bf16.mxu0 0
  %3147 = vmatpush1.bf16.msra.mxu0 %v2205
  %3148 = vmatprep.mubr.bf16.mxu0 %v771
  %3149 = vmatmul.mubr.bf16.gmra.mrb[0].mxu0 %v770
  %v3150 = vpop.f32.mrb[0].mxu0
  %v3151 = vadd.f32 %v3110, %v3150
  %v3152 = vpop.f32.mrb[0].mxu0
  %v3153 = vpop.f32.mrb[0].mxu0
  %v3154 = vadd.f32 %v3113, %v3153
  %v3155 = vpop.f32.mrb[0].mxu0
  %3156 = vdwg.mxu0
  %3157 = vmatprep.subr.bf16.mxu0 0
  %3158 = vmatpush1.bf16.msra.mxu0 %v2206
  %3159 = vmatprep.subr.bf16.mxu0 0
  %3160 = vmatpush1.bf16.msra.mxu0 %v2207
  %3161 = vmatprep.subr.bf16.mxu0 0
  %3162 = vmatpush1.bf16.msra.mxu0 %v2208
  %3163 = vmatprep.subr.bf16.mxu0 0
  %3164 = vmatpush1.bf16.msra.mxu0 %v2209
  %3165 = vmatprep.subr.bf16.mxu0 0
  %3166 = vmatpush1.bf16.msra.mxu0 %v2210
  %3167 = vmatprep.subr.bf16.mxu0 0
  %3168 = vmatpush1.bf16.msra.mxu0 %v2211
  %3169 = vmatprep.subr.bf16.mxu0 0
  %3170 = vmatpush1.bf16.msra.mxu0 %v2212
  %3171 = vmatprep.subr.bf16.mxu0 0
  %3172 = vmatpush1.bf16.msra.mxu0 %v2213
  %3173 = vmatprep.subr.bf16.mxu0 0
  %3174 = vmatpush1.bf16.msra.mxu0 %v2214
  %3175 = vmatprep.subr.bf16.mxu0 0
  %3176 = vmatpush1.bf16.msra.mxu0 %v2215
  %3177 = vmatprep.subr.bf16.mxu0 0
  %3178 = vmatpush1.bf16.msra.mxu0 %v2216
  %3179 = vmatprep.subr.bf16.mxu0 0
  %3180 = vmatpush1.bf16.msra.mxu0 %v2217
  %3181 = vmatprep.subr.bf16.mxu0 0
  %3182 = vmatpush1.bf16.msra.mxu0 %v2218
  %3183 = vmatprep.subr.bf16.mxu0 0
  %3184 = vmatpush1.bf16.msra.mxu0 %v2219
  %3185 = vmatprep.subr.bf16.mxu0 0
  %3186 = vmatpush1.bf16.msra.mxu0 %v2220
  %3187 = vmatprep.subr.bf16.mxu0 0
  %3188 = vmatpush1.bf16.msra.mxu0 %v2221
  %3189 = vmatprep.mubr.bf16.mxu0 %v773
  %3190 = vmatmul.mubr.bf16.gmra.mrb[0].mxu0 %v772
  %v3191 = vpop.f32.mrb[0].mxu0
  %v3192 = vadd.f32 %v3151, %v3191
  %v3193 = vpop.f32.mrb[0].mxu0
  %v3194 = vpop.f32.mrb[0].mxu0
  %v3195 = vadd.f32 %v3154, %v3194
  %v3196 = vpop.f32.mrb[0].mxu0
  %3197 = vdwg.mxu0
  %3198 = vmatprep.subr.bf16.mxu0 0
  %3199 = vmatpush1.bf16.msra.mxu0 %v2222
  %3200 = vmatprep.subr.bf16.mxu0 0
  %3201 = vmatpush1.bf16.msra.mxu0 %v2223
  %3202 = vmatprep.subr.bf16.mxu0 0
  %3203 = vmatpush1.bf16.msra.mxu0 %v2224
  %3204 = vmatprep.subr.bf16.mxu0 0
  %3205 = vmatpush1.bf16.msra.mxu0 %v2225
  %3206 = vmatprep.subr.bf16.mxu0 0
  %3207 = vmatpush1.bf16.msra.mxu0 %v2226
  %3208 = vmatprep.subr.bf16.mxu0 0
  %3209 = vmatpush1.bf16.msra.mxu0 %v2227
  %3210 = vmatprep.subr.bf16.mxu0 0
  %3211 = vmatpush1.bf16.msra.mxu0 %v2228
  %3212 = vmatprep.subr.bf16.mxu0 0
  %3213 = vmatpush1.bf16.msra.mxu0 %v2229
  %3214 = vmatprep.subr.bf16.mxu0 0
  %3215 = vmatpush1.bf16.msra.mxu0 %v2230
  %3216 = vmatprep.subr.bf16.mxu0 0
  %3217 = vmatpush1.bf16.msra.mxu0 %v2231
  %3218 = vmatprep.subr.bf16.mxu0 0
  %3219 = vmatpush1.bf16.msra.mxu0 %v2232
  %3220 = vmatprep.subr.bf16.mxu0 0
  %3221 = vmatpush1.bf16.msra.mxu0 %v2233
  %3222 = vmatprep.subr.bf16.mxu0 0
  %3223 = vmatpush1.bf16.msra.mxu0 %v2234
  %3224 = vmatprep.subr.bf16.mxu0 0
  %3225 = vmatpush1.bf16.msra.mxu0 %v2235
  %3226 = vmatprep.subr.bf16.mxu0 0
  %3227 = vmatpush1.bf16.msra.mxu0 %v2236
  %3228 = vmatprep.subr.bf16.mxu0 0
  %3229 = vmatpush1.bf16.msra.mxu0 %v2237
  %3230 = vmatprep.mubr.bf16.mxu0 %v775
  %3231 = vmatmul.mubr.bf16.gmra.mrb[0].mxu0 %v774
  %v3232 = vpop.f32.mrb[0].mxu0
  %v3233 = vadd.f32 %v3192, %v3232
  %v3234 = vpop.f32.mrb[0].mxu0
  %v3235 = vpop.f32.mrb[0].mxu0
  %v3236 = vadd.f32 %v3195, %v3235
  %v3237 = vpop.f32.mrb[0].mxu0
  %3238 = vdwg.mxu0
  %3239 = vmatprep.subr.bf16.mxu0 0
  %3240 = vmatpush1.bf16.msra.mxu0 %v2238
  %3241 = vmatprep.subr.bf16.mxu0 0
  %3242 = vmatpush1.bf16.msra.mxu0 %v2239
  %3243 = vmatprep.subr.bf16.mxu0 0
  %3244 = vmatpush1.bf16.msra.mxu0 %v2240
  %3245 = vmatprep.subr.bf16.mxu0 0
  %3246 = vmatpush1.bf16.msra.mxu0 %v2241
  %3247 = vmatprep.subr.bf16.mxu0 0
  %3248 = vmatpush1.bf16.msra.mxu0 %v2242
  %3249 = vmatprep.subr.bf16.mxu0 0
  %3250 = vmatpush1.bf16.msra.mxu0 %v2243
  %3251 = vmatprep.subr.bf16.mxu0 0
  %3252 = vmatpush1.bf16.msra.mxu0 %v2244
  %3253 = vmatprep.subr.bf16.mxu0 0
  %3254 = vmatpush1.bf16.msra.mxu0 %v2245
  %3255 = vmatprep.subr.bf16.mxu0 0
  %3256 = vmatpush1.bf16.msra.mxu0 %v2246
  %3257 = vmatprep.subr.bf16.mxu0 0
  %3258 = vmatpush1.bf16.msra.mxu0 %v2247
  %3259 = vmatprep.subr.bf16.mxu0 0
  %3260 = vmatpush1.bf16.msra.mxu0 %v2248
  %3261 = vmatprep.subr.bf16.mxu0 0
  %3262 = vmatpush1.bf16.msra.mxu0 %v2249
  %3263 = vmatprep.subr.bf16.mxu0 0
  %3264 = vmatpush1.bf16.msra.mxu0 %v2250
  %3265 = vmatprep.subr.bf16.mxu0 0
  %3266 = vmatpush1.bf16.msra.mxu0 %v2251
  %3267 = vmatprep.subr.bf16.mxu0 0
  %3268 = vmatpush1.bf16.msra.mxu0 %v2252
  %3269 = vmatprep.subr.bf16.mxu0 0
  %3270 = vmatpush1.bf16.msra.mxu0 %v2253
  %3271 = vmatprep.mubr.bf16.mxu0 %v777
  %3272 = vmatmul.mubr.bf16.gmra.mrb[0].mxu0 %v776
  %v3273 = vpop.f32.mrb[0].mxu0
  %v3274 = vadd.f32 %v3233, %v3273
  %v3275 = vpop.f32.mrb[0].mxu0
  %v3276 = vpop.f32.mrb[0].mxu0
  %v3277 = vadd.f32 %v3236, %v3276
  %v3278 = vpop.f32.mrb[0].mxu0
  %3279 = vdwg.mxu0
  %3280 = vst [vmem:[%s3] sm:$0xff] %v3274
  %3281 = vst [vmem:[%s3 + $0x8] sm:$0xff] %v3277
  // Predicated region
  $region14: #{cnn_forward.9} parent=0 // pred_check
    _
  $region15: #{cnn_forward.9} parent=0 // pred_check_branch
    %3283 = sbr.rel (0) target = $region17
  $region16: #{cnn_forward.9} parent=0 // pred_region
    _
  $region17: #{cnn_forward.9} parent=0 // pred_fallthru
    _
  // Predicated region
  $region18: #{cnn_forward.9} parent=0 // pred_check
    _
  $region19: #{cnn_forward.9} parent=0 // pred_check_branch
    %3285 = sbr.rel (0) target = $region21
  $region20: #{cnn_forward.9} parent=0 // pred_region
    _
  $region21: #{cnn_forward.9} parent=0 // pred_fallthru
    _

</llo_original>
